<compile_context>
chip_gen: v5e
topology: v5e:2x2
jax: 0.10.0
libtpu: 0.0.40
codegen_flags: <defaults>
</compile_context>

<pallas_src>
import functools
import math

import jax
import jax.numpy as jnp
from jax import lax
from jax.experimental import pallas as pl
from jax.experimental.pallas import tpu as pltpu

EPS_BN = 1e-5


# ------------------------- in-kernel 3x3 tap builder -------------------------

def _conv3x3_taps(h, h_top, h_bot, wid):
    """Build the (R, 9*C) im2col operand of a 3x3 / pad=1 conv, fully in VMEM.

    h     : (R, C)  post-BN-ReLU activations of TILE_H image rows (row-major y*W+x).
    h_top : (W, C)  the image row directly above the tile (already zeroed at the
                    image top boundary by the caller).
    h_bot : (W, C)  the image row directly below the tile.

    Spatial (dy, dx) shifts are sublane shifts of the flattened slab; left/right
    out-of-image taps are zeroed with an iota column mask.  Nothing touches HBM.
    """
    r, c = h.shape
    zrow = jnp.zeros((1, c), h.dtype)
    hext = jnp.concatenate([zrow, h_top, h, h_bot, zrow], axis=0)   # (R + 2W + 2, C)
    col = lax.broadcasted_iota(jnp.int32, (r, 1), 0) % wid          # x coordinate per row
    not_left = col > 0                                              # neighbour x-1 exists
    not_right = col < (wid - 1)                                     # neighbour x+1 exists
    base = wid + 1
    taps = []
    for dy in (-1, 0, 1):
        for dx in (-1, 0, 1):
            off = dy * wid + dx
            tap = hext[base + off: base + off + r, :]
            if dx == -1:
                tap = jnp.where(not_left, tap, jnp.zeros_like(tap))
            elif dx == 1:
                tap = jnp.where(not_right, tap, jnp.zeros_like(tap))
            taps.append(tap)
    return jnp.concatenate(taps, axis=-1)                           # (R, 9*C)


# ------------------------------ Pallas kernels -------------------------------

def _make_pass1_kernel(tile_h, wid):
    r = tile_h * wid

    def kernel(x_ref, xa_ref, xb_ref, s_ref, t_ref, w_ref,
               y_ref, ya_ref, yb_ref, ps_ref, pss_ref):
        t_idx = pl.program_id(1)
        last_t = pl.num_programs(1) - 1
        cd = w_ref.dtype
        # BN1 (precomputed per-channel scale/shift) + ReLU; elementwise math in f32.
        h = jnp.maximum(x_ref[0] * s_ref[...] + t_ref[...], 0.0)
        ha = jnp.maximum(xa_ref[0, 0] * s_ref[...] + t_ref[...], 0.0)
        hb = jnp.maximum(xb_ref[0, 0] * s_ref[...] + t_ref[...], 0.0)
        # conv zero padding applies to h (post BN+ReLU) at the image boundary.
        ha = jnp.where(t_idx > 0, ha, 0.0)
        hb = jnp.where(t_idx < last_t, hb, 0.0)
        taps = _conv3x3_taps(h.astype(cd), ha.astype(cd), hb.astype(cd), wid)
        y = jnp.dot(taps, w_ref[...], preferred_element_type=jnp.float32)   # (R, Cout)
        y_ref[0] = y.astype(y_ref.dtype)
        # Last / first image row of this tile -> halo inputs of pass 2 (tiny).
        ya_ref[0, 0] = y[r - wid:, :].astype(ya_ref.dtype)
        yb_ref[0, 0] = y[:wid, :].astype(yb_ref.dtype)
        # Per-block partial sums for BN2 batch statistics (finalized in the
        # wrapper, so global batch stats stay exact under tiling).
        ps_ref[0, 0] = jnp.sum(y, axis=0, keepdims=True)
        pss_ref[0, 0] = jnp.sum(y * y, axis=0, keepdims=True)

    return kernel


def _make_pass2_kernel(tile_h, wid):
    def kernel(y1_ref, ya_ref, yb_ref, x_ref, s_ref, t_ref,
               w2_ref, wsc_ref, b_ref, o_ref):
        t_idx = pl.program_id(1)
        last_t = pl.num_programs(1) - 1
        cd = w2_ref.dtype
        h = jnp.maximum(y1_ref[0] * s_ref[...] + t_ref[...], 0.0)
        ha = jnp.maximum(ya_ref[0, 0] * s_ref[...] + t_ref[...], 0.0)
        hb = jnp.maximum(yb_ref[0, 0] * s_ref[...] + t_ref[...], 0.0)
        ha = jnp.where(t_idx > 0, ha, 0.0)
        hb = jnp.where(t_idx < last_t, hb, 0.0)
        taps = _conv3x3_taps(h.astype(cd), ha.astype(cd), hb.astype(cd), wid)
        # 3x3 conv and the 1x1 learnable shortcut accumulate into the same f32
        # result: no operand concat (saves a (R, 9*Cout)-sized VMEM copy on all
        # generations; on v7x the MRB accumulates the second dot in place).
        o = jnp.dot(taps, w2_ref[...], preferred_element_type=jnp.float32)
        o = o + jnp.dot(x_ref[0].astype(cd), wsc_ref[...],
                        preferred_element_type=jnp.float32)
        o_ref[0] = (o + b_ref[...]).astype(o_ref.dtype)

    return kernel


# --------------------------- parameter construction --------------------------

def xavier_uniform(key, shape, gain):
    # shape = (Cout, Cin, kh, kw)
    fan_out = shape[0] * shape[2] * shape[3]
    fan_in = shape[1] * shape[2] * shape[3]
    bound = gain * math.sqrt(6.0 / (fan_in + fan_out))
    return jax.random.uniform(key, shape, jnp.float32, -bound, bound)


def conv_bias_init(key, cout, fan_in):
    bound = 1.0 / math.sqrt(fan_in)
    return jax.random.uniform(key, (cout,), jnp.float32, -bound, bound)


def spectral_normalize(w, u, num_iters=1, eps=1e-12):
    """Miyato power-iteration spectral norm (matches SpectralNorm.sn_weights)."""
    W = w.reshape(w.shape[0], -1)            # (Cout, fan)
    v = None
    for _ in range(num_iters):
        v = u @ W
        v = v / jnp.maximum(jnp.linalg.norm(v), eps)
        u = v @ W.T
        u = u / jnp.maximum(jnp.linalg.norm(u), eps)
    sigma = (u @ (W @ v.T))[0, 0]
    return w / sigma


def init_gblock_params(key, cin, cout):
    ks = jax.random.split(key, 8)
    p = {}
    p["w1"] = xavier_uniform(ks[0], (cout, cin, 3, 3), math.sqrt(2.0))
    p["b1"] = conv_bias_init(ks[1], cout, cin * 9)
    p["u1"] = jax.random.normal(ks[2], (1, cout), jnp.float32)
    p["w2"] = xavier_uniform(ks[3], (cout, cout, 3, 3), math.sqrt(2.0))
    p["b2"] = conv_bias_init(ks[4], cout, cout * 9)
    p["u2"] = jax.random.normal(ks[5], (1, cout), jnp.float32)
    p["wsc"] = xavier_uniform(ks[6], (cout, cin, 1, 1), 1.0)
    p["bsc"] = conv_bias_init(ks[7], cout, cin * 1)
    p["usc"] = jax.random.normal(jax.random.fold_in(key, 99), (1, cout), jnp.float32)
    # BatchNorm params (PyTorch init)
    p["g1"] = jnp.ones((cin,), jnp.float32)
    p["be1"] = jnp.zeros((cin,), jnp.float32)
    p["g2"] = jnp.ones((cout,), jnp.float32)
    p["be2"] = jnp.zeros((cout,), jnp.float32)
    return p


# ----------------------- VMEM budget / row-tile selection ---------------------

def _vmem_capacity_bytes():
    """Best-effort VMEM capacity query (v5e/v6e: 128 MiB, v7x: 64 MiB per TC)."""
    try:
        return int(pltpu.get_tpu_info().vmem_capacity_bytes)
    except Exception:
        return None


def _pick_tile_h(H, W, cin, cout, stream_bytes, mxu_bytes, budget_bytes):
    """Largest divisor of H whose per-step VMEM residency fits the budget."""
    best = None
    for th in range(1, H + 1):
        if H % th:
            continue
        R = th * W
        if (R % 8) and (th != H):          # (8,128) block-shape constraint
            continue
        per_step = (
            2 * R * cout * stream_bytes    # y1 block (in or out), double buffered
            + 2 * R * cin * stream_bytes   # x block, double buffered
            + R * 9 * cout * mxu_bytes     # im2col taps (largest temporary)
            + (R + 2 * W + 2) * cout * 4   # f32 h slab
            + 2 * R * cout * 4             # f32 accumulator + epilogue temps
            + 2 * R * cout * 4             # f32 output block, double buffered
        )
        if best is None or per_step <= budget_bytes:
            best = th                      # bytes grow with th -> keep largest fit
    return best


# ------------------------------- GBlock forward -------------------------------

def gblock_forward_pallas_nhwc(x_nhwc, p, *, compute_dtype=jnp.bfloat16,
                               tile_h=None, vmem_limit_bytes=None):
    """Native (layout-friendly) entry point: x is NHWC, output is NHWC."""
    N, H, W, Cin = x_nhwc.shape
    Cout = p["w1"].shape[0]
    HW = H * W

    # ---- cheap XLA glue: spectral norm, weight repack, BN1 stats ----
    w1 = spectral_normalize(p["w1"], p["u1"])
    w2 = spectral_normalize(p["w2"], p["u2"])
    wsc = spectral_normalize(p["wsc"], p["usc"])

    # OIHW -> (9*C, Cout), rows ordered (dy, dx, c) to match the tap concat.
    w1k = jnp.transpose(w1, (2, 3, 1, 0)).reshape(9 * Cin, Cout).astype(compute_dtype)
    w2k = jnp.transpose(w2, (2, 3, 1, 0)).reshape(9 * Cout, Cout).astype(compute_dtype)
    wsck = wsc[:, :, 0, 0].T.astype(compute_dtype)                 # (Cin, Cout)
    bcat = (p["b2"] + p["bsc"]).reshape(1, Cout).astype(jnp.float32)
    # NOTE: c1's bias (b1) is intentionally dropped: a per-channel constant added
    # before BatchNorm is exactly cancelled by mean-centering.

    # BN1 global batch statistics from the full-precision input (tiny XLA reduce).
    xf = x_nhwc.astype(jnp.float32)
    m1 = jnp.mean(xf, axis=(0, 1, 2))
    v1 = jnp.mean(jnp.square(xf - m1), axis=(0, 1, 2))
    inv1 = lax.rsqrt(v1 + EPS_BN)
    s1 = (p["g1"] * inv1).reshape(1, Cin)
    t1 = (p["be1"] - m1 * p["g1"] * inv1).reshape(1, Cin)

    # ---- generation-aware VMEM limit + row-tile selection ----
    stream_dtype = compute_dtype           # x / y1 HBM streams (bf16 halves traffic)
    stream_bytes = jnp.dtype(stream_dtype).itemsize
    mxu_bytes = jnp.dtype(compute_dtype).itemsize
    if vmem_limit_bytes is None:
        cap = _vmem_capacity_bytes()
        vmem_limit_bytes = None if cap is None else int(cap * 0.75)   # 48 MiB v7x, 96 MiB v5e/v6e
    budget = (vmem_limit_bytes // 2) if vmem_limit_bytes else 24 * 1024 * 1024
    if tile_h is None:
        tile_h = _pick_tile_h(H, W, Cin, Cout, stream_bytes, mxu_bytes, budget)
    assert H % tile_h == 0 and ((tile_h * W) % 8 == 0 or tile_h == H), \
        f"invalid tile_h={tile_h} for H={H}, W={W}"
    T = H // tile_h
    R = tile_h * W

    # ---- activation streams + tiny per-tile halo rows (all stream_dtype) ----
    xs = x_nhwc.astype(stream_dtype)
    x2d = xs.reshape(N, HW, Cin)
    zrow = jnp.zeros((N, 1, W, Cin), stream_dtype)
    xa = jnp.concatenate([zrow, xs[:, tile_h - 1:H - 1:tile_h]], axis=1)   # row above tile t
    xb = jnp.concatenate([xs[:, tile_h:H:tile_h], zrow], axis=1)           # row below tile t

    cp_kwargs = dict(dimension_semantics=("parallel", "parallel"))
    if vmem_limit_bytes is not None:
        cp_kwargs["vmem_limit_bytes"] = int(vmem_limit_bytes)
    cp = pltpu.CompilerParams(**cp_kwargs)

    # ---- pass 1: BN1 + ReLU + conv1 (tiled over (sample, row-tile) grid) ----
    k1 = 9 * Cin
    cost1 = pl.CostEstimate(
        flops=2 * N * HW * k1 * Cout, transcendentals=0,
        bytes_accessed=(N * HW * Cin * stream_bytes
                        + 2 * N * T * W * Cin * stream_bytes
                        + N * HW * Cout * stream_bytes
                        + 2 * N * (T + 1) * W * Cout * stream_bytes
                        + k1 * Cout * mxu_bytes
                        + 2 * N * T * Cout * 4))
    y1, y1a, y1b, psum, psumsq = pl.pallas_call(
        _make_pass1_kernel(tile_h, W),
        out_shape=(jax.ShapeDtypeStruct((N, HW, Cout), stream_dtype),
                   jax.ShapeDtypeStruct((N, T + 1, W, Cout), stream_dtype),
                   jax.ShapeDtypeStruct((N, T + 1, W, Cout), stream_dtype),
                   jax.ShapeDtypeStruct((N, T, 1, Cout), jnp.float32),
                   jax.ShapeDtypeStruct((N, T, 1, Cout), jnp.float32)),
        grid=(N, T),
        in_specs=[pl.BlockSpec((1, R, Cin), lambda n, t: (n, t, 0)),
                  pl.BlockSpec((1, 1, W, Cin), lambda n, t: (n, t, 0, 0)),
                  pl.BlockSpec((1, 1, W, Cin), lambda n, t: (n, t, 0, 0)),
                  pl.BlockSpec((1, Cin), lambda n, t: (0, 0)),
                  pl.BlockSpec((1, Cin), lambda n, t: (0, 0)),
                  # constant index_map => weights DMA'd once, stay VMEM-resident
                  pl.BlockSpec((k1, Cout), lambda n, t: (0, 0))],
        out_specs=(pl.BlockSpec((1, R, Cout), lambda n, t: (n, t, 0)),
                   # this tile's LAST row -> "row above" halo of tile t+1
                   pl.BlockSpec((1, 1, W, Cout), lambda n, t: (n, t + 1, 0, 0)),
                   # this tile's FIRST row -> "row below" halo of tile t-1
                   pl.BlockSpec((1, 1, W, Cout), lambda n, t: (n, t, 0, 0)),
                   pl.BlockSpec((1, 1, 1, Cout), lambda n, t: (n, t, 0, 0)),
                   pl.BlockSpec((1, 1, 1, Cout), lambda n, t: (n, t, 0, 0))),
        compiler_params=cp,
        cost_estimate=cost1,
    )(x2d, xa, xb, s1, t1, w1k)

    # ---- BN2 global stats finalized from per-block f32 partial sums (tiny) ----
    cnt = N * HW
    m2 = jnp.sum(psum, axis=(0, 1, 2)) / cnt
    v2 = jnp.maximum(jnp.sum(psumsq, axis=(0, 1, 2)) / cnt - m2 * m2, 0.0)
    inv2 = lax.rsqrt(v2 + EPS_BN)
    s2 = (p["g2"] * inv2).reshape(1, Cout)
    t2 = (p["be2"] - m2 * p["g2"] * inv2).reshape(1, Cout)

    # ---- pass 2: BN2 + ReLU + conv2, 1x1 shortcut accumulated in, + bias ----
    k2 = 9 * Cout
    cost2 = pl.CostEstimate(
        flops=2 * N * HW * (k2 + Cin) * Cout, transcendentals=0,
        bytes_accessed=(N * HW * (Cin + Cout) * stream_bytes
                        + 2 * N * (T + 1) * W * Cout * stream_bytes
                        + N * HW * Cout * 4
                        + (k2 + Cin + 1) * Cout * mxu_bytes))
    out2d = pl.pallas_call(
        _make_pass2_kernel(tile_h, W),
        out_shape=jax.ShapeDtypeStruct((N, HW, Cout), jnp.float32),
        grid=(N, T),
        in_specs=[pl.BlockSpec((1, R, Cout), lambda n, t: (n, t, 0)),
                  # halo above tile t = last row of tile t-1 (slot t of y1a)
                  pl.BlockSpec((1, 1, W, Cout), lambda n, t: (n, t, 0, 0)),
                  # halo below tile t = first row of tile t+1 (slot t+1 of y1b)
                  pl.BlockSpec((1, 1, W, Cout), lambda n, t: (n, t + 1, 0, 0)),
                  pl.BlockSpec((1, R, Cin), lambda n, t: (n, t, 0)),
                  pl.BlockSpec((1, Cout), lambda n, t: (0, 0)),
                  pl.BlockSpec((1, Cout), lambda n, t: (0, 0)),
                  pl.BlockSpec((k2, Cout), lambda n, t: (0, 0)),
                  pl.BlockSpec((Cin, Cout), lambda n, t: (0, 0)),
                  pl.BlockSpec((1, Cout), lambda n, t: (0, 0))],
        out_specs=pl.BlockSpec((1, R, Cout), lambda n, t: (n, t, 0)),
        compiler_params=cp,
        cost_estimate=cost2,
    )(y1, y1a, y1b, x2d, s2, t2, w2k, wsck, bcat)

    return out2d.reshape(N, H, W, Cout)


def gblock_forward_pallas(x_nchw, p, **kwargs):
    """NCHW compatibility adapter (matches the PyTorch module's layout).

    The two transposes below are pure layout plumbing (each is a full HBM round
    trip); prefer calling gblock_forward_pallas_nhwc and keeping the surrounding
    model NHWC so they disappear.
    """
    x_nhwc = jnp.transpose(x_nchw, (0, 2, 3, 1))
    out_nhwc = gblock_forward_pallas_nhwc(x_nhwc, p, **kwargs)
    return jnp.transpose(out_nhwc, (0, 3, 1, 2))


# ------------------------------ pure-JAX reference ----------------------------

def gblock_forward_reference(x, p):
    def conv(h, w, b, pad):
        y = lax.conv_general_dilated(h, w, (1, 1), [(pad, pad), (pad, pad)],
                                     dimension_numbers=("NCHW", "OIHW", "NCHW"))
        return y + b[None, :, None, None]

    def bn(h, g, be):
        m = h.mean(axis=(0, 2, 3), keepdims=True)
        v = ((h - m) ** 2).mean(axis=(0, 2, 3), keepdims=True)
        return (h - m) * lax.rsqrt(v + EPS_BN) * g[None, :, None, None] \
            + be[None, :, None, None]

    w1 = spectral_normalize(p["w1"], p["u1"])
    w2 = spectral_normalize(p["w2"], p["u2"])
    wsc = spectral_normalize(p["wsc"], p["usc"])

    h = jnp.maximum(bn(x, p["g1"], p["be1"]), 0.0)
    h = conv(h, w1, p["b1"], 1)
    h = jnp.maximum(bn(h, p["g2"], p["be2"]), 0.0)
    h = conv(h, w2, p["b2"], 1)
    sc = conv(x, wsc, p["bsc"], 0)
    return h + sc


# ------------------------------------ main ------------------------------------

if __name__ == "__main__":
    key = jax.random.PRNGKey(0)
    k_x, k_p = jax.random.split(key)

    N, Cin, Cout, H, W = 2, 4, 8, 16, 16
    x = jax.random.normal(k_x, (N, Cin, H, W), jnp.float32)
    params = init_gblock_params(k_p, Cin, Cout)

    ref = gblock_forward_reference(x, params)

    # (a) f32 MXU operands, auto tile size (whole image per step at this size):
    #     tight check of the fused structure vs the reference.
    fwd_f32 = jax.jit(functools.partial(gblock_forward_pallas,
                                        compute_dtype=jnp.float32))
    out_f32 = jax.block_until_ready(fwd_f32(x, params))
    assert out_f32.shape == (N, Cout, H, W)
    err_f32 = float(jnp.max(jnp.abs(out_f32 - ref)))
    assert err_f32 < 1e-3, f"f32 auto-tile max abs err {err_f32}"

    # (b) f32, forced 4-row tiles: exercises the halo'd row-tiling path
    #     (grid=(N, 4), cross-tile halos, boundary masking).
    fwd_f32_t4 = jax.jit(functools.partial(gblock_forward_pallas,
                                           compute_dtype=jnp.float32, tile_h=4))
    out_f32_t4 = jax.block_until_ready(fwd_f32_t4(x, params))
    err_t4 = float(jnp.max(jnp.abs(out_f32_t4 - ref)))
    assert err_t4 < 1e-3, f"f32 tiled max abs err {err_t4}"

    # (c) bf16 streams + bf16 MXU operands (production default), forced tiling.
    #     Looser tolerance accounts for bf16 rounding of x, y1 and MXU operands.
    fwd_bf16 = jax.jit(functools.partial(gblock_forward_pallas, tile_h=4))
    out_bf16 = jax.block_until_ready(fwd_bf16(x, params))
    err_bf16 = float(jnp.max(jnp.abs(out_bf16 - ref)))
    assert err_bf16 < 2.5e-1, f"bf16 max abs err {err_bf16}"

    print("KERNEL_OK")
</pallas_src>

<mosaic_0001>
module attributes {stable_mosaic.version = 11 : i64} {
  func.func @kernel(%arg0: i32, %arg1: i32, %arg2: memref<1x256x8xf32, #tpu.memory_space<vmem>>, %arg3: memref<1x1x16x8xf32, #tpu.memory_space<vmem>>, %arg4: memref<1x1x16x8xf32, #tpu.memory_space<vmem>>, %arg5: memref<1x256x4xf32, #tpu.memory_space<vmem>>, %arg6: memref<1x8xf32, #tpu.memory_space<vmem>>, %arg7: memref<1x8xf32, #tpu.memory_space<vmem>>, %arg8: memref<72x8xf32, #tpu.memory_space<vmem>>, %arg9: memref<4x8xf32, #tpu.memory_space<vmem>>, %arg10: memref<1x8xf32, #tpu.memory_space<vmem>>, %arg11: memref<1x256x8xf32, #tpu.memory_space<vmem>>) attributes {dimension_semantics = [#tpu.dimension_semantics<parallel>, #tpu.dimension_semantics<parallel>], iteration_bounds = array<i64: 2, 1>, scalar_prefetch = 0 : i64, scratch_operands = 0 : i64, tpu.core_type = #tpu.core_type<tc>, window_params = [{transform_indices = @transform_0, window_bounds = array<i64: 1, 256, 8>}, {transform_indices = @transform_1, window_bounds = array<i64: 1, 1, 16, 8>}, {transform_indices = @transform_2, window_bounds = array<i64: 1, 1, 16, 8>}, {transform_indices = @transform_3, window_bounds = array<i64: 1, 256, 4>}, {pipeline_mode = #tpu.pipeline_mode<synchronous>, transform_indices = @transform_4, window_bounds = array<i64: 1, 8>}, {pipeline_mode = #tpu.pipeline_mode<synchronous>, transform_indices = @transform_5, window_bounds = array<i64: 1, 8>}, {pipeline_mode = #tpu.pipeline_mode<synchronous>, transform_indices = @transform_6, window_bounds = array<i64: 72, 8>}, {pipeline_mode = #tpu.pipeline_mode<synchronous>, transform_indices = @transform_7, window_bounds = array<i64: 4, 8>}, {pipeline_mode = #tpu.pipeline_mode<synchronous>, transform_indices = @transform_8, window_bounds = array<i64: 1, 8>}, {transform_indices = @transform_9, window_bounds = array<i64: 1, 256, 8>}]} {
    %c0 = arith.constant 0 : index
    %c0_0 = arith.constant 0 : index
    %c0_1 = arith.constant 0 : index
    %0 = vector.load %arg2[%c0, %c0_0, %c0_1] : memref<1x256x8xf32, #tpu.memory_space<vmem>>, vector<1x256x8xf32>
    %1 = vector.shape_cast %0 : vector<1x256x8xf32> to vector<256x8xf32>
    %c0_2 = arith.constant 0 : index
    %c0_3 = arith.constant 0 : index
    %2 = vector.load %arg6[%c0_2, %c0_3] : memref<1x8xf32, #tpu.memory_space<vmem>>, vector<1x8xf32>
    %3 = vector.broadcast %2 : vector<1x8xf32> to vector<256x8xf32>
    %4 = arith.mulf %1, %3 : vector<256x8xf32>
    %c0_4 = arith.constant 0 : index
    %c0_5 = arith.constant 0 : index
    %5 = vector.load %arg7[%c0_4, %c0_5] : memref<1x8xf32, #tpu.memory_space<vmem>>, vector<1x8xf32>
    %6 = vector.broadcast %5 : vector<1x8xf32> to vector<256x8xf32>
    %7 = arith.addf %4, %6 : vector<256x8xf32>
    %cst = arith.constant 0.000000e+00 : f32
    %8 = vector.broadcast %cst : f32 to vector<256x8xf32>
    %9 = arith.maximumf %7, %8 : vector<256x8xf32>
    %c0_6 = arith.constant 0 : index
    %c0_7 = arith.constant 0 : index
    %c0_8 = arith.constant 0 : index
    %c0_9 = arith.constant 0 : index
    %10 = vector.load %arg3[%c0_6, %c0_7, %c0_8, %c0_9] : memref<1x1x16x8xf32, #tpu.memory_space<vmem>>, vector<1x1x16x8xf32>
    %11 = vector.shape_cast %10 : vector<1x1x16x8xf32> to vector<16x8xf32>
    %c0_10 = arith.constant 0 : index
    %c0_11 = arith.constant 0 : index
    %12 = vector.load %arg6[%c0_10, %c0_11] : memref<1x8xf32, #tpu.memory_space<vmem>>, vector<1x8xf32>
    %13 = vector.broadcast %12 : vector<1x8xf32> to vector<16x8xf32>
    %14 = arith.mulf %11, %13 : vector<16x8xf32>
    %c0_12 = arith.constant 0 : index
    %c0_13 = arith.constant 0 : index
    %15 = vector.load %arg7[%c0_12, %c0_13] : memref<1x8xf32, #tpu.memory_space<vmem>>, vector<1x8xf32>
    %16 = vector.broadcast %15 : vector<1x8xf32> to vector<16x8xf32>
    %17 = arith.addf %14, %16 : vector<16x8xf32>
    %cst_14 = arith.constant 0.000000e+00 : f32
    %18 = vector.broadcast %cst_14 : f32 to vector<16x8xf32>
    %19 = arith.maximumf %17, %18 : vector<16x8xf32>
    %c0_15 = arith.constant 0 : index
    %c0_16 = arith.constant 0 : index
    %c0_17 = arith.constant 0 : index
    %c0_18 = arith.constant 0 : index
    %20 = vector.load %arg4[%c0_15, %c0_16, %c0_17, %c0_18] : memref<1x1x16x8xf32, #tpu.memory_space<vmem>>, vector<1x1x16x8xf32>
    %21 = vector.shape_cast %20 : vector<1x1x16x8xf32> to vector<16x8xf32>
    %c0_19 = arith.constant 0 : index
    %c0_20 = arith.constant 0 : index
    %22 = vector.load %arg6[%c0_19, %c0_20] : memref<1x8xf32, #tpu.memory_space<vmem>>, vector<1x8xf32>
    %23 = vector.broadcast %22 : vector<1x8xf32> to vector<16x8xf32>
    %24 = arith.mulf %21, %23 : vector<16x8xf32>
    %c0_21 = arith.constant 0 : index
    %c0_22 = arith.constant 0 : index
    %25 = vector.load %arg7[%c0_21, %c0_22] : memref<1x8xf32, #tpu.memory_space<vmem>>, vector<1x8xf32>
    %26 = vector.broadcast %25 : vector<1x8xf32> to vector<16x8xf32>
    %27 = arith.addf %24, %26 : vector<16x8xf32>
    %cst_23 = arith.constant 0.000000e+00 : f32
    %28 = vector.broadcast %cst_23 : f32 to vector<16x8xf32>
    %29 = arith.maximumf %27, %28 : vector<16x8xf32>
    %c0_i32 = arith.constant 0 : i32
    %30 = arith.cmpi sgt, %arg1, %c0_i32 : i32
    %cst_24 = arith.constant 0.000000e+00 : f32
    %31 = vector.broadcast %cst_24 : f32 to vector<16x8xf32>
    %32 = arith.select %30, %19, %31 : vector<16x8xf32>
    %c0_i32_25 = arith.constant 0 : i32
    %33 = arith.cmpi slt, %arg1, %c0_i32_25 : i32
    %cst_26 = arith.constant 0.000000e+00 : f32
    %34 = vector.broadcast %cst_26 : f32 to vector<16x8xf32>
    %35 = arith.select %33, %29, %34 : vector<16x8xf32>
    %cst_27 = arith.constant 0.000000e+00 : f32
    %36 = vector.broadcast %cst_27 : f32 to vector<1x8xf32>
    %37 = tpu.concatenate %36, %32, %9, %35, %36 in 0 : vector<1x8xf32>, vector<16x8xf32>, vector<256x8xf32>, vector<16x8xf32>, vector<1x8xf32> -> vector<290x8xf32>
    %38 = tpu.iota {dimensions = array<i32: 0>} : vector<256x1xi32>
    %c16_i32 = arith.constant 16 : i32
    %c0_i32_28 = arith.constant 0 : i32
    %39 = arith.cmpi eq, %c16_i32, %c0_i32_28 : i32
    %c1_i32 = arith.constant 1 : i32
    %40 = arith.select %39, %c1_i32, %c16_i32 : i32
    %41 = vector.broadcast %40 : i32 to vector<256x1xi32>
    %42 = arith.remsi %38, %41 : vector<256x1xi32>
    %c0_i32_29 = arith.constant 0 : i32
    %43 = vector.broadcast %c0_i32_29 : i32 to vector<256x1xi32>
    %44 = arith.cmpi ne, %42, %43 : vector<256x1xi32>
    %c0_i32_30 = arith.constant 0 : i32
    %45 = vector.broadcast %c0_i32_30 : i32 to vector<256x1xi32>
    %46 = arith.cmpi slt, %42, %45 : vector<256x1xi32>
    %c0_i32_31 = arith.constant 0 : i32
    %47 = arith.cmpi slt, %40, %c0_i32_31 : i32
    %48 = vector.broadcast %47 : i1 to vector<256x1xi1>
    %49 = vector.broadcast %48 : vector<256x1xi1> to vector<256x1xi1>
    %50 = arith.xori %46, %49 : vector<256x1xi1>
    %51 = arith.andi %50, %44 : vector<256x1xi1>
    %52 = vector.broadcast %40 : i32 to vector<256x1xi32>
    %53 = arith.addi %42, %52 : vector<256x1xi32>
    %54 = arith.select %51, %53, %42 : vector<256x1xi1>, vector<256x1xi32>
    %c0_i32_32 = arith.constant 0 : i32
    %55 = vector.broadcast %c0_i32_32 : i32 to vector<256x1xi32>
    %56 = arith.cmpi sgt, %54, %55 : vector<256x1xi32>
    %c15_i32 = arith.constant 15 : i32
    %57 = vector.broadcast %c15_i32 : i32 to vector<256x1xi32>
    %58 = arith.cmpi slt, %54, %57 : vector<256x1xi32>
    %59 = vector.extract_strided_slice %37 {offsets = [0, 0], sizes = [256, 8], strides = [1, 1]} : vector<290x8xf32> to vector<256x8xf32>
    %cst_33 = arith.constant 0.000000e+00 : f32
    %60 = vector.broadcast %cst_33 : f32 to vector<256x8xf32>
    %61 = vector.shape_cast %56 : vector<256x1xi1> to vector<256x1xi1>
    %62 = vector.broadcast %61 : vector<256x1xi1> to vector<256x8xi1>
    %63 = arith.select %62, %59, %60 : vector<256x8xi1>, vector<256x8xf32>
    %64 = vector.extract_strided_slice %37 {offsets = [1, 0], sizes = [256, 8], strides = [1, 1]} : vector<290x8xf32> to vector<256x8xf32>
    %65 = vector.extract_strided_slice %37 {offsets = [2, 0], sizes = [256, 8], strides = [1, 1]} : vector<290x8xf32> to vector<256x8xf32>
    %cst_34 = arith.constant 0.000000e+00 : f32
    %66 = vector.broadcast %cst_34 : f32 to vector<256x8xf32>
    %67 = vector.shape_cast %58 : vector<256x1xi1> to vector<256x1xi1>
    %68 = vector.broadcast %67 : vector<256x1xi1> to vector<256x8xi1>
    %69 = arith.select %68, %65, %66 : vector<256x8xi1>, vector<256x8xf32>
    %70 = vector.extract_strided_slice %37 {offsets = [16, 0], sizes = [256, 8], strides = [1, 1]} : vector<290x8xf32> to vector<256x8xf32>
    %cst_35 = arith.constant 0.000000e+00 : f32
    %71 = vector.broadcast %cst_35 : f32 to vector<256x8xf32>
    %72 = vector.shape_cast %56 : vector<256x1xi1> to vector<256x1xi1>
    %73 = vector.broadcast %72 : vector<256x1xi1> to vector<256x8xi1>
    %74 = arith.select %73, %70, %71 : vector<256x8xi1>, vector<256x8xf32>
    %75 = vector.extract_strided_slice %37 {offsets = [17, 0], sizes = [256, 8], strides = [1, 1]} : vector<290x8xf32> to vector<256x8xf32>
    %76 = vector.extract_strided_slice %37 {offsets = [18, 0], sizes = [256, 8], strides = [1, 1]} : vector<290x8xf32> to vector<256x8xf32>
    %cst_36 = arith.constant 0.000000e+00 : f32
    %77 = vector.broadcast %cst_36 : f32 to vector<256x8xf32>
    %78 = vector.shape_cast %58 : vector<256x1xi1> to vector<256x1xi1>
    %79 = vector.broadcast %78 : vector<256x1xi1> to vector<256x8xi1>
    %80 = arith.select %79, %76, %77 : vector<256x8xi1>, vector<256x8xf32>
    %81 = vector.extract_strided_slice %37 {offsets = [32, 0], sizes = [256, 8], strides = [1, 1]} : vector<290x8xf32> to vector<256x8xf32>
    %cst_37 = arith.constant 0.000000e+00 : f32
    %82 = vector.broadcast %cst_37 : f32 to vector<256x8xf32>
    %83 = vector.shape_cast %56 : vector<256x1xi1> to vector<256x1xi1>
    %84 = vector.broadcast %83 : vector<256x1xi1> to vector<256x8xi1>
    %85 = arith.select %84, %81, %82 : vector<256x8xi1>, vector<256x8xf32>
    %86 = vector.extract_strided_slice %37 {offsets = [33, 0], sizes = [256, 8], strides = [1, 1]} : vector<290x8xf32> to vector<256x8xf32>
    %87 = vector.extract_strided_slice %37 {offsets = [34, 0], sizes = [256, 8], strides = [1, 1]} : vector<290x8xf32> to vector<256x8xf32>
    %cst_38 = arith.constant 0.000000e+00 : f32
    %88 = vector.broadcast %cst_38 : f32 to vector<256x8xf32>
    %89 = vector.shape_cast %58 : vector<256x1xi1> to vector<256x1xi1>
    %90 = vector.broadcast %89 : vector<256x1xi1> to vector<256x8xi1>
    %91 = arith.select %90, %87, %88 : vector<256x8xi1>, vector<256x8xf32>
    %92 = tpu.concatenate %63, %64, %69, %74, %75, %80, %85, %86, %91 in 1 : vector<256x8xf32>, vector<256x8xf32>, vector<256x8xf32>, vector<256x8xf32>, vector<256x8xf32>, vector<256x8xf32>, vector<256x8xf32>, vector<256x8xf32>, vector<256x8xf32> -> vector<256x72xf32>
    %c0_39 = arith.constant 0 : index
    %c0_40 = arith.constant 0 : index
    %93 = vector.load %arg8[%c0_39, %c0_40] : memref<72x8xf32, #tpu.memory_space<vmem>>, vector<72x8xf32>
    %cst_41 = arith.constant dense<0.000000e+00> : vector<256x8xf32>
    %94 = tpu.matmul %92, %93, %cst_41 {dimension_numbers = #tpu.dot_dimension_numbers<[1], [0], [0], [1], [0, 0, 1, 1], [], []>} : vector<256x72xf32>, vector<72x8xf32>, vector<256x8xf32> -> vector<256x8xf32>
    %c0_42 = arith.constant 0 : index
    %c0_43 = arith.constant 0 : index
    %c0_44 = arith.constant 0 : index
    %95 = vector.load %arg5[%c0_42, %c0_43, %c0_44] : memref<1x256x4xf32, #tpu.memory_space<vmem>>, vector<1x256x4xf32>
    %96 = vector.shape_cast %95 : vector<1x256x4xf32> to vector<256x4xf32>
    %c0_45 = arith.constant 0 : index
    %c0_46 = arith.constant 0 : index
    %97 = vector.load %arg9[%c0_45, %c0_46] : memref<4x8xf32, #tpu.memory_space<vmem>>, vector<4x8xf32>
    %cst_47 = arith.constant dense<0.000000e+00> : vector<256x8xf32>
    %98 = tpu.matmul %96, %97, %cst_47 {dimension_numbers = #tpu.dot_dimension_numbers<[1], [0], [0], [1], [0, 0, 1, 1], [], []>} : vector<256x4xf32>, vector<4x8xf32>, vector<256x8xf32> -> vector<256x8xf32>
    %99 = arith.addf %94, %98 : vector<256x8xf32>
    %c0_48 = arith.constant 0 : index
    %c0_49 = arith.constant 0 : index
    %100 = vector.load %arg10[%c0_48, %c0_49] : memref<1x8xf32, #tpu.memory_space<vmem>>, vector<1x8xf32>
    %101 = vector.broadcast %100 : vector<1x8xf32> to vector<256x8xf32>
    %102 = arith.addf %99, %101 : vector<256x8xf32>
    %c0_50 = arith.constant 0 : index
    %c0_51 = arith.constant 0 : index
    %c0_52 = arith.constant 0 : index
    %103 = vector.load %arg11[%c0_50, %c0_51, %c0_52] : memref<1x256x8xf32, #tpu.memory_space<vmem>>, vector<1x256x8xf32>
    %104 = vector.shape_cast %103 : vector<1x256x8xf32> to vector<256x8xf32>
    %105 = vector.shape_cast %102 : vector<256x8xf32> to vector<1x256x8xf32>
    tpu.vector_store %arg11[%c0_50, %c0_51, %c0_52], %105 {strides = array<i32>} : memref<1x256x8xf32, #tpu.memory_space<vmem>>, vector<1x256x8xf32>,
    return
  }
  func.func @transform_0(%arg0: i32, %arg1: i32) -> (i32, i32, i32) {
    %c0_i32 = arith.constant 0 : i32
    %c0_i32_0 = arith.constant 0 : i32
    return %arg0, %arg1, %c0_i32 : i32, i32, i32
  }
  func.func @transform_1(%arg0: i32, %arg1: i32) -> (i32, i32, i32, i32) {
    %c0_i32 = arith.constant 0 : i32
    %c0_i32_0 = arith.constant 0 : i32
    %c0_i32_1 = arith.constant 0 : i32
    return %arg0, %arg1, %c0_i32, %c0_i32_0 : i32, i32, i32, i32
  }
  func.func @transform_2(%arg0: i32, %arg1: i32) -> (i32, i32, i32, i32) {
    %c1_i32 = arith.constant 1 : i32
    %0 = arith.addi %arg1, %c1_i32 : i32
    %c0_i32 = arith.constant 0 : i32
    %c0_i32_0 = arith.constant 0 : i32
    %c0_i32_1 = arith.constant 0 : i32
    return %arg0, %0, %c0_i32, %c0_i32_0 : i32, i32, i32, i32
  }
  func.func @transform_3(%arg0: i32, %arg1: i32) -> (i32, i32, i32) {
    %c0_i32 = arith.constant 0 : i32
    %c0_i32_0 = arith.constant 0 : i32
    return %arg0, %arg1, %c0_i32 : i32, i32, i32
  }
  func.func @transform_4(%arg0: i32, %arg1: i32) -> (i32, i32) {
    %c0_i32 = arith.constant 0 : i32
    %c0_i32_0 = arith.constant 0 : i32
    %c0_i32_1 = arith.constant 0 : i32
    return %c0_i32, %c0_i32_0 : i32, i32
  }
  func.func @transform_5(%arg0: i32, %arg1: i32) -> (i32, i32) {
    %c0_i32 = arith.constant 0 : i32
    %c0_i32_0 = arith.constant 0 : i32
    %c0_i32_1 = arith.constant 0 : i32
    return %c0_i32, %c0_i32_0 : i32, i32
  }
  func.func @transform_6(%arg0: i32, %arg1: i32) -> (i32, i32) {
    %c0_i32 = arith.constant 0 : i32
    %c0_i32_0 = arith.constant 0 : i32
    %c0_i32_1 = arith.constant 0 : i32
    return %c0_i32, %c0_i32_0 : i32, i32
  }
  func.func @transform_7(%arg0: i32, %arg1: i32) -> (i32, i32) {
    %c0_i32 = arith.constant 0 : i32
    %c0_i32_0 = arith.constant 0 : i32
    %c0_i32_1 = arith.constant 0 : i32
    return %c0_i32, %c0_i32_0 : i32, i32
  }
  func.func @transform_8(%arg0: i32, %arg1: i32) -> (i32, i32) {
    %c0_i32 = arith.constant 0 : i32
    %c0_i32_0 = arith.constant 0 : i32
    %c0_i32_1 = arith.constant 0 : i32
    return %c0_i32, %c0_i32_0 : i32, i32
  }
  func.func @transform_9(%arg0: i32, %arg1: i32) -> (i32, i32, i32) {
    %c0_i32 = arith.constant 0 : i32
    %c0_i32_0 = arith.constant 0 : i32
    return %arg0, %arg1, %c0_i32 : i32, i32, i32
  }
}

module attributes {stable_mosaic.version = 11 : i64} {
  func.func @kernel(%arg0: i32, %arg1: i32, %arg2: memref<1x256x4xf32, #tpu.memory_space<vmem>>, %arg3: memref<1x1x16x4xf32, #tpu.memory_space<vmem>>, %arg4: memref<1x1x16x4xf32, #tpu.memory_space<vmem>>, %arg5: memref<1x4xf32, #tpu.memory_space<vmem>>, %arg6: memref<1x4xf32, #tpu.memory_space<vmem>>, %arg7: memref<36x8xf32, #tpu.memory_space<vmem>>, %arg8: memref<1x256x8xf32, #tpu.memory_space<vmem>>, %arg9: memref<1x1x16x8xf32, #tpu.memory_space<vmem>>, %arg10: memref<1x1x16x8xf32, #tpu.memory_space<vmem>>, %arg11: memref<1x1x1x8xf32, #tpu.memory_space<vmem>>, %arg12: memref<1x1x1x8xf32, #tpu.memory_space<vmem>>) attributes {dimension_semantics = [#tpu.dimension_semantics<parallel>, #tpu.dimension_semantics<parallel>], iteration_bounds = array<i64: 2, 1>, scalar_prefetch = 0 : i64, scratch_operands = 0 : i64, tpu.core_type = #tpu.core_type<tc>, window_params = [{transform_indices = @transform_0, window_bounds = array<i64: 1, 256, 4>}, {transform_indices = @transform_1, window_bounds = array<i64: 1, 1, 16, 4>}, {transform_indices = @transform_2, window_bounds = array<i64: 1, 1, 16, 4>}, {pipeline_mode = #tpu.pipeline_mode<synchronous>, transform_indices = @transform_3, window_bounds = array<i64: 1, 4>}, {pipeline_mode = #tpu.pipeline_mode<synchronous>, transform_indices = @transform_4, window_bounds = array<i64: 1, 4>}, {pipeline_mode = #tpu.pipeline_mode<synchronous>, transform_indices = @transform_5, window_bounds = array<i64: 36, 8>}, {transform_indices = @transform_6, window_bounds = array<i64: 1, 256, 8>}, {transform_indices = @transform_7, window_bounds = array<i64: 1, 1, 16, 8>}, {transform_indices = @transform_8, window_bounds = array<i64: 1, 1, 16, 8>}, {transform_indices = @transform_9, window_bounds = array<i64: 1, 1, 1, 8>}, {transform_indices = @transform_10, window_bounds = array<i64: 1, 1, 1, 8>}]} {
    %c0 = arith.constant 0 : index
    %c0_0 = arith.constant 0 : index
    %c0_1 = arith.constant 0 : index
    %0 = vector.load %arg2[%c0, %c0_0, %c0_1] : memref<1x256x4xf32, #tpu.memory_space<vmem>>, vector<1x256x4xf32>
    %1 = vector.shape_cast %0 : vector<1x256x4xf32> to vector<256x4xf32>
    %c0_2 = arith.constant 0 : index
    %c0_3 = arith.constant 0 : index
    %2 = vector.load %arg5[%c0_2, %c0_3] : memref<1x4xf32, #tpu.memory_space<vmem>>, vector<1x4xf32>
    %3 = vector.broadcast %2 : vector<1x4xf32> to vector<256x4xf32>
    %4 = arith.mulf %1, %3 : vector<256x4xf32>
    %c0_4 = arith.constant 0 : index
    %c0_5 = arith.constant 0 : index
    %5 = vector.load %arg6[%c0_4, %c0_5] : memref<1x4xf32, #tpu.memory_space<vmem>>, vector<1x4xf32>
    %6 = vector.broadcast %5 : vector<1x4xf32> to vector<256x4xf32>
    %7 = arith.addf %4, %6 : vector<256x4xf32>
    %cst = arith.constant 0.000000e+00 : f32
    %8 = vector.broadcast %cst : f32 to vector<256x4xf32>
    %9 = arith.maximumf %7, %8 : vector<256x4xf32>
    %c0_6 = arith.constant 0 : index
    %c0_7 = arith.constant 0 : index
    %c0_8 = arith.constant 0 : index
    %c0_9 = arith.constant 0 : index
    %10 = vector.load %arg3[%c0_6, %c0_7, %c0_8, %c0_9] : memref<1x1x16x4xf32, #tpu.memory_space<vmem>>, vector<1x1x16x4xf32>
    %11 = vector.shape_cast %10 : vector<1x1x16x4xf32> to vector<16x4xf32>
    %c0_10 = arith.constant 0 : index
    %c0_11 = arith.constant 0 : index
    %12 = vector.load %arg5[%c0_10, %c0_11] : memref<1x4xf32, #tpu.memory_space<vmem>>, vector<1x4xf32>
    %13 = vector.broadcast %12 : vector<1x4xf32> to vector<16x4xf32>
    %14 = arith.mulf %11, %13 : vector<16x4xf32>
    %c0_12 = arith.constant 0 : index
    %c0_13 = arith.constant 0 : index
    %15 = vector.load %arg6[%c0_12, %c0_13] : memref<1x4xf32, #tpu.memory_space<vmem>>, vector<1x4xf32>
    %16 = vector.broadcast %15 : vector<1x4xf32> to vector<16x4xf32>
    %17 = arith.addf %14, %16 : vector<16x4xf32>
    %cst_14 = arith.constant 0.000000e+00 : f32
    %18 = vector.broadcast %cst_14 : f32 to vector<16x4xf32>
    %19 = arith.maximumf %17, %18 : vector<16x4xf32>
    %c0_15 = arith.constant 0 : index
    %c0_16 = arith.constant 0 : index
    %c0_17 = arith.constant 0 : index
    %c0_18 = arith.constant 0 : index
    %20 = vector.load %arg4[%c0_15, %c0_16, %c0_17, %c0_18] : memref<1x1x16x4xf32, #tpu.memory_space<vmem>>, vector<1x1x16x4xf32>
    %21 = vector.shape_cast %20 : vector<1x1x16x4xf32> to vector<16x4xf32>
    %c0_19 = arith.constant 0 : index
    %c0_20 = arith.constant 0 : index
    %22 = vector.load %arg5[%c0_19, %c0_20] : memref<1x4xf32, #tpu.memory_space<vmem>>, vector<1x4xf32>
    %23 = vector.broadcast %22 : vector<1x4xf32> to vector<16x4xf32>
    %24 = arith.mulf %21, %23 : vector<16x4xf32>
    %c0_21 = arith.constant 0 : index
    %c0_22 = arith.constant 0 : index
    %25 = vector.load %arg6[%c0_21, %c0_22] : memref<1x4xf32, #tpu.memory_space<vmem>>, vector<1x4xf32>
    %26 = vector.broadcast %25 : vector<1x4xf32> to vector<16x4xf32>
    %27 = arith.addf %24, %26 : vector<16x4xf32>
    %cst_23 = arith.constant 0.000000e+00 : f32
    %28 = vector.broadcast %cst_23 : f32 to vector<16x4xf32>
    %29 = arith.maximumf %27, %28 : vector<16x4xf32>
    %c0_i32 = arith.constant 0 : i32
    %30 = arith.cmpi sgt, %arg1, %c0_i32 : i32
    %cst_24 = arith.constant 0.000000e+00 : f32
    %31 = vector.broadcast %cst_24 : f32 to vector<16x4xf32>
    %32 = arith.select %30, %19, %31 : vector<16x4xf32>
    %c0_i32_25 = arith.constant 0 : i32
    %33 = arith.cmpi slt, %arg1, %c0_i32_25 : i32
    %cst_26 = arith.constant 0.000000e+00 : f32
    %34 = vector.broadcast %cst_26 : f32 to vector<16x4xf32>
    %35 = arith.select %33, %29, %34 : vector<16x4xf32>
    %cst_27 = arith.constant 0.000000e+00 : f32
    %36 = vector.broadcast %cst_27 : f32 to vector<1x4xf32>
    %37 = tpu.concatenate %36, %32, %9, %35, %36 in 0 : vector<1x4xf32>, vector<16x4xf32>, vector<256x4xf32>, vector<16x4xf32>, vector<1x4xf32> -> vector<290x4xf32>
    %38 = tpu.iota {dimensions = array<i32: 0>} : vector<256x1xi32>
    %c16_i32 = arith.constant 16 : i32
    %c0_i32_28 = arith.constant 0 : i32
    %39 = arith.cmpi eq, %c16_i32, %c0_i32_28 : i32
    %c1_i32 = arith.constant 1 : i32
    %40 = arith.select %39, %c1_i32, %c16_i32 : i32
    %41 = vector.broadcast %40 : i32 to vector<256x1xi32>
    %42 = arith.remsi %38, %41 : vector<256x1xi32>
    %c0_i32_29 = arith.constant 0 : i32
    %43 = vector.broadcast %c0_i32_29 : i32 to vector<256x1xi32>
    %44 = arith.cmpi ne, %42, %43 : vector<256x1xi32>
    %c0_i32_30 = arith.constant 0 : i32
    %45 = vector.broadcast %c0_i32_30 : i32 to vector<256x1xi32>
    %46 = arith.cmpi slt, %42, %45 : vector<256x1xi32>
    %c0_i32_31 = arith.constant 0 : i32
    %47 = arith.cmpi slt, %40, %c0_i32_31 : i32
    %48 = vector.broadcast %47 : i1 to vector<256x1xi1>
    %49 = vector.broadcast %48 : vector<256x1xi1> to vector<256x1xi1>
    %50 = arith.xori %46, %49 : vector<256x1xi1>
    %51 = arith.andi %50, %44 : vector<256x1xi1>
    %52 = vector.broadcast %40 : i32 to vector<256x1xi32>
    %53 = arith.addi %42, %52 : vector<256x1xi32>
    %54 = arith.select %51, %53, %42 : vector<256x1xi1>, vector<256x1xi32>
    %c0_i32_32 = arith.constant 0 : i32
    %55 = vector.broadcast %c0_i32_32 : i32 to vector<256x1xi32>
    %56 = arith.cmpi sgt, %54, %55 : vector<256x1xi32>
    %c15_i32 = arith.constant 15 : i32
    %57 = vector.broadcast %c15_i32 : i32 to vector<256x1xi32>
    %58 = arith.cmpi slt, %54, %57 : vector<256x1xi32>
    %59 = vector.extract_strided_slice %37 {offsets = [0, 0], sizes = [256, 4], strides = [1, 1]} : vector<290x4xf32> to vector<256x4xf32>
    %cst_33 = arith.constant 0.000000e+00 : f32
    %60 = vector.broadcast %cst_33 : f32 to vector<256x4xf32>
    %61 = vector.shape_cast %56 : vector<256x1xi1> to vector<256x1xi1>
    %62 = vector.broadcast %61 : vector<256x1xi1> to vector<256x4xi1>
    %63 = arith.select %62, %59, %60 : vector<256x4xi1>, vector<256x4xf32>
    %64 = vector.extract_strided_slice %37 {offsets = [1, 0], sizes = [256, 4], strides = [1, 1]} : vector<290x4xf32> to vector<256x4xf32>
    %65 = vector.extract_strided_slice %37 {offsets = [2, 0], sizes = [256, 4], strides = [1, 1]} : vector<290x4xf32> to vector<256x4xf32>
    %cst_34 = arith.constant 0.000000e+00 : f32
    %66 = vector.broadcast %cst_34 : f32 to vector<256x4xf32>
    %67 = vector.shape_cast %58 : vector<256x1xi1> to vector<256x1xi1>
    %68 = vector.broadcast %67 : vector<256x1xi1> to vector<256x4xi1>
    %69 = arith.select %68, %65, %66 : vector<256x4xi1>, vector<256x4xf32>
    %70 = vector.extract_strided_slice %37 {offsets = [16, 0], sizes = [256, 4], strides = [1, 1]} : vector<290x4xf32> to vector<256x4xf32>
    %cst_35 = arith.constant 0.000000e+00 : f32
    %71 = vector.broadcast %cst_35 : f32 to vector<256x4xf32>
    %72 = vector.shape_cast %56 : vector<256x1xi1> to vector<256x1xi1>
    %73 = vector.broadcast %72 : vector<256x1xi1> to vector<256x4xi1>
    %74 = arith.select %73, %70, %71 : vector<256x4xi1>, vector<256x4xf32>
    %75 = vector.extract_strided_slice %37 {offsets = [17, 0], sizes = [256, 4], strides = [1, 1]} : vector<290x4xf32> to vector<256x4xf32>
    %76 = vector.extract_strided_slice %37 {offsets = [18, 0], sizes = [256, 4], strides = [1, 1]} : vector<290x4xf32> to vector<256x4xf32>
    %cst_36 = arith.constant 0.000000e+00 : f32
    %77 = vector.broadcast %cst_36 : f32 to vector<256x4xf32>
    %78 = vector.shape_cast %58 : vector<256x1xi1> to vector<256x1xi1>
    %79 = vector.broadcast %78 : vector<256x1xi1> to vector<256x4xi1>
    %80 = arith.select %79, %76, %77 : vector<256x4xi1>, vector<256x4xf32>
    %81 = vector.extract_strided_slice %37 {offsets = [32, 0], sizes = [256, 4], strides = [1, 1]} : vector<290x4xf32> to vector<256x4xf32>
    %cst_37 = arith.constant 0.000000e+00 : f32
    %82 = vector.broadcast %cst_37 : f32 to vector<256x4xf32>
    %83 = vector.shape_cast %56 : vector<256x1xi1> to vector<256x1xi1>
    %84 = vector.broadcast %83 : vector<256x1xi1> to vector<256x4xi1>
    %85 = arith.select %84, %81, %82 : vector<256x4xi1>, vector<256x4xf32>
    %86 = vector.extract_strided_slice %37 {offsets = [33, 0], sizes = [256, 4], strides = [1, 1]} : vector<290x4xf32> to vector<256x4xf32>
    %87 = vector.extract_strided_slice %37 {offsets = [34, 0], sizes = [256, 4], strides = [1, 1]} : vector<290x4xf32> to vector<256x4xf32>
    %cst_38 = arith.constant 0.000000e+00 : f32
    %88 = vector.broadcast %cst_38 : f32 to vector<256x4xf32>
    %89 = vector.shape_cast %58 : vector<256x1xi1> to vector<256x1xi1>
    %90 = vector.broadcast %89 : vector<256x1xi1> to vector<256x4xi1>
    %91 = arith.select %90, %87, %88 : vector<256x4xi1>, vector<256x4xf32>
    %92 = tpu.concatenate %63, %64, %69, %74, %75, %80, %85, %86, %91 in 1 : vector<256x4xf32>, vector<256x4xf32>, vector<256x4xf32>, vector<256x4xf32>, vector<256x4xf32>, vector<256x4xf32>, vector<256x4xf32>, vector<256x4xf32>, vector<256x4xf32> -> vector<256x36xf32>
    %c0_39 = arith.constant 0 : index
    %c0_40 = arith.constant 0 : index
    %93 = vector.load %arg7[%c0_39, %c0_40] : memref<36x8xf32, #tpu.memory_space<vmem>>, vector<36x8xf32>
    %cst_41 = arith.constant dense<0.000000e+00> : vector<256x8xf32>
    %94 = tpu.matmul %92, %93, %cst_41 {dimension_numbers = #tpu.dot_dimension_numbers<[1], [0], [0], [1], [0, 0, 1, 1], [], []>} : vector<256x36xf32>, vector<36x8xf32>, vector<256x8xf32> -> vector<256x8xf32>
    %c0_42 = arith.constant 0 : index
    %c0_43 = arith.constant 0 : index
    %c0_44 = arith.constant 0 : index
    %95 = vector.load %arg8[%c0_42, %c0_43, %c0_44] : memref<1x256x8xf32, #tpu.memory_space<vmem>>, vector<1x256x8xf32>
    %96 = vector.shape_cast %95 : vector<1x256x8xf32> to vector<256x8xf32>
    %97 = vector.shape_cast %94 : vector<256x8xf32> to vector<1x256x8xf32>
    tpu.vector_store %arg8[%c0_42, %c0_43, %c0_44], %97 {strides = array<i32>} : memref<1x256x8xf32, #tpu.memory_space<vmem>>, vector<1x256x8xf32>,
    %98 = vector.extract_strided_slice %94 {offsets = [240, 0], sizes = [16, 8], strides = [1, 1]} : vector<256x8xf32> to vector<16x8xf32>
    %c0_45 = arith.constant 0 : index
    %c0_46 = arith.constant 0 : index
    %c0_47 = arith.constant 0 : index
    %c0_48 = arith.constant 0 : index
    %99 = vector.load %arg9[%c0_45, %c0_46, %c0_47, %c0_48] : memref<1x1x16x8xf32, #tpu.memory_space<vmem>>, vector<1x1x16x8xf32>
    %100 = vector.shape_cast %99 : vector<1x1x16x8xf32> to vector<16x8xf32>
    %101 = vector.shape_cast %98 : vector<16x8xf32> to vector<1x1x16x8xf32>
    tpu.vector_store %arg9[%c0_45, %c0_46, %c0_47, %c0_48], %101 {strides = array<i32>} : memref<1x1x16x8xf32, #tpu.memory_space<vmem>>, vector<1x1x16x8xf32>,
    %102 = vector.extract_strided_slice %94 {offsets = [0, 0], sizes = [16, 8], strides = [1, 1]} : vector<256x8xf32> to vector<16x8xf32>
    %c0_49 = arith.constant 0 : index
    %c0_50 = arith.constant 0 : index
    %c0_51 = arith.constant 0 : index
    %c0_52 = arith.constant 0 : index
    %103 = vector.load %arg10[%c0_49, %c0_50, %c0_51, %c0_52] : memref<1x1x16x8xf32, #tpu.memory_space<vmem>>, vector<1x1x16x8xf32>
    %104 = vector.shape_cast %103 : vector<1x1x16x8xf32> to vector<16x8xf32>
    %105 = vector.shape_cast %102 : vector<16x8xf32> to vector<1x1x16x8xf32>
    tpu.vector_store %arg10[%c0_49, %c0_50, %c0_51, %c0_52], %105 {strides = array<i32>} : memref<1x1x16x8xf32, #tpu.memory_space<vmem>>, vector<1x1x16x8xf32>,
    %cst_53 = arith.constant dense<0.000000e+00> : vector<8xf32>
    %106 = vector.multi_reduction <add>, %94, %cst_53 [0] : vector<256x8xf32> to vector<8xf32>
    %107 = vector.shape_cast %106 : vector<8xf32> to vector<1x8xf32>
    %c0_54 = arith.constant 0 : index
    %c0_55 = arith.constant 0 : index
    %c0_56 = arith.constant 0 : index
    %c0_57 = arith.constant 0 : index
    %108 = vector.load %arg11[%c0_54, %c0_55, %c0_56, %c0_57] : memref<1x1x1x8xf32, #tpu.memory_space<vmem>>, vector<1x1x1x8xf32>
    %109 = vector.shape_cast %108 : vector<1x1x1x8xf32> to vector<1x8xf32>
    %110 = vector.shape_cast %107 : vector<1x8xf32> to vector<1x1x1x8xf32>
    tpu.vector_store %arg11[%c0_54, %c0_55, %c0_56, %c0_57], %110 {strides = array<i32>} : memref<1x1x1x8xf32, #tpu.memory_space<vmem>>, vector<1x1x1x8xf32>,
    %111 = arith.mulf %94, %94 : vector<256x8xf32>
    %cst_58 = arith.constant dense<0.000000e+00> : vector<8xf32>
    %112 = vector.multi_reduction <add>, %111, %cst_58 [0] : vector<256x8xf32> to vector<8xf32>
    %113 = vector.shape_cast %112 : vector<8xf32> to vector<1x8xf32>
    %c0_59 = arith.constant 0 : index
    %c0_60 = arith.constant 0 : index
    %c0_61 = arith.constant 0 : index
    %c0_62 = arith.constant 0 : index
    %114 = vector.load %arg12[%c0_59, %c0_60, %c0_61, %c0_62] : memref<1x1x1x8xf32, #tpu.memory_space<vmem>>, vector<1x1x1x8xf32>
    %115 = vector.shape_cast %114 : vector<1x1x1x8xf32> to vector<1x8xf32>
    %116 = vector.shape_cast %113 : vector<1x8xf32> to vector<1x1x1x8xf32>
    tpu.vector_store %arg12[%c0_59, %c0_60, %c0_61, %c0_62], %116 {strides = array<i32>} : memref<1x1x1x8xf32, #tpu.memory_space<vmem>>, vector<1x1x1x8xf32>,
    return
  }
  func.func @transform_0(%arg0: i32, %arg1: i32) -> (i32, i32, i32) {
    %c0_i32 = arith.constant 0 : i32
    %c0_i32_0 = arith.constant 0 : i32
    return %arg0, %arg1, %c0_i32 : i32, i32, i32
  }
  func.func @transform_1(%arg0: i32, %arg1: i32) -> (i32, i32, i32, i32) {
    %c0_i32 = arith.constant 0 : i32
    %c0_i32_0 = arith.constant 0 : i32
    %c0_i32_1 = arith.constant 0 : i32
    return %arg0, %arg1, %c0_i32, %c0_i32_0 : i32, i32, i32, i32
  }
  func.func @transform_2(%arg0: i32, %arg1: i32) -> (i32, i32, i32, i32) {
    %c0_i32 = arith.constant 0 : i32
    %c0_i32_0 = arith.constant 0 : i32
    %c0_i32_1 = arith.constant 0 : i32
    return %arg0, %arg1, %c0_i32, %c0_i32_0 : i32, i32, i32, i32
  }
  func.func @transform_3(%arg0: i32, %arg1: i32) -> (i32, i32) {
    %c0_i32 = arith.constant 0 : i32
    %c0_i32_0 = arith.constant 0 : i32
    %c0_i32_1 = arith.constant 0 : i32
    return %c0_i32, %c0_i32_0 : i32, i32
  }
  func.func @transform_4(%arg0: i32, %arg1: i32) -> (i32, i32) {
    %c0_i32 = arith.constant 0 : i32
    %c0_i32_0 = arith.constant 0 : i32
    %c0_i32_1 = arith.constant 0 : i32
    return %c0_i32, %c0_i32_0 : i32, i32
  }
  func.func @transform_5(%arg0: i32, %arg1: i32) -> (i32, i32) {
    %c0_i32 = arith.constant 0 : i32
    %c0_i32_0 = arith.constant 0 : i32
    %c0_i32_1 = arith.constant 0 : i32
    return %c0_i32, %c0_i32_0 : i32, i32
  }
  func.func @transform_6(%arg0: i32, %arg1: i32) -> (i32, i32, i32) {
    %c0_i32 = arith.constant 0 : i32
    %c0_i32_0 = arith.constant 0 : i32
    return %arg0, %arg1, %c0_i32 : i32, i32, i32
  }
  func.func @transform_7(%arg0: i32, %arg1: i32) -> (i32, i32, i32, i32) {
    %c1_i32 = arith.constant 1 : i32
    %0 = arith.addi %arg1, %c1_i32 : i32
    %c0_i32 = arith.constant 0 : i32
    %c0_i32_0 = arith.constant 0 : i32
    %c0_i32_1 = arith.constant 0 : i32
    return %arg0, %0, %c0_i32, %c0_i32_0 : i32, i32, i32, i32
  }
  func.func @transform_8(%arg0: i32, %arg1: i32) -> (i32, i32, i32, i32) {
    %c0_i32 = arith.constant 0 : i32
    %c0_i32_0 = arith.constant 0 : i32
    %c0_i32_1 = arith.constant 0 : i32
    return %arg0, %arg1, %c0_i32, %c0_i32_0 : i32, i32, i32, i32
  }
  func.func @transform_9(%arg0: i32, %arg1: i32) -> (i32, i32, i32, i32) {
    %c0_i32 = arith.constant 0 : i32
    %c0_i32_0 = arith.constant 0 : i32
    %c0_i32_1 = arith.constant 0 : i32
    return %arg0, %arg1, %c0_i32, %c0_i32_0 : i32, i32, i32, i32
  }
  func.func @transform_10(%arg0: i32, %arg1: i32) -> (i32, i32, i32, i32) {
    %c0_i32 = arith.constant 0 : i32
    %c0_i32_0 = arith.constant 0 : i32
    %c0_i32_1 = arith.constant 0 : i32
    return %arg0, %arg1, %c0_i32, %c0_i32_0 : i32, i32, i32, i32
  }
}

</mosaic_0001>

<llo_original>
// kernel: gblock_forward_pallas.3
$region0: #{gblock_forward_pallas.3}
  #allocation0 [shape = 'u32[]', space=smem, size = 0x4, offset = 0x4, fixed_abs, tag = 'smem constant byte address 0x4 - core index']
  #allocation1 [shape = 'u32[72,128]{1,0:T(1,128)}', space=vmem, size = 0x9000, scoped, tag = 'internal scratch']
  %s0 = inlined_call_operand.vmem [shape: f32[2,256,8], index: 0, kind: input, shape index: {}]
  %s1 = inlined_call_operand.vmem [shape: f32[2,2,16,8], index: 1, kind: input, shape index: {}]
  %s2 = inlined_call_operand.vmem [shape: f32[2,2,16,8], index: 2, kind: input, shape index: {}]
  %s3 = inlined_call_operand.vmem [shape: f32[2,256,4], index: 3, kind: input, shape index: {}]
  %s4 = inlined_call_operand.vmem [shape: f32[1,8], index: 4, kind: input, shape index: {}]
  %s5 = inlined_call_operand.vmem [shape: f32[1,8], index: 5, kind: input, shape index: {}]
  %s6 = inlined_call_operand.vmem [shape: f32[72,8], index: 6, kind: input, shape index: {}]
  %s7 = inlined_call_operand.vmem [shape: f32[4,8], index: 7, kind: input, shape index: {}]
  %s8 = inlined_call_operand.vmem [shape: f32[1,8], index: 8, kind: input, shape index: {}]
  %s9 = inlined_call_operand.vmem [shape: f32[2,256,8], index: 9, kind: output, shape index: {}]
  %s10 = sld [smem:[#allocation0]]
  $region69: #{gblock_forward_pallas.3} parent=0
    _
  %s12 = ssub.s32 1, %s10
  %s13 = scalar_select 0, %s12, %s10
  loop: start=0, step=1, limit=4
  $region2: #{gblock_forward_pallas.3} parent=0 // loop_pre_header
    _
  $region3: #{gblock_forward_pallas.3} parent=0 // loop_header
    %s15 = sphi 0, %s19
    %p16 = scmp.ge.s32.totalorder %s15, 4
    %s22 = sphi 0, %s34
    %s23 = sphi 0, %s30
    %s24 = sphi 0, %s22
    %s25 = sphi 0, %s23
    %s26 = sphi 0, %s24
    %s27 = sphi 0, %s25
    %s39 = sphi 0, %s41
    %s42 = sphi 0, %s39
    %s43 = sphi 0, %s42
    %s59 = sphi 0, %s43
    %s67 = sphi 0, %s69
    %s70 = sphi 0, %s67
    %s71 = sphi 0, %s70
    %s87 = sphi 0, %s71
    %s97 = sphi 0, %s99
    %s100 = sphi 0, %s97
    %s101 = sphi 0, %s100
    %s117 = sphi 0, %s101
    %s125 = sphi 0, %s127
    %s128 = sphi 0, %s125
    %s129 = sphi 0, %s128
    %s145 = sphi 0, %s129
    %s149 = sphi 0, %s149
    %s151 = sphi 0, %s149
    %s152 = sphi 0, %s151
    %s166 = sphi 0, %s152
    %s170 = sphi 0, %s170
    %s172 = sphi 0, %s170
    %s173 = sphi 0, %s172
    %s187 = sphi 0, %s173
    %s191 = sphi 0, %s191
    %s193 = sphi 0, %s191
    %s194 = sphi 0, %s193
    %s208 = sphi 0, %s194
    %s212 = sphi 0, %s212
    %s214 = sphi 0, %s212
    %s215 = sphi 0, %s214
    %s229 = sphi 0, %s215
    %s233 = sphi 0, %s233
    %s235 = sphi 0, %s233
    %s236 = sphi 0, %s235
    %s250 = sphi 0, %s236
    %s258 = sphi 0, %s260
    %s261 = sphi 0, %s258
    %s262 = sphi 0, %s261
    %s278 = sphi 0, %s262
  $region4: #{gblock_forward_pallas.3} parent=0 // loop_header_branch
    %18 = sbr.rel (%p16) target = $region8
  $region5: #{gblock_forward_pallas.3} parent=0 // loop_body
    %s20 = ssub.s32 %s15, 1
    %s21 = ssub.s32 %s15, 2
    %s28 = sadd.s32 1, %s23
    %p29 = scmp.ge.s32.totalorder %s28, 1
    %s30 = scalar_select %p29, 0, %s28
    %s31 = sadd.s32 1, %s22
    %s32 = scalar_select %p29, %s31, %s22
    %p33 = scmp.ge.s32.totalorder %s32, 2
    %s34 = scalar_select %p33, 0, %s32
    %s35 = ssub.s32 %s22, %s34
    %s36 = ssub.s32 %s23, %s30
    %s37 = sor.u32 %s35, %s36
    %p38 = scmp.eq.s32.totalorder %s37, 0
    %s40 = sadd.s32 %s39, 1
    %s41 = scalar_select %p38, %s39, %s40
    %p44 = pneg %p38
    %p45 = scmp.eq.s32.totalorder %s15, 1
    %p46 = por %p44, %p45
    %p47 = scmp.ne.s32.totalorder %s39, %s42
    %p48 = scmp.eq.s32.totalorder %s15, 0
    %p49 = por %p47, %p48
    %p50 = scmp.ne.s32.totalorder %s39, %s42
    %p51 = scmp.eq.s32.totalorder %s20, 1
    %p52 = por %p50, %p51
    %p53 = scmp.ne.s32.totalorder %s42, %s43
    %p54 = scmp.eq.s32.totalorder %s20, 0
    %p55 = por %p53, %p54
    %p56 = scmp.ne.s32.totalorder %s42, %s43
    %p57 = scmp.eq.s32.totalorder %s21, 1
    %p58 = por %p56, %p57
    %p60 = scmp.ne.s32.totalorder %s43, %s59
    %p61 = scmp.eq.s32.totalorder %s21, 0
    %p62 = por %p60, %p61
    %s63 = ssub.s32 %s22, %s34
    %s64 = ssub.s32 %s23, %s30
    %s65 = sor.u32 %s63, %s64
    %p66 = scmp.eq.s32.totalorder %s65, 0
    %s68 = sadd.s32 %s67, 1
    %s69 = scalar_select %p66, %s67, %s68
    %p72 = pneg %p66
    %p73 = scmp.eq.s32.totalorder %s15, 1
    %p74 = por %p72, %p73
    %p75 = scmp.ne.s32.totalorder %s67, %s70
    %p76 = scmp.eq.s32.totalorder %s15, 0
    %p77 = por %p75, %p76
    %p78 = scmp.ne.s32.totalorder %s67, %s70
    %p79 = scmp.eq.s32.totalorder %s20, 1
    %p80 = por %p78, %p79
    %p81 = scmp.ne.s32.totalorder %s70, %s71
    %p82 = scmp.eq.s32.totalorder %s20, 0
    %p83 = por %p81, %p82
    %p84 = scmp.ne.s32.totalorder %s70, %s71
    %p85 = scmp.eq.s32.totalorder %s21, 1
    %p86 = por %p84, %p85
    %p88 = scmp.ne.s32.totalorder %s71, %s87
    %p89 = scmp.eq.s32.totalorder %s21, 0
    %p90 = por %p88, %p89
    %s91 = sadd.s32 %s23, 1
    %s92 = sadd.s32 %s30, 1
    %s93 = ssub.s32 %s22, %s34
    %s94 = ssub.s32 %s91, %s92
    %s95 = sor.u32 %s93, %s94
    %p96 = scmp.eq.s32.totalorder %s95, 0
    %s98 = sadd.s32 %s97, 1
    %s99 = scalar_select %p96, %s97, %s98
    %p102 = pneg %p96
    %p103 = scmp.eq.s32.totalorder %s15, 1
    %p104 = por %p102, %p103
    %p105 = scmp.ne.s32.totalorder %s97, %s100
    %p106 = scmp.eq.s32.totalorder %s15, 0
    %p107 = por %p105, %p106
    %p108 = scmp.ne.s32.totalorder %s97, %s100
    %p109 = scmp.eq.s32.totalorder %s20, 1
    %p110 = por %p108, %p109
    %p111 = scmp.ne.s32.totalorder %s100, %s101
    %p112 = scmp.eq.s32.totalorder %s20, 0
    %p113 = por %p111, %p112
    %p114 = scmp.ne.s32.totalorder %s100, %s101
    %p115 = scmp.eq.s32.totalorder %s21, 1
    %p116 = por %p114, %p115
    %p118 = scmp.ne.s32.totalorder %s101, %s117
    %p119 = scmp.eq.s32.totalorder %s21, 0
    %p120 = por %p118, %p119
    %s121 = ssub.s32 %s22, %s34
    %s122 = ssub.s32 %s23, %s30
    %s123 = sor.u32 %s121, %s122
    %p124 = scmp.eq.s32.totalorder %s123, 0
    %s126 = sadd.s32 %s125, 1
    %s127 = scalar_select %p124, %s125, %s126
    %p130 = pneg %p124
    %p131 = scmp.eq.s32.totalorder %s15, 1
    %p132 = por %p130, %p131
    %p133 = scmp.ne.s32.totalorder %s125, %s128
    %p134 = scmp.eq.s32.totalorder %s15, 0
    %p135 = por %p133, %p134
    %p136 = scmp.ne.s32.totalorder %s125, %s128
    %p137 = scmp.eq.s32.totalorder %s20, 1
    %p138 = por %p136, %p137
    %p139 = scmp.ne.s32.totalorder %s128, %s129
    %p140 = scmp.eq.s32.totalorder %s20, 0
    %p141 = por %p139, %p140
    %p142 = scmp.ne.s32.totalorder %s128, %s129
    %p143 = scmp.eq.s32.totalorder %s21, 1
    %p144 = por %p142, %p143
    %p146 = scmp.ne.s32.totalorder %s129, %s145
    %p147 = scmp.eq.s32.totalorder %s21, 0
    %p148 = por %p146, %p147
    %s150 = sadd.s32 %s149, 1
    %p153 = scmp.eq.s32.totalorder %s15, 1
    %p154 = scmp.ne.s32.totalorder %s149, %s151
    %p155 = scmp.eq.s32.totalorder %s15, 0
    %p156 = por %p154, %p155
    %p157 = scmp.ne.s32.totalorder %s149, %s151
    %p158 = scmp.eq.s32.totalorder %s20, 1
    %p159 = por %p157, %p158
    %p160 = scmp.ne.s32.totalorder %s151, %s152
    %p161 = scmp.eq.s32.totalorder %s20, 0
    %p162 = por %p160, %p161
    %p163 = scmp.ne.s32.totalorder %s151, %s152
    %p164 = scmp.eq.s32.totalorder %s21, 1
    %p165 = por %p163, %p164
    %p167 = scmp.ne.s32.totalorder %s152, %s166
    %p168 = scmp.eq.s32.totalorder %s21, 0
    %p169 = por %p167, %p168
    %s171 = sadd.s32 %s170, 1
    %p174 = scmp.eq.s32.totalorder %s15, 1
    %p175 = scmp.ne.s32.totalorder %s170, %s172
    %p176 = scmp.eq.s32.totalorder %s15, 0
    %p177 = por %p175, %p176
    %p178 = scmp.ne.s32.totalorder %s170, %s172
    %p179 = scmp.eq.s32.totalorder %s20, 1
    %p180 = por %p178, %p179
    %p181 = scmp.ne.s32.totalorder %s172, %s173
    %p182 = scmp.eq.s32.totalorder %s20, 0
    %p183 = por %p181, %p182
    %p184 = scmp.ne.s32.totalorder %s172, %s173
    %p185 = scmp.eq.s32.totalorder %s21, 1
    %p186 = por %p184, %p185
    %p188 = scmp.ne.s32.totalorder %s173, %s187
    %p189 = scmp.eq.s32.totalorder %s21, 0
    %p190 = por %p188, %p189
    %s192 = sadd.s32 %s191, 1
    %p195 = scmp.eq.s32.totalorder %s15, 1
    %p196 = scmp.ne.s32.totalorder %s191, %s193
    %p197 = scmp.eq.s32.totalorder %s15, 0
    %p198 = por %p196, %p197
    %p199 = scmp.ne.s32.totalorder %s191, %s193
    %p200 = scmp.eq.s32.totalorder %s20, 1
    %p201 = por %p199, %p200
    %p202 = scmp.ne.s32.totalorder %s193, %s194
    %p203 = scmp.eq.s32.totalorder %s20, 0
    %p204 = por %p202, %p203
    %p205 = scmp.ne.s32.totalorder %s193, %s194
    %p206 = scmp.eq.s32.totalorder %s21, 1
    %p207 = por %p205, %p206
    %p209 = scmp.ne.s32.totalorder %s194, %s208
    %p210 = scmp.eq.s32.totalorder %s21, 0
    %p211 = por %p209, %p210
    %s213 = sadd.s32 %s212, 1
    %p216 = scmp.eq.s32.totalorder %s15, 1
    %p217 = scmp.ne.s32.totalorder %s212, %s214
    %p218 = scmp.eq.s32.totalorder %s15, 0
    %p219 = por %p217, %p218
    %p220 = scmp.ne.s32.totalorder %s212, %s214
    %p221 = scmp.eq.s32.totalorder %s20, 1
    %p222 = por %p220, %p221
    %p223 = scmp.ne.s32.totalorder %s214, %s215
    %p224 = scmp.eq.s32.totalorder %s20, 0
    %p225 = por %p223, %p224
    %p226 = scmp.ne.s32.totalorder %s214, %s215
    %p227 = scmp.eq.s32.totalorder %s21, 1
    %p228 = por %p226, %p227
    %p230 = scmp.ne.s32.totalorder %s215, %s229
    %p231 = scmp.eq.s32.totalorder %s21, 0
    %p232 = por %p230, %p231
    %s234 = sadd.s32 %s233, 1
    %p237 = scmp.eq.s32.totalorder %s15, 1
    %p238 = scmp.ne.s32.totalorder %s233, %s235
    %p239 = scmp.eq.s32.totalorder %s15, 0
    %p240 = por %p238, %p239
    %p241 = scmp.ne.s32.totalorder %s233, %s235
    %p242 = scmp.eq.s32.totalorder %s20, 1
    %p243 = por %p241, %p242
    %p244 = scmp.ne.s32.totalorder %s235, %s236
    %p245 = scmp.eq.s32.totalorder %s20, 0
    %p246 = por %p244, %p245
    %p247 = scmp.ne.s32.totalorder %s235, %s236
    %p248 = scmp.eq.s32.totalorder %s21, 1
    %p249 = por %p247, %p248
    %p251 = scmp.ne.s32.totalorder %s236, %s250
    %p252 = scmp.eq.s32.totalorder %s21, 0
    %p253 = por %p251, %p252
    %s254 = ssub.s32 %s22, %s34
    %s255 = ssub.s32 %s23, %s30
    %s256 = sor.u32 %s254, %s255
    %p257 = scmp.eq.s32.totalorder %s256, 0
    %s259 = sadd.s32 %s258, 1
    %s260 = scalar_select %p257, %s258, %s259
    %p263 = pneg %p257
    %p264 = scmp.eq.s32.totalorder %s15, 1
    %p265 = por %p263, %p264
    %p266 = scmp.ne.s32.totalorder %s258, %s261
    %p267 = scmp.eq.s32.totalorder %s15, 0
    %p268 = por %p266, %p267
    %p269 = scmp.ne.s32.totalorder %s258, %s261
    %p270 = scmp.eq.s32.totalorder %s20, 1
    %p271 = por %p269, %p270
    %p272 = scmp.ne.s32.totalorder %s261, %s262
    %p273 = scmp.eq.s32.totalorder %s20, 0
    %p274 = por %p272, %p273
    %p275 = scmp.ne.s32.totalorder %s261, %s262
    %p276 = scmp.eq.s32.totalorder %s21, 1
    %p277 = por %p275, %p276
    %p279 = scmp.ne.s32.totalorder %s262, %s278
    %p280 = scmp.eq.s32.totalorder %s21, 0
    %p281 = por %p279, %p280
    %p282 = scmp.le.s32.totalorder 1, %s15
    %p283 = scmp.lt.s32.totalorder %s15, 3
    %p284 = pnand %p282, %p283
    %p285 = pneg %p284
    // Predicated region
    $region9: #{gblock_forward_pallas.3} parent=5 // pred_check
      _
    $region10: #{gblock_forward_pallas.3} parent=5 // pred_check_branch
      %287 = sbr.rel (%p284) target = $region12
    $region11: #{gblock_forward_pallas.3} parent=5 // pred_region
      %s288 = ssub.s32 %s15, 1
      // Predicated region
      $region13: #{gblock_forward_pallas.3} parent=11 // pred_check
        %p289 = pneg %p162
      $region14: #{gblock_forward_pallas.3} parent=11 // pred_check_branch
        %291 = sbr.rel (%p289) target = $region16
      $region15: #{gblock_forward_pallas.3} parent=11 // pred_region
        _
      $region16: #{gblock_forward_pallas.3} parent=11 // pred_fallthru
        _
      // Predicated region
      $region17: #{gblock_forward_pallas.3} parent=11 // pred_check
        %p292 = pneg %p183
      $region18: #{gblock_forward_pallas.3} parent=11 // pred_check_branch
        %294 = sbr.rel (%p292) target = $region20
      $region19: #{gblock_forward_pallas.3} parent=11 // pred_region
        _
      $region20: #{gblock_forward_pallas.3} parent=11 // pred_fallthru
        _
      // Predicated region
      $region21: #{gblock_forward_pallas.3} parent=11 // pred_check
        %p295 = pneg %p204
      $region22: #{gblock_forward_pallas.3} parent=11 // pred_check_branch
        %297 = sbr.rel (%p295) target = $region24
      $region23: #{gblock_forward_pallas.3} parent=11 // pred_region
        _
      $region24: #{gblock_forward_pallas.3} parent=11 // pred_fallthru
        _
      // Predicated region
      $region25: #{gblock_forward_pallas.3} parent=11 // pred_check
        %p298 = pneg %p225
      $region26: #{gblock_forward_pallas.3} parent=11 // pred_check_branch
        %300 = sbr.rel (%p298) target = $region28
      $region27: #{gblock_forward_pallas.3} parent=11 // pred_region
        _
      $region28: #{gblock_forward_pallas.3} parent=11 // pred_fallthru
        _
      // Predicated region
      $region29: #{gblock_forward_pallas.3} parent=11 // pred_check
        %p301 = pneg %p246
      $region30: #{gblock_forward_pallas.3} parent=11 // pred_check_branch
        %303 = sbr.rel (%p301) target = $region32
      $region31: #{gblock_forward_pallas.3} parent=11 // pred_region
        _
      $region32: #{gblock_forward_pallas.3} parent=11 // pred_fallthru
        _
    $region12: #{gblock_forward_pallas.3} parent=5 // pred_fallthru
      _
    %p304 = scmp.lt.s32.totalorder %s15, 2
    // Predicated region
    $region33: #{gblock_forward_pallas.3} parent=5 // pred_check
      %p305 = pneg %p304
    $region34: #{gblock_forward_pallas.3} parent=5 // pred_check_branch
      %307 = sbr.rel (%p305) target = $region36
    $region35: #{gblock_forward_pallas.3} parent=5 // pred_region
      // Predicated region
      $region37: #{gblock_forward_pallas.3} parent=35 // pred_check
        %p308 = pneg %p49
      $region38: #{gblock_forward_pallas.3} parent=35 // pred_check_branch
        %310 = sbr.rel (%p308) target = $region40
      $region39: #{gblock_forward_pallas.3} parent=35 // pred_region
        %s311 = smul.u32 32, %s23
        %p312 = scmp.lt.s32.totalorder %s22, 1
        %s313 = scalar_select %p312, %s22, 1
        %p314 = scmp.lt.s32.totalorder %s311, 31
        %s315 = scalar_select %p314, %s311, 31
        %s316 = smul.addr %s313, 32
        %s317 = sadd.s32 %s315, %s316
        %s318 = smul.addr %s317, 8
        %s319 = scalar_lea.vmem %s0, %s318
        %s320 = smul.u32 32, %s23
      $region40: #{gblock_forward_pallas.3} parent=35 // pred_fallthru
        _
      // Predicated region
      $region41: #{gblock_forward_pallas.3} parent=35 // pred_check
        %p321 = pneg %p77
      $region42: #{gblock_forward_pallas.3} parent=35 // pred_check_branch
        %323 = sbr.rel (%p321) target = $region44
      $region43: #{gblock_forward_pallas.3} parent=35 // pred_region
        %p324 = scmp.lt.s32.totalorder %s22, 1
        %s325 = scalar_select %p324, %s22, 1
        %p326 = scmp.lt.s32.totalorder %s23, 1
        %s327 = scalar_select %p326, %s23, 1
        %s328 = smul.addr %s327, 2
        %s329 = smul.addr %s325, 4
        %s330 = sadd.s32 %s328, %s329
        %s331 = smul.addr %s330, 8
        %s332 = scalar_lea.vmem %s1, %s331
      $region44: #{gblock_forward_pallas.3} parent=35 // pred_fallthru
        _
      // Predicated region
      $region45: #{gblock_forward_pallas.3} parent=35 // pred_check
        %p333 = pneg %p107
      $region46: #{gblock_forward_pallas.3} parent=35 // pred_check_branch
        %335 = sbr.rel (%p333) target = $region48
      $region47: #{gblock_forward_pallas.3} parent=35 // pred_region
        %s336 = sadd.s32 %s23, 1
        %p337 = scmp.lt.s32.totalorder %s22, 1
        %s338 = scalar_select %p337, %s22, 1
        %p339 = scmp.lt.s32.totalorder %s336, 1
        %s340 = scalar_select %p339, %s336, 1
        %s341 = smul.addr %s340, 2
        %s342 = smul.addr %s338, 4
        %s343 = sadd.s32 %s341, %s342
        %s344 = smul.addr %s343, 8
        %s345 = scalar_lea.vmem %s2, %s344
        %s346 = sadd.s32 %s23, 1
      $region48: #{gblock_forward_pallas.3} parent=35 // pred_fallthru
        _
      // Predicated region
      $region49: #{gblock_forward_pallas.3} parent=35 // pred_check
        %p347 = pneg %p135
      $region50: #{gblock_forward_pallas.3} parent=35 // pred_check_branch
        %349 = sbr.rel (%p347) target = $region52
      $region51: #{gblock_forward_pallas.3} parent=35 // pred_region
        %s350 = smul.u32 32, %s23
        %p351 = scmp.lt.s32.totalorder %s22, 1
        %s352 = scalar_select %p351, %s22, 1
        %p353 = scmp.lt.s32.totalorder %s350, 31
        %s354 = scalar_select %p353, %s350, 31
        %s355 = smul.addr %s352, 32
        %s356 = sadd.s32 %s354, %s355
        %s357 = smul.addr %s356, 8
        %s358 = scalar_lea.vmem %s3, %s357
        %s359 = smul.u32 32, %s23
      $region52: #{gblock_forward_pallas.3} parent=35 // pred_fallthru
        _
    $region36: #{gblock_forward_pallas.3} parent=5 // pred_fallthru
      _
    %p360 = scmp.le.s32.totalorder 1, %s15
    %p361 = scmp.lt.s32.totalorder %s15, 3
    %p362 = pnand %p360, %p361
    %p363 = pneg %p362
    // Predicated region
    $region53: #{gblock_forward_pallas.3} parent=5 // pred_check
      _
    $region54: #{gblock_forward_pallas.3} parent=5 // pred_check_branch
      %365 = sbr.rel (%p362) target = $region56
    $region55: #{gblock_forward_pallas.3} parent=5 // pred_region
      %s366 = ssub.s32 %s15, 1
      %s367 = smul.u32 32, %s25
      %p368 = scmp.lt.s32.totalorder %s24, 1
      %s369 = scalar_select %p368, %s24, 1
      %p370 = scmp.lt.s32.totalorder %s367, 31
      %s371 = scalar_select %p370, %s367, 31
      %s372 = smul.addr %s369, 32
      %s373 = sadd.s32 %s371, %s372
      %s374 = smul.addr %s373, 8
      %s375 = scalar_lea.vmem %s0, %s374
      %p376 = pneg %p55
      %p377 = pneg %p52
      %p378 = scmp.lt.s32.totalorder %s24, 1
      %s379 = scalar_select %p378, %s24, 1
      %p380 = scmp.lt.s32.totalorder %s25, 1
      %s381 = scalar_select %p380, %s25, 1
      %s382 = smul.addr %s381, 2
      %s383 = smul.addr %s379, 4
      %s384 = sadd.s32 %s382, %s383
      %s385 = smul.addr %s384, 8
      %s386 = scalar_lea.vmem %s1, %s385
      %p387 = pneg %p83
      %p388 = pneg %p80
      %s389 = sadd.s32 %s25, 1
      %p390 = scmp.lt.s32.totalorder %s24, 1
      %s391 = scalar_select %p390, %s24, 1
      %p392 = scmp.lt.s32.totalorder %s389, 1
      %s393 = scalar_select %p392, %s389, 1
      %s394 = smul.addr %s393, 2
      %s395 = smul.addr %s391, 4
      %s396 = sadd.s32 %s394, %s395
      %s397 = smul.addr %s396, 8
      %s398 = scalar_lea.vmem %s2, %s397
      %p399 = pneg %p113
      %p400 = pneg %p110
      %s401 = smul.u32 32, %s25
      %p402 = scmp.lt.s32.totalorder %s24, 1
      %s403 = scalar_select %p402, %s24, 1
      %p404 = scmp.lt.s32.totalorder %s401, 31
      %s405 = scalar_select %p404, %s401, 31
      %s406 = smul.addr %s403, 32
      %s407 = sadd.s32 %s405, %s406
      %s408 = smul.addr %s407, 8
      %s409 = scalar_lea.vmem %s3, %s408
      %p410 = pneg %p141
      %p411 = pneg %p138
      %p412 = pneg %p162
      %p413 = pneg %p159
      %p414 = pneg %p183
      %p415 = pneg %p180
      %p416 = pneg %p204
      %p417 = pneg %p201
      %p418 = pneg %p225
      %p419 = pneg %p222
      %p420 = pneg %p246
      %p421 = pneg %p243
      %p422 = pneg %p274
      %p423 = pneg %p271
      %s424 = smul.u32 32, %s25
      %p425 = scmp.lt.s32.totalorder %s24, 1
      %s426 = scalar_select %p425, %s24, 1
      %p427 = scmp.lt.s32.totalorder %s424, 31
      %s428 = scalar_select %p427, %s424, 31
      %s429 = smul.addr %s426, 32
      %s430 = sadd.s32 %s428, %s429
      %s431 = smul.addr %s430, 8
      %s432 = scalar_lea.vmem %s9, %s431
      %s433 = smul.u32 32, %s25
      %p434 = scmp.lt.s32.totalorder %s24, 1
      %s435 = scalar_select %p434, %s24, 1
      %p436 = scmp.lt.s32.totalorder %s433, 31
      %s437 = scalar_select %p436, %s433, 31
      %s438 = smul.addr %s435, 32
      %s439 = sadd.s32 %s437, %s438
      %s440 = smul.addr %s439, 8
      %s441 = scalar_lea.vmem %s0, %s440
      %s442 = smul.u32 32, %s25
      %p443 = scmp.lt.s32.totalorder %s24, 1
      %s444 = scalar_select %p443, %s24, 1
      %p445 = scmp.lt.s32.totalorder %s25, 1
      %s446 = scalar_select %p445, %s25, 1
      %s447 = smul.addr %s446, 2
      %s448 = smul.addr %s444, 4
      %s449 = sadd.s32 %s447, %s448
      %s450 = smul.addr %s449, 8
      %s451 = scalar_lea.vmem %s1, %s450
      %s452 = sadd.s32 %s25, 1
      %p453 = scmp.lt.s32.totalorder %s24, 1
      %s454 = scalar_select %p453, %s24, 1
      %p455 = scmp.lt.s32.totalorder %s452, 1
      %s456 = scalar_select %p455, %s452, 1
      %s457 = smul.addr %s456, 2
      %s458 = smul.addr %s454, 4
      %s459 = sadd.s32 %s457, %s458
      %s460 = smul.addr %s459, 8
      %s461 = scalar_lea.vmem %s2, %s460
      %s462 = sadd.s32 %s25, 1
      %s463 = smul.u32 32, %s25
      %p464 = scmp.lt.s32.totalorder %s24, 1
      %s465 = scalar_select %p464, %s24, 1
      %p466 = scmp.lt.s32.totalorder %s463, 31
      %s467 = scalar_select %p466, %s463, 31
      %s468 = smul.addr %s465, 32
      %s469 = sadd.s32 %s467, %s468
      %s470 = smul.addr %s469, 8
      %s471 = scalar_lea.vmem %s3, %s470
      %s472 = smul.u32 32, %s25
      %s473 = smul.u32 32, %s25
      %p474 = scmp.lt.s32.totalorder %s24, 1
      %s475 = scalar_select %p474, %s24, 1
      %p476 = scmp.lt.s32.totalorder %s473, 31
      %s477 = scalar_select %p476, %s473, 31
      %s478 = smul.addr %s475, 32
      %s479 = sadd.s32 %s477, %s478
      %s480 = smul.addr %s479, 8
      %s481 = scalar_lea.vmem %s9, %s480
      %s482 = smul.u32 32, %s25
      %v483 = vld [vmem:[%s441] sm:$0xff]
      %v484 = vld [vmem:[%s441 + $0x8] sm:$0xff]
      %v485 = vld [vmem:[%s441 + $0x10] sm:$0xff]
      %v486 = vld [vmem:[%s441 + $0x18] sm:$0xff]
      %v487 = vld [vmem:[%s441 + $0x20] sm:$0xff]
      %v488 = vld [vmem:[%s441 + $0x28] sm:$0xff]
      %v489 = vld [vmem:[%s441 + $0x30] sm:$0xff]
      %v490 = vld [vmem:[%s441 + $0x38] sm:$0xff]
      %v491 = vld [vmem:[%s441 + $0x40] sm:$0xff]
      %v492 = vld [vmem:[%s441 + $0x48] sm:$0xff]
      %v493 = vld [vmem:[%s441 + $0x50] sm:$0xff]
      %v494 = vld [vmem:[%s441 + $0x58] sm:$0xff]
      %v495 = vld [vmem:[%s441 + $0x60] sm:$0xff]
      %v496 = vld [vmem:[%s441 + $0x68] sm:$0xff]
      %v497 = vld [vmem:[%s441 + $0x70] sm:$0xff]
      %v498 = vld [vmem:[%s441 + $0x78] sm:$0xff]
      %v499 = vld [vmem:[%s441 + $0x80] sm:$0xff]
      %v500 = vld [vmem:[%s441 + $0x88] sm:$0xff]
      %v501 = vld [vmem:[%s441 + $0x90] sm:$0xff]
      %v502 = vld [vmem:[%s441 + $0x98] sm:$0xff]
      %v503 = vld [vmem:[%s441 + $0xa0] sm:$0xff]
      %v504 = vld [vmem:[%s441 + $0xa8] sm:$0xff]
      %v505 = vld [vmem:[%s441 + $0xb0] sm:$0xff]
      %v506 = vld [vmem:[%s441 + $0xb8] sm:$0xff]
      %v507 = vld [vmem:[%s441 + $0xc0] sm:$0xff]
      %v508 = vld [vmem:[%s441 + $0xc8] sm:$0xff]
      %v509 = vld [vmem:[%s441 + $0xd0] sm:$0xff]
      %v510 = vld [vmem:[%s441 + $0xd8] sm:$0xff]
      %v511 = vld [vmem:[%s441 + $0xe0] sm:$0xff]
      %v512 = vld [vmem:[%s441 + $0xe8] sm:$0xff]
      %v513 = vld [vmem:[%s441 + $0xf0] sm:$0xff]
      %v514 = vld [vmem:[%s441 + $0xf8] sm:$0xff]
      %v515 = vld [vmem:[%s4] sm:$0x1]
      %v517 = vperm.slane %v515, 0
      %v519 = vmul.f32 %v483, %v517
      %v520 = vmul.f32 %v484, %v517
      %v521 = vmul.f32 %v485, %v517
      %v522 = vmul.f32 %v486, %v517
      %v523 = vmul.f32 %v487, %v517
      %v524 = vmul.f32 %v488, %v517
      %v525 = vmul.f32 %v489, %v517
      %v526 = vmul.f32 %v490, %v517
      %v527 = vmul.f32 %v491, %v517
      %v528 = vmul.f32 %v492, %v517
      %v529 = vmul.f32 %v493, %v517
      %v530 = vmul.f32 %v494, %v517
      %v531 = vmul.f32 %v495, %v517
      %v532 = vmul.f32 %v496, %v517
      %v533 = vmul.f32 %v497, %v517
      %v534 = vmul.f32 %v498, %v517
      %v535 = vmul.f32 %v499, %v517
      %v536 = vmul.f32 %v500, %v517
      %v537 = vmul.f32 %v501, %v517
      %v538 = vmul.f32 %v502, %v517
      %v539 = vmul.f32 %v503, %v517
      %v540 = vmul.f32 %v504, %v517
      %v541 = vmul.f32 %v505, %v517
      %v542 = vmul.f32 %v506, %v517
      %v543 = vmul.f32 %v507, %v517
      %v544 = vmul.f32 %v508, %v517
      %v545 = vmul.f32 %v509, %v517
      %v546 = vmul.f32 %v510, %v517
      %v547 = vmul.f32 %v511, %v517
      %v548 = vmul.f32 %v512, %v517
      %v549 = vmul.f32 %v513, %v517
      %v550 = vmul.f32 %v514, %v517
      %v551 = vld [vmem:[%s5] sm:$0x1]
      %v553 = vperm.slane %v551, 0
      %v555 = vadd.f32 %v519, %v553
      %v556 = vadd.f32 %v520, %v553
      %v557 = vadd.f32 %v521, %v553
      %v558 = vadd.f32 %v522, %v553
      %v559 = vadd.f32 %v523, %v553
      %v560 = vadd.f32 %v524, %v553
      %v561 = vadd.f32 %v525, %v553
      %v562 = vadd.f32 %v526, %v553
      %v563 = vadd.f32 %v527, %v553
      %v564 = vadd.f32 %v528, %v553
      %v565 = vadd.f32 %v529, %v553
      %v566 = vadd.f32 %v530, %v553
      %v567 = vadd.f32 %v531, %v553
      %v568 = vadd.f32 %v532, %v553
      %v569 = vadd.f32 %v533, %v553
      %v570 = vadd.f32 %v534, %v553
      %v571 = vadd.f32 %v535, %v553
      %v572 = vadd.f32 %v536, %v553
      %v573 = vadd.f32 %v537, %v553
      %v574 = vadd.f32 %v538, %v553
      %v575 = vadd.f32 %v539, %v553
      %v576 = vadd.f32 %v540, %v553
      %v577 = vadd.f32 %v541, %v553
      %v578 = vadd.f32 %v542, %v553
      %v579 = vadd.f32 %v543, %v553
      %v580 = vadd.f32 %v544, %v553
      %v581 = vadd.f32 %v545, %v553
      %v582 = vadd.f32 %v546, %v553
      %v583 = vadd.f32 %v547, %v553
      %v584 = vadd.f32 %v548, %v553
      %v585 = vadd.f32 %v549, %v553
      %v586 = vadd.f32 %v550, %v553
      %v587 = vmax.f32 %v555, 0.0
      %v588 = vmax.f32 %v556, 0.0
      %v589 = vmax.f32 %v557, 0.0
      %v590 = vmax.f32 %v558, 0.0
      %v591 = vmax.f32 %v559, 0.0
      %v592 = vmax.f32 %v560, 0.0
      %v593 = vmax.f32 %v561, 0.0
      %v594 = vmax.f32 %v562, 0.0
      %v595 = vmax.f32 %v563, 0.0
      %v596 = vmax.f32 %v564, 0.0
      %v597 = vmax.f32 %v565, 0.0
      %v598 = vmax.f32 %v566, 0.0
      %v599 = vmax.f32 %v567, 0.0
      %v600 = vmax.f32 %v568, 0.0
      %v601 = vmax.f32 %v569, 0.0
      %v602 = vmax.f32 %v570, 0.0
      %v603 = vmax.f32 %v571, 0.0
      %v604 = vmax.f32 %v572, 0.0
      %v605 = vmax.f32 %v573, 0.0
      %v606 = vmax.f32 %v574, 0.0
      %v607 = vmax.f32 %v575, 0.0
      %v608 = vmax.f32 %v576, 0.0
      %v609 = vmax.f32 %v577, 0.0
      %v610 = vmax.f32 %v578, 0.0
      %v611 = vmax.f32 %v579, 0.0
      %v612 = vmax.f32 %v580, 0.0
      %v613 = vmax.f32 %v581, 0.0
      %v614 = vmax.f32 %v582, 0.0
      %v615 = vmax.f32 %v583, 0.0
      %v616 = vmax.f32 %v584, 0.0
      %v617 = vmax.f32 %v585, 0.0
      %v618 = vmax.f32 %v586, 0.0
      %v619 = vld [vmem:[%s451] sm:$0xff]
      %v620 = vld [vmem:[%s451 + $0x8] sm:$0xff]
      %v621 = vmul.f32 %v619, %v517
      %v622 = vmul.f32 %v620, %v517
      %v623 = vadd.f32 %v621, %v553
      %v624 = vadd.f32 %v622, %v553
      %v625 = vmax.f32 %v623, 0.0
      %v626 = vmax.f32 %v624, 0.0
      %v627 = vld [vmem:[%s461] sm:$0xff]
      %v628 = vld [vmem:[%s461 + $0x8] sm:$0xff]
      %v629 = vmul.f32 %v627, %v517
      %v630 = vmul.f32 %v628, %v517
      %v631 = vadd.f32 %v629, %v553
      %v632 = vadd.f32 %v630, %v553
      %v633 = vmax.f32 %v631, 0.0
      %v634 = vmax.f32 %v632, 0.0
      %p635 = scmp.gt.s32.totalorder %s25, 0
      %s636 = scalar_select %p635, 1, 0
      %v637 = vstv %s636
      %vm638 = vcmp.eq.s32.totalorder %v637, 1
      %v639 = vsel %vm638, %v625, 0.0
      %v640 = vsel %vm638, %v626, 0.0
      %p641 = scmp.lt.s32.totalorder %s25, 0
      %s642 = scalar_select %p641, 1, 0
      %v643 = vstv %s642
      %vm644 = vcmp.eq.s32.totalorder %v643, 1
      %v645 = vsel %vm644, %v633, 0.0
      %v646 = vsel %vm644, %v634, 0.0
      %vm649 = vcmask 1040384
      %v650 = vrot.slane %v639, 7
      %v651 = vrot.slane %v640, 7
      %v652 = vsel %vm649, %v650, %v651
      %v688 = vrot.slane %v587, 7
      %v689 = vrot.slane %v588, 7
      %v690 = vsel %vm649, %v688, %v689
      %v691 = vrot.slane %v589, 7
      %v692 = vsel %vm649, %v689, %v691
      %v693 = vrot.slane %v590, 7
      %v694 = vsel %vm649, %v691, %v693
      %v695 = vrot.slane %v591, 7
      %v696 = vsel %vm649, %v693, %v695
      %v697 = vrot.slane %v592, 7
      %v698 = vsel %vm649, %v695, %v697
      %v699 = vrot.slane %v593, 7
      %v700 = vsel %vm649, %v697, %v699
      %v701 = vrot.slane %v594, 7
      %v702 = vsel %vm649, %v699, %v701
      %v703 = vrot.slane %v595, 7
      %v704 = vsel %vm649, %v701, %v703
      %v705 = vrot.slane %v596, 7
      %v706 = vsel %vm649, %v703, %v705
      %v707 = vrot.slane %v597, 7
      %v708 = vsel %vm649, %v705, %v707
      %v709 = vrot.slane %v598, 7
      %v710 = vsel %vm649, %v707, %v709
      %v711 = vrot.slane %v599, 7
      %v712 = vsel %vm649, %v709, %v711
      %v713 = vrot.slane %v600, 7
      %v714 = vsel %vm649, %v711, %v713
      %v715 = vrot.slane %v601, 7
      %v716 = vsel %vm649, %v713, %v715
      %v717 = vrot.slane %v602, 7
      %v718 = vsel %vm649, %v715, %v717
      %v719 = vrot.slane %v603, 7
      %v720 = vsel %vm649, %v717, %v719
      %v721 = vrot.slane %v604, 7
      %v722 = vsel %vm649, %v719, %v721
      %v723 = vrot.slane %v605, 7
      %v724 = vsel %vm649, %v721, %v723
      %v725 = vrot.slane %v606, 7
      %v726 = vsel %vm649, %v723, %v725
      %v727 = vrot.slane %v607, 7
      %v728 = vsel %vm649, %v725, %v727
      %v729 = vrot.slane %v608, 7
      %v730 = vsel %vm649, %v727, %v729
      %v731 = vrot.slane %v609, 7
      %v732 = vsel %vm649, %v729, %v731
      %v733 = vrot.slane %v610, 7
      %v734 = vsel %vm649, %v731, %v733
      %v735 = vrot.slane %v611, 7
      %v736 = vsel %vm649, %v733, %v735
      %v737 = vrot.slane %v612, 7
      %v738 = vsel %vm649, %v735, %v737
      %v739 = vrot.slane %v613, 7
      %v740 = vsel %vm649, %v737, %v739
      %v741 = vrot.slane %v614, 7
      %v742 = vsel %vm649, %v739, %v741
      %v743 = vrot.slane %v615, 7
      %v744 = vsel %vm649, %v741, %v743
      %v745 = vrot.slane %v616, 7
      %v746 = vsel %vm649, %v743, %v745
      %v747 = vrot.slane %v617, 7
      %v748 = vsel %vm649, %v745, %v747
      %v749 = vrot.slane %v618, 7
      %v750 = vsel %vm649, %v747, %v749
      %v786 = vrot.slane %v645, 7
      %v787 = vrot.slane %v646, 7
      %v788 = vsel %vm649, %v786, %v787
      %v792 = vsel %vm649, 0.0, %v650
      %v793 = vsel %vm649, %v651, %v688
      %v794 = vsel %vm649, %v749, %v786
      %v795 = vsel %vm649, %v787, 0.0
      %v796 = vlaneseq
      %v797 = vshrl.u32 %v796, 7
      %v798 = vadd.s32 %v797, 8
      %v799 = vadd.s32 %v797, 16
      %v800 = vadd.s32 %v797, 24
      %v801 = vadd.s32 %v797, 32
      %v802 = vadd.s32 %v797, 40
      %v803 = vadd.s32 %v797, 48
      %v804 = vadd.s32 %v797, 56
      %v805 = vadd.s32 %v797, 64
      %v806 = vadd.s32 %v797, 72
      %v807 = vadd.s32 %v797, 80
      %v808 = vadd.s32 %v797, 88
      %v809 = vadd.s32 %v797, 96
      %v810 = vadd.s32 %v797, 104
      %v811 = vadd.s32 %v797, 112
      %v812 = vadd.s32 %v797, 120
      %v813 = vadd.s32 %v797, 128
      %v814 = vadd.s32 %v797, 136
      %v815 = vadd.s32 %v797, 144
      %v816 = vadd.s32 %v797, 152
      %v817 = vadd.s32 %v797, 160
      %v818 = vadd.s32 %v797, 168
      %v819 = vadd.s32 %v797, 176
      %v820 = vadd.s32 %v797, 184
      %v821 = vadd.s32 %v797, 192
      %v822 = vadd.s32 %v797, 200
      %v823 = vadd.s32 %v797, 208
      %v824 = vadd.s32 %v797, 216
      %v825 = vadd.s32 %v797, 224
      %v826 = vadd.s32 %v797, 232
      %v827 = vadd.s32 %v797, 240
      %v828 = vadd.s32 %v797, 248
      %vm829 = vcmp.lt.s32.totalorder %v797, 0
      %v830 = vsub.s32 0, %v797
      %v831 = vsel %vm829, %v830, %v797
      %v832 = vshrl.u32 %v831, 4
      %v833 = vand.u32 %v831, 15
      %v834 = vsub.s32 0, %v833
      %v835 = vsel %vm829, %v834, %v833
      %vm836 = vcmp.lt.s32.totalorder %v798, 0
      %v837 = vsub.s32 0, %v798
      %v838 = vsel %vm836, %v837, %v798
      %v839 = vshrl.u32 %v838, 4
      %v840 = vand.u32 %v838, 15
      %v841 = vsub.s32 0, %v840
      %v842 = vsel %vm836, %v841, %v840
      %vm843 = vcmp.lt.s32.totalorder %v799, 0
      %v844 = vsub.s32 0, %v799
      %v845 = vsel %vm843, %v844, %v799
      %v846 = vshrl.u32 %v845, 4
      %v847 = vand.u32 %v845, 15
      %v848 = vsub.s32 0, %v847
      %v849 = vsel %vm843, %v848, %v847
      %vm850 = vcmp.lt.s32.totalorder %v800, 0
      %v851 = vsub.s32 0, %v800
      %v852 = vsel %vm850, %v851, %v800
      %v853 = vshrl.u32 %v852, 4
      %v854 = vand.u32 %v852, 15
      %v855 = vsub.s32 0, %v854
      %v856 = vsel %vm850, %v855, %v854
      %vm857 = vcmp.lt.s32.totalorder %v801, 0
      %v858 = vsub.s32 0, %v801
      %v859 = vsel %vm857, %v858, %v801
      %v860 = vshrl.u32 %v859, 4
      %v861 = vand.u32 %v859, 15
      %v862 = vsub.s32 0, %v861
      %v863 = vsel %vm857, %v862, %v861
      %vm864 = vcmp.lt.s32.totalorder %v802, 0
      %v865 = vsub.s32 0, %v802
      %v866 = vsel %vm864, %v865, %v802
      %v867 = vshrl.u32 %v866, 4
      %v868 = vand.u32 %v866, 15
      %v869 = vsub.s32 0, %v868
      %v870 = vsel %vm864, %v869, %v868
      %vm871 = vcmp.lt.s32.totalorder %v803, 0
      %v872 = vsub.s32 0, %v803
      %v873 = vsel %vm871, %v872, %v803
      %v874 = vshrl.u32 %v873, 4
      %v875 = vand.u32 %v873, 15
      %v876 = vsub.s32 0, %v875
      %v877 = vsel %vm871, %v876, %v875
      %vm878 = vcmp.lt.s32.totalorder %v804, 0
      %v879 = vsub.s32 0, %v804
      %v880 = vsel %vm878, %v879, %v804
      %v881 = vshrl.u32 %v880, 4
      %v882 = vand.u32 %v880, 15
      %v883 = vsub.s32 0, %v882
      %v884 = vsel %vm878, %v883, %v882
      %vm885 = vcmp.lt.s32.totalorder %v805, 0
      %v886 = vsub.s32 0, %v805
      %v887 = vsel %vm885, %v886, %v805
      %v888 = vshrl.u32 %v887, 4
      %v889 = vand.u32 %v887, 15
      %v890 = vsub.s32 0, %v889
      %v891 = vsel %vm885, %v890, %v889
      %vm892 = vcmp.lt.s32.totalorder %v806, 0
      %v893 = vsub.s32 0, %v806
      %v894 = vsel %vm892, %v893, %v806
      %v895 = vshrl.u32 %v894, 4
      %v896 = vand.u32 %v894, 15
      %v897 = vsub.s32 0, %v896
      %v898 = vsel %vm892, %v897, %v896
      %vm899 = vcmp.lt.s32.totalorder %v807, 0
      %v900 = vsub.s32 0, %v807
      %v901 = vsel %vm899, %v900, %v807
      %v902 = vshrl.u32 %v901, 4
      %v903 = vand.u32 %v901, 15
      %v904 = vsub.s32 0, %v903
      %v905 = vsel %vm899, %v904, %v903
      %vm906 = vcmp.lt.s32.totalorder %v808, 0
      %v907 = vsub.s32 0, %v808
      %v908 = vsel %vm906, %v907, %v808
      %v909 = vshrl.u32 %v908, 4
      %v910 = vand.u32 %v908, 15
      %v911 = vsub.s32 0, %v910
      %v912 = vsel %vm906, %v911, %v910
      %vm913 = vcmp.lt.s32.totalorder %v809, 0
      %v914 = vsub.s32 0, %v809
      %v915 = vsel %vm913, %v914, %v809
      %v916 = vshrl.u32 %v915, 4
      %v917 = vand.u32 %v915, 15
      %v918 = vsub.s32 0, %v917
      %v919 = vsel %vm913, %v918, %v917
      %vm920 = vcmp.lt.s32.totalorder %v810, 0
      %v921 = vsub.s32 0, %v810
      %v922 = vsel %vm920, %v921, %v810
      %v923 = vshrl.u32 %v922, 4
      %v924 = vand.u32 %v922, 15
      %v925 = vsub.s32 0, %v924
      %v926 = vsel %vm920, %v925, %v924
      %vm927 = vcmp.lt.s32.totalorder %v811, 0
      %v928 = vsub.s32 0, %v811
      %v929 = vsel %vm927, %v928, %v811
      %v930 = vshrl.u32 %v929, 4
      %v931 = vand.u32 %v929, 15
      %v932 = vsub.s32 0, %v931
      %v933 = vsel %vm927, %v932, %v931
      %vm934 = vcmp.lt.s32.totalorder %v812, 0
      %v935 = vsub.s32 0, %v812
      %v936 = vsel %vm934, %v935, %v812
      %v937 = vshrl.u32 %v936, 4
      %v938 = vand.u32 %v936, 15
      %v939 = vsub.s32 0, %v938
      %v940 = vsel %vm934, %v939, %v938
      %vm941 = vcmp.lt.s32.totalorder %v813, 0
      %v942 = vsub.s32 0, %v813
      %v943 = vsel %vm941, %v942, %v813
      %v944 = vshrl.u32 %v943, 4
      %v945 = vand.u32 %v943, 15
      %v946 = vsub.s32 0, %v945
      %v947 = vsel %vm941, %v946, %v945
      %vm948 = vcmp.lt.s32.totalorder %v814, 0
      %v949 = vsub.s32 0, %v814
      %v950 = vsel %vm948, %v949, %v814
      %v951 = vshrl.u32 %v950, 4
      %v952 = vand.u32 %v950, 15
      %v953 = vsub.s32 0, %v952
      %v954 = vsel %vm948, %v953, %v952
      %vm955 = vcmp.lt.s32.totalorder %v815, 0
      %v956 = vsub.s32 0, %v815
      %v957 = vsel %vm955, %v956, %v815
      %v958 = vshrl.u32 %v957, 4
      %v959 = vand.u32 %v957, 15
      %v960 = vsub.s32 0, %v959
      %v961 = vsel %vm955, %v960, %v959
      %vm962 = vcmp.lt.s32.totalorder %v816, 0
      %v963 = vsub.s32 0, %v816
      %v964 = vsel %vm962, %v963, %v816
      %v965 = vshrl.u32 %v964, 4
      %v966 = vand.u32 %v964, 15
      %v967 = vsub.s32 0, %v966
      %v968 = vsel %vm962, %v967, %v966
      %vm969 = vcmp.lt.s32.totalorder %v817, 0
      %v970 = vsub.s32 0, %v817
      %v971 = vsel %vm969, %v970, %v817
      %v972 = vshrl.u32 %v971, 4
      %v973 = vand.u32 %v971, 15
      %v974 = vsub.s32 0, %v973
      %v975 = vsel %vm969, %v974, %v973
      %vm976 = vcmp.lt.s32.totalorder %v818, 0
      %v977 = vsub.s32 0, %v818
      %v978 = vsel %vm976, %v977, %v818
      %v979 = vshrl.u32 %v978, 4
      %v980 = vand.u32 %v978, 15
      %v981 = vsub.s32 0, %v980
      %v982 = vsel %vm976, %v981, %v980
      %vm983 = vcmp.lt.s32.totalorder %v819, 0
      %v984 = vsub.s32 0, %v819
      %v985 = vsel %vm983, %v984, %v819
      %v986 = vshrl.u32 %v985, 4
      %v987 = vand.u32 %v985, 15
      %v988 = vsub.s32 0, %v987
      %v989 = vsel %vm983, %v988, %v987
      %vm990 = vcmp.lt.s32.totalorder %v820, 0
      %v991 = vsub.s32 0, %v820
      %v992 = vsel %vm990, %v991, %v820
      %v993 = vshrl.u32 %v992, 4
      %v994 = vand.u32 %v992, 15
      %v995 = vsub.s32 0, %v994
      %v996 = vsel %vm990, %v995, %v994
      %vm997 = vcmp.lt.s32.totalorder %v821, 0
      %v998 = vsub.s32 0, %v821
      %v999 = vsel %vm997, %v998, %v821
      %v1000 = vshrl.u32 %v999, 4
      %v1001 = vand.u32 %v999, 15
      %v1002 = vsub.s32 0, %v1001
      %v1003 = vsel %vm997, %v1002, %v1001
      %vm1004 = vcmp.lt.s32.totalorder %v822, 0
      %v1005 = vsub.s32 0, %v822
      %v1006 = vsel %vm1004, %v1005, %v822
      %v1007 = vshrl.u32 %v1006, 4
      %v1008 = vand.u32 %v1006, 15
      %v1009 = vsub.s32 0, %v1008
      %v1010 = vsel %vm1004, %v1009, %v1008
      %vm1011 = vcmp.lt.s32.totalorder %v823, 0
      %v1012 = vsub.s32 0, %v823
      %v1013 = vsel %vm1011, %v1012, %v823
      %v1014 = vshrl.u32 %v1013, 4
      %v1015 = vand.u32 %v1013, 15
      %v1016 = vsub.s32 0, %v1015
      %v1017 = vsel %vm1011, %v1016, %v1015
      %vm1018 = vcmp.lt.s32.totalorder %v824, 0
      %v1019 = vsub.s32 0, %v824
      %v1020 = vsel %vm1018, %v1019, %v824
      %v1021 = vshrl.u32 %v1020, 4
      %v1022 = vand.u32 %v1020, 15
      %v1023 = vsub.s32 0, %v1022
      %v1024 = vsel %vm1018, %v1023, %v1022
      %vm1025 = vcmp.lt.s32.totalorder %v825, 0
      %v1026 = vsub.s32 0, %v825
      %v1027 = vsel %vm1025, %v1026, %v825
      %v1028 = vshrl.u32 %v1027, 4
      %v1029 = vand.u32 %v1027, 15
      %v1030 = vsub.s32 0, %v1029
      %v1031 = vsel %vm1025, %v1030, %v1029
      %vm1032 = vcmp.lt.s32.totalorder %v826, 0
      %v1033 = vsub.s32 0, %v826
      %v1034 = vsel %vm1032, %v1033, %v826
      %v1035 = vshrl.u32 %v1034, 4
      %v1036 = vand.u32 %v1034, 15
      %v1037 = vsub.s32 0, %v1036
      %v1038 = vsel %vm1032, %v1037, %v1036
      %vm1039 = vcmp.lt.s32.totalorder %v827, 0
      %v1040 = vsub.s32 0, %v827
      %v1041 = vsel %vm1039, %v1040, %v827
      %v1042 = vshrl.u32 %v1041, 4
      %v1043 = vand.u32 %v1041, 15
      %v1044 = vsub.s32 0, %v1043
      %v1045 = vsel %vm1039, %v1044, %v1043
      %vm1046 = vcmp.lt.s32.totalorder %v828, 0
      %v1047 = vsub.s32 0, %v828
      %v1048 = vsel %vm1046, %v1047, %v828
      %v1049 = vshrl.u32 %v1048, 4
      %v1050 = vand.u32 %v1048, 15
      %v1051 = vsub.s32 0, %v1050
      %v1052 = vsel %vm1046, %v1051, %v1050
      %vm1053 = vcmp.ne.s32.totalorder %v835, 0
      %vm1054 = vcmp.ne.s32.totalorder %v842, 0
      %vm1055 = vcmp.ne.s32.totalorder %v849, 0
      %vm1056 = vcmp.ne.s32.totalorder %v856, 0
      %vm1057 = vcmp.ne.s32.totalorder %v863, 0
      %vm1058 = vcmp.ne.s32.totalorder %v870, 0
      %vm1059 = vcmp.ne.s32.totalorder %v877, 0
      %vm1060 = vcmp.ne.s32.totalorder %v884, 0
      %vm1061 = vcmp.ne.s32.totalorder %v891, 0
      %vm1062 = vcmp.ne.s32.totalorder %v898, 0
      %vm1063 = vcmp.ne.s32.totalorder %v905, 0
      %vm1064 = vcmp.ne.s32.totalorder %v912, 0
      %vm1065 = vcmp.ne.s32.totalorder %v919, 0
      %vm1066 = vcmp.ne.s32.totalorder %v926, 0
      %vm1067 = vcmp.ne.s32.totalorder %v933, 0
      %vm1068 = vcmp.ne.s32.totalorder %v940, 0
      %vm1069 = vcmp.ne.s32.totalorder %v947, 0
      %vm1070 = vcmp.ne.s32.totalorder %v954, 0
      %vm1071 = vcmp.ne.s32.totalorder %v961, 0
      %vm1072 = vcmp.ne.s32.totalorder %v968, 0
      %vm1073 = vcmp.ne.s32.totalorder %v975, 0
      %vm1074 = vcmp.ne.s32.totalorder %v982, 0
      %vm1075 = vcmp.ne.s32.totalorder %v989, 0
      %vm1076 = vcmp.ne.s32.totalorder %v996, 0
      %vm1077 = vcmp.ne.s32.totalorder %v1003, 0
      %vm1078 = vcmp.ne.s32.totalorder %v1010, 0
      %vm1079 = vcmp.ne.s32.totalorder %v1017, 0
      %vm1080 = vcmp.ne.s32.totalorder %v1024, 0
      %vm1081 = vcmp.ne.s32.totalorder %v1031, 0
      %vm1082 = vcmp.ne.s32.totalorder %v1038, 0
      %vm1083 = vcmp.ne.s32.totalorder %v1045, 0
      %vm1084 = vcmp.ne.s32.totalorder %v1052, 0
      %vm1085 = vcmp.lt.s32.totalorder %v835, 0
      %vm1086 = vcmp.lt.s32.totalorder %v842, 0
      %vm1087 = vcmp.lt.s32.totalorder %v849, 0
      %vm1088 = vcmp.lt.s32.totalorder %v856, 0
      %vm1089 = vcmp.lt.s32.totalorder %v863, 0
      %vm1090 = vcmp.lt.s32.totalorder %v870, 0
      %vm1091 = vcmp.lt.s32.totalorder %v877, 0
      %vm1092 = vcmp.lt.s32.totalorder %v884, 0
      %vm1093 = vcmp.lt.s32.totalorder %v891, 0
      %vm1094 = vcmp.lt.s32.totalorder %v898, 0
      %vm1095 = vcmp.lt.s32.totalorder %v905, 0
      %vm1096 = vcmp.lt.s32.totalorder %v912, 0
      %vm1097 = vcmp.lt.s32.totalorder %v919, 0
      %vm1098 = vcmp.lt.s32.totalorder %v926, 0
      %vm1099 = vcmp.lt.s32.totalorder %v933, 0
      %vm1100 = vcmp.lt.s32.totalorder %v940, 0
      %vm1101 = vcmp.lt.s32.totalorder %v947, 0
      %vm1102 = vcmp.lt.s32.totalorder %v954, 0
      %vm1103 = vcmp.lt.s32.totalorder %v961, 0
      %vm1104 = vcmp.lt.s32.totalorder %v968, 0
      %vm1105 = vcmp.lt.s32.totalorder %v975, 0
      %vm1106 = vcmp.lt.s32.totalorder %v982, 0
      %vm1107 = vcmp.lt.s32.totalorder %v989, 0
      %vm1108 = vcmp.lt.s32.totalorder %v996, 0
      %vm1109 = vcmp.lt.s32.totalorder %v1003, 0
      %vm1110 = vcmp.lt.s32.totalorder %v1010, 0
      %vm1111 = vcmp.lt.s32.totalorder %v1017, 0
      %vm1112 = vcmp.lt.s32.totalorder %v1024, 0
      %vm1113 = vcmp.lt.s32.totalorder %v1031, 0
      %vm1114 = vcmp.lt.s32.totalorder %v1038, 0
      %vm1115 = vcmp.lt.s32.totalorder %v1045, 0
      %vm1116 = vcmp.lt.s32.totalorder %v1052, 0
      %vm1117 = vmand %vm1085, %vm1053
      %vm1118 = vmand %vm1086, %vm1054
      %vm1119 = vmand %vm1087, %vm1055
      %vm1120 = vmand %vm1088, %vm1056
      %vm1121 = vmand %vm1089, %vm1057
      %vm1122 = vmand %vm1090, %vm1058
      %vm1123 = vmand %vm1091, %vm1059
      %vm1124 = vmand %vm1092, %vm1060
      %vm1125 = vmand %vm1093, %vm1061
      %vm1126 = vmand %vm1094, %vm1062
      %vm1127 = vmand %vm1095, %vm1063
      %vm1128 = vmand %vm1096, %vm1064
      %vm1129 = vmand %vm1097, %vm1065
      %vm1130 = vmand %vm1098, %vm1066
      %vm1131 = vmand %vm1099, %vm1067
      %vm1132 = vmand %vm1100, %vm1068
      %vm1133 = vmand %vm1101, %vm1069
      %vm1134 = vmand %vm1102, %vm1070
      %vm1135 = vmand %vm1103, %vm1071
      %vm1136 = vmand %vm1104, %vm1072
      %vm1137 = vmand %vm1105, %vm1073
      %vm1138 = vmand %vm1106, %vm1074
      %vm1139 = vmand %vm1107, %vm1075
      %vm1140 = vmand %vm1108, %vm1076
      %vm1141 = vmand %vm1109, %vm1077
      %vm1142 = vmand %vm1110, %vm1078
      %vm1143 = vmand %vm1111, %vm1079
      %vm1144 = vmand %vm1112, %vm1080
      %vm1145 = vmand %vm1113, %vm1081
      %vm1146 = vmand %vm1114, %vm1082
      %vm1147 = vmand %vm1115, %vm1083
      %vm1148 = vmand %vm1116, %vm1084
      %v1149 = vadd.s32 %v835, 16
      %v1150 = vadd.s32 %v842, 16
      %v1151 = vadd.s32 %v849, 16
      %v1152 = vadd.s32 %v856, 16
      %v1153 = vadd.s32 %v863, 16
      %v1154 = vadd.s32 %v870, 16
      %v1155 = vadd.s32 %v877, 16
      %v1156 = vadd.s32 %v884, 16
      %v1157 = vadd.s32 %v891, 16
      %v1158 = vadd.s32 %v898, 16
      %v1159 = vadd.s32 %v905, 16
      %v1160 = vadd.s32 %v912, 16
      %v1161 = vadd.s32 %v919, 16
      %v1162 = vadd.s32 %v926, 16
      %v1163 = vadd.s32 %v933, 16
      %v1164 = vadd.s32 %v940, 16
      %v1165 = vadd.s32 %v947, 16
      %v1166 = vadd.s32 %v954, 16
      %v1167 = vadd.s32 %v961, 16
      %v1168 = vadd.s32 %v968, 16
      %v1169 = vadd.s32 %v975, 16
      %v1170 = vadd.s32 %v982, 16
      %v1171 = vadd.s32 %v989, 16
      %v1172 = vadd.s32 %v996, 16
      %v1173 = vadd.s32 %v1003, 16
      %v1174 = vadd.s32 %v1010, 16
      %v1175 = vadd.s32 %v1017, 16
      %v1176 = vadd.s32 %v1024, 16
      %v1177 = vadd.s32 %v1031, 16
      %v1178 = vadd.s32 %v1038, 16
      %v1179 = vadd.s32 %v1045, 16
      %v1180 = vadd.s32 %v1052, 16
      %v1181 = vsel %vm1117, %v1149, %v835
      %v1182 = vsel %vm1118, %v1150, %v842
      %v1183 = vsel %vm1119, %v1151, %v849
      %v1184 = vsel %vm1120, %v1152, %v856
      %v1185 = vsel %vm1121, %v1153, %v863
      %v1186 = vsel %vm1122, %v1154, %v870
      %v1187 = vsel %vm1123, %v1155, %v877
      %v1188 = vsel %vm1124, %v1156, %v884
      %v1189 = vsel %vm1125, %v1157, %v891
      %v1190 = vsel %vm1126, %v1158, %v898
      %v1191 = vsel %vm1127, %v1159, %v905
      %v1192 = vsel %vm1128, %v1160, %v912
      %v1193 = vsel %vm1129, %v1161, %v919
      %v1194 = vsel %vm1130, %v1162, %v926
      %v1195 = vsel %vm1131, %v1163, %v933
      %v1196 = vsel %vm1132, %v1164, %v940
      %v1197 = vsel %vm1133, %v1165, %v947
      %v1198 = vsel %vm1134, %v1166, %v954
      %v1199 = vsel %vm1135, %v1167, %v961
      %v1200 = vsel %vm1136, %v1168, %v968
      %v1201 = vsel %vm1137, %v1169, %v975
      %v1202 = vsel %vm1138, %v1170, %v982
      %v1203 = vsel %vm1139, %v1171, %v989
      %v1204 = vsel %vm1140, %v1172, %v996
      %v1205 = vsel %vm1141, %v1173, %v1003
      %v1206 = vsel %vm1142, %v1174, %v1010
      %v1207 = vsel %vm1143, %v1175, %v1017
      %v1208 = vsel %vm1144, %v1176, %v1024
      %v1209 = vsel %vm1145, %v1177, %v1031
      %v1210 = vsel %vm1146, %v1178, %v1038
      %v1211 = vsel %vm1147, %v1179, %v1045
      %v1212 = vsel %vm1148, %v1180, %v1052
      %vm1213 = vcmp.gt.s32.totalorder %v1181, 0
      %vm1214 = vcmp.gt.s32.totalorder %v1182, 0
      %vm1215 = vcmp.gt.s32.totalorder %v1183, 0
      %vm1216 = vcmp.gt.s32.totalorder %v1184, 0
      %vm1217 = vcmp.gt.s32.totalorder %v1185, 0
      %vm1218 = vcmp.gt.s32.totalorder %v1186, 0
      %vm1219 = vcmp.gt.s32.totalorder %v1187, 0
      %vm1220 = vcmp.gt.s32.totalorder %v1188, 0
      %vm1221 = vcmp.gt.s32.totalorder %v1189, 0
      %vm1222 = vcmp.gt.s32.totalorder %v1190, 0
      %vm1223 = vcmp.gt.s32.totalorder %v1191, 0
      %vm1224 = vcmp.gt.s32.totalorder %v1192, 0
      %vm1225 = vcmp.gt.s32.totalorder %v1193, 0
      %vm1226 = vcmp.gt.s32.totalorder %v1194, 0
      %vm1227 = vcmp.gt.s32.totalorder %v1195, 0
      %vm1228 = vcmp.gt.s32.totalorder %v1196, 0
      %vm1229 = vcmp.gt.s32.totalorder %v1197, 0
      %vm1230 = vcmp.gt.s32.totalorder %v1198, 0
      %vm1231 = vcmp.gt.s32.totalorder %v1199, 0
      %vm1232 = vcmp.gt.s32.totalorder %v1200, 0
      %vm1233 = vcmp.gt.s32.totalorder %v1201, 0
      %vm1234 = vcmp.gt.s32.totalorder %v1202, 0
      %vm1235 = vcmp.gt.s32.totalorder %v1203, 0
      %vm1236 = vcmp.gt.s32.totalorder %v1204, 0
      %vm1237 = vcmp.gt.s32.totalorder %v1205, 0
      %vm1238 = vcmp.gt.s32.totalorder %v1206, 0
      %vm1239 = vcmp.gt.s32.totalorder %v1207, 0
      %vm1240 = vcmp.gt.s32.totalorder %v1208, 0
      %vm1241 = vcmp.gt.s32.totalorder %v1209, 0
      %vm1242 = vcmp.gt.s32.totalorder %v1210, 0
      %vm1243 = vcmp.gt.s32.totalorder %v1211, 0
      %vm1244 = vcmp.gt.s32.totalorder %v1212, 0
      %vm1245 = vcmp.lt.s32.totalorder %v1181, 15
      %vm1246 = vcmp.lt.s32.totalorder %v1182, 15
      %vm1247 = vcmp.lt.s32.totalorder %v1183, 15
      %vm1248 = vcmp.lt.s32.totalorder %v1184, 15
      %vm1249 = vcmp.lt.s32.totalorder %v1185, 15
      %vm1250 = vcmp.lt.s32.totalorder %v1186, 15
      %vm1251 = vcmp.lt.s32.totalorder %v1187, 15
      %vm1252 = vcmp.lt.s32.totalorder %v1188, 15
      %vm1253 = vcmp.lt.s32.totalorder %v1189, 15
      %vm1254 = vcmp.lt.s32.totalorder %v1190, 15
      %vm1255 = vcmp.lt.s32.totalorder %v1191, 15
      %vm1256 = vcmp.lt.s32.totalorder %v1192, 15
      %vm1257 = vcmp.lt.s32.totalorder %v1193, 15
      %vm1258 = vcmp.lt.s32.totalorder %v1194, 15
      %vm1259 = vcmp.lt.s32.totalorder %v1195, 15
      %vm1260 = vcmp.lt.s32.totalorder %v1196, 15
      %vm1261 = vcmp.lt.s32.totalorder %v1197, 15
      %vm1262 = vcmp.lt.s32.totalorder %v1198, 15
      %vm1263 = vcmp.lt.s32.totalorder %v1199, 15
      %vm1264 = vcmp.lt.s32.totalorder %v1200, 15
      %vm1265 = vcmp.lt.s32.totalorder %v1201, 15
      %vm1266 = vcmp.lt.s32.totalorder %v1202, 15
      %vm1267 = vcmp.lt.s32.totalorder %v1203, 15
      %vm1268 = vcmp.lt.s32.totalorder %v1204, 15
      %vm1269 = vcmp.lt.s32.totalorder %v1205, 15
      %vm1270 = vcmp.lt.s32.totalorder %v1206, 15
      %vm1271 = vcmp.lt.s32.totalorder %v1207, 15
      %vm1272 = vcmp.lt.s32.totalorder %v1208, 15
      %vm1273 = vcmp.lt.s32.totalorder %v1209, 15
      %vm1274 = vcmp.lt.s32.totalorder %v1210, 15
      %vm1275 = vcmp.lt.s32.totalorder %v1211, 15
      %vm1276 = vcmp.lt.s32.totalorder %v1212, 15
      %v1277 = vsel %vm1213, 1, 0
      %v1278 = vsel %vm1214, 1, 0
      %v1279 = vsel %vm1215, 1, 0
      %v1280 = vsel %vm1216, 1, 0
      %v1281 = vsel %vm1217, 1, 0
      %v1282 = vsel %vm1218, 1, 0
      %v1283 = vsel %vm1219, 1, 0
      %v1284 = vsel %vm1220, 1, 0
      %v1285 = vsel %vm1221, 1, 0
      %v1286 = vsel %vm1222, 1, 0
      %v1287 = vsel %vm1223, 1, 0
      %v1288 = vsel %vm1224, 1, 0
      %v1289 = vsel %vm1225, 1, 0
      %v1290 = vsel %vm1226, 1, 0
      %v1291 = vsel %vm1227, 1, 0
      %v1292 = vsel %vm1228, 1, 0
      %v1293 = vsel %vm1229, 1, 0
      %v1294 = vsel %vm1230, 1, 0
      %v1295 = vsel %vm1231, 1, 0
      %v1296 = vsel %vm1232, 1, 0
      %v1297 = vsel %vm1233, 1, 0
      %v1298 = vsel %vm1234, 1, 0
      %v1299 = vsel %vm1235, 1, 0
      %v1300 = vsel %vm1236, 1, 0
      %v1301 = vsel %vm1237, 1, 0
      %v1302 = vsel %vm1238, 1, 0
      %v1303 = vsel %vm1239, 1, 0
      %v1304 = vsel %vm1240, 1, 0
      %v1305 = vsel %vm1241, 1, 0
      %v1306 = vsel %vm1242, 1, 0
      %v1307 = vsel %vm1243, 1, 0
      %v1308 = vsel %vm1244, 1, 0
      %vm1309 = vcmp.eq.s32.totalorder %v1277, 1
      %vm1310 = vcmp.eq.s32.totalorder %v1278, 1
      %vm1311 = vcmp.eq.s32.totalorder %v1279, 1
      %vm1312 = vcmp.eq.s32.totalorder %v1280, 1
      %vm1313 = vcmp.eq.s32.totalorder %v1281, 1
      %vm1314 = vcmp.eq.s32.totalorder %v1282, 1
      %vm1315 = vcmp.eq.s32.totalorder %v1283, 1
      %vm1316 = vcmp.eq.s32.totalorder %v1284, 1
      %vm1317 = vcmp.eq.s32.totalorder %v1285, 1
      %vm1318 = vcmp.eq.s32.totalorder %v1286, 1
      %vm1319 = vcmp.eq.s32.totalorder %v1287, 1
      %vm1320 = vcmp.eq.s32.totalorder %v1288, 1
      %vm1321 = vcmp.eq.s32.totalorder %v1289, 1
      %vm1322 = vcmp.eq.s32.totalorder %v1290, 1
      %vm1323 = vcmp.eq.s32.totalorder %v1291, 1
      %vm1324 = vcmp.eq.s32.totalorder %v1292, 1
      %vm1325 = vcmp.eq.s32.totalorder %v1293, 1
      %vm1326 = vcmp.eq.s32.totalorder %v1294, 1
      %vm1327 = vcmp.eq.s32.totalorder %v1295, 1
      %vm1328 = vcmp.eq.s32.totalorder %v1296, 1
      %vm1329 = vcmp.eq.s32.totalorder %v1297, 1
      %vm1330 = vcmp.eq.s32.totalorder %v1298, 1
      %vm1331 = vcmp.eq.s32.totalorder %v1299, 1
      %vm1332 = vcmp.eq.s32.totalorder %v1300, 1
      %vm1333 = vcmp.eq.s32.totalorder %v1301, 1
      %vm1334 = vcmp.eq.s32.totalorder %v1302, 1
      %vm1335 = vcmp.eq.s32.totalorder %v1303, 1
      %vm1336 = vcmp.eq.s32.totalorder %v1304, 1
      %vm1337 = vcmp.eq.s32.totalorder %v1305, 1
      %vm1338 = vcmp.eq.s32.totalorder %v1306, 1
      %vm1339 = vcmp.eq.s32.totalorder %v1307, 1
      %vm1340 = vcmp.eq.s32.totalorder %v1308, 1
      %v1341 = vsel %vm1309, %v792, 0.0
      %v1342 = vsel %vm1310, %v652, 0.0
      %v1343 = vsel %vm1311, %v793, 0.0
      %v1344 = vsel %vm1312, %v690, 0.0
      %v1345 = vsel %vm1313, %v692, 0.0
      %v1346 = vsel %vm1314, %v694, 0.0
      %v1347 = vsel %vm1315, %v696, 0.0
      %v1348 = vsel %vm1316, %v698, 0.0
      %v1349 = vsel %vm1317, %v700, 0.0
      %v1350 = vsel %vm1318, %v702, 0.0
      %v1351 = vsel %vm1319, %v704, 0.0
      %v1352 = vsel %vm1320, %v706, 0.0
      %v1353 = vsel %vm1321, %v708, 0.0
      %v1354 = vsel %vm1322, %v710, 0.0
      %v1355 = vsel %vm1323, %v712, 0.0
      %v1356 = vsel %vm1324, %v714, 0.0
      %v1357 = vsel %vm1325, %v716, 0.0
      %v1358 = vsel %vm1326, %v718, 0.0
      %v1359 = vsel %vm1327, %v720, 0.0
      %v1360 = vsel %vm1328, %v722, 0.0
      %v1361 = vsel %vm1329, %v724, 0.0
      %v1362 = vsel %vm1330, %v726, 0.0
      %v1363 = vsel %vm1331, %v728, 0.0
      %v1364 = vsel %vm1332, %v730, 0.0
      %v1365 = vsel %vm1333, %v732, 0.0
      %v1366 = vsel %vm1334, %v734, 0.0
      %v1367 = vsel %vm1335, %v736, 0.0
      %v1368 = vsel %vm1336, %v738, 0.0
      %v1369 = vsel %vm1337, %v740, 0.0
      %v1370 = vsel %vm1338, %v742, 0.0
      %v1371 = vsel %vm1339, %v744, 0.0
      %v1372 = vsel %vm1340, %v746, 0.0
      %v1373 = vsel %vm1245, 1, 0
      %v1374 = vsel %vm1246, 1, 0
      %v1375 = vsel %vm1247, 1, 0
      %v1376 = vsel %vm1248, 1, 0
      %v1377 = vsel %vm1249, 1, 0
      %v1378 = vsel %vm1250, 1, 0
      %v1379 = vsel %vm1251, 1, 0
      %v1380 = vsel %vm1252, 1, 0
      %v1381 = vsel %vm1253, 1, 0
      %v1382 = vsel %vm1254, 1, 0
      %v1383 = vsel %vm1255, 1, 0
      %v1384 = vsel %vm1256, 1, 0
      %v1385 = vsel %vm1257, 1, 0
      %v1386 = vsel %vm1258, 1, 0
      %v1387 = vsel %vm1259, 1, 0
      %v1388 = vsel %vm1260, 1, 0
      %v1389 = vsel %vm1261, 1, 0
      %v1390 = vsel %vm1262, 1, 0
      %v1391 = vsel %vm1263, 1, 0
      %v1392 = vsel %vm1264, 1, 0
      %v1393 = vsel %vm1265, 1, 0
      %v1394 = vsel %vm1266, 1, 0
      %v1395 = vsel %vm1267, 1, 0
      %v1396 = vsel %vm1268, 1, 0
      %v1397 = vsel %vm1269, 1, 0
      %v1398 = vsel %vm1270, 1, 0
      %v1399 = vsel %vm1271, 1, 0
      %v1400 = vsel %vm1272, 1, 0
      %v1401 = vsel %vm1273, 1, 0
      %v1402 = vsel %vm1274, 1, 0
      %v1403 = vsel %vm1275, 1, 0
      %v1404 = vsel %vm1276, 1, 0
      %vm1405 = vcmp.eq.s32.totalorder %v1373, 1
      %vm1406 = vcmp.eq.s32.totalorder %v1374, 1
      %vm1407 = vcmp.eq.s32.totalorder %v1375, 1
      %vm1408 = vcmp.eq.s32.totalorder %v1376, 1
      %vm1409 = vcmp.eq.s32.totalorder %v1377, 1
      %vm1410 = vcmp.eq.s32.totalorder %v1378, 1
      %vm1411 = vcmp.eq.s32.totalorder %v1379, 1
      %vm1412 = vcmp.eq.s32.totalorder %v1380, 1
      %vm1413 = vcmp.eq.s32.totalorder %v1381, 1
      %vm1414 = vcmp.eq.s32.totalorder %v1382, 1
      %vm1415 = vcmp.eq.s32.totalorder %v1383, 1
      %vm1416 = vcmp.eq.s32.totalorder %v1384, 1
      %vm1417 = vcmp.eq.s32.totalorder %v1385, 1
      %vm1418 = vcmp.eq.s32.totalorder %v1386, 1
      %vm1419 = vcmp.eq.s32.totalorder %v1387, 1
      %vm1420 = vcmp.eq.s32.totalorder %v1388, 1
      %vm1421 = vcmp.eq.s32.totalorder %v1389, 1
      %vm1422 = vcmp.eq.s32.totalorder %v1390, 1
      %vm1423 = vcmp.eq.s32.totalorder %v1391, 1
      %vm1424 = vcmp.eq.s32.totalorder %v1392, 1
      %vm1425 = vcmp.eq.s32.totalorder %v1393, 1
      %vm1426 = vcmp.eq.s32.totalorder %v1394, 1
      %vm1427 = vcmp.eq.s32.totalorder %v1395, 1
      %vm1428 = vcmp.eq.s32.totalorder %v1396, 1
      %vm1429 = vcmp.eq.s32.totalorder %v1397, 1
      %vm1430 = vcmp.eq.s32.totalorder %v1398, 1
      %vm1431 = vcmp.eq.s32.totalorder %v1399, 1
      %vm1432 = vcmp.eq.s32.totalorder %v1400, 1
      %vm1433 = vcmp.eq.s32.totalorder %v1401, 1
      %vm1434 = vcmp.eq.s32.totalorder %v1402, 1
      %vm1435 = vcmp.eq.s32.totalorder %v1403, 1
      %vm1436 = vcmp.eq.s32.totalorder %v1404, 1
      %vm1439 = vcmask 1045504
      %v1440 = vrot.slane %v792, 2
      %v1441 = vrot.slane %v652, 2
      %v1442 = vsel %vm1439, %v1440, %v1441
      %v1443 = vrot.slane %v793, 2
      %v1444 = vsel %vm1439, %v1441, %v1443
      %v1445 = vrot.slane %v690, 2
      %v1446 = vsel %vm1439, %v1443, %v1445
      %v1447 = vrot.slane %v692, 2
      %v1448 = vsel %vm1439, %v1445, %v1447
      %v1449 = vrot.slane %v694, 2
      %v1450 = vsel %vm1439, %v1447, %v1449
      %v1451 = vrot.slane %v696, 2
      %v1452 = vsel %vm1439, %v1449, %v1451
      %v1453 = vrot.slane %v698, 2
      %v1454 = vsel %vm1439, %v1451, %v1453
      %v1455 = vrot.slane %v700, 2
      %v1456 = vsel %vm1439, %v1453, %v1455
      %v1457 = vrot.slane %v702, 2
      %v1458 = vsel %vm1439, %v1455, %v1457
      %v1459 = vrot.slane %v704, 2
      %v1460 = vsel %vm1439, %v1457, %v1459
      %v1461 = vrot.slane %v706, 2
      %v1462 = vsel %vm1439, %v1459, %v1461
      %v1463 = vrot.slane %v708, 2
      %v1464 = vsel %vm1439, %v1461, %v1463
      %v1465 = vrot.slane %v710, 2
      %v1466 = vsel %vm1439, %v1463, %v1465
      %v1467 = vrot.slane %v712, 2
      %v1468 = vsel %vm1439, %v1465, %v1467
      %v1469 = vrot.slane %v714, 2
      %v1470 = vsel %vm1439, %v1467, %v1469
      %v1471 = vrot.slane %v716, 2
      %v1472 = vsel %vm1439, %v1469, %v1471
      %v1473 = vrot.slane %v718, 2
      %v1474 = vsel %vm1439, %v1471, %v1473
      %v1475 = vrot.slane %v720, 2
      %v1476 = vsel %vm1439, %v1473, %v1475
      %v1477 = vrot.slane %v722, 2
      %v1478 = vsel %vm1439, %v1475, %v1477
      %v1479 = vrot.slane %v724, 2
      %v1480 = vsel %vm1439, %v1477, %v1479
      %v1481 = vrot.slane %v726, 2
      %v1482 = vsel %vm1439, %v1479, %v1481
      %v1483 = vrot.slane %v728, 2
      %v1484 = vsel %vm1439, %v1481, %v1483
      %v1485 = vrot.slane %v730, 2
      %v1486 = vsel %vm1439, %v1483, %v1485
      %v1487 = vrot.slane %v732, 2
      %v1488 = vsel %vm1439, %v1485, %v1487
      %v1489 = vrot.slane %v734, 2
      %v1490 = vsel %vm1439, %v1487, %v1489
      %v1491 = vrot.slane %v736, 2
      %v1492 = vsel %vm1439, %v1489, %v1491
      %v1493 = vrot.slane %v738, 2
      %v1494 = vsel %vm1439, %v1491, %v1493
      %v1495 = vrot.slane %v740, 2
      %v1496 = vsel %vm1439, %v1493, %v1495
      %v1497 = vrot.slane %v742, 2
      %v1498 = vsel %vm1439, %v1495, %v1497
      %v1499 = vrot.slane %v744, 2
      %v1500 = vsel %vm1439, %v1497, %v1499
      %v1501 = vrot.slane %v746, 2
      %v1502 = vsel %vm1439, %v1499, %v1501
      %v1503 = vrot.slane %v748, 2
      %v1504 = vsel %vm1439, %v1501, %v1503
      %v1537 = vsel %vm1405, %v1442, 0.0
      %v1538 = vsel %vm1406, %v1444, 0.0
      %v1539 = vsel %vm1407, %v1446, 0.0
      %v1540 = vsel %vm1408, %v1448, 0.0
      %v1541 = vsel %vm1409, %v1450, 0.0
      %v1542 = vsel %vm1410, %v1452, 0.0
      %v1543 = vsel %vm1411, %v1454, 0.0
      %v1544 = vsel %vm1412, %v1456, 0.0
      %v1545 = vsel %vm1413, %v1458, 0.0
      %v1546 = vsel %vm1414, %v1460, 0.0
      %v1547 = vsel %vm1415, %v1462, 0.0
      %v1548 = vsel %vm1416, %v1464, 0.0
      %v1549 = vsel %vm1417, %v1466, 0.0
      %v1550 = vsel %vm1418, %v1468, 0.0
      %v1551 = vsel %vm1419, %v1470, 0.0
      %v1552 = vsel %vm1420, %v1472, 0.0
      %v1553 = vsel %vm1421, %v1474, 0.0
      %v1554 = vsel %vm1422, %v1476, 0.0
      %v1555 = vsel %vm1423, %v1478, 0.0
      %v1556 = vsel %vm1424, %v1480, 0.0
      %v1557 = vsel %vm1425, %v1482, 0.0
      %v1558 = vsel %vm1426, %v1484, 0.0
      %v1559 = vsel %vm1427, %v1486, 0.0
      %v1560 = vsel %vm1428, %v1488, 0.0
      %v1561 = vsel %vm1429, %v1490, 0.0
      %v1562 = vsel %vm1430, %v1492, 0.0
      %v1563 = vsel %vm1431, %v1494, 0.0
      %v1564 = vsel %vm1432, %v1496, 0.0
      %v1565 = vsel %vm1433, %v1498, 0.0
      %v1566 = vsel %vm1434, %v1500, 0.0
      %v1567 = vsel %vm1435, %v1502, 0.0
      %v1568 = vsel %vm1436, %v1504, 0.0
      %v1569 = vsel %vm1309, %v793, 0.0
      %v1570 = vsel %vm1310, %v690, 0.0
      %v1571 = vsel %vm1311, %v692, 0.0
      %v1572 = vsel %vm1312, %v694, 0.0
      %v1573 = vsel %vm1313, %v696, 0.0
      %v1574 = vsel %vm1314, %v698, 0.0
      %v1575 = vsel %vm1315, %v700, 0.0
      %v1576 = vsel %vm1316, %v702, 0.0
      %v1577 = vsel %vm1317, %v704, 0.0
      %v1578 = vsel %vm1318, %v706, 0.0
      %v1579 = vsel %vm1319, %v708, 0.0
      %v1580 = vsel %vm1320, %v710, 0.0
      %v1581 = vsel %vm1321, %v712, 0.0
      %v1582 = vsel %vm1322, %v714, 0.0
      %v1583 = vsel %vm1323, %v716, 0.0
      %v1584 = vsel %vm1324, %v718, 0.0
      %v1585 = vsel %vm1325, %v720, 0.0
      %v1586 = vsel %vm1326, %v722, 0.0
      %v1587 = vsel %vm1327, %v724, 0.0
      %v1588 = vsel %vm1328, %v726, 0.0
      %v1589 = vsel %vm1329, %v728, 0.0
      %v1590 = vsel %vm1330, %v730, 0.0
      %v1591 = vsel %vm1331, %v732, 0.0
      %v1592 = vsel %vm1332, %v734, 0.0
      %v1593 = vsel %vm1333, %v736, 0.0
      %v1594 = vsel %vm1334, %v738, 0.0
      %v1595 = vsel %vm1335, %v740, 0.0
      %v1596 = vsel %vm1336, %v742, 0.0
      %v1597 = vsel %vm1337, %v744, 0.0
      %v1598 = vsel %vm1338, %v746, 0.0
      %v1599 = vsel %vm1339, %v748, 0.0
      %v1600 = vsel %vm1340, %v750, 0.0
      %v1602 = vrot.slane %v750, 2
      %v1603 = vsel %vm1439, %v1503, %v1602
      %v1604 = vrot.slane %v794, 2
      %v1605 = vsel %vm1439, %v1602, %v1604
      %v1608 = vsel %vm1405, %v1446, 0.0
      %v1609 = vsel %vm1406, %v1448, 0.0
      %v1610 = vsel %vm1407, %v1450, 0.0
      %v1611 = vsel %vm1408, %v1452, 0.0
      %v1612 = vsel %vm1409, %v1454, 0.0
      %v1613 = vsel %vm1410, %v1456, 0.0
      %v1614 = vsel %vm1411, %v1458, 0.0
      %v1615 = vsel %vm1412, %v1460, 0.0
      %v1616 = vsel %vm1413, %v1462, 0.0
      %v1617 = vsel %vm1414, %v1464, 0.0
      %v1618 = vsel %vm1415, %v1466, 0.0
      %v1619 = vsel %vm1416, %v1468, 0.0
      %v1620 = vsel %vm1417, %v1470, 0.0
      %v1621 = vsel %vm1418, %v1472, 0.0
      %v1622 = vsel %vm1419, %v1474, 0.0
      %v1623 = vsel %vm1420, %v1476, 0.0
      %v1624 = vsel %vm1421, %v1478, 0.0
      %v1625 = vsel %vm1422, %v1480, 0.0
      %v1626 = vsel %vm1423, %v1482, 0.0
      %v1627 = vsel %vm1424, %v1484, 0.0
      %v1628 = vsel %vm1425, %v1486, 0.0
      %v1629 = vsel %vm1426, %v1488, 0.0
      %v1630 = vsel %vm1427, %v1490, 0.0
      %v1631 = vsel %vm1428, %v1492, 0.0
      %v1632 = vsel %vm1429, %v1494, 0.0
      %v1633 = vsel %vm1430, %v1496, 0.0
      %v1634 = vsel %vm1431, %v1498, 0.0
      %v1635 = vsel %vm1432, %v1500, 0.0
      %v1636 = vsel %vm1433, %v1502, 0.0
      %v1637 = vsel %vm1434, %v1504, 0.0
      %v1638 = vsel %vm1435, %v1603, 0.0
      %v1639 = vsel %vm1436, %v1605, 0.0
      %v1640 = vsel %vm1309, %v692, 0.0
      %v1641 = vsel %vm1310, %v694, 0.0
      %v1642 = vsel %vm1311, %v696, 0.0
      %v1643 = vsel %vm1312, %v698, 0.0
      %v1644 = vsel %vm1313, %v700, 0.0
      %v1645 = vsel %vm1314, %v702, 0.0
      %v1646 = vsel %vm1315, %v704, 0.0
      %v1647 = vsel %vm1316, %v706, 0.0
      %v1648 = vsel %vm1317, %v708, 0.0
      %v1649 = vsel %vm1318, %v710, 0.0
      %v1650 = vsel %vm1319, %v712, 0.0
      %v1651 = vsel %vm1320, %v714, 0.0
      %v1652 = vsel %vm1321, %v716, 0.0
      %v1653 = vsel %vm1322, %v718, 0.0
      %v1654 = vsel %vm1323, %v720, 0.0
      %v1655 = vsel %vm1324, %v722, 0.0
      %v1656 = vsel %vm1325, %v724, 0.0
      %v1657 = vsel %vm1326, %v726, 0.0
      %v1658 = vsel %vm1327, %v728, 0.0
      %v1659 = vsel %vm1328, %v730, 0.0
      %v1660 = vsel %vm1329, %v732, 0.0
      %v1661 = vsel %vm1330, %v734, 0.0
      %v1662 = vsel %vm1331, %v736, 0.0
      %v1663 = vsel %vm1332, %v738, 0.0
      %v1664 = vsel %vm1333, %v740, 0.0
      %v1665 = vsel %vm1334, %v742, 0.0
      %v1666 = vsel %vm1335, %v744, 0.0
      %v1667 = vsel %vm1336, %v746, 0.0
      %v1668 = vsel %vm1337, %v748, 0.0
      %v1669 = vsel %vm1338, %v750, 0.0
      %v1670 = vsel %vm1339, %v794, 0.0
      %v1671 = vsel %vm1340, %v788, 0.0
      %v1673 = vrot.slane %v788, 2
      %v1674 = vsel %vm1439, %v1604, %v1673
      %v1675 = vrot.slane %v795, 2
      %v1676 = vsel %vm1439, %v1673, %v1675
      %v1679 = vsel %vm1405, %v1450, 0.0
      %v1680 = vsel %vm1406, %v1452, 0.0
      %v1681 = vsel %vm1407, %v1454, 0.0
      %v1682 = vsel %vm1408, %v1456, 0.0
      %v1683 = vsel %vm1409, %v1458, 0.0
      %v1684 = vsel %vm1410, %v1460, 0.0
      %v1685 = vsel %vm1411, %v1462, 0.0
      %v1686 = vsel %vm1412, %v1464, 0.0
      %v1687 = vsel %vm1413, %v1466, 0.0
      %v1688 = vsel %vm1414, %v1468, 0.0
      %v1689 = vsel %vm1415, %v1470, 0.0
      %v1690 = vsel %vm1416, %v1472, 0.0
      %v1691 = vsel %vm1417, %v1474, 0.0
      %v1692 = vsel %vm1418, %v1476, 0.0
      %v1693 = vsel %vm1419, %v1478, 0.0
      %v1694 = vsel %vm1420, %v1480, 0.0
      %v1695 = vsel %vm1421, %v1482, 0.0
      %v1696 = vsel %vm1422, %v1484, 0.0
      %v1697 = vsel %vm1423, %v1486, 0.0
      %v1698 = vsel %vm1424, %v1488, 0.0
      %v1699 = vsel %vm1425, %v1490, 0.0
      %v1700 = vsel %vm1426, %v1492, 0.0
      %v1701 = vsel %vm1427, %v1494, 0.0
      %v1702 = vsel %vm1428, %v1496, 0.0
      %v1703 = vsel %vm1429, %v1498, 0.0
      %v1704 = vsel %vm1430, %v1500, 0.0
      %v1705 = vsel %vm1431, %v1502, 0.0
      %v1706 = vsel %vm1432, %v1504, 0.0
      %v1707 = vsel %vm1433, %v1603, 0.0
      %v1708 = vsel %vm1434, %v1605, 0.0
      %v1709 = vsel %vm1435, %v1674, 0.0
      %v1710 = vsel %vm1436, %v1676, 0.0
      %vm1711 = vcmask 1046528
      %v1712 = vrot.slane %v792, 1
      %v1713 = vrot.slane %v652, 1
      %v1714 = vsel %vm1711, %v1712, %v1713
      %v1715 = vrot.slane %v793, 1
      %v1716 = vsel %vm1711, %v1713, %v1715
      %v1717 = vrot.slane %v690, 1
      %v1718 = vsel %vm1711, %v1715, %v1717
      %v1719 = vrot.slane %v692, 1
      %v1720 = vsel %vm1711, %v1717, %v1719
      %v1721 = vrot.slane %v694, 1
      %v1722 = vsel %vm1711, %v1719, %v1721
      %v1723 = vrot.slane %v696, 1
      %v1724 = vsel %vm1711, %v1721, %v1723
      %v1725 = vrot.slane %v698, 1
      %v1726 = vsel %vm1711, %v1723, %v1725
      %v1727 = vrot.slane %v700, 1
      %v1728 = vsel %vm1711, %v1725, %v1727
      %v1729 = vrot.slane %v702, 1
      %v1730 = vsel %vm1711, %v1727, %v1729
      %v1731 = vrot.slane %v704, 1
      %v1732 = vsel %vm1711, %v1729, %v1731
      %v1733 = vrot.slane %v706, 1
      %v1734 = vsel %vm1711, %v1731, %v1733
      %v1735 = vrot.slane %v708, 1
      %v1736 = vsel %vm1711, %v1733, %v1735
      %v1737 = vrot.slane %v710, 1
      %v1738 = vsel %vm1711, %v1735, %v1737
      %v1739 = vrot.slane %v712, 1
      %v1740 = vsel %vm1711, %v1737, %v1739
      %v1741 = vrot.slane %v714, 1
      %v1742 = vsel %vm1711, %v1739, %v1741
      %v1743 = vrot.slane %v716, 1
      %v1744 = vsel %vm1711, %v1741, %v1743
      %v1745 = vrot.slane %v718, 1
      %v1746 = vsel %vm1711, %v1743, %v1745
      %v1747 = vrot.slane %v720, 1
      %v1748 = vsel %vm1711, %v1745, %v1747
      %v1749 = vrot.slane %v722, 1
      %v1750 = vsel %vm1711, %v1747, %v1749
      %v1751 = vrot.slane %v724, 1
      %v1752 = vsel %vm1711, %v1749, %v1751
      %v1753 = vrot.slane %v726, 1
      %v1754 = vsel %vm1711, %v1751, %v1753
      %v1755 = vrot.slane %v728, 1
      %v1756 = vsel %vm1711, %v1753, %v1755
      %v1757 = vrot.slane %v730, 1
      %v1758 = vsel %vm1711, %v1755, %v1757
      %v1759 = vrot.slane %v732, 1
      %v1760 = vsel %vm1711, %v1757, %v1759
      %v1761 = vrot.slane %v734, 1
      %v1762 = vsel %vm1711, %v1759, %v1761
      %v1763 = vrot.slane %v736, 1
      %v1764 = vsel %vm1711, %v1761, %v1763
      %v1765 = vrot.slane %v738, 1
      %v1766 = vsel %vm1711, %v1763, %v1765
      %v1767 = vrot.slane %v740, 1
      %v1768 = vsel %vm1711, %v1765, %v1767
      %v1769 = vrot.slane %v742, 1
      %v1770 = vsel %vm1711, %v1767, %v1769
      %v1771 = vrot.slane %v744, 1
      %v1772 = vsel %vm1711, %v1769, %v1771
      %v1773 = vrot.slane %v746, 1
      %v1774 = vsel %vm1711, %v1771, %v1773
      %v1775 = vrot.slane %v748, 1
      %v1776 = vsel %vm1711, %v1773, %v1775
      %1777 = vrot.lane.b32.xlu0 %v1714, 8
      %v1778 = vpop.permute.xlu0 %1777
      %1779 = vrot.lane.b32.xlu0 %v1716, 8
      %v1780 = vpop.permute.xlu0 %1779
      %1781 = vrot.lane.b32.xlu0 %v1718, 8
      %v1782 = vpop.permute.xlu0 %1781
      %1783 = vrot.lane.b32.xlu0 %v1720, 8
      %v1784 = vpop.permute.xlu0 %1783
      %1785 = vrot.lane.b32.xlu0 %v1722, 8
      %v1786 = vpop.permute.xlu0 %1785
      %1787 = vrot.lane.b32.xlu0 %v1724, 8
      %v1788 = vpop.permute.xlu0 %1787
      %1789 = vrot.lane.b32.xlu0 %v1726, 8
      %v1790 = vpop.permute.xlu0 %1789
      %1791 = vrot.lane.b32.xlu0 %v1728, 8
      %v1792 = vpop.permute.xlu0 %1791
      %1793 = vrot.lane.b32.xlu0 %v1730, 8
      %v1794 = vpop.permute.xlu0 %1793
      %1795 = vrot.lane.b32.xlu0 %v1732, 8
      %v1796 = vpop.permute.xlu0 %1795
      %1797 = vrot.lane.b32.xlu0 %v1734, 8
      %v1798 = vpop.permute.xlu0 %1797
      %1799 = vrot.lane.b32.xlu0 %v1736, 8
      %v1800 = vpop.permute.xlu0 %1799
      %1801 = vrot.lane.b32.xlu0 %v1738, 8
      %v1802 = vpop.permute.xlu0 %1801
      %1803 = vrot.lane.b32.xlu0 %v1740, 8
      %v1804 = vpop.permute.xlu0 %1803
      %1805 = vrot.lane.b32.xlu0 %v1742, 8
      %v1806 = vpop.permute.xlu0 %1805
      %1807 = vrot.lane.b32.xlu0 %v1744, 8
      %v1808 = vpop.permute.xlu0 %1807
      %1809 = vrot.lane.b32.xlu0 %v1746, 8
      %v1810 = vpop.permute.xlu0 %1809
      %1811 = vrot.lane.b32.xlu0 %v1748, 8
      %v1812 = vpop.permute.xlu0 %1811
      %1813 = vrot.lane.b32.xlu0 %v1750, 8
      %v1814 = vpop.permute.xlu0 %1813
      %1815 = vrot.lane.b32.xlu0 %v1752, 8
      %v1816 = vpop.permute.xlu0 %1815
      %1817 = vrot.lane.b32.xlu0 %v1754, 8
      %v1818 = vpop.permute.xlu0 %1817
      %1819 = vrot.lane.b32.xlu0 %v1756, 8
      %v1820 = vpop.permute.xlu0 %1819
      %1821 = vrot.lane.b32.xlu0 %v1758, 8
      %v1822 = vpop.permute.xlu0 %1821
      %1823 = vrot.lane.b32.xlu0 %v1760, 8
      %v1824 = vpop.permute.xlu0 %1823
      %1825 = vrot.lane.b32.xlu0 %v1762, 8
      %v1826 = vpop.permute.xlu0 %1825
      %1827 = vrot.lane.b32.xlu0 %v1764, 8
      %v1828 = vpop.permute.xlu0 %1827
      %1829 = vrot.lane.b32.xlu0 %v1766, 8
      %v1830 = vpop.permute.xlu0 %1829
      %1831 = vrot.lane.b32.xlu0 %v1768, 8
      %v1832 = vpop.permute.xlu0 %1831
      %1833 = vrot.lane.b32.xlu0 %v1770, 8
      %v1834 = vpop.permute.xlu0 %1833
      %1835 = vrot.lane.b32.xlu0 %v1772, 8
      %v1836 = vpop.permute.xlu0 %1835
      %1837 = vrot.lane.b32.xlu0 %v1774, 8
      %v1838 = vpop.permute.xlu0 %1837
      %1839 = vrot.lane.b32.xlu0 %v1776, 8
      %v1840 = vpop.permute.xlu0 %1839
      %1905 = vrot.lane.b32.xlu0 %v1537, 16
      %v1906 = vpop.permute.xlu0 %1905
      %1907 = vrot.lane.b32.xlu0 %v1538, 16
      %v1908 = vpop.permute.xlu0 %1907
      %1909 = vrot.lane.b32.xlu0 %v1539, 16
      %v1910 = vpop.permute.xlu0 %1909
      %1911 = vrot.lane.b32.xlu0 %v1540, 16
      %v1912 = vpop.permute.xlu0 %1911
      %1913 = vrot.lane.b32.xlu0 %v1541, 16
      %v1914 = vpop.permute.xlu0 %1913
      %1915 = vrot.lane.b32.xlu0 %v1542, 16
      %v1916 = vpop.permute.xlu0 %1915
      %1917 = vrot.lane.b32.xlu0 %v1543, 16
      %v1918 = vpop.permute.xlu0 %1917
      %1919 = vrot.lane.b32.xlu0 %v1544, 16
      %v1920 = vpop.permute.xlu0 %1919
      %1921 = vrot.lane.b32.xlu0 %v1545, 16
      %v1922 = vpop.permute.xlu0 %1921
      %1923 = vrot.lane.b32.xlu0 %v1546, 16
      %v1924 = vpop.permute.xlu0 %1923
      %1925 = vrot.lane.b32.xlu0 %v1547, 16
      %v1926 = vpop.permute.xlu0 %1925
      %1927 = vrot.lane.b32.xlu0 %v1548, 16
      %v1928 = vpop.permute.xlu0 %1927
      %1929 = vrot.lane.b32.xlu0 %v1549, 16
      %v1930 = vpop.permute.xlu0 %1929
      %1931 = vrot.lane.b32.xlu0 %v1550, 16
      %v1932 = vpop.permute.xlu0 %1931
      %1933 = vrot.lane.b32.xlu0 %v1551, 16
      %v1934 = vpop.permute.xlu0 %1933
      %1935 = vrot.lane.b32.xlu0 %v1552, 16
      %v1936 = vpop.permute.xlu0 %1935
      %1937 = vrot.lane.b32.xlu0 %v1553, 16
      %v1938 = vpop.permute.xlu0 %1937
      %1939 = vrot.lane.b32.xlu0 %v1554, 16
      %v1940 = vpop.permute.xlu0 %1939
      %1941 = vrot.lane.b32.xlu0 %v1555, 16
      %v1942 = vpop.permute.xlu0 %1941
      %1943 = vrot.lane.b32.xlu0 %v1556, 16
      %v1944 = vpop.permute.xlu0 %1943
      %1945 = vrot.lane.b32.xlu0 %v1557, 16
      %v1946 = vpop.permute.xlu0 %1945
      %1947 = vrot.lane.b32.xlu0 %v1558, 16
      %v1948 = vpop.permute.xlu0 %1947
      %1949 = vrot.lane.b32.xlu0 %v1559, 16
      %v1950 = vpop.permute.xlu0 %1949
      %1951 = vrot.lane.b32.xlu0 %v1560, 16
      %v1952 = vpop.permute.xlu0 %1951
      %1953 = vrot.lane.b32.xlu0 %v1561, 16
      %v1954 = vpop.permute.xlu0 %1953
      %1955 = vrot.lane.b32.xlu0 %v1562, 16
      %v1956 = vpop.permute.xlu0 %1955
      %1957 = vrot.lane.b32.xlu0 %v1563, 16
      %v1958 = vpop.permute.xlu0 %1957
      %1959 = vrot.lane.b32.xlu0 %v1564, 16
      %v1960 = vpop.permute.xlu0 %1959
      %1961 = vrot.lane.b32.xlu0 %v1565, 16
      %v1962 = vpop.permute.xlu0 %1961
      %1963 = vrot.lane.b32.xlu0 %v1566, 16
      %v1964 = vpop.permute.xlu0 %1963
      %1965 = vrot.lane.b32.xlu0 %v1567, 16
      %v1966 = vpop.permute.xlu0 %1965
      %1967 = vrot.lane.b32.xlu0 %v1568, 16
      %v1968 = vpop.permute.xlu0 %1967
      %2033 = vrot.lane.b32.xlu0 %v1569, 24
      %v2034 = vpop.permute.xlu0 %2033
      %2035 = vrot.lane.b32.xlu0 %v1570, 24
      %v2036 = vpop.permute.xlu0 %2035
      %2037 = vrot.lane.b32.xlu0 %v1571, 24
      %v2038 = vpop.permute.xlu0 %2037
      %2039 = vrot.lane.b32.xlu0 %v1572, 24
      %v2040 = vpop.permute.xlu0 %2039
      %2041 = vrot.lane.b32.xlu0 %v1573, 24
      %v2042 = vpop.permute.xlu0 %2041
      %2043 = vrot.lane.b32.xlu0 %v1574, 24
      %v2044 = vpop.permute.xlu0 %2043
      %2045 = vrot.lane.b32.xlu0 %v1575, 24
      %v2046 = vpop.permute.xlu0 %2045
      %2047 = vrot.lane.b32.xlu0 %v1576, 24
      %v2048 = vpop.permute.xlu0 %2047
      %2049 = vrot.lane.b32.xlu0 %v1577, 24
      %v2050 = vpop.permute.xlu0 %2049
      %2051 = vrot.lane.b32.xlu0 %v1578, 24
      %v2052 = vpop.permute.xlu0 %2051
      %2053 = vrot.lane.b32.xlu0 %v1579, 24
      %v2054 = vpop.permute.xlu0 %2053
      %2055 = vrot.lane.b32.xlu0 %v1580, 24
      %v2056 = vpop.permute.xlu0 %2055
      %2057 = vrot.lane.b32.xlu0 %v1581, 24
      %v2058 = vpop.permute.xlu0 %2057
      %2059 = vrot.lane.b32.xlu0 %v1582, 24
      %v2060 = vpop.permute.xlu0 %2059
      %2061 = vrot.lane.b32.xlu0 %v1583, 24
      %v2062 = vpop.permute.xlu0 %2061
      %2063 = vrot.lane.b32.xlu0 %v1584, 24
      %v2064 = vpop.permute.xlu0 %2063
      %2065 = vrot.lane.b32.xlu0 %v1585, 24
      %v2066 = vpop.permute.xlu0 %2065
      %2067 = vrot.lane.b32.xlu0 %v1586, 24
      %v2068 = vpop.permute.xlu0 %2067
      %2069 = vrot.lane.b32.xlu0 %v1587, 24
      %v2070 = vpop.permute.xlu0 %2069
      %2071 = vrot.lane.b32.xlu0 %v1588, 24
      %v2072 = vpop.permute.xlu0 %2071
      %2073 = vrot.lane.b32.xlu0 %v1589, 24
      %v2074 = vpop.permute.xlu0 %2073
      %2075 = vrot.lane.b32.xlu0 %v1590, 24
      %v2076 = vpop.permute.xlu0 %2075
      %2077 = vrot.lane.b32.xlu0 %v1591, 24
      %v2078 = vpop.permute.xlu0 %2077
      %2079 = vrot.lane.b32.xlu0 %v1592, 24
      %v2080 = vpop.permute.xlu0 %2079
      %2081 = vrot.lane.b32.xlu0 %v1593, 24
      %v2082 = vpop.permute.xlu0 %2081
      %2083 = vrot.lane.b32.xlu0 %v1594, 24
      %v2084 = vpop.permute.xlu0 %2083
      %2085 = vrot.lane.b32.xlu0 %v1595, 24
      %v2086 = vpop.permute.xlu0 %2085
      %2087 = vrot.lane.b32.xlu0 %v1596, 24
      %v2088 = vpop.permute.xlu0 %2087
      %2089 = vrot.lane.b32.xlu0 %v1597, 24
      %v2090 = vpop.permute.xlu0 %2089
      %2091 = vrot.lane.b32.xlu0 %v1598, 24
      %v2092 = vpop.permute.xlu0 %2091
      %2093 = vrot.lane.b32.xlu0 %v1599, 24
      %v2094 = vpop.permute.xlu0 %2093
      %2095 = vrot.lane.b32.xlu0 %v1600, 24
      %v2096 = vpop.permute.xlu0 %2095
      %v2129 = vrot.slane %v750, 1
      %v2130 = vsel %vm1711, %v1775, %v2129
      %v2131 = vrot.slane %v794, 1
      %v2132 = vsel %vm1711, %v2129, %v2131
      %2133 = vrot.lane.b32.xlu0 %v1718, 32
      %v2134 = vpop.permute.xlu0 %2133
      %2135 = vrot.lane.b32.xlu0 %v1720, 32
      %v2136 = vpop.permute.xlu0 %2135
      %2137 = vrot.lane.b32.xlu0 %v1722, 32
      %v2138 = vpop.permute.xlu0 %2137
      %2139 = vrot.lane.b32.xlu0 %v1724, 32
      %v2140 = vpop.permute.xlu0 %2139
      %2141 = vrot.lane.b32.xlu0 %v1726, 32
      %v2142 = vpop.permute.xlu0 %2141
      %2143 = vrot.lane.b32.xlu0 %v1728, 32
      %v2144 = vpop.permute.xlu0 %2143
      %2145 = vrot.lane.b32.xlu0 %v1730, 32
      %v2146 = vpop.permute.xlu0 %2145
      %2147 = vrot.lane.b32.xlu0 %v1732, 32
      %v2148 = vpop.permute.xlu0 %2147
      %2149 = vrot.lane.b32.xlu0 %v1734, 32
      %v2150 = vpop.permute.xlu0 %2149
      %2151 = vrot.lane.b32.xlu0 %v1736, 32
      %v2152 = vpop.permute.xlu0 %2151
      %2153 = vrot.lane.b32.xlu0 %v1738, 32
      %v2154 = vpop.permute.xlu0 %2153
      %2155 = vrot.lane.b32.xlu0 %v1740, 32
      %v2156 = vpop.permute.xlu0 %2155
      %2157 = vrot.lane.b32.xlu0 %v1742, 32
      %v2158 = vpop.permute.xlu0 %2157
      %2159 = vrot.lane.b32.xlu0 %v1744, 32
      %v2160 = vpop.permute.xlu0 %2159
      %2161 = vrot.lane.b32.xlu0 %v1746, 32
      %v2162 = vpop.permute.xlu0 %2161
      %2163 = vrot.lane.b32.xlu0 %v1748, 32
      %v2164 = vpop.permute.xlu0 %2163
      %2165 = vrot.lane.b32.xlu0 %v1750, 32
      %v2166 = vpop.permute.xlu0 %2165
      %2167 = vrot.lane.b32.xlu0 %v1752, 32
      %v2168 = vpop.permute.xlu0 %2167
      %2169 = vrot.lane.b32.xlu0 %v1754, 32
      %v2170 = vpop.permute.xlu0 %2169
      %2171 = vrot.lane.b32.xlu0 %v1756, 32
      %v2172 = vpop.permute.xlu0 %2171
      %2173 = vrot.lane.b32.xlu0 %v1758, 32
      %v2174 = vpop.permute.xlu0 %2173
      %2175 = vrot.lane.b32.xlu0 %v1760, 32
      %v2176 = vpop.permute.xlu0 %2175
      %2177 = vrot.lane.b32.xlu0 %v1762, 32
      %v2178 = vpop.permute.xlu0 %2177
      %2179 = vrot.lane.b32.xlu0 %v1764, 32
      %v2180 = vpop.permute.xlu0 %2179
      %2181 = vrot.lane.b32.xlu0 %v1766, 32
      %v2182 = vpop.permute.xlu0 %2181
      %2183 = vrot.lane.b32.xlu0 %v1768, 32
      %v2184 = vpop.permute.xlu0 %2183
      %2185 = vrot.lane.b32.xlu0 %v1770, 32
      %v2186 = vpop.permute.xlu0 %2185
      %2187 = vrot.lane.b32.xlu0 %v1772, 32
      %v2188 = vpop.permute.xlu0 %2187
      %2189 = vrot.lane.b32.xlu0 %v1774, 32
      %v2190 = vpop.permute.xlu0 %2189
      %2191 = vrot.lane.b32.xlu0 %v1776, 32
      %v2192 = vpop.permute.xlu0 %2191
      %2193 = vrot.lane.b32.xlu0 %v2130, 32
      %v2194 = vpop.permute.xlu0 %2193
      %2195 = vrot.lane.b32.xlu0 %v2132, 32
      %v2196 = vpop.permute.xlu0 %2195
      %2261 = vrot.lane.b32.xlu0 %v1608, 40
      %v2262 = vpop.permute.xlu0 %2261
      %2263 = vrot.lane.b32.xlu0 %v1609, 40
      %v2264 = vpop.permute.xlu0 %2263
      %2265 = vrot.lane.b32.xlu0 %v1610, 40
      %v2266 = vpop.permute.xlu0 %2265
      %2267 = vrot.lane.b32.xlu0 %v1611, 40
      %v2268 = vpop.permute.xlu0 %2267
      %2269 = vrot.lane.b32.xlu0 %v1612, 40
      %v2270 = vpop.permute.xlu0 %2269
      %2271 = vrot.lane.b32.xlu0 %v1613, 40
      %v2272 = vpop.permute.xlu0 %2271
      %2273 = vrot.lane.b32.xlu0 %v1614, 40
      %v2274 = vpop.permute.xlu0 %2273
      %2275 = vrot.lane.b32.xlu0 %v1615, 40
      %v2276 = vpop.permute.xlu0 %2275
      %2277 = vrot.lane.b32.xlu0 %v1616, 40
      %v2278 = vpop.permute.xlu0 %2277
      %2279 = vrot.lane.b32.xlu0 %v1617, 40
      %v2280 = vpop.permute.xlu0 %2279
      %2281 = vrot.lane.b32.xlu0 %v1618, 40
      %v2282 = vpop.permute.xlu0 %2281
      %2283 = vrot.lane.b32.xlu0 %v1619, 40
      %v2284 = vpop.permute.xlu0 %2283
      %2285 = vrot.lane.b32.xlu0 %v1620, 40
      %v2286 = vpop.permute.xlu0 %2285
      %2287 = vrot.lane.b32.xlu0 %v1621, 40
      %v2288 = vpop.permute.xlu0 %2287
      %2289 = vrot.lane.b32.xlu0 %v1622, 40
      %v2290 = vpop.permute.xlu0 %2289
      %2291 = vrot.lane.b32.xlu0 %v1623, 40
      %v2292 = vpop.permute.xlu0 %2291
      %2293 = vrot.lane.b32.xlu0 %v1624, 40
      %v2294 = vpop.permute.xlu0 %2293
      %2295 = vrot.lane.b32.xlu0 %v1625, 40
      %v2296 = vpop.permute.xlu0 %2295
      %2297 = vrot.lane.b32.xlu0 %v1626, 40
      %v2298 = vpop.permute.xlu0 %2297
      %2299 = vrot.lane.b32.xlu0 %v1627, 40
      %v2300 = vpop.permute.xlu0 %2299
      %2301 = vrot.lane.b32.xlu0 %v1628, 40
      %v2302 = vpop.permute.xlu0 %2301
      %2303 = vrot.lane.b32.xlu0 %v1629, 40
      %v2304 = vpop.permute.xlu0 %2303
      %2305 = vrot.lane.b32.xlu0 %v1630, 40
      %v2306 = vpop.permute.xlu0 %2305
      %2307 = vrot.lane.b32.xlu0 %v1631, 40
      %v2308 = vpop.permute.xlu0 %2307
      %2309 = vrot.lane.b32.xlu0 %v1632, 40
      %v2310 = vpop.permute.xlu0 %2309
      %2311 = vrot.lane.b32.xlu0 %v1633, 40
      %v2312 = vpop.permute.xlu0 %2311
      %2313 = vrot.lane.b32.xlu0 %v1634, 40
      %v2314 = vpop.permute.xlu0 %2313
      %2315 = vrot.lane.b32.xlu0 %v1635, 40
      %v2316 = vpop.permute.xlu0 %2315
      %2317 = vrot.lane.b32.xlu0 %v1636, 40
      %v2318 = vpop.permute.xlu0 %2317
      %2319 = vrot.lane.b32.xlu0 %v1637, 40
      %v2320 = vpop.permute.xlu0 %2319
      %2321 = vrot.lane.b32.xlu0 %v1638, 40
      %v2322 = vpop.permute.xlu0 %2321
      %2323 = vrot.lane.b32.xlu0 %v1639, 40
      %v2324 = vpop.permute.xlu0 %2323
      %2389 = vrot.lane.b32.xlu0 %v1640, 48
      %v2390 = vpop.permute.xlu0 %2389
      %2391 = vrot.lane.b32.xlu0 %v1641, 48
      %v2392 = vpop.permute.xlu0 %2391
      %2393 = vrot.lane.b32.xlu0 %v1642, 48
      %v2394 = vpop.permute.xlu0 %2393
      %2395 = vrot.lane.b32.xlu0 %v1643, 48
      %v2396 = vpop.permute.xlu0 %2395
      %2397 = vrot.lane.b32.xlu0 %v1644, 48
      %v2398 = vpop.permute.xlu0 %2397
      %2399 = vrot.lane.b32.xlu0 %v1645, 48
      %v2400 = vpop.permute.xlu0 %2399
      %2401 = vrot.lane.b32.xlu0 %v1646, 48
      %v2402 = vpop.permute.xlu0 %2401
      %2403 = vrot.lane.b32.xlu0 %v1647, 48
      %v2404 = vpop.permute.xlu0 %2403
      %2405 = vrot.lane.b32.xlu0 %v1648, 48
      %v2406 = vpop.permute.xlu0 %2405
      %2407 = vrot.lane.b32.xlu0 %v1649, 48
      %v2408 = vpop.permute.xlu0 %2407
      %2409 = vrot.lane.b32.xlu0 %v1650, 48
      %v2410 = vpop.permute.xlu0 %2409
      %2411 = vrot.lane.b32.xlu0 %v1651, 48
      %v2412 = vpop.permute.xlu0 %2411
      %2413 = vrot.lane.b32.xlu0 %v1652, 48
      %v2414 = vpop.permute.xlu0 %2413
      %2415 = vrot.lane.b32.xlu0 %v1653, 48
      %v2416 = vpop.permute.xlu0 %2415
      %2417 = vrot.lane.b32.xlu0 %v1654, 48
      %v2418 = vpop.permute.xlu0 %2417
      %2419 = vrot.lane.b32.xlu0 %v1655, 48
      %v2420 = vpop.permute.xlu0 %2419
      %2421 = vrot.lane.b32.xlu0 %v1656, 48
      %v2422 = vpop.permute.xlu0 %2421
      %2423 = vrot.lane.b32.xlu0 %v1657, 48
      %v2424 = vpop.permute.xlu0 %2423
      %2425 = vrot.lane.b32.xlu0 %v1658, 48
      %v2426 = vpop.permute.xlu0 %2425
      %2427 = vrot.lane.b32.xlu0 %v1659, 48
      %v2428 = vpop.permute.xlu0 %2427
      %2429 = vrot.lane.b32.xlu0 %v1660, 48
      %v2430 = vpop.permute.xlu0 %2429
      %2431 = vrot.lane.b32.xlu0 %v1661, 48
      %v2432 = vpop.permute.xlu0 %2431
      %2433 = vrot.lane.b32.xlu0 %v1662, 48
      %v2434 = vpop.permute.xlu0 %2433
      %2435 = vrot.lane.b32.xlu0 %v1663, 48
      %v2436 = vpop.permute.xlu0 %2435
      %2437 = vrot.lane.b32.xlu0 %v1664, 48
      %v2438 = vpop.permute.xlu0 %2437
      %2439 = vrot.lane.b32.xlu0 %v1665, 48
      %v2440 = vpop.permute.xlu0 %2439
      %2441 = vrot.lane.b32.xlu0 %v1666, 48
      %v2442 = vpop.permute.xlu0 %2441
      %2443 = vrot.lane.b32.xlu0 %v1667, 48
      %v2444 = vpop.permute.xlu0 %2443
      %2445 = vrot.lane.b32.xlu0 %v1668, 48
      %v2446 = vpop.permute.xlu0 %2445
      %2447 = vrot.lane.b32.xlu0 %v1669, 48
      %v2448 = vpop.permute.xlu0 %2447
      %2449 = vrot.lane.b32.xlu0 %v1670, 48
      %v2450 = vpop.permute.xlu0 %2449
      %2451 = vrot.lane.b32.xlu0 %v1671, 48
      %v2452 = vpop.permute.xlu0 %2451
      %v2485 = vrot.slane %v788, 1
      %v2486 = vsel %vm1711, %v2131, %v2485
      %v2487 = vrot.slane %v795, 1
      %v2488 = vsel %vm1711, %v2485, %v2487
      %2489 = vrot.lane.b32.xlu0 %v1722, 56
      %v2490 = vpop.permute.xlu0 %2489
      %2491 = vrot.lane.b32.xlu0 %v1724, 56
      %v2492 = vpop.permute.xlu0 %2491
      %2493 = vrot.lane.b32.xlu0 %v1726, 56
      %v2494 = vpop.permute.xlu0 %2493
      %2495 = vrot.lane.b32.xlu0 %v1728, 56
      %v2496 = vpop.permute.xlu0 %2495
      %2497 = vrot.lane.b32.xlu0 %v1730, 56
      %v2498 = vpop.permute.xlu0 %2497
      %2499 = vrot.lane.b32.xlu0 %v1732, 56
      %v2500 = vpop.permute.xlu0 %2499
      %2501 = vrot.lane.b32.xlu0 %v1734, 56
      %v2502 = vpop.permute.xlu0 %2501
      %2503 = vrot.lane.b32.xlu0 %v1736, 56
      %v2504 = vpop.permute.xlu0 %2503
      %2505 = vrot.lane.b32.xlu0 %v1738, 56
      %v2506 = vpop.permute.xlu0 %2505
      %2507 = vrot.lane.b32.xlu0 %v1740, 56
      %v2508 = vpop.permute.xlu0 %2507
      %2509 = vrot.lane.b32.xlu0 %v1742, 56
      %v2510 = vpop.permute.xlu0 %2509
      %2511 = vrot.lane.b32.xlu0 %v1744, 56
      %v2512 = vpop.permute.xlu0 %2511
      %2513 = vrot.lane.b32.xlu0 %v1746, 56
      %v2514 = vpop.permute.xlu0 %2513
      %2515 = vrot.lane.b32.xlu0 %v1748, 56
      %v2516 = vpop.permute.xlu0 %2515
      %2517 = vrot.lane.b32.xlu0 %v1750, 56
      %v2518 = vpop.permute.xlu0 %2517
      %2519 = vrot.lane.b32.xlu0 %v1752, 56
      %v2520 = vpop.permute.xlu0 %2519
      %2521 = vrot.lane.b32.xlu0 %v1754, 56
      %v2522 = vpop.permute.xlu0 %2521
      %2523 = vrot.lane.b32.xlu0 %v1756, 56
      %v2524 = vpop.permute.xlu0 %2523
      %2525 = vrot.lane.b32.xlu0 %v1758, 56
      %v2526 = vpop.permute.xlu0 %2525
      %2527 = vrot.lane.b32.xlu0 %v1760, 56
      %v2528 = vpop.permute.xlu0 %2527
      %2529 = vrot.lane.b32.xlu0 %v1762, 56
      %v2530 = vpop.permute.xlu0 %2529
      %2531 = vrot.lane.b32.xlu0 %v1764, 56
      %v2532 = vpop.permute.xlu0 %2531
      %2533 = vrot.lane.b32.xlu0 %v1766, 56
      %v2534 = vpop.permute.xlu0 %2533
      %2535 = vrot.lane.b32.xlu0 %v1768, 56
      %v2536 = vpop.permute.xlu0 %2535
      %2537 = vrot.lane.b32.xlu0 %v1770, 56
      %v2538 = vpop.permute.xlu0 %2537
      %2539 = vrot.lane.b32.xlu0 %v1772, 56
      %v2540 = vpop.permute.xlu0 %2539
      %2541 = vrot.lane.b32.xlu0 %v1774, 56
      %v2542 = vpop.permute.xlu0 %2541
      %2543 = vrot.lane.b32.xlu0 %v1776, 56
      %v2544 = vpop.permute.xlu0 %2543
      %2545 = vrot.lane.b32.xlu0 %v2130, 56
      %v2546 = vpop.permute.xlu0 %2545
      %2547 = vrot.lane.b32.xlu0 %v2132, 56
      %v2548 = vpop.permute.xlu0 %2547
      %2549 = vrot.lane.b32.xlu0 %v2486, 56
      %v2550 = vpop.permute.xlu0 %2549
      %2551 = vrot.lane.b32.xlu0 %v2488, 56
      %v2552 = vpop.permute.xlu0 %2551
      %2617 = vrot.lane.b32.xlu0 %v1679, 64
      %v2618 = vpop.permute.xlu0 %2617
      %2619 = vrot.lane.b32.xlu0 %v1680, 64
      %v2620 = vpop.permute.xlu0 %2619
      %2621 = vrot.lane.b32.xlu0 %v1681, 64
      %v2622 = vpop.permute.xlu0 %2621
      %2623 = vrot.lane.b32.xlu0 %v1682, 64
      %v2624 = vpop.permute.xlu0 %2623
      %2625 = vrot.lane.b32.xlu0 %v1683, 64
      %v2626 = vpop.permute.xlu0 %2625
      %2627 = vrot.lane.b32.xlu0 %v1684, 64
      %v2628 = vpop.permute.xlu0 %2627
      %2629 = vrot.lane.b32.xlu0 %v1685, 64
      %v2630 = vpop.permute.xlu0 %2629
      %2631 = vrot.lane.b32.xlu0 %v1686, 64
      %v2632 = vpop.permute.xlu0 %2631
      %2633 = vrot.lane.b32.xlu0 %v1687, 64
      %v2634 = vpop.permute.xlu0 %2633
      %2635 = vrot.lane.b32.xlu0 %v1688, 64
      %v2636 = vpop.permute.xlu0 %2635
      %2637 = vrot.lane.b32.xlu0 %v1689, 64
      %v2638 = vpop.permute.xlu0 %2637
      %2639 = vrot.lane.b32.xlu0 %v1690, 64
      %v2640 = vpop.permute.xlu0 %2639
      %2641 = vrot.lane.b32.xlu0 %v1691, 64
      %v2642 = vpop.permute.xlu0 %2641
      %2643 = vrot.lane.b32.xlu0 %v1692, 64
      %v2644 = vpop.permute.xlu0 %2643
      %2645 = vrot.lane.b32.xlu0 %v1693, 64
      %v2646 = vpop.permute.xlu0 %2645
      %2647 = vrot.lane.b32.xlu0 %v1694, 64
      %v2648 = vpop.permute.xlu0 %2647
      %2649 = vrot.lane.b32.xlu0 %v1695, 64
      %v2650 = vpop.permute.xlu0 %2649
      %2651 = vrot.lane.b32.xlu0 %v1696, 64
      %v2652 = vpop.permute.xlu0 %2651
      %2653 = vrot.lane.b32.xlu0 %v1697, 64
      %v2654 = vpop.permute.xlu0 %2653
      %2655 = vrot.lane.b32.xlu0 %v1698, 64
      %v2656 = vpop.permute.xlu0 %2655
      %2657 = vrot.lane.b32.xlu0 %v1699, 64
      %v2658 = vpop.permute.xlu0 %2657
      %2659 = vrot.lane.b32.xlu0 %v1700, 64
      %v2660 = vpop.permute.xlu0 %2659
      %2661 = vrot.lane.b32.xlu0 %v1701, 64
      %v2662 = vpop.permute.xlu0 %2661
      %2663 = vrot.lane.b32.xlu0 %v1702, 64
      %v2664 = vpop.permute.xlu0 %2663
      %2665 = vrot.lane.b32.xlu0 %v1703, 64
      %v2666 = vpop.permute.xlu0 %2665
      %2667 = vrot.lane.b32.xlu0 %v1704, 64
      %v2668 = vpop.permute.xlu0 %2667
      %2669 = vrot.lane.b32.xlu0 %v1705, 64
      %v2670 = vpop.permute.xlu0 %2669
      %2671 = vrot.lane.b32.xlu0 %v1706, 64
      %v2672 = vpop.permute.xlu0 %2671
      %2673 = vrot.lane.b32.xlu0 %v1707, 64
      %v2674 = vpop.permute.xlu0 %2673
      %2675 = vrot.lane.b32.xlu0 %v1708, 64
      %v2676 = vpop.permute.xlu0 %2675
      %2677 = vrot.lane.b32.xlu0 %v1709, 64
      %v2678 = vpop.permute.xlu0 %2677
      %2679 = vrot.lane.b32.xlu0 %v1710, 64
      %v2680 = vpop.permute.xlu0 %2679
      %vm2713 = vcmask 64512
      %v2714 = vsel %vm2713, %v1341, %v1778
      %v2715 = vsel %vm2713, %v1342, %v1780
      %v2716 = vsel %vm2713, %v1343, %v1782
      %v2717 = vsel %vm2713, %v1344, %v1784
      %v2718 = vsel %vm2713, %v1345, %v1786
      %v2719 = vsel %vm2713, %v1346, %v1788
      %v2720 = vsel %vm2713, %v1347, %v1790
      %v2721 = vsel %vm2713, %v1348, %v1792
      %v2722 = vsel %vm2713, %v1349, %v1794
      %v2723 = vsel %vm2713, %v1350, %v1796
      %v2724 = vsel %vm2713, %v1351, %v1798
      %v2725 = vsel %vm2713, %v1352, %v1800
      %v2726 = vsel %vm2713, %v1353, %v1802
      %v2727 = vsel %vm2713, %v1354, %v1804
      %v2728 = vsel %vm2713, %v1355, %v1806
      %v2729 = vsel %vm2713, %v1356, %v1808
      %v2730 = vsel %vm2713, %v1357, %v1810
      %v2731 = vsel %vm2713, %v1358, %v1812
      %v2732 = vsel %vm2713, %v1359, %v1814
      %v2733 = vsel %vm2713, %v1360, %v1816
      %v2734 = vsel %vm2713, %v1361, %v1818
      %v2735 = vsel %vm2713, %v1362, %v1820
      %v2736 = vsel %vm2713, %v1363, %v1822
      %v2737 = vsel %vm2713, %v1364, %v1824
      %v2738 = vsel %vm2713, %v1365, %v1826
      %v2739 = vsel %vm2713, %v1366, %v1828
      %v2740 = vsel %vm2713, %v1367, %v1830
      %v2741 = vsel %vm2713, %v1368, %v1832
      %v2742 = vsel %vm2713, %v1369, %v1834
      %v2743 = vsel %vm2713, %v1370, %v1836
      %v2744 = vsel %vm2713, %v1371, %v1838
      %v2745 = vsel %vm2713, %v1372, %v1840
      %vm2746 = vcmask 130048
      %v2747 = vsel %vm2746, %v2714, %v1906
      %v2748 = vsel %vm2746, %v2715, %v1908
      %v2749 = vsel %vm2746, %v2716, %v1910
      %v2750 = vsel %vm2746, %v2717, %v1912
      %v2751 = vsel %vm2746, %v2718, %v1914
      %v2752 = vsel %vm2746, %v2719, %v1916
      %v2753 = vsel %vm2746, %v2720, %v1918
      %v2754 = vsel %vm2746, %v2721, %v1920
      %v2755 = vsel %vm2746, %v2722, %v1922
      %v2756 = vsel %vm2746, %v2723, %v1924
      %v2757 = vsel %vm2746, %v2724, %v1926
      %v2758 = vsel %vm2746, %v2725, %v1928
      %v2759 = vsel %vm2746, %v2726, %v1930
      %v2760 = vsel %vm2746, %v2727, %v1932
      %v2761 = vsel %vm2746, %v2728, %v1934
      %v2762 = vsel %vm2746, %v2729, %v1936
      %v2763 = vsel %vm2746, %v2730, %v1938
      %v2764 = vsel %vm2746, %v2731, %v1940
      %v2765 = vsel %vm2746, %v2732, %v1942
      %v2766 = vsel %vm2746, %v2733, %v1944
      %v2767 = vsel %vm2746, %v2734, %v1946
      %v2768 = vsel %vm2746, %v2735, %v1948
      %v2769 = vsel %vm2746, %v2736, %v1950
      %v2770 = vsel %vm2746, %v2737, %v1952
      %v2771 = vsel %vm2746, %v2738, %v1954
      %v2772 = vsel %vm2746, %v2739, %v1956
      %v2773 = vsel %vm2746, %v2740, %v1958
      %v2774 = vsel %vm2746, %v2741, %v1960
      %v2775 = vsel %vm2746, %v2742, %v1962
      %v2776 = vsel %vm2746, %v2743, %v1964
      %v2777 = vsel %vm2746, %v2744, %v1966
      %v2778 = vsel %vm2746, %v2745, %v1968
      %vm2779 = vcmask 195584
      %v2780 = vsel %vm2779, %v2747, %v2034
      %v2781 = vsel %vm2779, %v2748, %v2036
      %v2782 = vsel %vm2779, %v2749, %v2038
      %v2783 = vsel %vm2779, %v2750, %v2040
      %v2784 = vsel %vm2779, %v2751, %v2042
      %v2785 = vsel %vm2779, %v2752, %v2044
      %v2786 = vsel %vm2779, %v2753, %v2046
      %v2787 = vsel %vm2779, %v2754, %v2048
      %v2788 = vsel %vm2779, %v2755, %v2050
      %v2789 = vsel %vm2779, %v2756, %v2052
      %v2790 = vsel %vm2779, %v2757, %v2054
      %v2791 = vsel %vm2779, %v2758, %v2056
      %v2792 = vsel %vm2779, %v2759, %v2058
      %v2793 = vsel %vm2779, %v2760, %v2060
      %v2794 = vsel %vm2779, %v2761, %v2062
      %v2795 = vsel %vm2779, %v2762, %v2064
      %v2796 = vsel %vm2779, %v2763, %v2066
      %v2797 = vsel %vm2779, %v2764, %v2068
      %v2798 = vsel %vm2779, %v2765, %v2070
      %v2799 = vsel %vm2779, %v2766, %v2072
      %v2800 = vsel %vm2779, %v2767, %v2074
      %v2801 = vsel %vm2779, %v2768, %v2076
      %v2802 = vsel %vm2779, %v2769, %v2078
      %v2803 = vsel %vm2779, %v2770, %v2080
      %v2804 = vsel %vm2779, %v2771, %v2082
      %v2805 = vsel %vm2779, %v2772, %v2084
      %v2806 = vsel %vm2779, %v2773, %v2086
      %v2807 = vsel %vm2779, %v2774, %v2088
      %v2808 = vsel %vm2779, %v2775, %v2090
      %v2809 = vsel %vm2779, %v2776, %v2092
      %v2810 = vsel %vm2779, %v2777, %v2094
      %v2811 = vsel %vm2779, %v2778, %v2096
      %vm2812 = vcmask 261120
      %v2813 = vsel %vm2812, %v2780, %v2134
      %v2814 = vsel %vm2812, %v2781, %v2136
      %v2815 = vsel %vm2812, %v2782, %v2138
      %v2816 = vsel %vm2812, %v2783, %v2140
      %v2817 = vsel %vm2812, %v2784, %v2142
      %v2818 = vsel %vm2812, %v2785, %v2144
      %v2819 = vsel %vm2812, %v2786, %v2146
      %v2820 = vsel %vm2812, %v2787, %v2148
      %v2821 = vsel %vm2812, %v2788, %v2150
      %v2822 = vsel %vm2812, %v2789, %v2152
      %v2823 = vsel %vm2812, %v2790, %v2154
      %v2824 = vsel %vm2812, %v2791, %v2156
      %v2825 = vsel %vm2812, %v2792, %v2158
      %v2826 = vsel %vm2812, %v2793, %v2160
      %v2827 = vsel %vm2812, %v2794, %v2162
      %v2828 = vsel %vm2812, %v2795, %v2164
      %v2829 = vsel %vm2812, %v2796, %v2166
      %v2830 = vsel %vm2812, %v2797, %v2168
      %v2831 = vsel %vm2812, %v2798, %v2170
      %v2832 = vsel %vm2812, %v2799, %v2172
      %v2833 = vsel %vm2812, %v2800, %v2174
      %v2834 = vsel %vm2812, %v2801, %v2176
      %v2835 = vsel %vm2812, %v2802, %v2178
      %v2836 = vsel %vm2812, %v2803, %v2180
      %v2837 = vsel %vm2812, %v2804, %v2182
      %v2838 = vsel %vm2812, %v2805, %v2184
      %v2839 = vsel %vm2812, %v2806, %v2186
      %v2840 = vsel %vm2812, %v2807, %v2188
      %v2841 = vsel %vm2812, %v2808, %v2190
      %v2842 = vsel %vm2812, %v2809, %v2192
      %v2843 = vsel %vm2812, %v2810, %v2194
      %v2844 = vsel %vm2812, %v2811, %v2196
      %vm2845 = vcmask 326656
      %v2846 = vsel %vm2845, %v2813, %v2262
      %v2847 = vsel %vm2845, %v2814, %v2264
      %v2848 = vsel %vm2845, %v2815, %v2266
      %v2849 = vsel %vm2845, %v2816, %v2268
      %v2850 = vsel %vm2845, %v2817, %v2270
      %v2851 = vsel %vm2845, %v2818, %v2272
      %v2852 = vsel %vm2845, %v2819, %v2274
      %v2853 = vsel %vm2845, %v2820, %v2276
      %v2854 = vsel %vm2845, %v2821, %v2278
      %v2855 = vsel %vm2845, %v2822, %v2280
      %v2856 = vsel %vm2845, %v2823, %v2282
      %v2857 = vsel %vm2845, %v2824, %v2284
      %v2858 = vsel %vm2845, %v2825, %v2286
      %v2859 = vsel %vm2845, %v2826, %v2288
      %v2860 = vsel %vm2845, %v2827, %v2290
      %v2861 = vsel %vm2845, %v2828, %v2292
      %v2862 = vsel %vm2845, %v2829, %v2294
      %v2863 = vsel %vm2845, %v2830, %v2296
      %v2864 = vsel %vm2845, %v2831, %v2298
      %v2865 = vsel %vm2845, %v2832, %v2300
      %v2866 = vsel %vm2845, %v2833, %v2302
      %v2867 = vsel %vm2845, %v2834, %v2304
      %v2868 = vsel %vm2845, %v2835, %v2306
      %v2869 = vsel %vm2845, %v2836, %v2308
      %v2870 = vsel %vm2845, %v2837, %v2310
      %v2871 = vsel %vm2845, %v2838, %v2312
      %v2872 = vsel %vm2845, %v2839, %v2314
      %v2873 = vsel %vm2845, %v2840, %v2316
      %v2874 = vsel %vm2845, %v2841, %v2318
      %v2875 = vsel %vm2845, %v2842, %v2320
      %v2876 = vsel %vm2845, %v2843, %v2322
      %v2877 = vsel %vm2845, %v2844, %v2324
      %vm2878 = vcmask 392192
      %v2879 = vsel %vm2878, %v2846, %v2390
      %v2880 = vsel %vm2878, %v2847, %v2392
      %v2881 = vsel %vm2878, %v2848, %v2394
      %v2882 = vsel %vm2878, %v2849, %v2396
      %v2883 = vsel %vm2878, %v2850, %v2398
      %v2884 = vsel %vm2878, %v2851, %v2400
      %v2885 = vsel %vm2878, %v2852, %v2402
      %v2886 = vsel %vm2878, %v2853, %v2404
      %v2887 = vsel %vm2878, %v2854, %v2406
      %v2888 = vsel %vm2878, %v2855, %v2408
      %v2889 = vsel %vm2878, %v2856, %v2410
      %v2890 = vsel %vm2878, %v2857, %v2412
      %v2891 = vsel %vm2878, %v2858, %v2414
      %v2892 = vsel %vm2878, %v2859, %v2416
      %v2893 = vsel %vm2878, %v2860, %v2418
      %v2894 = vsel %vm2878, %v2861, %v2420
      %v2895 = vsel %vm2878, %v2862, %v2422
      %v2896 = vsel %vm2878, %v2863, %v2424
      %v2897 = vsel %vm2878, %v2864, %v2426
      %v2898 = vsel %vm2878, %v2865, %v2428
      %v2899 = vsel %vm2878, %v2866, %v2430
      %v2900 = vsel %vm2878, %v2867, %v2432
      %v2901 = vsel %vm2878, %v2868, %v2434
      %v2902 = vsel %vm2878, %v2869, %v2436
      %v2903 = vsel %vm2878, %v2870, %v2438
      %v2904 = vsel %vm2878, %v2871, %v2440
      %v2905 = vsel %vm2878, %v2872, %v2442
      %v2906 = vsel %vm2878, %v2873, %v2444
      %v2907 = vsel %vm2878, %v2874, %v2446
      %v2908 = vsel %vm2878, %v2875, %v2448
      %v2909 = vsel %vm2878, %v2876, %v2450
      %v2910 = vsel %vm2878, %v2877, %v2452
      %vm2911 = vcmask 457728
      %v2912 = vsel %vm2911, %v2879, %v2490
      %v2913 = vsel %vm2911, %v2880, %v2492
      %v2914 = vsel %vm2911, %v2881, %v2494
      %v2915 = vsel %vm2911, %v2882, %v2496
      %v2916 = vsel %vm2911, %v2883, %v2498
      %v2917 = vsel %vm2911, %v2884, %v2500
      %v2918 = vsel %vm2911, %v2885, %v2502
      %v2919 = vsel %vm2911, %v2886, %v2504
      %v2920 = vsel %vm2911, %v2887, %v2506
      %v2921 = vsel %vm2911, %v2888, %v2508
      %v2922 = vsel %vm2911, %v2889, %v2510
      %v2923 = vsel %vm2911, %v2890, %v2512
      %v2924 = vsel %vm2911, %v2891, %v2514
      %v2925 = vsel %vm2911, %v2892, %v2516
      %v2926 = vsel %vm2911, %v2893, %v2518
      %v2927 = vsel %vm2911, %v2894, %v2520
      %v2928 = vsel %vm2911, %v2895, %v2522
      %v2929 = vsel %vm2911, %v2896, %v2524
      %v2930 = vsel %vm2911, %v2897, %v2526
      %v2931 = vsel %vm2911, %v2898, %v2528
      %v2932 = vsel %vm2911, %v2899, %v2530
      %v2933 = vsel %vm2911, %v2900, %v2532
      %v2934 = vsel %vm2911, %v2901, %v2534
      %v2935 = vsel %vm2911, %v2902, %v2536
      %v2936 = vsel %vm2911, %v2903, %v2538
      %v2937 = vsel %vm2911, %v2904, %v2540
      %v2938 = vsel %vm2911, %v2905, %v2542
      %v2939 = vsel %vm2911, %v2906, %v2544
      %v2940 = vsel %vm2911, %v2907, %v2546
      %v2941 = vsel %vm2911, %v2908, %v2548
      %v2942 = vsel %vm2911, %v2909, %v2550
      %v2943 = vsel %vm2911, %v2910, %v2552
      %vm2944 = vcmask 523264
      %v2945 = vsel %vm2944, %v2912, %v2618
      %v2946 = vsel %vm2944, %v2913, %v2620
      %v2947 = vsel %vm2944, %v2914, %v2622
      %v2948 = vsel %vm2944, %v2915, %v2624
      %v2949 = vsel %vm2944, %v2916, %v2626
      %v2950 = vsel %vm2944, %v2917, %v2628
      %v2951 = vsel %vm2944, %v2918, %v2630
      %v2952 = vsel %vm2944, %v2919, %v2632
      %v2953 = vsel %vm2944, %v2920, %v2634
      %v2954 = vsel %vm2944, %v2921, %v2636
      %v2955 = vsel %vm2944, %v2922, %v2638
      %v2956 = vsel %vm2944, %v2923, %v2640
      %v2957 = vsel %vm2944, %v2924, %v2642
      %v2958 = vsel %vm2944, %v2925, %v2644
      %v2959 = vsel %vm2944, %v2926, %v2646
      %v2960 = vsel %vm2944, %v2927, %v2648
      %v2961 = vsel %vm2944, %v2928, %v2650
      %v2962 = vsel %vm2944, %v2929, %v2652
      %v2963 = vsel %vm2944, %v2930, %v2654
      %v2964 = vsel %vm2944, %v2931, %v2656
      %v2965 = vsel %vm2944, %v2932, %v2658
      %v2966 = vsel %vm2944, %v2933, %v2660
      %v2967 = vsel %vm2944, %v2934, %v2662
      %v2968 = vsel %vm2944, %v2935, %v2664
      %v2969 = vsel %vm2944, %v2936, %v2666
      %v2970 = vsel %vm2944, %v2937, %v2668
      %v2971 = vsel %vm2944, %v2938, %v2670
      %v2972 = vsel %vm2944, %v2939, %v2672
      %v2973 = vsel %vm2944, %v2940, %v2674
      %v2974 = vsel %vm2944, %v2941, %v2676
      %v2975 = vsel %vm2944, %v2942, %v2678
      %v2976 = vsel %vm2944, %v2943, %v2680
      %v2977 = vld [vmem:[%s6] sm:$0xff]
      %v2978 = vld [vmem:[%s6 + $0x8] sm:$0xff]
      %v2979 = vld [vmem:[%s6 + $0x10] sm:$0xff]
      %v2980 = vld [vmem:[%s6 + $0x18] sm:$0xff]
      %v2981 = vld [vmem:[%s6 + $0x20] sm:$0xff]
      %v2982 = vld [vmem:[%s6 + $0x28] sm:$0xff]
      %v2983 = vld [vmem:[%s6 + $0x30] sm:$0xff]
      %v2984 = vld [vmem:[%s6 + $0x38] sm:$0xff]
      %v2985 = vld [vmem:[%s6 + $0x40] sm:$0xff]
      %v2986 = vld [vmem:[%s471] sm:$0xff]
      %v2987 = vld [vmem:[%s471 + $0x8] sm:$0xff]
      %v2988 = vld [vmem:[%s471 + $0x10] sm:$0xff]
      %v2989 = vld [vmem:[%s471 + $0x18] sm:$0xff]
      %v2990 = vld [vmem:[%s471 + $0x20] sm:$0xff]
      %v2991 = vld [vmem:[%s471 + $0x28] sm:$0xff]
      %v2992 = vld [vmem:[%s471 + $0x30] sm:$0xff]
      %v2993 = vld [vmem:[%s471 + $0x38] sm:$0xff]
      %v2994 = vld [vmem:[%s471 + $0x40] sm:$0xff]
      %v2995 = vld [vmem:[%s471 + $0x48] sm:$0xff]
      %v2996 = vld [vmem:[%s471 + $0x50] sm:$0xff]
      %v2997 = vld [vmem:[%s471 + $0x58] sm:$0xff]
      %v2998 = vld [vmem:[%s471 + $0x60] sm:$0xff]
      %v2999 = vld [vmem:[%s471 + $0x68] sm:$0xff]
      %v3000 = vld [vmem:[%s471 + $0x70] sm:$0xff]
      %v3001 = vld [vmem:[%s471 + $0x78] sm:$0xff]
      %v3002 = vld [vmem:[%s471 + $0x80] sm:$0xff]
      %v3003 = vld [vmem:[%s471 + $0x88] sm:$0xff]
      %v3004 = vld [vmem:[%s471 + $0x90] sm:$0xff]
      %v3005 = vld [vmem:[%s471 + $0x98] sm:$0xff]
      %v3006 = vld [vmem:[%s471 + $0xa0] sm:$0xff]
      %v3007 = vld [vmem:[%s471 + $0xa8] sm:$0xff]
      %v3008 = vld [vmem:[%s471 + $0xb0] sm:$0xff]
      %v3009 = vld [vmem:[%s471 + $0xb8] sm:$0xff]
      %v3010 = vld [vmem:[%s471 + $0xc0] sm:$0xff]
      %v3011 = vld [vmem:[%s471 + $0xc8] sm:$0xff]
      %v3012 = vld [vmem:[%s471 + $0xd0] sm:$0xff]
      %v3013 = vld [vmem:[%s471 + $0xd8] sm:$0xff]
      %v3014 = vld [vmem:[%s471 + $0xe0] sm:$0xff]
      %v3015 = vld [vmem:[%s471 + $0xe8] sm:$0xff]
      %v3016 = vld [vmem:[%s471 + $0xf0] sm:$0xff]
      %v3017 = vld [vmem:[%s471 + $0xf8] sm:$0xff]
      %v3018 = vld [vmem:[%s7] sm:$0xf]
      %vm3019 = vcmask 31744
      %v3021 = vsel %vm3019, %v2986, 0
      %v3024 = vsel %vm3019, %v2987, 0
      %v3027 = vsel %vm3019, %v2988, 0
      %v3030 = vsel %vm3019, %v2989, 0
      %v3033 = vsel %vm3019, %v2990, 0
      %v3036 = vsel %vm3019, %v2991, 0
      %v3039 = vsel %vm3019, %v2992, 0
      %v3042 = vsel %vm3019, %v2993, 0
      %v3045 = vsel %vm3019, %v2994, 0
      %v3048 = vsel %vm3019, %v2995, 0
      %v3051 = vsel %vm3019, %v2996, 0
      %v3054 = vsel %vm3019, %v2997, 0
      %v3057 = vsel %vm3019, %v2998, 0
      %v3060 = vsel %vm3019, %v2999, 0
      %v3063 = vsel %vm3019, %v3000, 0
      %v3066 = vsel %vm3019, %v3001, 0
      %v3069 = vsel %vm3019, %v3002, 0
      %v3072 = vsel %vm3019, %v3003, 0
      %v3075 = vsel %vm3019, %v3004, 0
      %v3078 = vsel %vm3019, %v3005, 0
      %v3081 = vsel %vm3019, %v3006, 0
      %v3084 = vsel %vm3019, %v3007, 0
      %v3087 = vsel %vm3019, %v3008, 0
      %v3090 = vsel %vm3019, %v3009, 0
      %v3093 = vsel %vm3019, %v3010, 0
      %v3096 = vsel %vm3019, %v3011, 0
      %v3099 = vsel %vm3019, %v3012, 0
      %v3102 = vsel %vm3019, %v3013, 0
      %v3105 = vsel %vm3019, %v3014, 0
      %v3108 = vsel %vm3019, %v3015, 0
      %v3111 = vsel %vm3019, %v3016, 0
      %v3114 = vsel %vm3019, %v3017, 0
      %vm3116 = vcmask 1043456
      %v3118 = vsel %vm3116, %v3018, 0
      %3120 = vmatpush.msra.mxu0 0.0
      %3121 = vmatpush.msra.mxu0 0.0
      %3122 = vmatpush.msra.mxu0 0.0
      %3123 = vmatpush.msra.mxu0 0.0
      %3124 = vmatpush.msra.mxu0 0.0
      %3125 = vmatpush.msra.mxu0 0.0
      %3126 = vmatpush.msra.mxu0 0.0
      %3127 = vmatpush.msra.mxu0 0.0
      %3128 = vmatpush.msra.mxu0 0.0
      %3129 = vmatpush.msra.mxu0 0.0
      %3130 = vmatpush.msra.mxu0 0.0
      %3131 = vmatpush.msra.mxu0 0.0
      %3132 = vmatpush.msra.mxu0 0.0
      %3133 = vmatpush.msra.mxu0 0.0
      %3134 = vmatpush.msra.mxu0 0.0
      %3135 = vmatpush.msra.mxu0 %v3118
      %3136 = vmatmul.f32.gmra.mxu0 %v3021
      %v3137 = vpop.f32.mrf.mxu0
      %v3138 = vadd.f32 0.0, %v3137
      %3139 = vmatmul.f32.gmra.mxu0 %v3024
      %v3140 = vpop.f32.mrf.mxu0
      %v3141 = vadd.f32 0.0, %v3140
      %3142 = vmatmul.f32.gmra.mxu0 %v3027
      %v3143 = vpop.f32.mrf.mxu0
      %v3144 = vadd.f32 0.0, %v3143
      %3145 = vmatmul.f32.gmra.mxu0 %v3030
      %v3146 = vpop.f32.mrf.mxu0
      %v3147 = vadd.f32 0.0, %v3146
      %3148 = vmatmul.f32.gmra.mxu0 %v3033
      %v3149 = vpop.f32.mrf.mxu0
      %v3150 = vadd.f32 0.0, %v3149
      %3151 = vmatmul.f32.gmra.mxu0 %v3036
      %v3152 = vpop.f32.mrf.mxu0
      %v3153 = vadd.f32 0.0, %v3152
      %3154 = vmatmul.f32.gmra.mxu0 %v3039
      %v3155 = vpop.f32.mrf.mxu0
      %v3156 = vadd.f32 0.0, %v3155
      %3157 = vmatmul.f32.gmra.mxu0 %v3042
      %v3158 = vpop.f32.mrf.mxu0
      %v3159 = vadd.f32 0.0, %v3158
      %3160 = vmatmul.f32.gmra.mxu0 %v3045
      %v3161 = vpop.f32.mrf.mxu0
      %v3162 = vadd.f32 0.0, %v3161
      %3163 = vmatmul.f32.gmra.mxu0 %v3048
      %v3164 = vpop.f32.mrf.mxu0
      %v3165 = vadd.f32 0.0, %v3164
      %3166 = vmatmul.f32.gmra.mxu0 %v3051
      %v3167 = vpop.f32.mrf.mxu0
      %v3168 = vadd.f32 0.0, %v3167
      %3169 = vmatmul.f32.gmra.mxu0 %v3054
      %v3170 = vpop.f32.mrf.mxu0
      %v3171 = vadd.f32 0.0, %v3170
      %3172 = vmatmul.f32.gmra.mxu0 %v3057
      %v3173 = vpop.f32.mrf.mxu0
      %v3174 = vadd.f32 0.0, %v3173
      %3175 = vmatmul.f32.gmra.mxu0 %v3060
      %v3176 = vpop.f32.mrf.mxu0
      %v3177 = vadd.f32 0.0, %v3176
      %3178 = vmatmul.f32.gmra.mxu0 %v3063
      %v3179 = vpop.f32.mrf.mxu0
      %v3180 = vadd.f32 0.0, %v3179
      %3181 = vmatmul.f32.gmra.mxu0 %v3066
      %v3182 = vpop.f32.mrf.mxu0
      %v3183 = vadd.f32 0.0, %v3182
      %3184 = vmatmul.f32.gmra.mxu0 %v3069
      %v3185 = vpop.f32.mrf.mxu0
      %v3186 = vadd.f32 0.0, %v3185
      %3187 = vmatmul.f32.gmra.mxu0 %v3072
      %v3188 = vpop.f32.mrf.mxu0
      %v3189 = vadd.f32 0.0, %v3188
      %3190 = vmatmul.f32.gmra.mxu0 %v3075
      %v3191 = vpop.f32.mrf.mxu0
      %v3192 = vadd.f32 0.0, %v3191
      %3193 = vmatmul.f32.gmra.mxu0 %v3078
      %v3194 = vpop.f32.mrf.mxu0
      %v3195 = vadd.f32 0.0, %v3194
      %3196 = vmatmul.f32.gmra.mxu0 %v3081
      %v3197 = vpop.f32.mrf.mxu0
      %v3198 = vadd.f32 0.0, %v3197
      %3199 = vmatmul.f32.gmra.mxu0 %v3084
      %v3200 = vpop.f32.mrf.mxu0
      %v3201 = vadd.f32 0.0, %v3200
      %3202 = vmatmul.f32.gmra.mxu0 %v3087
      %v3203 = vpop.f32.mrf.mxu0
      %v3204 = vadd.f32 0.0, %v3203
      %3205 = vmatmul.f32.gmra.mxu0 %v3090
      %v3206 = vpop.f32.mrf.mxu0
      %v3207 = vadd.f32 0.0, %v3206
      %3208 = vmatmul.f32.gmra.mxu0 %v3093
      %v3209 = vpop.f32.mrf.mxu0
      %v3210 = vadd.f32 0.0, %v3209
      %3211 = vmatmul.f32.gmra.mxu0 %v3096
      %v3212 = vpop.f32.mrf.mxu0
      %v3213 = vadd.f32 0.0, %v3212
      %3214 = vmatmul.f32.gmra.mxu0 %v3099
      %v3215 = vpop.f32.mrf.mxu0
      %v3216 = vadd.f32 0.0, %v3215
      %3217 = vmatmul.f32.gmra.mxu0 %v3102
      %v3218 = vpop.f32.mrf.mxu0
      %v3219 = vadd.f32 0.0, %v3218
      %3220 = vmatmul.f32.gmra.mxu0 %v3105
      %v3221 = vpop.f32.mrf.mxu0
      %v3222 = vadd.f32 0.0, %v3221
      %3223 = vmatmul.f32.gmra.mxu0 %v3108
      %v3224 = vpop.f32.mrf.mxu0
      %v3225 = vadd.f32 0.0, %v3224
      %3226 = vmatmul.f32.gmra.mxu0 %v3111
      %v3227 = vpop.f32.mrf.mxu0
      %v3228 = vadd.f32 0.0, %v3227
      %3229 = vmatmul.f32.gmra.mxu0 %v3114
      %v3230 = vpop.f32.mrf.mxu0
      %v3231 = vadd.f32 0.0, %v3230
      %3232 = vdwg.mxu0
      %vm3233 = vcmask 588800
      %v3235 = vsel %vm3233, %v2945, 0
      %v3238 = vsel %vm3233, %v2946, 0
      %v3241 = vsel %vm3233, %v2947, 0
      %v3244 = vsel %vm3233, %v2948, 0
      %v3247 = vsel %vm3233, %v2949, 0
      %v3250 = vsel %vm3233, %v2950, 0
      %v3253 = vsel %vm3233, %v2951, 0
      %v3256 = vsel %vm3233, %v2952, 0
      %v3259 = vsel %vm3233, %v2953, 0
      %v3262 = vsel %vm3233, %v2954, 0
      %v3265 = vsel %vm3233, %v2955, 0
      %v3268 = vsel %vm3233, %v2956, 0
      %v3271 = vsel %vm3233, %v2957, 0
      %v3274 = vsel %vm3233, %v2958, 0
      %v3277 = vsel %vm3233, %v2959, 0
      %v3280 = vsel %vm3233, %v2960, 0
      %v3283 = vsel %vm3233, %v2961, 0
      %v3286 = vsel %vm3233, %v2962, 0
      %v3289 = vsel %vm3233, %v2963, 0
      %v3292 = vsel %vm3233, %v2964, 0
      %v3295 = vsel %vm3233, %v2965, 0
      %v3298 = vsel %vm3233, %v2966, 0
      %v3301 = vsel %vm3233, %v2967, 0
      %v3304 = vsel %vm3233, %v2968, 0
      %v3307 = vsel %vm3233, %v2969, 0
      %v3310 = vsel %vm3233, %v2970, 0
      %v3313 = vsel %vm3233, %v2971, 0
      %v3316 = vsel %vm3233, %v2972, 0
      %v3319 = vsel %vm3233, %v2973, 0
      %v3322 = vsel %vm3233, %v2974, 0
      %v3325 = vsel %vm3233, %v2975, 0
      %v3328 = vsel %vm3233, %v2976, 0
      %3330 = vmatpush.msra.mxu0 0.0
      %3331 = vmatpush.msra.mxu0 0.0
      %3332 = vmatpush.msra.mxu0 0.0
      %3333 = vmatpush.msra.mxu0 0.0
      %3334 = vmatpush.msra.mxu0 0.0
      %3335 = vmatpush.msra.mxu0 0.0
      %3336 = vmatpush.msra.mxu0 0.0
      %3337 = vmatpush.msra.mxu0 %v2985
      %3338 = vmatpush.msra.mxu0 %v2984
      %3339 = vmatpush.msra.mxu0 %v2983
      %3340 = vmatpush.msra.mxu0 %v2982
      %3341 = vmatpush.msra.mxu0 %v2981
      %3342 = vmatpush.msra.mxu0 %v2980
      %3343 = vmatpush.msra.mxu0 %v2979
      %3344 = vmatpush.msra.mxu0 %v2978
      %3345 = vmatpush.msra.mxu0 %v2977
      %3346 = vmatmul.f32.gmra.mxu0 %v3235
      %v3347 = vpop.f32.mrf.mxu0
      %v3348 = vadd.f32 %v3138, %v3347
      %3349 = vmatmul.f32.gmra.mxu0 %v3238
      %v3350 = vpop.f32.mrf.mxu0
      %v3351 = vadd.f32 %v3141, %v3350
      %3352 = vmatmul.f32.gmra.mxu0 %v3241
      %v3353 = vpop.f32.mrf.mxu0
      %v3354 = vadd.f32 %v3144, %v3353
      %3355 = vmatmul.f32.gmra.mxu0 %v3244
      %v3356 = vpop.f32.mrf.mxu0
      %v3357 = vadd.f32 %v3147, %v3356
      %3358 = vmatmul.f32.gmra.mxu0 %v3247
      %v3359 = vpop.f32.mrf.mxu0
      %v3360 = vadd.f32 %v3150, %v3359
      %3361 = vmatmul.f32.gmra.mxu0 %v3250
      %v3362 = vpop.f32.mrf.mxu0
      %v3363 = vadd.f32 %v3153, %v3362
      %3364 = vmatmul.f32.gmra.mxu0 %v3253
      %v3365 = vpop.f32.mrf.mxu0
      %v3366 = vadd.f32 %v3156, %v3365
      %3367 = vmatmul.f32.gmra.mxu0 %v3256
      %v3368 = vpop.f32.mrf.mxu0
      %v3369 = vadd.f32 %v3159, %v3368
      %3370 = vmatmul.f32.gmra.mxu0 %v3259
      %v3371 = vpop.f32.mrf.mxu0
      %v3372 = vadd.f32 %v3162, %v3371
      %3373 = vmatmul.f32.gmra.mxu0 %v3262
      %v3374 = vpop.f32.mrf.mxu0
      %v3375 = vadd.f32 %v3165, %v3374
      %3376 = vmatmul.f32.gmra.mxu0 %v3265
      %v3377 = vpop.f32.mrf.mxu0
      %v3378 = vadd.f32 %v3168, %v3377
      %3379 = vmatmul.f32.gmra.mxu0 %v3268
      %v3380 = vpop.f32.mrf.mxu0
      %v3381 = vadd.f32 %v3171, %v3380
      %3382 = vmatmul.f32.gmra.mxu0 %v3271
      %v3383 = vpop.f32.mrf.mxu0
      %v3384 = vadd.f32 %v3174, %v3383
      %3385 = vmatmul.f32.gmra.mxu0 %v3274
      %v3386 = vpop.f32.mrf.mxu0
      %v3387 = vadd.f32 %v3177, %v3386
      %3388 = vmatmul.f32.gmra.mxu0 %v3277
      %v3389 = vpop.f32.mrf.mxu0
      %v3390 = vadd.f32 %v3180, %v3389
      %3391 = vmatmul.f32.gmra.mxu0 %v3280
      %v3392 = vpop.f32.mrf.mxu0
      %v3393 = vadd.f32 %v3183, %v3392
      %3394 = vmatmul.f32.gmra.mxu0 %v3283
      %v3395 = vpop.f32.mrf.mxu0
      %v3396 = vadd.f32 %v3186, %v3395
      %3397 = vmatmul.f32.gmra.mxu0 %v3286
      %v3398 = vpop.f32.mrf.mxu0
      %v3399 = vadd.f32 %v3189, %v3398
      %3400 = vmatmul.f32.gmra.mxu0 %v3289
      %v3401 = vpop.f32.mrf.mxu0
      %v3402 = vadd.f32 %v3192, %v3401
      %3403 = vmatmul.f32.gmra.mxu0 %v3292
      %v3404 = vpop.f32.mrf.mxu0
      %v3405 = vadd.f32 %v3195, %v3404
      %3406 = vmatmul.f32.gmra.mxu0 %v3295
      %v3407 = vpop.f32.mrf.mxu0
      %v3408 = vadd.f32 %v3198, %v3407
      %3409 = vmatmul.f32.gmra.mxu0 %v3298
      %v3410 = vpop.f32.mrf.mxu0
      %v3411 = vadd.f32 %v3201, %v3410
      %3412 = vmatmul.f32.gmra.mxu0 %v3301
      %v3413 = vpop.f32.mrf.mxu0
      %v3414 = vadd.f32 %v3204, %v3413
      %3415 = vmatmul.f32.gmra.mxu0 %v3304
      %v3416 = vpop.f32.mrf.mxu0
      %v3417 = vadd.f32 %v3207, %v3416
      %3418 = vmatmul.f32.gmra.mxu0 %v3307
      %v3419 = vpop.f32.mrf.mxu0
      %v3420 = vadd.f32 %v3210, %v3419
      %3421 = vmatmul.f32.gmra.mxu0 %v3310
      %v3422 = vpop.f32.mrf.mxu0
      %v3423 = vadd.f32 %v3213, %v3422
      %3424 = vmatmul.f32.gmra.mxu0 %v3313
      %v3425 = vpop.f32.mrf.mxu0
      %v3426 = vadd.f32 %v3216, %v3425
      %3427 = vmatmul.f32.gmra.mxu0 %v3316
      %v3428 = vpop.f32.mrf.mxu0
      %v3429 = vadd.f32 %v3219, %v3428
      %3430 = vmatmul.f32.gmra.mxu0 %v3319
      %v3431 = vpop.f32.mrf.mxu0
      %v3432 = vadd.f32 %v3222, %v3431
      %3433 = vmatmul.f32.gmra.mxu0 %v3322
      %v3434 = vpop.f32.mrf.mxu0
      %v3435 = vadd.f32 %v3225, %v3434
      %3436 = vmatmul.f32.gmra.mxu0 %v3325
      %v3437 = vpop.f32.mrf.mxu0
      %v3438 = vadd.f32 %v3228, %v3437
      %3439 = vmatmul.f32.gmra.mxu0 %v3328
      %v3440 = vpop.f32.mrf.mxu0
      %v3441 = vadd.f32 %v3231, %v3440
      %3442 = vdwg.mxu0
      %v3443 = vld [vmem:[%s8] sm:$0x1]
      %v3445 = vperm.slane %v3443, 0
      %v3447 = vadd.f32 %v3348, %v3445
      %v3448 = vadd.f32 %v3351, %v3445
      %v3449 = vadd.f32 %v3354, %v3445
      %v3450 = vadd.f32 %v3357, %v3445
      %v3451 = vadd.f32 %v3360, %v3445
      %v3452 = vadd.f32 %v3363, %v3445
      %v3453 = vadd.f32 %v3366, %v3445
      %v3454 = vadd.f32 %v3369, %v3445
      %v3455 = vadd.f32 %v3372, %v3445
      %v3456 = vadd.f32 %v3375, %v3445
      %v3457 = vadd.f32 %v3378, %v3445
      %v3458 = vadd.f32 %v3381, %v3445
      %v3459 = vadd.f32 %v3384, %v3445
      %v3460 = vadd.f32 %v3387, %v3445
      %v3461 = vadd.f32 %v3390, %v3445
      %v3462 = vadd.f32 %v3393, %v3445
      %v3463 = vadd.f32 %v3396, %v3445
      %v3464 = vadd.f32 %v3399, %v3445
      %v3465 = vadd.f32 %v3402, %v3445
      %v3466 = vadd.f32 %v3405, %v3445
      %v3467 = vadd.f32 %v3408, %v3445
      %v3468 = vadd.f32 %v3411, %v3445
      %v3469 = vadd.f32 %v3414, %v3445
      %v3470 = vadd.f32 %v3417, %v3445
      %v3471 = vadd.f32 %v3420, %v3445
      %v3472 = vadd.f32 %v3423, %v3445
      %v3473 = vadd.f32 %v3426, %v3445
      %v3474 = vadd.f32 %v3429, %v3445
      %v3475 = vadd.f32 %v3432, %v3445
      %v3476 = vadd.f32 %v3435, %v3445
      %v3477 = vadd.f32 %v3438, %v3445
      %v3478 = vadd.f32 %v3441, %v3445
      %3479 = vst.msk [vmem:[%s481] sm:$0xff] %vm2713, %v3447
      %3480 = vst.msk [vmem:[%s481 + $0x8] sm:$0xff] %vm2713, %v3448
      %3481 = vst.msk [vmem:[%s481 + $0x10] sm:$0xff] %vm2713, %v3449
      %3482 = vst.msk [vmem:[%s481 + $0x18] sm:$0xff] %vm2713, %v3450
      %3483 = vst.msk [vmem:[%s481 + $0x20] sm:$0xff] %vm2713, %v3451
      %3484 = vst.msk [vmem:[%s481 + $0x28] sm:$0xff] %vm2713, %v3452
      %3485 = vst.msk [vmem:[%s481 + $0x30] sm:$0xff] %vm2713, %v3453
      %3486 = vst.msk [vmem:[%s481 + $0x38] sm:$0xff] %vm2713, %v3454
      %3487 = vst.msk [vmem:[%s481 + $0x40] sm:$0xff] %vm2713, %v3455
      %3488 = vst.msk [vmem:[%s481 + $0x48] sm:$0xff] %vm2713, %v3456
      %3489 = vst.msk [vmem:[%s481 + $0x50] sm:$0xff] %vm2713, %v3457
      %3490 = vst.msk [vmem:[%s481 + $0x58] sm:$0xff] %vm2713, %v3458
      %3491 = vst.msk [vmem:[%s481 + $0x60] sm:$0xff] %vm2713, %v3459
      %3492 = vst.msk [vmem:[%s481 + $0x68] sm:$0xff] %vm2713, %v3460
      %3493 = vst.msk [vmem:[%s481 + $0x70] sm:$0xff] %vm2713, %v3461
      %3494 = vst.msk [vmem:[%s481 + $0x78] sm:$0xff] %vm2713, %v3462
      %3495 = vst.msk [vmem:[%s481 + $0x80] sm:$0xff] %vm2713, %v3463
      %3496 = vst.msk [vmem:[%s481 + $0x88] sm:$0xff] %vm2713, %v3464
      %3497 = vst.msk [vmem:[%s481 + $0x90] sm:$0xff] %vm2713, %v3465
      %3498 = vst.msk [vmem:[%s481 + $0x98] sm:$0xff] %vm2713, %v3466
      %3499 = vst.msk [vmem:[%s481 + $0xa0] sm:$0xff] %vm2713, %v3467
      %3500 = vst.msk [vmem:[%s481 + $0xa8] sm:$0xff] %vm2713, %v3468
      %3501 = vst.msk [vmem:[%s481 + $0xb0] sm:$0xff] %vm2713, %v3469
      %3502 = vst.msk [vmem:[%s481 + $0xb8] sm:$0xff] %vm2713, %v3470
      %3503 = vst.msk [vmem:[%s481 + $0xc0] sm:$0xff] %vm2713, %v3471
      %3504 = vst.msk [vmem:[%s481 + $0xc8] sm:$0xff] %vm2713, %v3472
      %3505 = vst.msk [vmem:[%s481 + $0xd0] sm:$0xff] %vm2713, %v3473
      %3506 = vst.msk [vmem:[%s481 + $0xd8] sm:$0xff] %vm2713, %v3474
      %3507 = vst.msk [vmem:[%s481 + $0xe0] sm:$0xff] %vm2713, %v3475
      %3508 = vst.msk [vmem:[%s481 + $0xe8] sm:$0xff] %vm2713, %v3476
      %3509 = vst.msk [vmem:[%s481 + $0xf0] sm:$0xff] %vm2713, %v3477
      %3510 = vst.msk [vmem:[%s481 + $0xf8] sm:$0xff] %vm2713, %v3478
      %s3511 = smul.u32 32, %s25
      %p3512 = scmp.lt.s32.totalorder %s24, 1
      %s3513 = scalar_select %p3512, %s24, 1
      %p3514 = scmp.lt.s32.totalorder %s3511, 31
      %s3515 = scalar_select %p3514, %s3511, 31
      %s3516 = smul.addr %s3513, 32
      %s3517 = sadd.s32 %s3515, %s3516
      %s3518 = smul.addr %s3517, 8
      %s3519 = scalar_lea.vmem %s9, %s3518
      // Predicated region
      $region57: #{gblock_forward_pallas.3} parent=55 // pred_check
        %p3520 = pneg %p271
      $region58: #{gblock_forward_pallas.3} parent=55 // pred_check_branch
        %3522 = sbr.rel (%p3520) target = $region60
      $region59: #{gblock_forward_pallas.3} parent=55 // pred_region
        %s3523 = smul.u32 32, %s25
      $region60: #{gblock_forward_pallas.3} parent=55 // pred_fallthru
        _
    $region56: #{gblock_forward_pallas.3} parent=5 // pred_fallthru
      _
    %p3524 = scmp.le.s32.totalorder 2, %s15
    // Predicated region
    $region61: #{gblock_forward_pallas.3} parent=5 // pred_check
      %p3525 = pneg %p3524
    $region62: #{gblock_forward_pallas.3} parent=5 // pred_check_branch
      %3527 = sbr.rel (%p3525) target = $region64
    $region63: #{gblock_forward_pallas.3} parent=5 // pred_region
      %s3528 = ssub.s32 %s15, 2
      // Predicated region
      $region65: #{gblock_forward_pallas.3} parent=63 // pred_check
        %p3529 = pneg %p277
      $region66: #{gblock_forward_pallas.3} parent=63 // pred_check_branch
        %3531 = sbr.rel (%p3529) target = $region68
      $region67: #{gblock_forward_pallas.3} parent=63 // pred_region
        %s3532 = smul.u32 32, %s27
        %p3533 = scmp.lt.s32.totalorder %s26, 1
        %s3534 = scalar_select %p3533, %s26, 1
        %p3535 = scmp.lt.s32.totalorder %s3532, 31
        %s3536 = scalar_select %p3535, %s3532, 31
        %s3537 = smul.addr %s3534, 32
        %s3538 = sadd.s32 %s3536, %s3537
        %s3539 = smul.addr %s3538, 8
        %s3540 = scalar_lea.vmem %s9, %s3539
      $region68: #{gblock_forward_pallas.3} parent=63 // pred_fallthru
        _
    $region64: #{gblock_forward_pallas.3} parent=5 // pred_fallthru
      _
  $region6: #{gblock_forward_pallas.3} parent=0 // loop_footer
    %s19 = sadd.s32 1, %s15
  $region7: #{gblock_forward_pallas.3} parent=0 // loop_footer_branch
    %14 = sbr.rel target = $region3
  $region8: #{gblock_forward_pallas.3} parent=0 // loop_exit
    _

// kernel: gblock_forward_pallas.2
$region0: #{gblock_forward_pallas.2}
  #allocation0 [shape = 'u32[]', space=smem, size = 0x4, offset = 0x4, fixed_abs, tag = 'smem constant byte address 0x4 - core index']
  #allocation1 [shape = 'u32[72,128]{1,0:T(1,128)}', space=vmem, size = 0x9000, scoped, tag = 'internal scratch']
  %s0 = inlined_call_operand.vmem [shape: f32[2,256,4], index: 0, kind: input, shape index: {}]
  %s1 = inlined_call_operand.vmem [shape: f32[2,1,16,4], index: 1, kind: input, shape index: {}, may-alias: {1,2}]
  %s2 = inlined_call_operand.vmem [shape: f32[2,1,16,4], index: 2, kind: input, shape index: {}, may-alias: {1,2}]
  %s3 = inlined_call_operand.vmem [shape: f32[1,4], index: 3, kind: input, shape index: {}]
  %s4 = inlined_call_operand.vmem [shape: f32[1,4], index: 4, kind: input, shape index: {}]
  %s5 = inlined_call_operand.vmem [shape: f32[36,8], index: 5, kind: input, shape index: {}]
  %s6 = inlined_call_operand.vmem [shape: f32[2,256,8], index: 6, kind: output, shape index: {0}]
  %s7 = inlined_call_operand.vmem [shape: f32[2,2,16,8], index: 7, kind: output, shape index: {1}]
  %s8 = inlined_call_operand.vmem [shape: f32[2,2,16,8], index: 8, kind: output, shape index: {2}]
  %s9 = inlined_call_operand.vmem [shape: f32[2,1,1,8], index: 9, kind: output, shape index: {3}]
  %s10 = inlined_call_operand.vmem [shape: f32[2,1,1,8], index: 10, kind: output, shape index: {4}]
  %11 = xla_tuple %s6, %s7, %s8, %s9, %s10
  %s12 = sld [smem:[#allocation0]]
  $region89: #{gblock_forward_pallas.2} parent=0
    _
  %s14 = ssub.s32 1, %s12
  %s15 = scalar_select 0, %s14, %s12
  loop: start=0, step=1, limit=4
  $region2: #{gblock_forward_pallas.2} parent=0 // loop_pre_header
    _
  $region3: #{gblock_forward_pallas.2} parent=0 // loop_header
    %s17 = sphi 0, %s21
    %p18 = scmp.ge.s32.totalorder %s17, 4
    %s24 = sphi 0, %s36
    %s25 = sphi 0, %s32
    %s26 = sphi 0, %s24
    %s27 = sphi 0, %s25
    %s28 = sphi 0, %s26
    %s29 = sphi 0, %s27
    %s41 = sphi 0, %s43
    %s44 = sphi 0, %s41
    %s45 = sphi 0, %s44
    %s61 = sphi 0, %s45
    %s69 = sphi 0, %s71
    %s72 = sphi 0, %s69
    %s73 = sphi 0, %s72
    %s89 = sphi 0, %s73
    %s97 = sphi 0, %s99
    %s100 = sphi 0, %s97
    %s101 = sphi 0, %s100
    %s117 = sphi 0, %s101
    %s121 = sphi 0, %s121
    %s123 = sphi 0, %s121
    %s124 = sphi 0, %s123
    %s138 = sphi 0, %s124
    %s142 = sphi 0, %s142
    %s144 = sphi 0, %s142
    %s145 = sphi 0, %s144
    %s159 = sphi 0, %s145
    %s163 = sphi 0, %s163
    %s165 = sphi 0, %s163
    %s166 = sphi 0, %s165
    %s180 = sphi 0, %s166
    %s188 = sphi 0, %s190
    %s191 = sphi 0, %s188
    %s192 = sphi 0, %s191
    %s208 = sphi 0, %s192
    %s218 = sphi 0, %s220
    %s221 = sphi 0, %s218
    %s222 = sphi 0, %s221
    %s238 = sphi 0, %s222
    %s246 = sphi 0, %s248
    %s249 = sphi 0, %s246
    %s250 = sphi 0, %s249
    %s266 = sphi 0, %s250
    %s274 = sphi 0, %s276
    %s277 = sphi 0, %s274
    %s278 = sphi 0, %s277
    %s294 = sphi 0, %s278
    %s302 = sphi 0, %s304
    %s305 = sphi 0, %s302
    %s306 = sphi 0, %s305
    %s322 = sphi 0, %s306
  $region4: #{gblock_forward_pallas.2} parent=0 // loop_header_branch
    %20 = sbr.rel (%p18) target = $region8
  $region5: #{gblock_forward_pallas.2} parent=0 // loop_body
    %s22 = ssub.s32 %s17, 1
    %s23 = ssub.s32 %s17, 2
    %s30 = sadd.s32 1, %s25
    %p31 = scmp.ge.s32.totalorder %s30, 1
    %s32 = scalar_select %p31, 0, %s30
    %s33 = sadd.s32 1, %s24
    %s34 = scalar_select %p31, %s33, %s24
    %p35 = scmp.ge.s32.totalorder %s34, 2
    %s36 = scalar_select %p35, 0, %s34
    %s37 = ssub.s32 %s24, %s36
    %s38 = ssub.s32 %s25, %s32
    %s39 = sor.u32 %s37, %s38
    %p40 = scmp.eq.s32.totalorder %s39, 0
    %s42 = sadd.s32 %s41, 1
    %s43 = scalar_select %p40, %s41, %s42
    %p46 = pneg %p40
    %p47 = scmp.eq.s32.totalorder %s17, 1
    %p48 = por %p46, %p47
    %p49 = scmp.ne.s32.totalorder %s41, %s44
    %p50 = scmp.eq.s32.totalorder %s17, 0
    %p51 = por %p49, %p50
    %p52 = scmp.ne.s32.totalorder %s41, %s44
    %p53 = scmp.eq.s32.totalorder %s22, 1
    %p54 = por %p52, %p53
    %p55 = scmp.ne.s32.totalorder %s44, %s45
    %p56 = scmp.eq.s32.totalorder %s22, 0
    %p57 = por %p55, %p56
    %p58 = scmp.ne.s32.totalorder %s44, %s45
    %p59 = scmp.eq.s32.totalorder %s23, 1
    %p60 = por %p58, %p59
    %p62 = scmp.ne.s32.totalorder %s45, %s61
    %p63 = scmp.eq.s32.totalorder %s23, 0
    %p64 = por %p62, %p63
    %s65 = ssub.s32 %s24, %s36
    %s66 = ssub.s32 %s25, %s32
    %s67 = sor.u32 %s65, %s66
    %p68 = scmp.eq.s32.totalorder %s67, 0
    %s70 = sadd.s32 %s69, 1
    %s71 = scalar_select %p68, %s69, %s70
    %p74 = pneg %p68
    %p75 = scmp.eq.s32.totalorder %s17, 1
    %p76 = por %p74, %p75
    %p77 = scmp.ne.s32.totalorder %s69, %s72
    %p78 = scmp.eq.s32.totalorder %s17, 0
    %p79 = por %p77, %p78
    %p80 = scmp.ne.s32.totalorder %s69, %s72
    %p81 = scmp.eq.s32.totalorder %s22, 1
    %p82 = por %p80, %p81
    %p83 = scmp.ne.s32.totalorder %s72, %s73
    %p84 = scmp.eq.s32.totalorder %s22, 0
    %p85 = por %p83, %p84
    %p86 = scmp.ne.s32.totalorder %s72, %s73
    %p87 = scmp.eq.s32.totalorder %s23, 1
    %p88 = por %p86, %p87
    %p90 = scmp.ne.s32.totalorder %s73, %s89
    %p91 = scmp.eq.s32.totalorder %s23, 0
    %p92 = por %p90, %p91
    %s93 = ssub.s32 %s24, %s36
    %s94 = ssub.s32 %s25, %s32
    %s95 = sor.u32 %s93, %s94
    %p96 = scmp.eq.s32.totalorder %s95, 0
    %s98 = sadd.s32 %s97, 1
    %s99 = scalar_select %p96, %s97, %s98
    %p102 = pneg %p96
    %p103 = scmp.eq.s32.totalorder %s17, 1
    %p104 = por %p102, %p103
    %p105 = scmp.ne.s32.totalorder %s97, %s100
    %p106 = scmp.eq.s32.totalorder %s17, 0
    %p107 = por %p105, %p106
    %p108 = scmp.ne.s32.totalorder %s97, %s100
    %p109 = scmp.eq.s32.totalorder %s22, 1
    %p110 = por %p108, %p109
    %p111 = scmp.ne.s32.totalorder %s100, %s101
    %p112 = scmp.eq.s32.totalorder %s22, 0
    %p113 = por %p111, %p112
    %p114 = scmp.ne.s32.totalorder %s100, %s101
    %p115 = scmp.eq.s32.totalorder %s23, 1
    %p116 = por %p114, %p115
    %p118 = scmp.ne.s32.totalorder %s101, %s117
    %p119 = scmp.eq.s32.totalorder %s23, 0
    %p120 = por %p118, %p119
    %s122 = sadd.s32 %s121, 1
    %p125 = scmp.eq.s32.totalorder %s17, 1
    %p126 = scmp.ne.s32.totalorder %s121, %s123
    %p127 = scmp.eq.s32.totalorder %s17, 0
    %p128 = por %p126, %p127
    %p129 = scmp.ne.s32.totalorder %s121, %s123
    %p130 = scmp.eq.s32.totalorder %s22, 1
    %p131 = por %p129, %p130
    %p132 = scmp.ne.s32.totalorder %s123, %s124
    %p133 = scmp.eq.s32.totalorder %s22, 0
    %p134 = por %p132, %p133
    %p135 = scmp.ne.s32.totalorder %s123, %s124
    %p136 = scmp.eq.s32.totalorder %s23, 1
    %p137 = por %p135, %p136
    %p139 = scmp.ne.s32.totalorder %s124, %s138
    %p140 = scmp.eq.s32.totalorder %s23, 0
    %p141 = por %p139, %p140
    %s143 = sadd.s32 %s142, 1
    %p146 = scmp.eq.s32.totalorder %s17, 1
    %p147 = scmp.ne.s32.totalorder %s142, %s144
    %p148 = scmp.eq.s32.totalorder %s17, 0
    %p149 = por %p147, %p148
    %p150 = scmp.ne.s32.totalorder %s142, %s144
    %p151 = scmp.eq.s32.totalorder %s22, 1
    %p152 = por %p150, %p151
    %p153 = scmp.ne.s32.totalorder %s144, %s145
    %p154 = scmp.eq.s32.totalorder %s22, 0
    %p155 = por %p153, %p154
    %p156 = scmp.ne.s32.totalorder %s144, %s145
    %p157 = scmp.eq.s32.totalorder %s23, 1
    %p158 = por %p156, %p157
    %p160 = scmp.ne.s32.totalorder %s145, %s159
    %p161 = scmp.eq.s32.totalorder %s23, 0
    %p162 = por %p160, %p161
    %s164 = sadd.s32 %s163, 1
    %p167 = scmp.eq.s32.totalorder %s17, 1
    %p168 = scmp.ne.s32.totalorder %s163, %s165
    %p169 = scmp.eq.s32.totalorder %s17, 0
    %p170 = por %p168, %p169
    %p171 = scmp.ne.s32.totalorder %s163, %s165
    %p172 = scmp.eq.s32.totalorder %s22, 1
    %p173 = por %p171, %p172
    %p174 = scmp.ne.s32.totalorder %s165, %s166
    %p175 = scmp.eq.s32.totalorder %s22, 0
    %p176 = por %p174, %p175
    %p177 = scmp.ne.s32.totalorder %s165, %s166
    %p178 = scmp.eq.s32.totalorder %s23, 1
    %p179 = por %p177, %p178
    %p181 = scmp.ne.s32.totalorder %s166, %s180
    %p182 = scmp.eq.s32.totalorder %s23, 0
    %p183 = por %p181, %p182
    %s184 = ssub.s32 %s24, %s36
    %s185 = ssub.s32 %s25, %s32
    %s186 = sor.u32 %s184, %s185
    %p187 = scmp.eq.s32.totalorder %s186, 0
    %s189 = sadd.s32 %s188, 1
    %s190 = scalar_select %p187, %s188, %s189
    %p193 = pneg %p187
    %p194 = scmp.eq.s32.totalorder %s17, 1
    %p195 = por %p193, %p194
    %p196 = scmp.ne.s32.totalorder %s188, %s191
    %p197 = scmp.eq.s32.totalorder %s17, 0
    %p198 = por %p196, %p197
    %p199 = scmp.ne.s32.totalorder %s188, %s191
    %p200 = scmp.eq.s32.totalorder %s22, 1
    %p201 = por %p199, %p200
    %p202 = scmp.ne.s32.totalorder %s191, %s192
    %p203 = scmp.eq.s32.totalorder %s22, 0
    %p204 = por %p202, %p203
    %p205 = scmp.ne.s32.totalorder %s191, %s192
    %p206 = scmp.eq.s32.totalorder %s23, 1
    %p207 = por %p205, %p206
    %p209 = scmp.ne.s32.totalorder %s192, %s208
    %p210 = scmp.eq.s32.totalorder %s23, 0
    %p211 = por %p209, %p210
    %s212 = sadd.s32 %s25, 1
    %s213 = sadd.s32 %s32, 1
    %s214 = ssub.s32 %s24, %s36
    %s215 = ssub.s32 %s212, %s213
    %s216 = sor.u32 %s214, %s215
    %p217 = scmp.eq.s32.totalorder %s216, 0
    %s219 = sadd.s32 %s218, 1
    %s220 = scalar_select %p217, %s218, %s219
    %p223 = pneg %p217
    %p224 = scmp.eq.s32.totalorder %s17, 1
    %p225 = por %p223, %p224
    %p226 = scmp.ne.s32.totalorder %s218, %s221
    %p227 = scmp.eq.s32.totalorder %s17, 0
    %p228 = por %p226, %p227
    %p229 = scmp.ne.s32.totalorder %s218, %s221
    %p230 = scmp.eq.s32.totalorder %s22, 1
    %p231 = por %p229, %p230
    %p232 = scmp.ne.s32.totalorder %s221, %s222
    %p233 = scmp.eq.s32.totalorder %s22, 0
    %p234 = por %p232, %p233
    %p235 = scmp.ne.s32.totalorder %s221, %s222
    %p236 = scmp.eq.s32.totalorder %s23, 1
    %p237 = por %p235, %p236
    %p239 = scmp.ne.s32.totalorder %s222, %s238
    %p240 = scmp.eq.s32.totalorder %s23, 0
    %p241 = por %p239, %p240
    %s242 = ssub.s32 %s24, %s36
    %s243 = ssub.s32 %s25, %s32
    %s244 = sor.u32 %s242, %s243
    %p245 = scmp.eq.s32.totalorder %s244, 0
    %s247 = sadd.s32 %s246, 1
    %s248 = scalar_select %p245, %s246, %s247
    %p251 = pneg %p245
    %p252 = scmp.eq.s32.totalorder %s17, 1
    %p253 = por %p251, %p252
    %p254 = scmp.ne.s32.totalorder %s246, %s249
    %p255 = scmp.eq.s32.totalorder %s17, 0
    %p256 = por %p254, %p255
    %p257 = scmp.ne.s32.totalorder %s246, %s249
    %p258 = scmp.eq.s32.totalorder %s22, 1
    %p259 = por %p257, %p258
    %p260 = scmp.ne.s32.totalorder %s249, %s250
    %p261 = scmp.eq.s32.totalorder %s22, 0
    %p262 = por %p260, %p261
    %p263 = scmp.ne.s32.totalorder %s249, %s250
    %p264 = scmp.eq.s32.totalorder %s23, 1
    %p265 = por %p263, %p264
    %p267 = scmp.ne.s32.totalorder %s250, %s266
    %p268 = scmp.eq.s32.totalorder %s23, 0
    %p269 = por %p267, %p268
    %s270 = ssub.s32 %s24, %s36
    %s271 = ssub.s32 %s25, %s32
    %s272 = sor.u32 %s270, %s271
    %p273 = scmp.eq.s32.totalorder %s272, 0
    %s275 = sadd.s32 %s274, 1
    %s276 = scalar_select %p273, %s274, %s275
    %p279 = pneg %p273
    %p280 = scmp.eq.s32.totalorder %s17, 1
    %p281 = por %p279, %p280
    %p282 = scmp.ne.s32.totalorder %s274, %s277
    %p283 = scmp.eq.s32.totalorder %s17, 0
    %p284 = por %p282, %p283
    %p285 = scmp.ne.s32.totalorder %s274, %s277
    %p286 = scmp.eq.s32.totalorder %s22, 1
    %p287 = por %p285, %p286
    %p288 = scmp.ne.s32.totalorder %s277, %s278
    %p289 = scmp.eq.s32.totalorder %s22, 0
    %p290 = por %p288, %p289
    %p291 = scmp.ne.s32.totalorder %s277, %s278
    %p292 = scmp.eq.s32.totalorder %s23, 1
    %p293 = por %p291, %p292
    %p295 = scmp.ne.s32.totalorder %s278, %s294
    %p296 = scmp.eq.s32.totalorder %s23, 0
    %p297 = por %p295, %p296
    %s298 = ssub.s32 %s24, %s36
    %s299 = ssub.s32 %s25, %s32
    %s300 = sor.u32 %s298, %s299
    %p301 = scmp.eq.s32.totalorder %s300, 0
    %s303 = sadd.s32 %s302, 1
    %s304 = scalar_select %p301, %s302, %s303
    %p307 = pneg %p301
    %p308 = scmp.eq.s32.totalorder %s17, 1
    %p309 = por %p307, %p308
    %p310 = scmp.ne.s32.totalorder %s302, %s305
    %p311 = scmp.eq.s32.totalorder %s17, 0
    %p312 = por %p310, %p311
    %p313 = scmp.ne.s32.totalorder %s302, %s305
    %p314 = scmp.eq.s32.totalorder %s22, 1
    %p315 = por %p313, %p314
    %p316 = scmp.ne.s32.totalorder %s305, %s306
    %p317 = scmp.eq.s32.totalorder %s22, 0
    %p318 = por %p316, %p317
    %p319 = scmp.ne.s32.totalorder %s305, %s306
    %p320 = scmp.eq.s32.totalorder %s23, 1
    %p321 = por %p319, %p320
    %p323 = scmp.ne.s32.totalorder %s306, %s322
    %p324 = scmp.eq.s32.totalorder %s23, 0
    %p325 = por %p323, %p324
    %p326 = scmp.le.s32.totalorder 1, %s17
    %p327 = scmp.lt.s32.totalorder %s17, 3
    %p328 = pnand %p326, %p327
    %p329 = pneg %p328
    // Predicated region
    $region9: #{gblock_forward_pallas.2} parent=5 // pred_check
      _
    $region10: #{gblock_forward_pallas.2} parent=5 // pred_check_branch
      %331 = sbr.rel (%p328) target = $region12
    $region11: #{gblock_forward_pallas.2} parent=5 // pred_region
      %s332 = ssub.s32 %s17, 1
      // Predicated region
      $region13: #{gblock_forward_pallas.2} parent=11 // pred_check
        %p333 = pneg %p134
      $region14: #{gblock_forward_pallas.2} parent=11 // pred_check_branch
        %335 = sbr.rel (%p333) target = $region16
      $region15: #{gblock_forward_pallas.2} parent=11 // pred_region
        _
      $region16: #{gblock_forward_pallas.2} parent=11 // pred_fallthru
        _
      // Predicated region
      $region17: #{gblock_forward_pallas.2} parent=11 // pred_check
        %p336 = pneg %p155
      $region18: #{gblock_forward_pallas.2} parent=11 // pred_check_branch
        %338 = sbr.rel (%p336) target = $region20
      $region19: #{gblock_forward_pallas.2} parent=11 // pred_region
        _
      $region20: #{gblock_forward_pallas.2} parent=11 // pred_fallthru
        _
      // Predicated region
      $region21: #{gblock_forward_pallas.2} parent=11 // pred_check
        %p339 = pneg %p176
      $region22: #{gblock_forward_pallas.2} parent=11 // pred_check_branch
        %341 = sbr.rel (%p339) target = $region24
      $region23: #{gblock_forward_pallas.2} parent=11 // pred_region
        _
      $region24: #{gblock_forward_pallas.2} parent=11 // pred_fallthru
        _
    $region12: #{gblock_forward_pallas.2} parent=5 // pred_fallthru
      _
    %p342 = scmp.lt.s32.totalorder %s17, 2
    // Predicated region
    $region25: #{gblock_forward_pallas.2} parent=5 // pred_check
      %p343 = pneg %p342
    $region26: #{gblock_forward_pallas.2} parent=5 // pred_check_branch
      %345 = sbr.rel (%p343) target = $region28
    $region27: #{gblock_forward_pallas.2} parent=5 // pred_region
      // Predicated region
      $region29: #{gblock_forward_pallas.2} parent=27 // pred_check
        %p346 = pneg %p51
      $region30: #{gblock_forward_pallas.2} parent=27 // pred_check_branch
        %348 = sbr.rel (%p346) target = $region32
      $region31: #{gblock_forward_pallas.2} parent=27 // pred_region
        %s349 = smul.u32 32, %s25
        %p350 = scmp.lt.s32.totalorder %s24, 1
        %s351 = scalar_select %p350, %s24, 1
        %p352 = scmp.lt.s32.totalorder %s349, 31
        %s353 = scalar_select %p352, %s349, 31
        %s354 = smul.addr %s351, 32
        %s355 = sadd.s32 %s353, %s354
        %s356 = smul.addr %s355, 8
        %s357 = scalar_lea.vmem %s0, %s356
        %s358 = smul.u32 32, %s25
      $region32: #{gblock_forward_pallas.2} parent=27 // pred_fallthru
        _
      // Predicated region
      $region33: #{gblock_forward_pallas.2} parent=27 // pred_check
        %p359 = pneg %p79
      $region34: #{gblock_forward_pallas.2} parent=27 // pred_check_branch
        %361 = sbr.rel (%p359) target = $region36
      $region35: #{gblock_forward_pallas.2} parent=27 // pred_region
        %p362 = scmp.lt.s32.totalorder %s24, 1
        %s363 = scalar_select %p362, %s24, 1
        %p364 = scmp.lt.s32.totalorder %s25, 0
        %s365 = scalar_select %p364, %s25, 0
        %s366 = smul.addr %s365, 2
        %s367 = smul.addr %s363, 2
        %s368 = sadd.s32 %s366, %s367
        %s369 = smul.addr %s368, 8
        %s370 = scalar_lea.vmem %s1, %s369
      $region36: #{gblock_forward_pallas.2} parent=27 // pred_fallthru
        _
      // Predicated region
      $region37: #{gblock_forward_pallas.2} parent=27 // pred_check
        %p371 = pneg %p107
      $region38: #{gblock_forward_pallas.2} parent=27 // pred_check_branch
        %373 = sbr.rel (%p371) target = $region40
      $region39: #{gblock_forward_pallas.2} parent=27 // pred_region
        %p374 = scmp.lt.s32.totalorder %s24, 1
        %s375 = scalar_select %p374, %s24, 1
        %p376 = scmp.lt.s32.totalorder %s25, 0
        %s377 = scalar_select %p376, %s25, 0
        %s378 = smul.addr %s377, 2
        %s379 = smul.addr %s375, 2
        %s380 = sadd.s32 %s378, %s379
        %s381 = smul.addr %s380, 8
        %s382 = scalar_lea.vmem %s2, %s381
      $region40: #{gblock_forward_pallas.2} parent=27 // pred_fallthru
        _
    $region28: #{gblock_forward_pallas.2} parent=5 // pred_fallthru
      _
    %p383 = scmp.le.s32.totalorder 1, %s17
    %p384 = scmp.lt.s32.totalorder %s17, 3
    %p385 = pnand %p383, %p384
    %p386 = pneg %p385
    // Predicated region
    $region41: #{gblock_forward_pallas.2} parent=5 // pred_check
      _
    $region42: #{gblock_forward_pallas.2} parent=5 // pred_check_branch
      %388 = sbr.rel (%p385) target = $region44
    $region43: #{gblock_forward_pallas.2} parent=5 // pred_region
      %s389 = ssub.s32 %s17, 1
      %s390 = smul.u32 32, %s27
      %p391 = scmp.lt.s32.totalorder %s26, 1
      %s392 = scalar_select %p391, %s26, 1
      %p393 = scmp.lt.s32.totalorder %s390, 31
      %s394 = scalar_select %p393, %s390, 31
      %s395 = smul.addr %s392, 32
      %s396 = sadd.s32 %s394, %s395
      %s397 = smul.addr %s396, 8
      %s398 = scalar_lea.vmem %s0, %s397
      %p399 = pneg %p57
      %p400 = pneg %p54
      %p401 = scmp.lt.s32.totalorder %s26, 1
      %s402 = scalar_select %p401, %s26, 1
      %p403 = scmp.lt.s32.totalorder %s27, 0
      %s404 = scalar_select %p403, %s27, 0
      %s405 = smul.addr %s404, 2
      %s406 = smul.addr %s402, 2
      %s407 = sadd.s32 %s405, %s406
      %s408 = smul.addr %s407, 8
      %s409 = scalar_lea.vmem %s1, %s408
      %p410 = pneg %p85
      %p411 = pneg %p82
      %p412 = scmp.lt.s32.totalorder %s26, 1
      %s413 = scalar_select %p412, %s26, 1
      %p414 = scmp.lt.s32.totalorder %s27, 0
      %s415 = scalar_select %p414, %s27, 0
      %s416 = smul.addr %s415, 2
      %s417 = smul.addr %s413, 2
      %s418 = sadd.s32 %s416, %s417
      %s419 = smul.addr %s418, 8
      %s420 = scalar_lea.vmem %s2, %s419
      %p421 = pneg %p113
      %p422 = pneg %p110
      %p423 = pneg %p134
      %p424 = pneg %p131
      %p425 = pneg %p155
      %p426 = pneg %p152
      %p427 = pneg %p176
      %p428 = pneg %p173
      %p429 = pneg %p204
      %p430 = pneg %p201
      %s431 = smul.u32 32, %s27
      %p432 = scmp.lt.s32.totalorder %s26, 1
      %s433 = scalar_select %p432, %s26, 1
      %p434 = scmp.lt.s32.totalorder %s431, 31
      %s435 = scalar_select %p434, %s431, 31
      %s436 = smul.addr %s433, 32
      %s437 = sadd.s32 %s435, %s436
      %s438 = smul.addr %s437, 8
      %s439 = scalar_lea.vmem %s6, %s438
      %p440 = pneg %p234
      %p441 = pneg %p231
      %s442 = sadd.s32 %s27, 1
      %p443 = scmp.lt.s32.totalorder %s26, 1
      %s444 = scalar_select %p443, %s26, 1
      %p445 = scmp.lt.s32.totalorder %s442, 1
      %s446 = scalar_select %p445, %s442, 1
      %s447 = smul.addr %s446, 2
      %s448 = smul.addr %s444, 4
      %s449 = sadd.s32 %s447, %s448
      %s450 = smul.addr %s449, 8
      %s451 = scalar_lea.vmem %s7, %s450
      %p452 = pneg %p262
      %p453 = pneg %p259
      %p454 = scmp.lt.s32.totalorder %s26, 1
      %s455 = scalar_select %p454, %s26, 1
      %p456 = scmp.lt.s32.totalorder %s27, 1
      %s457 = scalar_select %p456, %s27, 1
      %s458 = smul.addr %s457, 2
      %s459 = smul.addr %s455, 4
      %s460 = sadd.s32 %s458, %s459
      %s461 = smul.addr %s460, 8
      %s462 = scalar_lea.vmem %s8, %s461
      %p463 = pneg %p290
      %p464 = pneg %p287
      %p465 = scmp.lt.s32.totalorder %s26, 1
      %s466 = scalar_select %p465, %s26, 1
      %p467 = scmp.lt.s32.totalorder %s27, 0
      %s468 = scalar_select %p467, %s27, 0
      %s469 = sadd.s32 %s468, %s466
      %s470 = scalar_lea.vmem %s9, %s469
      %p471 = pneg %p318
      %p472 = pneg %p315
      %p473 = scmp.lt.s32.totalorder %s26, 1
      %s474 = scalar_select %p473, %s26, 1
      %p475 = scmp.lt.s32.totalorder %s27, 0
      %s476 = scalar_select %p475, %s27, 0
      %s477 = sadd.s32 %s476, %s474
      %s478 = scalar_lea.vmem %s10, %s477
      %s479 = smul.u32 32, %s27
      %p480 = scmp.lt.s32.totalorder %s26, 1
      %s481 = scalar_select %p480, %s26, 1
      %p482 = scmp.lt.s32.totalorder %s479, 31
      %s483 = scalar_select %p482, %s479, 31
      %s484 = smul.addr %s481, 32
      %s485 = sadd.s32 %s483, %s484
      %s486 = smul.addr %s485, 8
      %s487 = scalar_lea.vmem %s0, %s486
      %s488 = smul.u32 32, %s27
      %p489 = scmp.lt.s32.totalorder %s26, 1
      %s490 = scalar_select %p489, %s26, 1
      %p491 = scmp.lt.s32.totalorder %s27, 0
      %s492 = scalar_select %p491, %s27, 0
      %s493 = smul.addr %s492, 2
      %s494 = smul.addr %s490, 2
      %s495 = sadd.s32 %s493, %s494
      %s496 = smul.addr %s495, 8
      %s497 = scalar_lea.vmem %s1, %s496
      %p498 = scmp.lt.s32.totalorder %s26, 1
      %s499 = scalar_select %p498, %s26, 1
      %p500 = scmp.lt.s32.totalorder %s27, 0
      %s501 = scalar_select %p500, %s27, 0
      %s502 = smul.addr %s501, 2
      %s503 = smul.addr %s499, 2
      %s504 = sadd.s32 %s502, %s503
      %s505 = smul.addr %s504, 8
      %s506 = scalar_lea.vmem %s2, %s505
      %s507 = smul.u32 32, %s27
      %p508 = scmp.lt.s32.totalorder %s26, 1
      %s509 = scalar_select %p508, %s26, 1
      %p510 = scmp.lt.s32.totalorder %s507, 31
      %s511 = scalar_select %p510, %s507, 31
      %s512 = smul.addr %s509, 32
      %s513 = sadd.s32 %s511, %s512
      %s514 = smul.addr %s513, 8
      %s515 = scalar_lea.vmem %s6, %s514
      %s516 = smul.u32 32, %s27
      %s517 = sadd.s32 %s27, 1
      %p518 = scmp.lt.s32.totalorder %s26, 1
      %s519 = scalar_select %p518, %s26, 1
      %p520 = scmp.lt.s32.totalorder %s517, 1
      %s521 = scalar_select %p520, %s517, 1
      %s522 = smul.addr %s521, 2
      %s523 = smul.addr %s519, 4
      %s524 = sadd.s32 %s522, %s523
      %s525 = smul.addr %s524, 8
      %s526 = scalar_lea.vmem %s7, %s525
      %s527 = sadd.s32 %s27, 1
      %p528 = scmp.lt.s32.totalorder %s26, 1
      %s529 = scalar_select %p528, %s26, 1
      %p530 = scmp.lt.s32.totalorder %s27, 1
      %s531 = scalar_select %p530, %s27, 1
      %s532 = smul.addr %s531, 2
      %s533 = smul.addr %s529, 4
      %s534 = sadd.s32 %s532, %s533
      %s535 = smul.addr %s534, 8
      %s536 = scalar_lea.vmem %s8, %s535
      %p537 = scmp.lt.s32.totalorder %s26, 1
      %s538 = scalar_select %p537, %s26, 1
      %p539 = scmp.lt.s32.totalorder %s27, 0
      %s540 = scalar_select %p539, %s27, 0
      %s541 = sadd.s32 %s540, %s538
      %s542 = scalar_lea.vmem %s9, %s541
      %p543 = scmp.lt.s32.totalorder %s26, 1
      %s544 = scalar_select %p543, %s26, 1
      %p545 = scmp.lt.s32.totalorder %s27, 0
      %s546 = scalar_select %p545, %s27, 0
      %s547 = sadd.s32 %s546, %s544
      %s548 = scalar_lea.vmem %s10, %s547
      %v549 = vld [vmem:[%s487] sm:$0xff]
      %v550 = vld [vmem:[%s487 + $0x8] sm:$0xff]
      %v551 = vld [vmem:[%s487 + $0x10] sm:$0xff]
      %v552 = vld [vmem:[%s487 + $0x18] sm:$0xff]
      %v553 = vld [vmem:[%s487 + $0x20] sm:$0xff]
      %v554 = vld [vmem:[%s487 + $0x28] sm:$0xff]
      %v555 = vld [vmem:[%s487 + $0x30] sm:$0xff]
      %v556 = vld [vmem:[%s487 + $0x38] sm:$0xff]
      %v557 = vld [vmem:[%s487 + $0x40] sm:$0xff]
      %v558 = vld [vmem:[%s487 + $0x48] sm:$0xff]
      %v559 = vld [vmem:[%s487 + $0x50] sm:$0xff]
      %v560 = vld [vmem:[%s487 + $0x58] sm:$0xff]
      %v561 = vld [vmem:[%s487 + $0x60] sm:$0xff]
      %v562 = vld [vmem:[%s487 + $0x68] sm:$0xff]
      %v563 = vld [vmem:[%s487 + $0x70] sm:$0xff]
      %v564 = vld [vmem:[%s487 + $0x78] sm:$0xff]
      %v565 = vld [vmem:[%s487 + $0x80] sm:$0xff]
      %v566 = vld [vmem:[%s487 + $0x88] sm:$0xff]
      %v567 = vld [vmem:[%s487 + $0x90] sm:$0xff]
      %v568 = vld [vmem:[%s487 + $0x98] sm:$0xff]
      %v569 = vld [vmem:[%s487 + $0xa0] sm:$0xff]
      %v570 = vld [vmem:[%s487 + $0xa8] sm:$0xff]
      %v571 = vld [vmem:[%s487 + $0xb0] sm:$0xff]
      %v572 = vld [vmem:[%s487 + $0xb8] sm:$0xff]
      %v573 = vld [vmem:[%s487 + $0xc0] sm:$0xff]
      %v574 = vld [vmem:[%s487 + $0xc8] sm:$0xff]
      %v575 = vld [vmem:[%s487 + $0xd0] sm:$0xff]
      %v576 = vld [vmem:[%s487 + $0xd8] sm:$0xff]
      %v577 = vld [vmem:[%s487 + $0xe0] sm:$0xff]
      %v578 = vld [vmem:[%s487 + $0xe8] sm:$0xff]
      %v579 = vld [vmem:[%s487 + $0xf0] sm:$0xff]
      %v580 = vld [vmem:[%s487 + $0xf8] sm:$0xff]
      %v581 = vld [vmem:[%s3] sm:$0x1]
      %v583 = vperm.slane %v581, 0
      %v585 = vmul.f32 %v549, %v583
      %v586 = vmul.f32 %v550, %v583
      %v587 = vmul.f32 %v551, %v583
      %v588 = vmul.f32 %v552, %v583
      %v589 = vmul.f32 %v553, %v583
      %v590 = vmul.f32 %v554, %v583
      %v591 = vmul.f32 %v555, %v583
      %v592 = vmul.f32 %v556, %v583
      %v593 = vmul.f32 %v557, %v583
      %v594 = vmul.f32 %v558, %v583
      %v595 = vmul.f32 %v559, %v583
      %v596 = vmul.f32 %v560, %v583
      %v597 = vmul.f32 %v561, %v583
      %v598 = vmul.f32 %v562, %v583
      %v599 = vmul.f32 %v563, %v583
      %v600 = vmul.f32 %v564, %v583
      %v601 = vmul.f32 %v565, %v583
      %v602 = vmul.f32 %v566, %v583
      %v603 = vmul.f32 %v567, %v583
      %v604 = vmul.f32 %v568, %v583
      %v605 = vmul.f32 %v569, %v583
      %v606 = vmul.f32 %v570, %v583
      %v607 = vmul.f32 %v571, %v583
      %v608 = vmul.f32 %v572, %v583
      %v609 = vmul.f32 %v573, %v583
      %v610 = vmul.f32 %v574, %v583
      %v611 = vmul.f32 %v575, %v583
      %v612 = vmul.f32 %v576, %v583
      %v613 = vmul.f32 %v577, %v583
      %v614 = vmul.f32 %v578, %v583
      %v615 = vmul.f32 %v579, %v583
      %v616 = vmul.f32 %v580, %v583
      %v617 = vld [vmem:[%s4] sm:$0x1]
      %v619 = vperm.slane %v617, 0
      %v621 = vadd.f32 %v585, %v619
      %v622 = vadd.f32 %v586, %v619
      %v623 = vadd.f32 %v587, %v619
      %v624 = vadd.f32 %v588, %v619
      %v625 = vadd.f32 %v589, %v619
      %v626 = vadd.f32 %v590, %v619
      %v627 = vadd.f32 %v591, %v619
      %v628 = vadd.f32 %v592, %v619
      %v629 = vadd.f32 %v593, %v619
      %v630 = vadd.f32 %v594, %v619
      %v631 = vadd.f32 %v595, %v619
      %v632 = vadd.f32 %v596, %v619
      %v633 = vadd.f32 %v597, %v619
      %v634 = vadd.f32 %v598, %v619
      %v635 = vadd.f32 %v599, %v619
      %v636 = vadd.f32 %v600, %v619
      %v637 = vadd.f32 %v601, %v619
      %v638 = vadd.f32 %v602, %v619
      %v639 = vadd.f32 %v603, %v619
      %v640 = vadd.f32 %v604, %v619
      %v641 = vadd.f32 %v605, %v619
      %v642 = vadd.f32 %v606, %v619
      %v643 = vadd.f32 %v607, %v619
      %v644 = vadd.f32 %v608, %v619
      %v645 = vadd.f32 %v609, %v619
      %v646 = vadd.f32 %v610, %v619
      %v647 = vadd.f32 %v611, %v619
      %v648 = vadd.f32 %v612, %v619
      %v649 = vadd.f32 %v613, %v619
      %v650 = vadd.f32 %v614, %v619
      %v651 = vadd.f32 %v615, %v619
      %v652 = vadd.f32 %v616, %v619
      %v653 = vmax.f32 %v621, 0.0
      %v654 = vmax.f32 %v622, 0.0
      %v655 = vmax.f32 %v623, 0.0
      %v656 = vmax.f32 %v624, 0.0
      %v657 = vmax.f32 %v625, 0.0
      %v658 = vmax.f32 %v626, 0.0
      %v659 = vmax.f32 %v627, 0.0
      %v660 = vmax.f32 %v628, 0.0
      %v661 = vmax.f32 %v629, 0.0
      %v662 = vmax.f32 %v630, 0.0
      %v663 = vmax.f32 %v631, 0.0
      %v664 = vmax.f32 %v632, 0.0
      %v665 = vmax.f32 %v633, 0.0
      %v666 = vmax.f32 %v634, 0.0
      %v667 = vmax.f32 %v635, 0.0
      %v668 = vmax.f32 %v636, 0.0
      %v669 = vmax.f32 %v637, 0.0
      %v670 = vmax.f32 %v638, 0.0
      %v671 = vmax.f32 %v639, 0.0
      %v672 = vmax.f32 %v640, 0.0
      %v673 = vmax.f32 %v641, 0.0
      %v674 = vmax.f32 %v642, 0.0
      %v675 = vmax.f32 %v643, 0.0
      %v676 = vmax.f32 %v644, 0.0
      %v677 = vmax.f32 %v645, 0.0
      %v678 = vmax.f32 %v646, 0.0
      %v679 = vmax.f32 %v647, 0.0
      %v680 = vmax.f32 %v648, 0.0
      %v681 = vmax.f32 %v649, 0.0
      %v682 = vmax.f32 %v650, 0.0
      %v683 = vmax.f32 %v651, 0.0
      %v684 = vmax.f32 %v652, 0.0
      %v685 = vld [vmem:[%s497] sm:$0xff]
      %v686 = vld [vmem:[%s497 + $0x8] sm:$0xff]
      %v687 = vmul.f32 %v685, %v583
      %v688 = vmul.f32 %v686, %v583
      %v689 = vadd.f32 %v687, %v619
      %v690 = vadd.f32 %v688, %v619
      %v691 = vmax.f32 %v689, 0.0
      %v692 = vmax.f32 %v690, 0.0
      %v693 = vld [vmem:[%s506] sm:$0xff]
      %v694 = vld [vmem:[%s506 + $0x8] sm:$0xff]
      %v695 = vmul.f32 %v693, %v583
      %v696 = vmul.f32 %v694, %v583
      %v697 = vadd.f32 %v695, %v619
      %v698 = vadd.f32 %v696, %v619
      %v699 = vmax.f32 %v697, 0.0
      %v700 = vmax.f32 %v698, 0.0
      %p701 = scmp.gt.s32.totalorder %s27, 0
      %s702 = scalar_select %p701, 1, 0
      %v703 = vstv %s702
      %vm704 = vcmp.eq.s32.totalorder %v703, 1
      %v705 = vsel %vm704, %v691, 0.0
      %v706 = vsel %vm704, %v692, 0.0
      %p707 = scmp.lt.s32.totalorder %s27, 0
      %s708 = scalar_select %p707, 1, 0
      %v709 = vstv %s708
      %vm710 = vcmp.eq.s32.totalorder %v709, 1
      %v711 = vsel %vm710, %v699, 0.0
      %v712 = vsel %vm710, %v700, 0.0
      %vm715 = vcmask 1040384
      %v716 = vrot.slane %v705, 7
      %v717 = vrot.slane %v706, 7
      %v718 = vsel %vm715, %v716, %v717
      %v754 = vrot.slane %v653, 7
      %v755 = vrot.slane %v654, 7
      %v756 = vsel %vm715, %v754, %v755
      %v757 = vrot.slane %v655, 7
      %v758 = vsel %vm715, %v755, %v757
      %v759 = vrot.slane %v656, 7
      %v760 = vsel %vm715, %v757, %v759
      %v761 = vrot.slane %v657, 7
      %v762 = vsel %vm715, %v759, %v761
      %v763 = vrot.slane %v658, 7
      %v764 = vsel %vm715, %v761, %v763
      %v765 = vrot.slane %v659, 7
      %v766 = vsel %vm715, %v763, %v765
      %v767 = vrot.slane %v660, 7
      %v768 = vsel %vm715, %v765, %v767
      %v769 = vrot.slane %v661, 7
      %v770 = vsel %vm715, %v767, %v769
      %v771 = vrot.slane %v662, 7
      %v772 = vsel %vm715, %v769, %v771
      %v773 = vrot.slane %v663, 7
      %v774 = vsel %vm715, %v771, %v773
      %v775 = vrot.slane %v664, 7
      %v776 = vsel %vm715, %v773, %v775
      %v777 = vrot.slane %v665, 7
      %v778 = vsel %vm715, %v775, %v777
      %v779 = vrot.slane %v666, 7
      %v780 = vsel %vm715, %v777, %v779
      %v781 = vrot.slane %v667, 7
      %v782 = vsel %vm715, %v779, %v781
      %v783 = vrot.slane %v668, 7
      %v784 = vsel %vm715, %v781, %v783
      %v785 = vrot.slane %v669, 7
      %v786 = vsel %vm715, %v783, %v785
      %v787 = vrot.slane %v670, 7
      %v788 = vsel %vm715, %v785, %v787
      %v789 = vrot.slane %v671, 7
      %v790 = vsel %vm715, %v787, %v789
      %v791 = vrot.slane %v672, 7
      %v792 = vsel %vm715, %v789, %v791
      %v793 = vrot.slane %v673, 7
      %v794 = vsel %vm715, %v791, %v793
      %v795 = vrot.slane %v674, 7
      %v796 = vsel %vm715, %v793, %v795
      %v797 = vrot.slane %v675, 7
      %v798 = vsel %vm715, %v795, %v797
      %v799 = vrot.slane %v676, 7
      %v800 = vsel %vm715, %v797, %v799
      %v801 = vrot.slane %v677, 7
      %v802 = vsel %vm715, %v799, %v801
      %v803 = vrot.slane %v678, 7
      %v804 = vsel %vm715, %v801, %v803
      %v805 = vrot.slane %v679, 7
      %v806 = vsel %vm715, %v803, %v805
      %v807 = vrot.slane %v680, 7
      %v808 = vsel %vm715, %v805, %v807
      %v809 = vrot.slane %v681, 7
      %v810 = vsel %vm715, %v807, %v809
      %v811 = vrot.slane %v682, 7
      %v812 = vsel %vm715, %v809, %v811
      %v813 = vrot.slane %v683, 7
      %v814 = vsel %vm715, %v811, %v813
      %v815 = vrot.slane %v684, 7
      %v816 = vsel %vm715, %v813, %v815
      %v852 = vrot.slane %v711, 7
      %v853 = vrot.slane %v712, 7
      %v854 = vsel %vm715, %v852, %v853
      %v858 = vsel %vm715, 0.0, %v716
      %v859 = vsel %vm715, %v717, %v754
      %v860 = vsel %vm715, %v815, %v852
      %v861 = vsel %vm715, %v853, 0.0
      %v862 = vlaneseq
      %v863 = vshrl.u32 %v862, 7
      %v864 = vadd.s32 %v863, 8
      %v865 = vadd.s32 %v863, 16
      %v866 = vadd.s32 %v863, 24
      %v867 = vadd.s32 %v863, 32
      %v868 = vadd.s32 %v863, 40
      %v869 = vadd.s32 %v863, 48
      %v870 = vadd.s32 %v863, 56
      %v871 = vadd.s32 %v863, 64
      %v872 = vadd.s32 %v863, 72
      %v873 = vadd.s32 %v863, 80
      %v874 = vadd.s32 %v863, 88
      %v875 = vadd.s32 %v863, 96
      %v876 = vadd.s32 %v863, 104
      %v877 = vadd.s32 %v863, 112
      %v878 = vadd.s32 %v863, 120
      %v879 = vadd.s32 %v863, 128
      %v880 = vadd.s32 %v863, 136
      %v881 = vadd.s32 %v863, 144
      %v882 = vadd.s32 %v863, 152
      %v883 = vadd.s32 %v863, 160
      %v884 = vadd.s32 %v863, 168
      %v885 = vadd.s32 %v863, 176
      %v886 = vadd.s32 %v863, 184
      %v887 = vadd.s32 %v863, 192
      %v888 = vadd.s32 %v863, 200
      %v889 = vadd.s32 %v863, 208
      %v890 = vadd.s32 %v863, 216
      %v891 = vadd.s32 %v863, 224
      %v892 = vadd.s32 %v863, 232
      %v893 = vadd.s32 %v863, 240
      %v894 = vadd.s32 %v863, 248
      %vm895 = vcmp.lt.s32.totalorder %v863, 0
      %v896 = vsub.s32 0, %v863
      %v897 = vsel %vm895, %v896, %v863
      %v898 = vshrl.u32 %v897, 4
      %v899 = vand.u32 %v897, 15
      %v900 = vsub.s32 0, %v899
      %v901 = vsel %vm895, %v900, %v899
      %vm902 = vcmp.lt.s32.totalorder %v864, 0
      %v903 = vsub.s32 0, %v864
      %v904 = vsel %vm902, %v903, %v864
      %v905 = vshrl.u32 %v904, 4
      %v906 = vand.u32 %v904, 15
      %v907 = vsub.s32 0, %v906
      %v908 = vsel %vm902, %v907, %v906
      %vm909 = vcmp.lt.s32.totalorder %v865, 0
      %v910 = vsub.s32 0, %v865
      %v911 = vsel %vm909, %v910, %v865
      %v912 = vshrl.u32 %v911, 4
      %v913 = vand.u32 %v911, 15
      %v914 = vsub.s32 0, %v913
      %v915 = vsel %vm909, %v914, %v913
      %vm916 = vcmp.lt.s32.totalorder %v866, 0
      %v917 = vsub.s32 0, %v866
      %v918 = vsel %vm916, %v917, %v866
      %v919 = vshrl.u32 %v918, 4
      %v920 = vand.u32 %v918, 15
      %v921 = vsub.s32 0, %v920
      %v922 = vsel %vm916, %v921, %v920
      %vm923 = vcmp.lt.s32.totalorder %v867, 0
      %v924 = vsub.s32 0, %v867
      %v925 = vsel %vm923, %v924, %v867
      %v926 = vshrl.u32 %v925, 4
      %v927 = vand.u32 %v925, 15
      %v928 = vsub.s32 0, %v927
      %v929 = vsel %vm923, %v928, %v927
      %vm930 = vcmp.lt.s32.totalorder %v868, 0
      %v931 = vsub.s32 0, %v868
      %v932 = vsel %vm930, %v931, %v868
      %v933 = vshrl.u32 %v932, 4
      %v934 = vand.u32 %v932, 15
      %v935 = vsub.s32 0, %v934
      %v936 = vsel %vm930, %v935, %v934
      %vm937 = vcmp.lt.s32.totalorder %v869, 0
      %v938 = vsub.s32 0, %v869
      %v939 = vsel %vm937, %v938, %v869
      %v940 = vshrl.u32 %v939, 4
      %v941 = vand.u32 %v939, 15
      %v942 = vsub.s32 0, %v941
      %v943 = vsel %vm937, %v942, %v941
      %vm944 = vcmp.lt.s32.totalorder %v870, 0
      %v945 = vsub.s32 0, %v870
      %v946 = vsel %vm944, %v945, %v870
      %v947 = vshrl.u32 %v946, 4
      %v948 = vand.u32 %v946, 15
      %v949 = vsub.s32 0, %v948
      %v950 = vsel %vm944, %v949, %v948
      %vm951 = vcmp.lt.s32.totalorder %v871, 0
      %v952 = vsub.s32 0, %v871
      %v953 = vsel %vm951, %v952, %v871
      %v954 = vshrl.u32 %v953, 4
      %v955 = vand.u32 %v953, 15
      %v956 = vsub.s32 0, %v955
      %v957 = vsel %vm951, %v956, %v955
      %vm958 = vcmp.lt.s32.totalorder %v872, 0
      %v959 = vsub.s32 0, %v872
      %v960 = vsel %vm958, %v959, %v872
      %v961 = vshrl.u32 %v960, 4
      %v962 = vand.u32 %v960, 15
      %v963 = vsub.s32 0, %v962
      %v964 = vsel %vm958, %v963, %v962
      %vm965 = vcmp.lt.s32.totalorder %v873, 0
      %v966 = vsub.s32 0, %v873
      %v967 = vsel %vm965, %v966, %v873
      %v968 = vshrl.u32 %v967, 4
      %v969 = vand.u32 %v967, 15
      %v970 = vsub.s32 0, %v969
      %v971 = vsel %vm965, %v970, %v969
      %vm972 = vcmp.lt.s32.totalorder %v874, 0
      %v973 = vsub.s32 0, %v874
      %v974 = vsel %vm972, %v973, %v874
      %v975 = vshrl.u32 %v974, 4
      %v976 = vand.u32 %v974, 15
      %v977 = vsub.s32 0, %v976
      %v978 = vsel %vm972, %v977, %v976
      %vm979 = vcmp.lt.s32.totalorder %v875, 0
      %v980 = vsub.s32 0, %v875
      %v981 = vsel %vm979, %v980, %v875
      %v982 = vshrl.u32 %v981, 4
      %v983 = vand.u32 %v981, 15
      %v984 = vsub.s32 0, %v983
      %v985 = vsel %vm979, %v984, %v983
      %vm986 = vcmp.lt.s32.totalorder %v876, 0
      %v987 = vsub.s32 0, %v876
      %v988 = vsel %vm986, %v987, %v876
      %v989 = vshrl.u32 %v988, 4
      %v990 = vand.u32 %v988, 15
      %v991 = vsub.s32 0, %v990
      %v992 = vsel %vm986, %v991, %v990
      %vm993 = vcmp.lt.s32.totalorder %v877, 0
      %v994 = vsub.s32 0, %v877
      %v995 = vsel %vm993, %v994, %v877
      %v996 = vshrl.u32 %v995, 4
      %v997 = vand.u32 %v995, 15
      %v998 = vsub.s32 0, %v997
      %v999 = vsel %vm993, %v998, %v997
      %vm1000 = vcmp.lt.s32.totalorder %v878, 0
      %v1001 = vsub.s32 0, %v878
      %v1002 = vsel %vm1000, %v1001, %v878
      %v1003 = vshrl.u32 %v1002, 4
      %v1004 = vand.u32 %v1002, 15
      %v1005 = vsub.s32 0, %v1004
      %v1006 = vsel %vm1000, %v1005, %v1004
      %vm1007 = vcmp.lt.s32.totalorder %v879, 0
      %v1008 = vsub.s32 0, %v879
      %v1009 = vsel %vm1007, %v1008, %v879
      %v1010 = vshrl.u32 %v1009, 4
      %v1011 = vand.u32 %v1009, 15
      %v1012 = vsub.s32 0, %v1011
      %v1013 = vsel %vm1007, %v1012, %v1011
      %vm1014 = vcmp.lt.s32.totalorder %v880, 0
      %v1015 = vsub.s32 0, %v880
      %v1016 = vsel %vm1014, %v1015, %v880
      %v1017 = vshrl.u32 %v1016, 4
      %v1018 = vand.u32 %v1016, 15
      %v1019 = vsub.s32 0, %v1018
      %v1020 = vsel %vm1014, %v1019, %v1018
      %vm1021 = vcmp.lt.s32.totalorder %v881, 0
      %v1022 = vsub.s32 0, %v881
      %v1023 = vsel %vm1021, %v1022, %v881
      %v1024 = vshrl.u32 %v1023, 4
      %v1025 = vand.u32 %v1023, 15
      %v1026 = vsub.s32 0, %v1025
      %v1027 = vsel %vm1021, %v1026, %v1025
      %vm1028 = vcmp.lt.s32.totalorder %v882, 0
      %v1029 = vsub.s32 0, %v882
      %v1030 = vsel %vm1028, %v1029, %v882
      %v1031 = vshrl.u32 %v1030, 4
      %v1032 = vand.u32 %v1030, 15
      %v1033 = vsub.s32 0, %v1032
      %v1034 = vsel %vm1028, %v1033, %v1032
      %vm1035 = vcmp.lt.s32.totalorder %v883, 0
      %v1036 = vsub.s32 0, %v883
      %v1037 = vsel %vm1035, %v1036, %v883
      %v1038 = vshrl.u32 %v1037, 4
      %v1039 = vand.u32 %v1037, 15
      %v1040 = vsub.s32 0, %v1039
      %v1041 = vsel %vm1035, %v1040, %v1039
      %vm1042 = vcmp.lt.s32.totalorder %v884, 0
      %v1043 = vsub.s32 0, %v884
      %v1044 = vsel %vm1042, %v1043, %v884
      %v1045 = vshrl.u32 %v1044, 4
      %v1046 = vand.u32 %v1044, 15
      %v1047 = vsub.s32 0, %v1046
      %v1048 = vsel %vm1042, %v1047, %v1046
      %vm1049 = vcmp.lt.s32.totalorder %v885, 0
      %v1050 = vsub.s32 0, %v885
      %v1051 = vsel %vm1049, %v1050, %v885
      %v1052 = vshrl.u32 %v1051, 4
      %v1053 = vand.u32 %v1051, 15
      %v1054 = vsub.s32 0, %v1053
      %v1055 = vsel %vm1049, %v1054, %v1053
      %vm1056 = vcmp.lt.s32.totalorder %v886, 0
      %v1057 = vsub.s32 0, %v886
      %v1058 = vsel %vm1056, %v1057, %v886
      %v1059 = vshrl.u32 %v1058, 4
      %v1060 = vand.u32 %v1058, 15
      %v1061 = vsub.s32 0, %v1060
      %v1062 = vsel %vm1056, %v1061, %v1060
      %vm1063 = vcmp.lt.s32.totalorder %v887, 0
      %v1064 = vsub.s32 0, %v887
      %v1065 = vsel %vm1063, %v1064, %v887
      %v1066 = vshrl.u32 %v1065, 4
      %v1067 = vand.u32 %v1065, 15
      %v1068 = vsub.s32 0, %v1067
      %v1069 = vsel %vm1063, %v1068, %v1067
      %vm1070 = vcmp.lt.s32.totalorder %v888, 0
      %v1071 = vsub.s32 0, %v888
      %v1072 = vsel %vm1070, %v1071, %v888
      %v1073 = vshrl.u32 %v1072, 4
      %v1074 = vand.u32 %v1072, 15
      %v1075 = vsub.s32 0, %v1074
      %v1076 = vsel %vm1070, %v1075, %v1074
      %vm1077 = vcmp.lt.s32.totalorder %v889, 0
      %v1078 = vsub.s32 0, %v889
      %v1079 = vsel %vm1077, %v1078, %v889
      %v1080 = vshrl.u32 %v1079, 4
      %v1081 = vand.u32 %v1079, 15
      %v1082 = vsub.s32 0, %v1081
      %v1083 = vsel %vm1077, %v1082, %v1081
      %vm1084 = vcmp.lt.s32.totalorder %v890, 0
      %v1085 = vsub.s32 0, %v890
      %v1086 = vsel %vm1084, %v1085, %v890
      %v1087 = vshrl.u32 %v1086, 4
      %v1088 = vand.u32 %v1086, 15
      %v1089 = vsub.s32 0, %v1088
      %v1090 = vsel %vm1084, %v1089, %v1088
      %vm1091 = vcmp.lt.s32.totalorder %v891, 0
      %v1092 = vsub.s32 0, %v891
      %v1093 = vsel %vm1091, %v1092, %v891
      %v1094 = vshrl.u32 %v1093, 4
      %v1095 = vand.u32 %v1093, 15
      %v1096 = vsub.s32 0, %v1095
      %v1097 = vsel %vm1091, %v1096, %v1095
      %vm1098 = vcmp.lt.s32.totalorder %v892, 0
      %v1099 = vsub.s32 0, %v892
      %v1100 = vsel %vm1098, %v1099, %v892
      %v1101 = vshrl.u32 %v1100, 4
      %v1102 = vand.u32 %v1100, 15
      %v1103 = vsub.s32 0, %v1102
      %v1104 = vsel %vm1098, %v1103, %v1102
      %vm1105 = vcmp.lt.s32.totalorder %v893, 0
      %v1106 = vsub.s32 0, %v893
      %v1107 = vsel %vm1105, %v1106, %v893
      %v1108 = vshrl.u32 %v1107, 4
      %v1109 = vand.u32 %v1107, 15
      %v1110 = vsub.s32 0, %v1109
      %v1111 = vsel %vm1105, %v1110, %v1109
      %vm1112 = vcmp.lt.s32.totalorder %v894, 0
      %v1113 = vsub.s32 0, %v894
      %v1114 = vsel %vm1112, %v1113, %v894
      %v1115 = vshrl.u32 %v1114, 4
      %v1116 = vand.u32 %v1114, 15
      %v1117 = vsub.s32 0, %v1116
      %v1118 = vsel %vm1112, %v1117, %v1116
      %vm1119 = vcmp.ne.s32.totalorder %v901, 0
      %vm1120 = vcmp.ne.s32.totalorder %v908, 0
      %vm1121 = vcmp.ne.s32.totalorder %v915, 0
      %vm1122 = vcmp.ne.s32.totalorder %v922, 0
      %vm1123 = vcmp.ne.s32.totalorder %v929, 0
      %vm1124 = vcmp.ne.s32.totalorder %v936, 0
      %vm1125 = vcmp.ne.s32.totalorder %v943, 0
      %vm1126 = vcmp.ne.s32.totalorder %v950, 0
      %vm1127 = vcmp.ne.s32.totalorder %v957, 0
      %vm1128 = vcmp.ne.s32.totalorder %v964, 0
      %vm1129 = vcmp.ne.s32.totalorder %v971, 0
      %vm1130 = vcmp.ne.s32.totalorder %v978, 0
      %vm1131 = vcmp.ne.s32.totalorder %v985, 0
      %vm1132 = vcmp.ne.s32.totalorder %v992, 0
      %vm1133 = vcmp.ne.s32.totalorder %v999, 0
      %vm1134 = vcmp.ne.s32.totalorder %v1006, 0
      %vm1135 = vcmp.ne.s32.totalorder %v1013, 0
      %vm1136 = vcmp.ne.s32.totalorder %v1020, 0
      %vm1137 = vcmp.ne.s32.totalorder %v1027, 0
      %vm1138 = vcmp.ne.s32.totalorder %v1034, 0
      %vm1139 = vcmp.ne.s32.totalorder %v1041, 0
      %vm1140 = vcmp.ne.s32.totalorder %v1048, 0
      %vm1141 = vcmp.ne.s32.totalorder %v1055, 0
      %vm1142 = vcmp.ne.s32.totalorder %v1062, 0
      %vm1143 = vcmp.ne.s32.totalorder %v1069, 0
      %vm1144 = vcmp.ne.s32.totalorder %v1076, 0
      %vm1145 = vcmp.ne.s32.totalorder %v1083, 0
      %vm1146 = vcmp.ne.s32.totalorder %v1090, 0
      %vm1147 = vcmp.ne.s32.totalorder %v1097, 0
      %vm1148 = vcmp.ne.s32.totalorder %v1104, 0
      %vm1149 = vcmp.ne.s32.totalorder %v1111, 0
      %vm1150 = vcmp.ne.s32.totalorder %v1118, 0
      %vm1151 = vcmp.lt.s32.totalorder %v901, 0
      %vm1152 = vcmp.lt.s32.totalorder %v908, 0
      %vm1153 = vcmp.lt.s32.totalorder %v915, 0
      %vm1154 = vcmp.lt.s32.totalorder %v922, 0
      %vm1155 = vcmp.lt.s32.totalorder %v929, 0
      %vm1156 = vcmp.lt.s32.totalorder %v936, 0
      %vm1157 = vcmp.lt.s32.totalorder %v943, 0
      %vm1158 = vcmp.lt.s32.totalorder %v950, 0
      %vm1159 = vcmp.lt.s32.totalorder %v957, 0
      %vm1160 = vcmp.lt.s32.totalorder %v964, 0
      %vm1161 = vcmp.lt.s32.totalorder %v971, 0
      %vm1162 = vcmp.lt.s32.totalorder %v978, 0
      %vm1163 = vcmp.lt.s32.totalorder %v985, 0
      %vm1164 = vcmp.lt.s32.totalorder %v992, 0
      %vm1165 = vcmp.lt.s32.totalorder %v999, 0
      %vm1166 = vcmp.lt.s32.totalorder %v1006, 0
      %vm1167 = vcmp.lt.s32.totalorder %v1013, 0
      %vm1168 = vcmp.lt.s32.totalorder %v1020, 0
      %vm1169 = vcmp.lt.s32.totalorder %v1027, 0
      %vm1170 = vcmp.lt.s32.totalorder %v1034, 0
      %vm1171 = vcmp.lt.s32.totalorder %v1041, 0
      %vm1172 = vcmp.lt.s32.totalorder %v1048, 0
      %vm1173 = vcmp.lt.s32.totalorder %v1055, 0
      %vm1174 = vcmp.lt.s32.totalorder %v1062, 0
      %vm1175 = vcmp.lt.s32.totalorder %v1069, 0
      %vm1176 = vcmp.lt.s32.totalorder %v1076, 0
      %vm1177 = vcmp.lt.s32.totalorder %v1083, 0
      %vm1178 = vcmp.lt.s32.totalorder %v1090, 0
      %vm1179 = vcmp.lt.s32.totalorder %v1097, 0
      %vm1180 = vcmp.lt.s32.totalorder %v1104, 0
      %vm1181 = vcmp.lt.s32.totalorder %v1111, 0
      %vm1182 = vcmp.lt.s32.totalorder %v1118, 0
      %vm1183 = vmand %vm1151, %vm1119
      %vm1184 = vmand %vm1152, %vm1120
      %vm1185 = vmand %vm1153, %vm1121
      %vm1186 = vmand %vm1154, %vm1122
      %vm1187 = vmand %vm1155, %vm1123
      %vm1188 = vmand %vm1156, %vm1124
      %vm1189 = vmand %vm1157, %vm1125
      %vm1190 = vmand %vm1158, %vm1126
      %vm1191 = vmand %vm1159, %vm1127
      %vm1192 = vmand %vm1160, %vm1128
      %vm1193 = vmand %vm1161, %vm1129
      %vm1194 = vmand %vm1162, %vm1130
      %vm1195 = vmand %vm1163, %vm1131
      %vm1196 = vmand %vm1164, %vm1132
      %vm1197 = vmand %vm1165, %vm1133
      %vm1198 = vmand %vm1166, %vm1134
      %vm1199 = vmand %vm1167, %vm1135
      %vm1200 = vmand %vm1168, %vm1136
      %vm1201 = vmand %vm1169, %vm1137
      %vm1202 = vmand %vm1170, %vm1138
      %vm1203 = vmand %vm1171, %vm1139
      %vm1204 = vmand %vm1172, %vm1140
      %vm1205 = vmand %vm1173, %vm1141
      %vm1206 = vmand %vm1174, %vm1142
      %vm1207 = vmand %vm1175, %vm1143
      %vm1208 = vmand %vm1176, %vm1144
      %vm1209 = vmand %vm1177, %vm1145
      %vm1210 = vmand %vm1178, %vm1146
      %vm1211 = vmand %vm1179, %vm1147
      %vm1212 = vmand %vm1180, %vm1148
      %vm1213 = vmand %vm1181, %vm1149
      %vm1214 = vmand %vm1182, %vm1150
      %v1215 = vadd.s32 %v901, 16
      %v1216 = vadd.s32 %v908, 16
      %v1217 = vadd.s32 %v915, 16
      %v1218 = vadd.s32 %v922, 16
      %v1219 = vadd.s32 %v929, 16
      %v1220 = vadd.s32 %v936, 16
      %v1221 = vadd.s32 %v943, 16
      %v1222 = vadd.s32 %v950, 16
      %v1223 = vadd.s32 %v957, 16
      %v1224 = vadd.s32 %v964, 16
      %v1225 = vadd.s32 %v971, 16
      %v1226 = vadd.s32 %v978, 16
      %v1227 = vadd.s32 %v985, 16
      %v1228 = vadd.s32 %v992, 16
      %v1229 = vadd.s32 %v999, 16
      %v1230 = vadd.s32 %v1006, 16
      %v1231 = vadd.s32 %v1013, 16
      %v1232 = vadd.s32 %v1020, 16
      %v1233 = vadd.s32 %v1027, 16
      %v1234 = vadd.s32 %v1034, 16
      %v1235 = vadd.s32 %v1041, 16
      %v1236 = vadd.s32 %v1048, 16
      %v1237 = vadd.s32 %v1055, 16
      %v1238 = vadd.s32 %v1062, 16
      %v1239 = vadd.s32 %v1069, 16
      %v1240 = vadd.s32 %v1076, 16
      %v1241 = vadd.s32 %v1083, 16
      %v1242 = vadd.s32 %v1090, 16
      %v1243 = vadd.s32 %v1097, 16
      %v1244 = vadd.s32 %v1104, 16
      %v1245 = vadd.s32 %v1111, 16
      %v1246 = vadd.s32 %v1118, 16
      %v1247 = vsel %vm1183, %v1215, %v901
      %v1248 = vsel %vm1184, %v1216, %v908
      %v1249 = vsel %vm1185, %v1217, %v915
      %v1250 = vsel %vm1186, %v1218, %v922
      %v1251 = vsel %vm1187, %v1219, %v929
      %v1252 = vsel %vm1188, %v1220, %v936
      %v1253 = vsel %vm1189, %v1221, %v943
      %v1254 = vsel %vm1190, %v1222, %v950
      %v1255 = vsel %vm1191, %v1223, %v957
      %v1256 = vsel %vm1192, %v1224, %v964
      %v1257 = vsel %vm1193, %v1225, %v971
      %v1258 = vsel %vm1194, %v1226, %v978
      %v1259 = vsel %vm1195, %v1227, %v985
      %v1260 = vsel %vm1196, %v1228, %v992
      %v1261 = vsel %vm1197, %v1229, %v999
      %v1262 = vsel %vm1198, %v1230, %v1006
      %v1263 = vsel %vm1199, %v1231, %v1013
      %v1264 = vsel %vm1200, %v1232, %v1020
      %v1265 = vsel %vm1201, %v1233, %v1027
      %v1266 = vsel %vm1202, %v1234, %v1034
      %v1267 = vsel %vm1203, %v1235, %v1041
      %v1268 = vsel %vm1204, %v1236, %v1048
      %v1269 = vsel %vm1205, %v1237, %v1055
      %v1270 = vsel %vm1206, %v1238, %v1062
      %v1271 = vsel %vm1207, %v1239, %v1069
      %v1272 = vsel %vm1208, %v1240, %v1076
      %v1273 = vsel %vm1209, %v1241, %v1083
      %v1274 = vsel %vm1210, %v1242, %v1090
      %v1275 = vsel %vm1211, %v1243, %v1097
      %v1276 = vsel %vm1212, %v1244, %v1104
      %v1277 = vsel %vm1213, %v1245, %v1111
      %v1278 = vsel %vm1214, %v1246, %v1118
      %vm1279 = vcmp.gt.s32.totalorder %v1247, 0
      %vm1280 = vcmp.gt.s32.totalorder %v1248, 0
      %vm1281 = vcmp.gt.s32.totalorder %v1249, 0
      %vm1282 = vcmp.gt.s32.totalorder %v1250, 0
      %vm1283 = vcmp.gt.s32.totalorder %v1251, 0
      %vm1284 = vcmp.gt.s32.totalorder %v1252, 0
      %vm1285 = vcmp.gt.s32.totalorder %v1253, 0
      %vm1286 = vcmp.gt.s32.totalorder %v1254, 0
      %vm1287 = vcmp.gt.s32.totalorder %v1255, 0
      %vm1288 = vcmp.gt.s32.totalorder %v1256, 0
      %vm1289 = vcmp.gt.s32.totalorder %v1257, 0
      %vm1290 = vcmp.gt.s32.totalorder %v1258, 0
      %vm1291 = vcmp.gt.s32.totalorder %v1259, 0
      %vm1292 = vcmp.gt.s32.totalorder %v1260, 0
      %vm1293 = vcmp.gt.s32.totalorder %v1261, 0
      %vm1294 = vcmp.gt.s32.totalorder %v1262, 0
      %vm1295 = vcmp.gt.s32.totalorder %v1263, 0
      %vm1296 = vcmp.gt.s32.totalorder %v1264, 0
      %vm1297 = vcmp.gt.s32.totalorder %v1265, 0
      %vm1298 = vcmp.gt.s32.totalorder %v1266, 0
      %vm1299 = vcmp.gt.s32.totalorder %v1267, 0
      %vm1300 = vcmp.gt.s32.totalorder %v1268, 0
      %vm1301 = vcmp.gt.s32.totalorder %v1269, 0
      %vm1302 = vcmp.gt.s32.totalorder %v1270, 0
      %vm1303 = vcmp.gt.s32.totalorder %v1271, 0
      %vm1304 = vcmp.gt.s32.totalorder %v1272, 0
      %vm1305 = vcmp.gt.s32.totalorder %v1273, 0
      %vm1306 = vcmp.gt.s32.totalorder %v1274, 0
      %vm1307 = vcmp.gt.s32.totalorder %v1275, 0
      %vm1308 = vcmp.gt.s32.totalorder %v1276, 0
      %vm1309 = vcmp.gt.s32.totalorder %v1277, 0
      %vm1310 = vcmp.gt.s32.totalorder %v1278, 0
      %vm1311 = vcmp.lt.s32.totalorder %v1247, 15
      %vm1312 = vcmp.lt.s32.totalorder %v1248, 15
      %vm1313 = vcmp.lt.s32.totalorder %v1249, 15
      %vm1314 = vcmp.lt.s32.totalorder %v1250, 15
      %vm1315 = vcmp.lt.s32.totalorder %v1251, 15
      %vm1316 = vcmp.lt.s32.totalorder %v1252, 15
      %vm1317 = vcmp.lt.s32.totalorder %v1253, 15
      %vm1318 = vcmp.lt.s32.totalorder %v1254, 15
      %vm1319 = vcmp.lt.s32.totalorder %v1255, 15
      %vm1320 = vcmp.lt.s32.totalorder %v1256, 15
      %vm1321 = vcmp.lt.s32.totalorder %v1257, 15
      %vm1322 = vcmp.lt.s32.totalorder %v1258, 15
      %vm1323 = vcmp.lt.s32.totalorder %v1259, 15
      %vm1324 = vcmp.lt.s32.totalorder %v1260, 15
      %vm1325 = vcmp.lt.s32.totalorder %v1261, 15
      %vm1326 = vcmp.lt.s32.totalorder %v1262, 15
      %vm1327 = vcmp.lt.s32.totalorder %v1263, 15
      %vm1328 = vcmp.lt.s32.totalorder %v1264, 15
      %vm1329 = vcmp.lt.s32.totalorder %v1265, 15
      %vm1330 = vcmp.lt.s32.totalorder %v1266, 15
      %vm1331 = vcmp.lt.s32.totalorder %v1267, 15
      %vm1332 = vcmp.lt.s32.totalorder %v1268, 15
      %vm1333 = vcmp.lt.s32.totalorder %v1269, 15
      %vm1334 = vcmp.lt.s32.totalorder %v1270, 15
      %vm1335 = vcmp.lt.s32.totalorder %v1271, 15
      %vm1336 = vcmp.lt.s32.totalorder %v1272, 15
      %vm1337 = vcmp.lt.s32.totalorder %v1273, 15
      %vm1338 = vcmp.lt.s32.totalorder %v1274, 15
      %vm1339 = vcmp.lt.s32.totalorder %v1275, 15
      %vm1340 = vcmp.lt.s32.totalorder %v1276, 15
      %vm1341 = vcmp.lt.s32.totalorder %v1277, 15
      %vm1342 = vcmp.lt.s32.totalorder %v1278, 15
      %v1343 = vsel %vm1279, 1, 0
      %v1344 = vsel %vm1280, 1, 0
      %v1345 = vsel %vm1281, 1, 0
      %v1346 = vsel %vm1282, 1, 0
      %v1347 = vsel %vm1283, 1, 0
      %v1348 = vsel %vm1284, 1, 0
      %v1349 = vsel %vm1285, 1, 0
      %v1350 = vsel %vm1286, 1, 0
      %v1351 = vsel %vm1287, 1, 0
      %v1352 = vsel %vm1288, 1, 0
      %v1353 = vsel %vm1289, 1, 0
      %v1354 = vsel %vm1290, 1, 0
      %v1355 = vsel %vm1291, 1, 0
      %v1356 = vsel %vm1292, 1, 0
      %v1357 = vsel %vm1293, 1, 0
      %v1358 = vsel %vm1294, 1, 0
      %v1359 = vsel %vm1295, 1, 0
      %v1360 = vsel %vm1296, 1, 0
      %v1361 = vsel %vm1297, 1, 0
      %v1362 = vsel %vm1298, 1, 0
      %v1363 = vsel %vm1299, 1, 0
      %v1364 = vsel %vm1300, 1, 0
      %v1365 = vsel %vm1301, 1, 0
      %v1366 = vsel %vm1302, 1, 0
      %v1367 = vsel %vm1303, 1, 0
      %v1368 = vsel %vm1304, 1, 0
      %v1369 = vsel %vm1305, 1, 0
      %v1370 = vsel %vm1306, 1, 0
      %v1371 = vsel %vm1307, 1, 0
      %v1372 = vsel %vm1308, 1, 0
      %v1373 = vsel %vm1309, 1, 0
      %v1374 = vsel %vm1310, 1, 0
      %vm1375 = vcmp.eq.s32.totalorder %v1343, 1
      %vm1376 = vcmp.eq.s32.totalorder %v1344, 1
      %vm1377 = vcmp.eq.s32.totalorder %v1345, 1
      %vm1378 = vcmp.eq.s32.totalorder %v1346, 1
      %vm1379 = vcmp.eq.s32.totalorder %v1347, 1
      %vm1380 = vcmp.eq.s32.totalorder %v1348, 1
      %vm1381 = vcmp.eq.s32.totalorder %v1349, 1
      %vm1382 = vcmp.eq.s32.totalorder %v1350, 1
      %vm1383 = vcmp.eq.s32.totalorder %v1351, 1
      %vm1384 = vcmp.eq.s32.totalorder %v1352, 1
      %vm1385 = vcmp.eq.s32.totalorder %v1353, 1
      %vm1386 = vcmp.eq.s32.totalorder %v1354, 1
      %vm1387 = vcmp.eq.s32.totalorder %v1355, 1
      %vm1388 = vcmp.eq.s32.totalorder %v1356, 1
      %vm1389 = vcmp.eq.s32.totalorder %v1357, 1
      %vm1390 = vcmp.eq.s32.totalorder %v1358, 1
      %vm1391 = vcmp.eq.s32.totalorder %v1359, 1
      %vm1392 = vcmp.eq.s32.totalorder %v1360, 1
      %vm1393 = vcmp.eq.s32.totalorder %v1361, 1
      %vm1394 = vcmp.eq.s32.totalorder %v1362, 1
      %vm1395 = vcmp.eq.s32.totalorder %v1363, 1
      %vm1396 = vcmp.eq.s32.totalorder %v1364, 1
      %vm1397 = vcmp.eq.s32.totalorder %v1365, 1
      %vm1398 = vcmp.eq.s32.totalorder %v1366, 1
      %vm1399 = vcmp.eq.s32.totalorder %v1367, 1
      %vm1400 = vcmp.eq.s32.totalorder %v1368, 1
      %vm1401 = vcmp.eq.s32.totalorder %v1369, 1
      %vm1402 = vcmp.eq.s32.totalorder %v1370, 1
      %vm1403 = vcmp.eq.s32.totalorder %v1371, 1
      %vm1404 = vcmp.eq.s32.totalorder %v1372, 1
      %vm1405 = vcmp.eq.s32.totalorder %v1373, 1
      %vm1406 = vcmp.eq.s32.totalorder %v1374, 1
      %v1407 = vsel %vm1375, %v858, 0.0
      %v1408 = vsel %vm1376, %v718, 0.0
      %v1409 = vsel %vm1377, %v859, 0.0
      %v1410 = vsel %vm1378, %v756, 0.0
      %v1411 = vsel %vm1379, %v758, 0.0
      %v1412 = vsel %vm1380, %v760, 0.0
      %v1413 = vsel %vm1381, %v762, 0.0
      %v1414 = vsel %vm1382, %v764, 0.0
      %v1415 = vsel %vm1383, %v766, 0.0
      %v1416 = vsel %vm1384, %v768, 0.0
      %v1417 = vsel %vm1385, %v770, 0.0
      %v1418 = vsel %vm1386, %v772, 0.0
      %v1419 = vsel %vm1387, %v774, 0.0
      %v1420 = vsel %vm1388, %v776, 0.0
      %v1421 = vsel %vm1389, %v778, 0.0
      %v1422 = vsel %vm1390, %v780, 0.0
      %v1423 = vsel %vm1391, %v782, 0.0
      %v1424 = vsel %vm1392, %v784, 0.0
      %v1425 = vsel %vm1393, %v786, 0.0
      %v1426 = vsel %vm1394, %v788, 0.0
      %v1427 = vsel %vm1395, %v790, 0.0
      %v1428 = vsel %vm1396, %v792, 0.0
      %v1429 = vsel %vm1397, %v794, 0.0
      %v1430 = vsel %vm1398, %v796, 0.0
      %v1431 = vsel %vm1399, %v798, 0.0
      %v1432 = vsel %vm1400, %v800, 0.0
      %v1433 = vsel %vm1401, %v802, 0.0
      %v1434 = vsel %vm1402, %v804, 0.0
      %v1435 = vsel %vm1403, %v806, 0.0
      %v1436 = vsel %vm1404, %v808, 0.0
      %v1437 = vsel %vm1405, %v810, 0.0
      %v1438 = vsel %vm1406, %v812, 0.0
      %v1439 = vsel %vm1311, 1, 0
      %v1440 = vsel %vm1312, 1, 0
      %v1441 = vsel %vm1313, 1, 0
      %v1442 = vsel %vm1314, 1, 0
      %v1443 = vsel %vm1315, 1, 0
      %v1444 = vsel %vm1316, 1, 0
      %v1445 = vsel %vm1317, 1, 0
      %v1446 = vsel %vm1318, 1, 0
      %v1447 = vsel %vm1319, 1, 0
      %v1448 = vsel %vm1320, 1, 0
      %v1449 = vsel %vm1321, 1, 0
      %v1450 = vsel %vm1322, 1, 0
      %v1451 = vsel %vm1323, 1, 0
      %v1452 = vsel %vm1324, 1, 0
      %v1453 = vsel %vm1325, 1, 0
      %v1454 = vsel %vm1326, 1, 0
      %v1455 = vsel %vm1327, 1, 0
      %v1456 = vsel %vm1328, 1, 0
      %v1457 = vsel %vm1329, 1, 0
      %v1458 = vsel %vm1330, 1, 0
      %v1459 = vsel %vm1331, 1, 0
      %v1460 = vsel %vm1332, 1, 0
      %v1461 = vsel %vm1333, 1, 0
      %v1462 = vsel %vm1334, 1, 0
      %v1463 = vsel %vm1335, 1, 0
      %v1464 = vsel %vm1336, 1, 0
      %v1465 = vsel %vm1337, 1, 0
      %v1466 = vsel %vm1338, 1, 0
      %v1467 = vsel %vm1339, 1, 0
      %v1468 = vsel %vm1340, 1, 0
      %v1469 = vsel %vm1341, 1, 0
      %v1470 = vsel %vm1342, 1, 0
      %vm1471 = vcmp.eq.s32.totalorder %v1439, 1
      %vm1472 = vcmp.eq.s32.totalorder %v1440, 1
      %vm1473 = vcmp.eq.s32.totalorder %v1441, 1
      %vm1474 = vcmp.eq.s32.totalorder %v1442, 1
      %vm1475 = vcmp.eq.s32.totalorder %v1443, 1
      %vm1476 = vcmp.eq.s32.totalorder %v1444, 1
      %vm1477 = vcmp.eq.s32.totalorder %v1445, 1
      %vm1478 = vcmp.eq.s32.totalorder %v1446, 1
      %vm1479 = vcmp.eq.s32.totalorder %v1447, 1
      %vm1480 = vcmp.eq.s32.totalorder %v1448, 1
      %vm1481 = vcmp.eq.s32.totalorder %v1449, 1
      %vm1482 = vcmp.eq.s32.totalorder %v1450, 1
      %vm1483 = vcmp.eq.s32.totalorder %v1451, 1
      %vm1484 = vcmp.eq.s32.totalorder %v1452, 1
      %vm1485 = vcmp.eq.s32.totalorder %v1453, 1
      %vm1486 = vcmp.eq.s32.totalorder %v1454, 1
      %vm1487 = vcmp.eq.s32.totalorder %v1455, 1
      %vm1488 = vcmp.eq.s32.totalorder %v1456, 1
      %vm1489 = vcmp.eq.s32.totalorder %v1457, 1
      %vm1490 = vcmp.eq.s32.totalorder %v1458, 1
      %vm1491 = vcmp.eq.s32.totalorder %v1459, 1
      %vm1492 = vcmp.eq.s32.totalorder %v1460, 1
      %vm1493 = vcmp.eq.s32.totalorder %v1461, 1
      %vm1494 = vcmp.eq.s32.totalorder %v1462, 1
      %vm1495 = vcmp.eq.s32.totalorder %v1463, 1
      %vm1496 = vcmp.eq.s32.totalorder %v1464, 1
      %vm1497 = vcmp.eq.s32.totalorder %v1465, 1
      %vm1498 = vcmp.eq.s32.totalorder %v1466, 1
      %vm1499 = vcmp.eq.s32.totalorder %v1467, 1
      %vm1500 = vcmp.eq.s32.totalorder %v1468, 1
      %vm1501 = vcmp.eq.s32.totalorder %v1469, 1
      %vm1502 = vcmp.eq.s32.totalorder %v1470, 1
      %vm1505 = vcmask 1045504
      %v1506 = vrot.slane %v858, 2
      %v1507 = vrot.slane %v718, 2
      %v1508 = vsel %vm1505, %v1506, %v1507
      %v1509 = vrot.slane %v859, 2
      %v1510 = vsel %vm1505, %v1507, %v1509
      %v1511 = vrot.slane %v756, 2
      %v1512 = vsel %vm1505, %v1509, %v1511
      %v1513 = vrot.slane %v758, 2
      %v1514 = vsel %vm1505, %v1511, %v1513
      %v1515 = vrot.slane %v760, 2
      %v1516 = vsel %vm1505, %v1513, %v1515
      %v1517 = vrot.slane %v762, 2
      %v1518 = vsel %vm1505, %v1515, %v1517
      %v1519 = vrot.slane %v764, 2
      %v1520 = vsel %vm1505, %v1517, %v1519
      %v1521 = vrot.slane %v766, 2
      %v1522 = vsel %vm1505, %v1519, %v1521
      %v1523 = vrot.slane %v768, 2
      %v1524 = vsel %vm1505, %v1521, %v1523
      %v1525 = vrot.slane %v770, 2
      %v1526 = vsel %vm1505, %v1523, %v1525
      %v1527 = vrot.slane %v772, 2
      %v1528 = vsel %vm1505, %v1525, %v1527
      %v1529 = vrot.slane %v774, 2
      %v1530 = vsel %vm1505, %v1527, %v1529
      %v1531 = vrot.slane %v776, 2
      %v1532 = vsel %vm1505, %v1529, %v1531
      %v1533 = vrot.slane %v778, 2
      %v1534 = vsel %vm1505, %v1531, %v1533
      %v1535 = vrot.slane %v780, 2
      %v1536 = vsel %vm1505, %v1533, %v1535
      %v1537 = vrot.slane %v782, 2
      %v1538 = vsel %vm1505, %v1535, %v1537
      %v1539 = vrot.slane %v784, 2
      %v1540 = vsel %vm1505, %v1537, %v1539
      %v1541 = vrot.slane %v786, 2
      %v1542 = vsel %vm1505, %v1539, %v1541
      %v1543 = vrot.slane %v788, 2
      %v1544 = vsel %vm1505, %v1541, %v1543
      %v1545 = vrot.slane %v790, 2
      %v1546 = vsel %vm1505, %v1543, %v1545
      %v1547 = vrot.slane %v792, 2
      %v1548 = vsel %vm1505, %v1545, %v1547
      %v1549 = vrot.slane %v794, 2
      %v1550 = vsel %vm1505, %v1547, %v1549
      %v1551 = vrot.slane %v796, 2
      %v1552 = vsel %vm1505, %v1549, %v1551
      %v1553 = vrot.slane %v798, 2
      %v1554 = vsel %vm1505, %v1551, %v1553
      %v1555 = vrot.slane %v800, 2
      %v1556 = vsel %vm1505, %v1553, %v1555
      %v1557 = vrot.slane %v802, 2
      %v1558 = vsel %vm1505, %v1555, %v1557
      %v1559 = vrot.slane %v804, 2
      %v1560 = vsel %vm1505, %v1557, %v1559
      %v1561 = vrot.slane %v806, 2
      %v1562 = vsel %vm1505, %v1559, %v1561
      %v1563 = vrot.slane %v808, 2
      %v1564 = vsel %vm1505, %v1561, %v1563
      %v1565 = vrot.slane %v810, 2
      %v1566 = vsel %vm1505, %v1563, %v1565
      %v1567 = vrot.slane %v812, 2
      %v1568 = vsel %vm1505, %v1565, %v1567
      %v1569 = vrot.slane %v814, 2
      %v1570 = vsel %vm1505, %v1567, %v1569
      %v1603 = vsel %vm1471, %v1508, 0.0
      %v1604 = vsel %vm1472, %v1510, 0.0
      %v1605 = vsel %vm1473, %v1512, 0.0
      %v1606 = vsel %vm1474, %v1514, 0.0
      %v1607 = vsel %vm1475, %v1516, 0.0
      %v1608 = vsel %vm1476, %v1518, 0.0
      %v1609 = vsel %vm1477, %v1520, 0.0
      %v1610 = vsel %vm1478, %v1522, 0.0
      %v1611 = vsel %vm1479, %v1524, 0.0
      %v1612 = vsel %vm1480, %v1526, 0.0
      %v1613 = vsel %vm1481, %v1528, 0.0
      %v1614 = vsel %vm1482, %v1530, 0.0
      %v1615 = vsel %vm1483, %v1532, 0.0
      %v1616 = vsel %vm1484, %v1534, 0.0
      %v1617 = vsel %vm1485, %v1536, 0.0
      %v1618 = vsel %vm1486, %v1538, 0.0
      %v1619 = vsel %vm1487, %v1540, 0.0
      %v1620 = vsel %vm1488, %v1542, 0.0
      %v1621 = vsel %vm1489, %v1544, 0.0
      %v1622 = vsel %vm1490, %v1546, 0.0
      %v1623 = vsel %vm1491, %v1548, 0.0
      %v1624 = vsel %vm1492, %v1550, 0.0
      %v1625 = vsel %vm1493, %v1552, 0.0
      %v1626 = vsel %vm1494, %v1554, 0.0
      %v1627 = vsel %vm1495, %v1556, 0.0
      %v1628 = vsel %vm1496, %v1558, 0.0
      %v1629 = vsel %vm1497, %v1560, 0.0
      %v1630 = vsel %vm1498, %v1562, 0.0
      %v1631 = vsel %vm1499, %v1564, 0.0
      %v1632 = vsel %vm1500, %v1566, 0.0
      %v1633 = vsel %vm1501, %v1568, 0.0
      %v1634 = vsel %vm1502, %v1570, 0.0
      %v1635 = vsel %vm1375, %v859, 0.0
      %v1636 = vsel %vm1376, %v756, 0.0
      %v1637 = vsel %vm1377, %v758, 0.0
      %v1638 = vsel %vm1378, %v760, 0.0
      %v1639 = vsel %vm1379, %v762, 0.0
      %v1640 = vsel %vm1380, %v764, 0.0
      %v1641 = vsel %vm1381, %v766, 0.0
      %v1642 = vsel %vm1382, %v768, 0.0
      %v1643 = vsel %vm1383, %v770, 0.0
      %v1644 = vsel %vm1384, %v772, 0.0
      %v1645 = vsel %vm1385, %v774, 0.0
      %v1646 = vsel %vm1386, %v776, 0.0
      %v1647 = vsel %vm1387, %v778, 0.0
      %v1648 = vsel %vm1388, %v780, 0.0
      %v1649 = vsel %vm1389, %v782, 0.0
      %v1650 = vsel %vm1390, %v784, 0.0
      %v1651 = vsel %vm1391, %v786, 0.0
      %v1652 = vsel %vm1392, %v788, 0.0
      %v1653 = vsel %vm1393, %v790, 0.0
      %v1654 = vsel %vm1394, %v792, 0.0
      %v1655 = vsel %vm1395, %v794, 0.0
      %v1656 = vsel %vm1396, %v796, 0.0
      %v1657 = vsel %vm1397, %v798, 0.0
      %v1658 = vsel %vm1398, %v800, 0.0
      %v1659 = vsel %vm1399, %v802, 0.0
      %v1660 = vsel %vm1400, %v804, 0.0
      %v1661 = vsel %vm1401, %v806, 0.0
      %v1662 = vsel %vm1402, %v808, 0.0
      %v1663 = vsel %vm1403, %v810, 0.0
      %v1664 = vsel %vm1404, %v812, 0.0
      %v1665 = vsel %vm1405, %v814, 0.0
      %v1666 = vsel %vm1406, %v816, 0.0
      %v1668 = vrot.slane %v816, 2
      %v1669 = vsel %vm1505, %v1569, %v1668
      %v1670 = vrot.slane %v860, 2
      %v1671 = vsel %vm1505, %v1668, %v1670
      %v1674 = vsel %vm1471, %v1512, 0.0
      %v1675 = vsel %vm1472, %v1514, 0.0
      %v1676 = vsel %vm1473, %v1516, 0.0
      %v1677 = vsel %vm1474, %v1518, 0.0
      %v1678 = vsel %vm1475, %v1520, 0.0
      %v1679 = vsel %vm1476, %v1522, 0.0
      %v1680 = vsel %vm1477, %v1524, 0.0
      %v1681 = vsel %vm1478, %v1526, 0.0
      %v1682 = vsel %vm1479, %v1528, 0.0
      %v1683 = vsel %vm1480, %v1530, 0.0
      %v1684 = vsel %vm1481, %v1532, 0.0
      %v1685 = vsel %vm1482, %v1534, 0.0
      %v1686 = vsel %vm1483, %v1536, 0.0
      %v1687 = vsel %vm1484, %v1538, 0.0
      %v1688 = vsel %vm1485, %v1540, 0.0
      %v1689 = vsel %vm1486, %v1542, 0.0
      %v1690 = vsel %vm1487, %v1544, 0.0
      %v1691 = vsel %vm1488, %v1546, 0.0
      %v1692 = vsel %vm1489, %v1548, 0.0
      %v1693 = vsel %vm1490, %v1550, 0.0
      %v1694 = vsel %vm1491, %v1552, 0.0
      %v1695 = vsel %vm1492, %v1554, 0.0
      %v1696 = vsel %vm1493, %v1556, 0.0
      %v1697 = vsel %vm1494, %v1558, 0.0
      %v1698 = vsel %vm1495, %v1560, 0.0
      %v1699 = vsel %vm1496, %v1562, 0.0
      %v1700 = vsel %vm1497, %v1564, 0.0
      %v1701 = vsel %vm1498, %v1566, 0.0
      %v1702 = vsel %vm1499, %v1568, 0.0
      %v1703 = vsel %vm1500, %v1570, 0.0
      %v1704 = vsel %vm1501, %v1669, 0.0
      %v1705 = vsel %vm1502, %v1671, 0.0
      %v1706 = vsel %vm1375, %v758, 0.0
      %v1707 = vsel %vm1376, %v760, 0.0
      %v1708 = vsel %vm1377, %v762, 0.0
      %v1709 = vsel %vm1378, %v764, 0.0
      %v1710 = vsel %vm1379, %v766, 0.0
      %v1711 = vsel %vm1380, %v768, 0.0
      %v1712 = vsel %vm1381, %v770, 0.0
      %v1713 = vsel %vm1382, %v772, 0.0
      %v1714 = vsel %vm1383, %v774, 0.0
      %v1715 = vsel %vm1384, %v776, 0.0
      %v1716 = vsel %vm1385, %v778, 0.0
      %v1717 = vsel %vm1386, %v780, 0.0
      %v1718 = vsel %vm1387, %v782, 0.0
      %v1719 = vsel %vm1388, %v784, 0.0
      %v1720 = vsel %vm1389, %v786, 0.0
      %v1721 = vsel %vm1390, %v788, 0.0
      %v1722 = vsel %vm1391, %v790, 0.0
      %v1723 = vsel %vm1392, %v792, 0.0
      %v1724 = vsel %vm1393, %v794, 0.0
      %v1725 = vsel %vm1394, %v796, 0.0
      %v1726 = vsel %vm1395, %v798, 0.0
      %v1727 = vsel %vm1396, %v800, 0.0
      %v1728 = vsel %vm1397, %v802, 0.0
      %v1729 = vsel %vm1398, %v804, 0.0
      %v1730 = vsel %vm1399, %v806, 0.0
      %v1731 = vsel %vm1400, %v808, 0.0
      %v1732 = vsel %vm1401, %v810, 0.0
      %v1733 = vsel %vm1402, %v812, 0.0
      %v1734 = vsel %vm1403, %v814, 0.0
      %v1735 = vsel %vm1404, %v816, 0.0
      %v1736 = vsel %vm1405, %v860, 0.0
      %v1737 = vsel %vm1406, %v854, 0.0
      %v1739 = vrot.slane %v854, 2
      %v1740 = vsel %vm1505, %v1670, %v1739
      %v1741 = vrot.slane %v861, 2
      %v1742 = vsel %vm1505, %v1739, %v1741
      %v1745 = vsel %vm1471, %v1516, 0.0
      %v1746 = vsel %vm1472, %v1518, 0.0
      %v1747 = vsel %vm1473, %v1520, 0.0
      %v1748 = vsel %vm1474, %v1522, 0.0
      %v1749 = vsel %vm1475, %v1524, 0.0
      %v1750 = vsel %vm1476, %v1526, 0.0
      %v1751 = vsel %vm1477, %v1528, 0.0
      %v1752 = vsel %vm1478, %v1530, 0.0
      %v1753 = vsel %vm1479, %v1532, 0.0
      %v1754 = vsel %vm1480, %v1534, 0.0
      %v1755 = vsel %vm1481, %v1536, 0.0
      %v1756 = vsel %vm1482, %v1538, 0.0
      %v1757 = vsel %vm1483, %v1540, 0.0
      %v1758 = vsel %vm1484, %v1542, 0.0
      %v1759 = vsel %vm1485, %v1544, 0.0
      %v1760 = vsel %vm1486, %v1546, 0.0
      %v1761 = vsel %vm1487, %v1548, 0.0
      %v1762 = vsel %vm1488, %v1550, 0.0
      %v1763 = vsel %vm1489, %v1552, 0.0
      %v1764 = vsel %vm1490, %v1554, 0.0
      %v1765 = vsel %vm1491, %v1556, 0.0
      %v1766 = vsel %vm1492, %v1558, 0.0
      %v1767 = vsel %vm1493, %v1560, 0.0
      %v1768 = vsel %vm1494, %v1562, 0.0
      %v1769 = vsel %vm1495, %v1564, 0.0
      %v1770 = vsel %vm1496, %v1566, 0.0
      %v1771 = vsel %vm1497, %v1568, 0.0
      %v1772 = vsel %vm1498, %v1570, 0.0
      %v1773 = vsel %vm1499, %v1669, 0.0
      %v1774 = vsel %vm1500, %v1671, 0.0
      %v1775 = vsel %vm1501, %v1740, 0.0
      %v1776 = vsel %vm1502, %v1742, 0.0
      %vm1777 = vcmask 1046528
      %v1778 = vrot.slane %v858, 1
      %v1779 = vrot.slane %v718, 1
      %v1780 = vsel %vm1777, %v1778, %v1779
      %v1781 = vrot.slane %v859, 1
      %v1782 = vsel %vm1777, %v1779, %v1781
      %v1783 = vrot.slane %v756, 1
      %v1784 = vsel %vm1777, %v1781, %v1783
      %v1785 = vrot.slane %v758, 1
      %v1786 = vsel %vm1777, %v1783, %v1785
      %v1787 = vrot.slane %v760, 1
      %v1788 = vsel %vm1777, %v1785, %v1787
      %v1789 = vrot.slane %v762, 1
      %v1790 = vsel %vm1777, %v1787, %v1789
      %v1791 = vrot.slane %v764, 1
      %v1792 = vsel %vm1777, %v1789, %v1791
      %v1793 = vrot.slane %v766, 1
      %v1794 = vsel %vm1777, %v1791, %v1793
      %v1795 = vrot.slane %v768, 1
      %v1796 = vsel %vm1777, %v1793, %v1795
      %v1797 = vrot.slane %v770, 1
      %v1798 = vsel %vm1777, %v1795, %v1797
      %v1799 = vrot.slane %v772, 1
      %v1800 = vsel %vm1777, %v1797, %v1799
      %v1801 = vrot.slane %v774, 1
      %v1802 = vsel %vm1777, %v1799, %v1801
      %v1803 = vrot.slane %v776, 1
      %v1804 = vsel %vm1777, %v1801, %v1803
      %v1805 = vrot.slane %v778, 1
      %v1806 = vsel %vm1777, %v1803, %v1805
      %v1807 = vrot.slane %v780, 1
      %v1808 = vsel %vm1777, %v1805, %v1807
      %v1809 = vrot.slane %v782, 1
      %v1810 = vsel %vm1777, %v1807, %v1809
      %v1811 = vrot.slane %v784, 1
      %v1812 = vsel %vm1777, %v1809, %v1811
      %v1813 = vrot.slane %v786, 1
      %v1814 = vsel %vm1777, %v1811, %v1813
      %v1815 = vrot.slane %v788, 1
      %v1816 = vsel %vm1777, %v1813, %v1815
      %v1817 = vrot.slane %v790, 1
      %v1818 = vsel %vm1777, %v1815, %v1817
      %v1819 = vrot.slane %v792, 1
      %v1820 = vsel %vm1777, %v1817, %v1819
      %v1821 = vrot.slane %v794, 1
      %v1822 = vsel %vm1777, %v1819, %v1821
      %v1823 = vrot.slane %v796, 1
      %v1824 = vsel %vm1777, %v1821, %v1823
      %v1825 = vrot.slane %v798, 1
      %v1826 = vsel %vm1777, %v1823, %v1825
      %v1827 = vrot.slane %v800, 1
      %v1828 = vsel %vm1777, %v1825, %v1827
      %v1829 = vrot.slane %v802, 1
      %v1830 = vsel %vm1777, %v1827, %v1829
      %v1831 = vrot.slane %v804, 1
      %v1832 = vsel %vm1777, %v1829, %v1831
      %v1833 = vrot.slane %v806, 1
      %v1834 = vsel %vm1777, %v1831, %v1833
      %v1835 = vrot.slane %v808, 1
      %v1836 = vsel %vm1777, %v1833, %v1835
      %v1837 = vrot.slane %v810, 1
      %v1838 = vsel %vm1777, %v1835, %v1837
      %v1839 = vrot.slane %v812, 1
      %v1840 = vsel %vm1777, %v1837, %v1839
      %v1841 = vrot.slane %v814, 1
      %v1842 = vsel %vm1777, %v1839, %v1841
      %1843 = vrot.lane.b32.xlu0 %v1780, 4
      %v1844 = vpop.permute.xlu0 %1843
      %1845 = vrot.lane.b32.xlu0 %v1782, 4
      %v1846 = vpop.permute.xlu0 %1845
      %1847 = vrot.lane.b32.xlu0 %v1784, 4
      %v1848 = vpop.permute.xlu0 %1847
      %1849 = vrot.lane.b32.xlu0 %v1786, 4
      %v1850 = vpop.permute.xlu0 %1849
      %1851 = vrot.lane.b32.xlu0 %v1788, 4
      %v1852 = vpop.permute.xlu0 %1851
      %1853 = vrot.lane.b32.xlu0 %v1790, 4
      %v1854 = vpop.permute.xlu0 %1853
      %1855 = vrot.lane.b32.xlu0 %v1792, 4
      %v1856 = vpop.permute.xlu0 %1855
      %1857 = vrot.lane.b32.xlu0 %v1794, 4
      %v1858 = vpop.permute.xlu0 %1857
      %1859 = vrot.lane.b32.xlu0 %v1796, 4
      %v1860 = vpop.permute.xlu0 %1859
      %1861 = vrot.lane.b32.xlu0 %v1798, 4
      %v1862 = vpop.permute.xlu0 %1861
      %1863 = vrot.lane.b32.xlu0 %v1800, 4
      %v1864 = vpop.permute.xlu0 %1863
      %1865 = vrot.lane.b32.xlu0 %v1802, 4
      %v1866 = vpop.permute.xlu0 %1865
      %1867 = vrot.lane.b32.xlu0 %v1804, 4
      %v1868 = vpop.permute.xlu0 %1867
      %1869 = vrot.lane.b32.xlu0 %v1806, 4
      %v1870 = vpop.permute.xlu0 %1869
      %1871 = vrot.lane.b32.xlu0 %v1808, 4
      %v1872 = vpop.permute.xlu0 %1871
      %1873 = vrot.lane.b32.xlu0 %v1810, 4
      %v1874 = vpop.permute.xlu0 %1873
      %1875 = vrot.lane.b32.xlu0 %v1812, 4
      %v1876 = vpop.permute.xlu0 %1875
      %1877 = vrot.lane.b32.xlu0 %v1814, 4
      %v1878 = vpop.permute.xlu0 %1877
      %1879 = vrot.lane.b32.xlu0 %v1816, 4
      %v1880 = vpop.permute.xlu0 %1879
      %1881 = vrot.lane.b32.xlu0 %v1818, 4
      %v1882 = vpop.permute.xlu0 %1881
      %1883 = vrot.lane.b32.xlu0 %v1820, 4
      %v1884 = vpop.permute.xlu0 %1883
      %1885 = vrot.lane.b32.xlu0 %v1822, 4
      %v1886 = vpop.permute.xlu0 %1885
      %1887 = vrot.lane.b32.xlu0 %v1824, 4
      %v1888 = vpop.permute.xlu0 %1887
      %1889 = vrot.lane.b32.xlu0 %v1826, 4
      %v1890 = vpop.permute.xlu0 %1889
      %1891 = vrot.lane.b32.xlu0 %v1828, 4
      %v1892 = vpop.permute.xlu0 %1891
      %1893 = vrot.lane.b32.xlu0 %v1830, 4
      %v1894 = vpop.permute.xlu0 %1893
      %1895 = vrot.lane.b32.xlu0 %v1832, 4
      %v1896 = vpop.permute.xlu0 %1895
      %1897 = vrot.lane.b32.xlu0 %v1834, 4
      %v1898 = vpop.permute.xlu0 %1897
      %1899 = vrot.lane.b32.xlu0 %v1836, 4
      %v1900 = vpop.permute.xlu0 %1899
      %1901 = vrot.lane.b32.xlu0 %v1838, 4
      %v1902 = vpop.permute.xlu0 %1901
      %1903 = vrot.lane.b32.xlu0 %v1840, 4
      %v1904 = vpop.permute.xlu0 %1903
      %1905 = vrot.lane.b32.xlu0 %v1842, 4
      %v1906 = vpop.permute.xlu0 %1905
      %1971 = vrot.lane.b32.xlu0 %v1603, 8
      %v1972 = vpop.permute.xlu0 %1971
      %1973 = vrot.lane.b32.xlu0 %v1604, 8
      %v1974 = vpop.permute.xlu0 %1973
      %1975 = vrot.lane.b32.xlu0 %v1605, 8
      %v1976 = vpop.permute.xlu0 %1975
      %1977 = vrot.lane.b32.xlu0 %v1606, 8
      %v1978 = vpop.permute.xlu0 %1977
      %1979 = vrot.lane.b32.xlu0 %v1607, 8
      %v1980 = vpop.permute.xlu0 %1979
      %1981 = vrot.lane.b32.xlu0 %v1608, 8
      %v1982 = vpop.permute.xlu0 %1981
      %1983 = vrot.lane.b32.xlu0 %v1609, 8
      %v1984 = vpop.permute.xlu0 %1983
      %1985 = vrot.lane.b32.xlu0 %v1610, 8
      %v1986 = vpop.permute.xlu0 %1985
      %1987 = vrot.lane.b32.xlu0 %v1611, 8
      %v1988 = vpop.permute.xlu0 %1987
      %1989 = vrot.lane.b32.xlu0 %v1612, 8
      %v1990 = vpop.permute.xlu0 %1989
      %1991 = vrot.lane.b32.xlu0 %v1613, 8
      %v1992 = vpop.permute.xlu0 %1991
      %1993 = vrot.lane.b32.xlu0 %v1614, 8
      %v1994 = vpop.permute.xlu0 %1993
      %1995 = vrot.lane.b32.xlu0 %v1615, 8
      %v1996 = vpop.permute.xlu0 %1995
      %1997 = vrot.lane.b32.xlu0 %v1616, 8
      %v1998 = vpop.permute.xlu0 %1997
      %1999 = vrot.lane.b32.xlu0 %v1617, 8
      %v2000 = vpop.permute.xlu0 %1999
      %2001 = vrot.lane.b32.xlu0 %v1618, 8
      %v2002 = vpop.permute.xlu0 %2001
      %2003 = vrot.lane.b32.xlu0 %v1619, 8
      %v2004 = vpop.permute.xlu0 %2003
      %2005 = vrot.lane.b32.xlu0 %v1620, 8
      %v2006 = vpop.permute.xlu0 %2005
      %2007 = vrot.lane.b32.xlu0 %v1621, 8
      %v2008 = vpop.permute.xlu0 %2007
      %2009 = vrot.lane.b32.xlu0 %v1622, 8
      %v2010 = vpop.permute.xlu0 %2009
      %2011 = vrot.lane.b32.xlu0 %v1623, 8
      %v2012 = vpop.permute.xlu0 %2011
      %2013 = vrot.lane.b32.xlu0 %v1624, 8
      %v2014 = vpop.permute.xlu0 %2013
      %2015 = vrot.lane.b32.xlu0 %v1625, 8
      %v2016 = vpop.permute.xlu0 %2015
      %2017 = vrot.lane.b32.xlu0 %v1626, 8
      %v2018 = vpop.permute.xlu0 %2017
      %2019 = vrot.lane.b32.xlu0 %v1627, 8
      %v2020 = vpop.permute.xlu0 %2019
      %2021 = vrot.lane.b32.xlu0 %v1628, 8
      %v2022 = vpop.permute.xlu0 %2021
      %2023 = vrot.lane.b32.xlu0 %v1629, 8
      %v2024 = vpop.permute.xlu0 %2023
      %2025 = vrot.lane.b32.xlu0 %v1630, 8
      %v2026 = vpop.permute.xlu0 %2025
      %2027 = vrot.lane.b32.xlu0 %v1631, 8
      %v2028 = vpop.permute.xlu0 %2027
      %2029 = vrot.lane.b32.xlu0 %v1632, 8
      %v2030 = vpop.permute.xlu0 %2029
      %2031 = vrot.lane.b32.xlu0 %v1633, 8
      %v2032 = vpop.permute.xlu0 %2031
      %2033 = vrot.lane.b32.xlu0 %v1634, 8
      %v2034 = vpop.permute.xlu0 %2033
      %2099 = vrot.lane.b32.xlu0 %v1635, 12
      %v2100 = vpop.permute.xlu0 %2099
      %2101 = vrot.lane.b32.xlu0 %v1636, 12
      %v2102 = vpop.permute.xlu0 %2101
      %2103 = vrot.lane.b32.xlu0 %v1637, 12
      %v2104 = vpop.permute.xlu0 %2103
      %2105 = vrot.lane.b32.xlu0 %v1638, 12
      %v2106 = vpop.permute.xlu0 %2105
      %2107 = vrot.lane.b32.xlu0 %v1639, 12
      %v2108 = vpop.permute.xlu0 %2107
      %2109 = vrot.lane.b32.xlu0 %v1640, 12
      %v2110 = vpop.permute.xlu0 %2109
      %2111 = vrot.lane.b32.xlu0 %v1641, 12
      %v2112 = vpop.permute.xlu0 %2111
      %2113 = vrot.lane.b32.xlu0 %v1642, 12
      %v2114 = vpop.permute.xlu0 %2113
      %2115 = vrot.lane.b32.xlu0 %v1643, 12
      %v2116 = vpop.permute.xlu0 %2115
      %2117 = vrot.lane.b32.xlu0 %v1644, 12
      %v2118 = vpop.permute.xlu0 %2117
      %2119 = vrot.lane.b32.xlu0 %v1645, 12
      %v2120 = vpop.permute.xlu0 %2119
      %2121 = vrot.lane.b32.xlu0 %v1646, 12
      %v2122 = vpop.permute.xlu0 %2121
      %2123 = vrot.lane.b32.xlu0 %v1647, 12
      %v2124 = vpop.permute.xlu0 %2123
      %2125 = vrot.lane.b32.xlu0 %v1648, 12
      %v2126 = vpop.permute.xlu0 %2125
      %2127 = vrot.lane.b32.xlu0 %v1649, 12
      %v2128 = vpop.permute.xlu0 %2127
      %2129 = vrot.lane.b32.xlu0 %v1650, 12
      %v2130 = vpop.permute.xlu0 %2129
      %2131 = vrot.lane.b32.xlu0 %v1651, 12
      %v2132 = vpop.permute.xlu0 %2131
      %2133 = vrot.lane.b32.xlu0 %v1652, 12
      %v2134 = vpop.permute.xlu0 %2133
      %2135 = vrot.lane.b32.xlu0 %v1653, 12
      %v2136 = vpop.permute.xlu0 %2135
      %2137 = vrot.lane.b32.xlu0 %v1654, 12
      %v2138 = vpop.permute.xlu0 %2137
      %2139 = vrot.lane.b32.xlu0 %v1655, 12
      %v2140 = vpop.permute.xlu0 %2139
      %2141 = vrot.lane.b32.xlu0 %v1656, 12
      %v2142 = vpop.permute.xlu0 %2141
      %2143 = vrot.lane.b32.xlu0 %v1657, 12
      %v2144 = vpop.permute.xlu0 %2143
      %2145 = vrot.lane.b32.xlu0 %v1658, 12
      %v2146 = vpop.permute.xlu0 %2145
      %2147 = vrot.lane.b32.xlu0 %v1659, 12
      %v2148 = vpop.permute.xlu0 %2147
      %2149 = vrot.lane.b32.xlu0 %v1660, 12
      %v2150 = vpop.permute.xlu0 %2149
      %2151 = vrot.lane.b32.xlu0 %v1661, 12
      %v2152 = vpop.permute.xlu0 %2151
      %2153 = vrot.lane.b32.xlu0 %v1662, 12
      %v2154 = vpop.permute.xlu0 %2153
      %2155 = vrot.lane.b32.xlu0 %v1663, 12
      %v2156 = vpop.permute.xlu0 %2155
      %2157 = vrot.lane.b32.xlu0 %v1664, 12
      %v2158 = vpop.permute.xlu0 %2157
      %2159 = vrot.lane.b32.xlu0 %v1665, 12
      %v2160 = vpop.permute.xlu0 %2159
      %2161 = vrot.lane.b32.xlu0 %v1666, 12
      %v2162 = vpop.permute.xlu0 %2161
      %v2195 = vrot.slane %v816, 1
      %v2196 = vsel %vm1777, %v1841, %v2195
      %v2197 = vrot.slane %v860, 1
      %v2198 = vsel %vm1777, %v2195, %v2197
      %2199 = vrot.lane.b32.xlu0 %v1784, 16
      %v2200 = vpop.permute.xlu0 %2199
      %2201 = vrot.lane.b32.xlu0 %v1786, 16
      %v2202 = vpop.permute.xlu0 %2201
      %2203 = vrot.lane.b32.xlu0 %v1788, 16
      %v2204 = vpop.permute.xlu0 %2203
      %2205 = vrot.lane.b32.xlu0 %v1790, 16
      %v2206 = vpop.permute.xlu0 %2205
      %2207 = vrot.lane.b32.xlu0 %v1792, 16
      %v2208 = vpop.permute.xlu0 %2207
      %2209 = vrot.lane.b32.xlu0 %v1794, 16
      %v2210 = vpop.permute.xlu0 %2209
      %2211 = vrot.lane.b32.xlu0 %v1796, 16
      %v2212 = vpop.permute.xlu0 %2211
      %2213 = vrot.lane.b32.xlu0 %v1798, 16
      %v2214 = vpop.permute.xlu0 %2213
      %2215 = vrot.lane.b32.xlu0 %v1800, 16
      %v2216 = vpop.permute.xlu0 %2215
      %2217 = vrot.lane.b32.xlu0 %v1802, 16
      %v2218 = vpop.permute.xlu0 %2217
      %2219 = vrot.lane.b32.xlu0 %v1804, 16
      %v2220 = vpop.permute.xlu0 %2219
      %2221 = vrot.lane.b32.xlu0 %v1806, 16
      %v2222 = vpop.permute.xlu0 %2221
      %2223 = vrot.lane.b32.xlu0 %v1808, 16
      %v2224 = vpop.permute.xlu0 %2223
      %2225 = vrot.lane.b32.xlu0 %v1810, 16
      %v2226 = vpop.permute.xlu0 %2225
      %2227 = vrot.lane.b32.xlu0 %v1812, 16
      %v2228 = vpop.permute.xlu0 %2227
      %2229 = vrot.lane.b32.xlu0 %v1814, 16
      %v2230 = vpop.permute.xlu0 %2229
      %2231 = vrot.lane.b32.xlu0 %v1816, 16
      %v2232 = vpop.permute.xlu0 %2231
      %2233 = vrot.lane.b32.xlu0 %v1818, 16
      %v2234 = vpop.permute.xlu0 %2233
      %2235 = vrot.lane.b32.xlu0 %v1820, 16
      %v2236 = vpop.permute.xlu0 %2235
      %2237 = vrot.lane.b32.xlu0 %v1822, 16
      %v2238 = vpop.permute.xlu0 %2237
      %2239 = vrot.lane.b32.xlu0 %v1824, 16
      %v2240 = vpop.permute.xlu0 %2239
      %2241 = vrot.lane.b32.xlu0 %v1826, 16
      %v2242 = vpop.permute.xlu0 %2241
      %2243 = vrot.lane.b32.xlu0 %v1828, 16
      %v2244 = vpop.permute.xlu0 %2243
      %2245 = vrot.lane.b32.xlu0 %v1830, 16
      %v2246 = vpop.permute.xlu0 %2245
      %2247 = vrot.lane.b32.xlu0 %v1832, 16
      %v2248 = vpop.permute.xlu0 %2247
      %2249 = vrot.lane.b32.xlu0 %v1834, 16
      %v2250 = vpop.permute.xlu0 %2249
      %2251 = vrot.lane.b32.xlu0 %v1836, 16
      %v2252 = vpop.permute.xlu0 %2251
      %2253 = vrot.lane.b32.xlu0 %v1838, 16
      %v2254 = vpop.permute.xlu0 %2253
      %2255 = vrot.lane.b32.xlu0 %v1840, 16
      %v2256 = vpop.permute.xlu0 %2255
      %2257 = vrot.lane.b32.xlu0 %v1842, 16
      %v2258 = vpop.permute.xlu0 %2257
      %2259 = vrot.lane.b32.xlu0 %v2196, 16
      %v2260 = vpop.permute.xlu0 %2259
      %2261 = vrot.lane.b32.xlu0 %v2198, 16
      %v2262 = vpop.permute.xlu0 %2261
      %2327 = vrot.lane.b32.xlu0 %v1674, 20
      %v2328 = vpop.permute.xlu0 %2327
      %2329 = vrot.lane.b32.xlu0 %v1675, 20
      %v2330 = vpop.permute.xlu0 %2329
      %2331 = vrot.lane.b32.xlu0 %v1676, 20
      %v2332 = vpop.permute.xlu0 %2331
      %2333 = vrot.lane.b32.xlu0 %v1677, 20
      %v2334 = vpop.permute.xlu0 %2333
      %2335 = vrot.lane.b32.xlu0 %v1678, 20
      %v2336 = vpop.permute.xlu0 %2335
      %2337 = vrot.lane.b32.xlu0 %v1679, 20
      %v2338 = vpop.permute.xlu0 %2337
      %2339 = vrot.lane.b32.xlu0 %v1680, 20
      %v2340 = vpop.permute.xlu0 %2339
      %2341 = vrot.lane.b32.xlu0 %v1681, 20
      %v2342 = vpop.permute.xlu0 %2341
      %2343 = vrot.lane.b32.xlu0 %v1682, 20
      %v2344 = vpop.permute.xlu0 %2343
      %2345 = vrot.lane.b32.xlu0 %v1683, 20
      %v2346 = vpop.permute.xlu0 %2345
      %2347 = vrot.lane.b32.xlu0 %v1684, 20
      %v2348 = vpop.permute.xlu0 %2347
      %2349 = vrot.lane.b32.xlu0 %v1685, 20
      %v2350 = vpop.permute.xlu0 %2349
      %2351 = vrot.lane.b32.xlu0 %v1686, 20
      %v2352 = vpop.permute.xlu0 %2351
      %2353 = vrot.lane.b32.xlu0 %v1687, 20
      %v2354 = vpop.permute.xlu0 %2353
      %2355 = vrot.lane.b32.xlu0 %v1688, 20
      %v2356 = vpop.permute.xlu0 %2355
      %2357 = vrot.lane.b32.xlu0 %v1689, 20
      %v2358 = vpop.permute.xlu0 %2357
      %2359 = vrot.lane.b32.xlu0 %v1690, 20
      %v2360 = vpop.permute.xlu0 %2359
      %2361 = vrot.lane.b32.xlu0 %v1691, 20
      %v2362 = vpop.permute.xlu0 %2361
      %2363 = vrot.lane.b32.xlu0 %v1692, 20
      %v2364 = vpop.permute.xlu0 %2363
      %2365 = vrot.lane.b32.xlu0 %v1693, 20
      %v2366 = vpop.permute.xlu0 %2365
      %2367 = vrot.lane.b32.xlu0 %v1694, 20
      %v2368 = vpop.permute.xlu0 %2367
      %2369 = vrot.lane.b32.xlu0 %v1695, 20
      %v2370 = vpop.permute.xlu0 %2369
      %2371 = vrot.lane.b32.xlu0 %v1696, 20
      %v2372 = vpop.permute.xlu0 %2371
      %2373 = vrot.lane.b32.xlu0 %v1697, 20
      %v2374 = vpop.permute.xlu0 %2373
      %2375 = vrot.lane.b32.xlu0 %v1698, 20
      %v2376 = vpop.permute.xlu0 %2375
      %2377 = vrot.lane.b32.xlu0 %v1699, 20
      %v2378 = vpop.permute.xlu0 %2377
      %2379 = vrot.lane.b32.xlu0 %v1700, 20
      %v2380 = vpop.permute.xlu0 %2379
      %2381 = vrot.lane.b32.xlu0 %v1701, 20
      %v2382 = vpop.permute.xlu0 %2381
      %2383 = vrot.lane.b32.xlu0 %v1702, 20
      %v2384 = vpop.permute.xlu0 %2383
      %2385 = vrot.lane.b32.xlu0 %v1703, 20
      %v2386 = vpop.permute.xlu0 %2385
      %2387 = vrot.lane.b32.xlu0 %v1704, 20
      %v2388 = vpop.permute.xlu0 %2387
      %2389 = vrot.lane.b32.xlu0 %v1705, 20
      %v2390 = vpop.permute.xlu0 %2389
      %2455 = vrot.lane.b32.xlu0 %v1706, 24
      %v2456 = vpop.permute.xlu0 %2455
      %2457 = vrot.lane.b32.xlu0 %v1707, 24
      %v2458 = vpop.permute.xlu0 %2457
      %2459 = vrot.lane.b32.xlu0 %v1708, 24
      %v2460 = vpop.permute.xlu0 %2459
      %2461 = vrot.lane.b32.xlu0 %v1709, 24
      %v2462 = vpop.permute.xlu0 %2461
      %2463 = vrot.lane.b32.xlu0 %v1710, 24
      %v2464 = vpop.permute.xlu0 %2463
      %2465 = vrot.lane.b32.xlu0 %v1711, 24
      %v2466 = vpop.permute.xlu0 %2465
      %2467 = vrot.lane.b32.xlu0 %v1712, 24
      %v2468 = vpop.permute.xlu0 %2467
      %2469 = vrot.lane.b32.xlu0 %v1713, 24
      %v2470 = vpop.permute.xlu0 %2469
      %2471 = vrot.lane.b32.xlu0 %v1714, 24
      %v2472 = vpop.permute.xlu0 %2471
      %2473 = vrot.lane.b32.xlu0 %v1715, 24
      %v2474 = vpop.permute.xlu0 %2473
      %2475 = vrot.lane.b32.xlu0 %v1716, 24
      %v2476 = vpop.permute.xlu0 %2475
      %2477 = vrot.lane.b32.xlu0 %v1717, 24
      %v2478 = vpop.permute.xlu0 %2477
      %2479 = vrot.lane.b32.xlu0 %v1718, 24
      %v2480 = vpop.permute.xlu0 %2479
      %2481 = vrot.lane.b32.xlu0 %v1719, 24
      %v2482 = vpop.permute.xlu0 %2481
      %2483 = vrot.lane.b32.xlu0 %v1720, 24
      %v2484 = vpop.permute.xlu0 %2483
      %2485 = vrot.lane.b32.xlu0 %v1721, 24
      %v2486 = vpop.permute.xlu0 %2485
      %2487 = vrot.lane.b32.xlu0 %v1722, 24
      %v2488 = vpop.permute.xlu0 %2487
      %2489 = vrot.lane.b32.xlu0 %v1723, 24
      %v2490 = vpop.permute.xlu0 %2489
      %2491 = vrot.lane.b32.xlu0 %v1724, 24
      %v2492 = vpop.permute.xlu0 %2491
      %2493 = vrot.lane.b32.xlu0 %v1725, 24
      %v2494 = vpop.permute.xlu0 %2493
      %2495 = vrot.lane.b32.xlu0 %v1726, 24
      %v2496 = vpop.permute.xlu0 %2495
      %2497 = vrot.lane.b32.xlu0 %v1727, 24
      %v2498 = vpop.permute.xlu0 %2497
      %2499 = vrot.lane.b32.xlu0 %v1728, 24
      %v2500 = vpop.permute.xlu0 %2499
      %2501 = vrot.lane.b32.xlu0 %v1729, 24
      %v2502 = vpop.permute.xlu0 %2501
      %2503 = vrot.lane.b32.xlu0 %v1730, 24
      %v2504 = vpop.permute.xlu0 %2503
      %2505 = vrot.lane.b32.xlu0 %v1731, 24
      %v2506 = vpop.permute.xlu0 %2505
      %2507 = vrot.lane.b32.xlu0 %v1732, 24
      %v2508 = vpop.permute.xlu0 %2507
      %2509 = vrot.lane.b32.xlu0 %v1733, 24
      %v2510 = vpop.permute.xlu0 %2509
      %2511 = vrot.lane.b32.xlu0 %v1734, 24
      %v2512 = vpop.permute.xlu0 %2511
      %2513 = vrot.lane.b32.xlu0 %v1735, 24
      %v2514 = vpop.permute.xlu0 %2513
      %2515 = vrot.lane.b32.xlu0 %v1736, 24
      %v2516 = vpop.permute.xlu0 %2515
      %2517 = vrot.lane.b32.xlu0 %v1737, 24
      %v2518 = vpop.permute.xlu0 %2517
      %v2551 = vrot.slane %v854, 1
      %v2552 = vsel %vm1777, %v2197, %v2551
      %v2553 = vrot.slane %v861, 1
      %v2554 = vsel %vm1777, %v2551, %v2553
      %2555 = vrot.lane.b32.xlu0 %v1788, 28
      %v2556 = vpop.permute.xlu0 %2555
      %2557 = vrot.lane.b32.xlu0 %v1790, 28
      %v2558 = vpop.permute.xlu0 %2557
      %2559 = vrot.lane.b32.xlu0 %v1792, 28
      %v2560 = vpop.permute.xlu0 %2559
      %2561 = vrot.lane.b32.xlu0 %v1794, 28
      %v2562 = vpop.permute.xlu0 %2561
      %2563 = vrot.lane.b32.xlu0 %v1796, 28
      %v2564 = vpop.permute.xlu0 %2563
      %2565 = vrot.lane.b32.xlu0 %v1798, 28
      %v2566 = vpop.permute.xlu0 %2565
      %2567 = vrot.lane.b32.xlu0 %v1800, 28
      %v2568 = vpop.permute.xlu0 %2567
      %2569 = vrot.lane.b32.xlu0 %v1802, 28
      %v2570 = vpop.permute.xlu0 %2569
      %2571 = vrot.lane.b32.xlu0 %v1804, 28
      %v2572 = vpop.permute.xlu0 %2571
      %2573 = vrot.lane.b32.xlu0 %v1806, 28
      %v2574 = vpop.permute.xlu0 %2573
      %2575 = vrot.lane.b32.xlu0 %v1808, 28
      %v2576 = vpop.permute.xlu0 %2575
      %2577 = vrot.lane.b32.xlu0 %v1810, 28
      %v2578 = vpop.permute.xlu0 %2577
      %2579 = vrot.lane.b32.xlu0 %v1812, 28
      %v2580 = vpop.permute.xlu0 %2579
      %2581 = vrot.lane.b32.xlu0 %v1814, 28
      %v2582 = vpop.permute.xlu0 %2581
      %2583 = vrot.lane.b32.xlu0 %v1816, 28
      %v2584 = vpop.permute.xlu0 %2583
      %2585 = vrot.lane.b32.xlu0 %v1818, 28
      %v2586 = vpop.permute.xlu0 %2585
      %2587 = vrot.lane.b32.xlu0 %v1820, 28
      %v2588 = vpop.permute.xlu0 %2587
      %2589 = vrot.lane.b32.xlu0 %v1822, 28
      %v2590 = vpop.permute.xlu0 %2589
      %2591 = vrot.lane.b32.xlu0 %v1824, 28
      %v2592 = vpop.permute.xlu0 %2591
      %2593 = vrot.lane.b32.xlu0 %v1826, 28
      %v2594 = vpop.permute.xlu0 %2593
      %2595 = vrot.lane.b32.xlu0 %v1828, 28
      %v2596 = vpop.permute.xlu0 %2595
      %2597 = vrot.lane.b32.xlu0 %v1830, 28
      %v2598 = vpop.permute.xlu0 %2597
      %2599 = vrot.lane.b32.xlu0 %v1832, 28
      %v2600 = vpop.permute.xlu0 %2599
      %2601 = vrot.lane.b32.xlu0 %v1834, 28
      %v2602 = vpop.permute.xlu0 %2601
      %2603 = vrot.lane.b32.xlu0 %v1836, 28
      %v2604 = vpop.permute.xlu0 %2603
      %2605 = vrot.lane.b32.xlu0 %v1838, 28
      %v2606 = vpop.permute.xlu0 %2605
      %2607 = vrot.lane.b32.xlu0 %v1840, 28
      %v2608 = vpop.permute.xlu0 %2607
      %2609 = vrot.lane.b32.xlu0 %v1842, 28
      %v2610 = vpop.permute.xlu0 %2609
      %2611 = vrot.lane.b32.xlu0 %v2196, 28
      %v2612 = vpop.permute.xlu0 %2611
      %2613 = vrot.lane.b32.xlu0 %v2198, 28
      %v2614 = vpop.permute.xlu0 %2613
      %2615 = vrot.lane.b32.xlu0 %v2552, 28
      %v2616 = vpop.permute.xlu0 %2615
      %2617 = vrot.lane.b32.xlu0 %v2554, 28
      %v2618 = vpop.permute.xlu0 %2617
      %2683 = vrot.lane.b32.xlu0 %v1745, 32
      %v2684 = vpop.permute.xlu0 %2683
      %2685 = vrot.lane.b32.xlu0 %v1746, 32
      %v2686 = vpop.permute.xlu0 %2685
      %2687 = vrot.lane.b32.xlu0 %v1747, 32
      %v2688 = vpop.permute.xlu0 %2687
      %2689 = vrot.lane.b32.xlu0 %v1748, 32
      %v2690 = vpop.permute.xlu0 %2689
      %2691 = vrot.lane.b32.xlu0 %v1749, 32
      %v2692 = vpop.permute.xlu0 %2691
      %2693 = vrot.lane.b32.xlu0 %v1750, 32
      %v2694 = vpop.permute.xlu0 %2693
      %2695 = vrot.lane.b32.xlu0 %v1751, 32
      %v2696 = vpop.permute.xlu0 %2695
      %2697 = vrot.lane.b32.xlu0 %v1752, 32
      %v2698 = vpop.permute.xlu0 %2697
      %2699 = vrot.lane.b32.xlu0 %v1753, 32
      %v2700 = vpop.permute.xlu0 %2699
      %2701 = vrot.lane.b32.xlu0 %v1754, 32
      %v2702 = vpop.permute.xlu0 %2701
      %2703 = vrot.lane.b32.xlu0 %v1755, 32
      %v2704 = vpop.permute.xlu0 %2703
      %2705 = vrot.lane.b32.xlu0 %v1756, 32
      %v2706 = vpop.permute.xlu0 %2705
      %2707 = vrot.lane.b32.xlu0 %v1757, 32
      %v2708 = vpop.permute.xlu0 %2707
      %2709 = vrot.lane.b32.xlu0 %v1758, 32
      %v2710 = vpop.permute.xlu0 %2709
      %2711 = vrot.lane.b32.xlu0 %v1759, 32
      %v2712 = vpop.permute.xlu0 %2711
      %2713 = vrot.lane.b32.xlu0 %v1760, 32
      %v2714 = vpop.permute.xlu0 %2713
      %2715 = vrot.lane.b32.xlu0 %v1761, 32
      %v2716 = vpop.permute.xlu0 %2715
      %2717 = vrot.lane.b32.xlu0 %v1762, 32
      %v2718 = vpop.permute.xlu0 %2717
      %2719 = vrot.lane.b32.xlu0 %v1763, 32
      %v2720 = vpop.permute.xlu0 %2719
      %2721 = vrot.lane.b32.xlu0 %v1764, 32
      %v2722 = vpop.permute.xlu0 %2721
      %2723 = vrot.lane.b32.xlu0 %v1765, 32
      %v2724 = vpop.permute.xlu0 %2723
      %2725 = vrot.lane.b32.xlu0 %v1766, 32
      %v2726 = vpop.permute.xlu0 %2725
      %2727 = vrot.lane.b32.xlu0 %v1767, 32
      %v2728 = vpop.permute.xlu0 %2727
      %2729 = vrot.lane.b32.xlu0 %v1768, 32
      %v2730 = vpop.permute.xlu0 %2729
      %2731 = vrot.lane.b32.xlu0 %v1769, 32
      %v2732 = vpop.permute.xlu0 %2731
      %2733 = vrot.lane.b32.xlu0 %v1770, 32
      %v2734 = vpop.permute.xlu0 %2733
      %2735 = vrot.lane.b32.xlu0 %v1771, 32
      %v2736 = vpop.permute.xlu0 %2735
      %2737 = vrot.lane.b32.xlu0 %v1772, 32
      %v2738 = vpop.permute.xlu0 %2737
      %2739 = vrot.lane.b32.xlu0 %v1773, 32
      %v2740 = vpop.permute.xlu0 %2739
      %2741 = vrot.lane.b32.xlu0 %v1774, 32
      %v2742 = vpop.permute.xlu0 %2741
      %2743 = vrot.lane.b32.xlu0 %v1775, 32
      %v2744 = vpop.permute.xlu0 %2743
      %2745 = vrot.lane.b32.xlu0 %v1776, 32
      %v2746 = vpop.permute.xlu0 %2745
      %vm2779 = vcmask 31744
      %v2780 = vsel %vm2779, %v1407, %v1844
      %v2781 = vsel %vm2779, %v1408, %v1846
      %v2782 = vsel %vm2779, %v1409, %v1848
      %v2783 = vsel %vm2779, %v1410, %v1850
      %v2784 = vsel %vm2779, %v1411, %v1852
      %v2785 = vsel %vm2779, %v1412, %v1854
      %v2786 = vsel %vm2779, %v1413, %v1856
      %v2787 = vsel %vm2779, %v1414, %v1858
      %v2788 = vsel %vm2779, %v1415, %v1860
      %v2789 = vsel %vm2779, %v1416, %v1862
      %v2790 = vsel %vm2779, %v1417, %v1864
      %v2791 = vsel %vm2779, %v1418, %v1866
      %v2792 = vsel %vm2779, %v1419, %v1868
      %v2793 = vsel %vm2779, %v1420, %v1870
      %v2794 = vsel %vm2779, %v1421, %v1872
      %v2795 = vsel %vm2779, %v1422, %v1874
      %v2796 = vsel %vm2779, %v1423, %v1876
      %v2797 = vsel %vm2779, %v1424, %v1878
      %v2798 = vsel %vm2779, %v1425, %v1880
      %v2799 = vsel %vm2779, %v1426, %v1882
      %v2800 = vsel %vm2779, %v1427, %v1884
      %v2801 = vsel %vm2779, %v1428, %v1886
      %v2802 = vsel %vm2779, %v1429, %v1888
      %v2803 = vsel %vm2779, %v1430, %v1890
      %v2804 = vsel %vm2779, %v1431, %v1892
      %v2805 = vsel %vm2779, %v1432, %v1894
      %v2806 = vsel %vm2779, %v1433, %v1896
      %v2807 = vsel %vm2779, %v1434, %v1898
      %v2808 = vsel %vm2779, %v1435, %v1900
      %v2809 = vsel %vm2779, %v1436, %v1902
      %v2810 = vsel %vm2779, %v1437, %v1904
      %v2811 = vsel %vm2779, %v1438, %v1906
      %vm2812 = vcmask 64512
      %v2813 = vsel %vm2812, %v2780, %v1972
      %v2814 = vsel %vm2812, %v2781, %v1974
      %v2815 = vsel %vm2812, %v2782, %v1976
      %v2816 = vsel %vm2812, %v2783, %v1978
      %v2817 = vsel %vm2812, %v2784, %v1980
      %v2818 = vsel %vm2812, %v2785, %v1982
      %v2819 = vsel %vm2812, %v2786, %v1984
      %v2820 = vsel %vm2812, %v2787, %v1986
      %v2821 = vsel %vm2812, %v2788, %v1988
      %v2822 = vsel %vm2812, %v2789, %v1990
      %v2823 = vsel %vm2812, %v2790, %v1992
      %v2824 = vsel %vm2812, %v2791, %v1994
      %v2825 = vsel %vm2812, %v2792, %v1996
      %v2826 = vsel %vm2812, %v2793, %v1998
      %v2827 = vsel %vm2812, %v2794, %v2000
      %v2828 = vsel %vm2812, %v2795, %v2002
      %v2829 = vsel %vm2812, %v2796, %v2004
      %v2830 = vsel %vm2812, %v2797, %v2006
      %v2831 = vsel %vm2812, %v2798, %v2008
      %v2832 = vsel %vm2812, %v2799, %v2010
      %v2833 = vsel %vm2812, %v2800, %v2012
      %v2834 = vsel %vm2812, %v2801, %v2014
      %v2835 = vsel %vm2812, %v2802, %v2016
      %v2836 = vsel %vm2812, %v2803, %v2018
      %v2837 = vsel %vm2812, %v2804, %v2020
      %v2838 = vsel %vm2812, %v2805, %v2022
      %v2839 = vsel %vm2812, %v2806, %v2024
      %v2840 = vsel %vm2812, %v2807, %v2026
      %v2841 = vsel %vm2812, %v2808, %v2028
      %v2842 = vsel %vm2812, %v2809, %v2030
      %v2843 = vsel %vm2812, %v2810, %v2032
      %v2844 = vsel %vm2812, %v2811, %v2034
      %vm2845 = vcmask 97280
      %v2846 = vsel %vm2845, %v2813, %v2100
      %v2847 = vsel %vm2845, %v2814, %v2102
      %v2848 = vsel %vm2845, %v2815, %v2104
      %v2849 = vsel %vm2845, %v2816, %v2106
      %v2850 = vsel %vm2845, %v2817, %v2108
      %v2851 = vsel %vm2845, %v2818, %v2110
      %v2852 = vsel %vm2845, %v2819, %v2112
      %v2853 = vsel %vm2845, %v2820, %v2114
      %v2854 = vsel %vm2845, %v2821, %v2116
      %v2855 = vsel %vm2845, %v2822, %v2118
      %v2856 = vsel %vm2845, %v2823, %v2120
      %v2857 = vsel %vm2845, %v2824, %v2122
      %v2858 = vsel %vm2845, %v2825, %v2124
      %v2859 = vsel %vm2845, %v2826, %v2126
      %v2860 = vsel %vm2845, %v2827, %v2128
      %v2861 = vsel %vm2845, %v2828, %v2130
      %v2862 = vsel %vm2845, %v2829, %v2132
      %v2863 = vsel %vm2845, %v2830, %v2134
      %v2864 = vsel %vm2845, %v2831, %v2136
      %v2865 = vsel %vm2845, %v2832, %v2138
      %v2866 = vsel %vm2845, %v2833, %v2140
      %v2867 = vsel %vm2845, %v2834, %v2142
      %v2868 = vsel %vm2845, %v2835, %v2144
      %v2869 = vsel %vm2845, %v2836, %v2146
      %v2870 = vsel %vm2845, %v2837, %v2148
      %v2871 = vsel %vm2845, %v2838, %v2150
      %v2872 = vsel %vm2845, %v2839, %v2152
      %v2873 = vsel %vm2845, %v2840, %v2154
      %v2874 = vsel %vm2845, %v2841, %v2156
      %v2875 = vsel %vm2845, %v2842, %v2158
      %v2876 = vsel %vm2845, %v2843, %v2160
      %v2877 = vsel %vm2845, %v2844, %v2162
      %vm2878 = vcmask 130048
      %v2879 = vsel %vm2878, %v2846, %v2200
      %v2880 = vsel %vm2878, %v2847, %v2202
      %v2881 = vsel %vm2878, %v2848, %v2204
      %v2882 = vsel %vm2878, %v2849, %v2206
      %v2883 = vsel %vm2878, %v2850, %v2208
      %v2884 = vsel %vm2878, %v2851, %v2210
      %v2885 = vsel %vm2878, %v2852, %v2212
      %v2886 = vsel %vm2878, %v2853, %v2214
      %v2887 = vsel %vm2878, %v2854, %v2216
      %v2888 = vsel %vm2878, %v2855, %v2218
      %v2889 = vsel %vm2878, %v2856, %v2220
      %v2890 = vsel %vm2878, %v2857, %v2222
      %v2891 = vsel %vm2878, %v2858, %v2224
      %v2892 = vsel %vm2878, %v2859, %v2226
      %v2893 = vsel %vm2878, %v2860, %v2228
      %v2894 = vsel %vm2878, %v2861, %v2230
      %v2895 = vsel %vm2878, %v2862, %v2232
      %v2896 = vsel %vm2878, %v2863, %v2234
      %v2897 = vsel %vm2878, %v2864, %v2236
      %v2898 = vsel %vm2878, %v2865, %v2238
      %v2899 = vsel %vm2878, %v2866, %v2240
      %v2900 = vsel %vm2878, %v2867, %v2242
      %v2901 = vsel %vm2878, %v2868, %v2244
      %v2902 = vsel %vm2878, %v2869, %v2246
      %v2903 = vsel %vm2878, %v2870, %v2248
      %v2904 = vsel %vm2878, %v2871, %v2250
      %v2905 = vsel %vm2878, %v2872, %v2252
      %v2906 = vsel %vm2878, %v2873, %v2254
      %v2907 = vsel %vm2878, %v2874, %v2256
      %v2908 = vsel %vm2878, %v2875, %v2258
      %v2909 = vsel %vm2878, %v2876, %v2260
      %v2910 = vsel %vm2878, %v2877, %v2262
      %vm2911 = vcmask 162816
      %v2912 = vsel %vm2911, %v2879, %v2328
      %v2913 = vsel %vm2911, %v2880, %v2330
      %v2914 = vsel %vm2911, %v2881, %v2332
      %v2915 = vsel %vm2911, %v2882, %v2334
      %v2916 = vsel %vm2911, %v2883, %v2336
      %v2917 = vsel %vm2911, %v2884, %v2338
      %v2918 = vsel %vm2911, %v2885, %v2340
      %v2919 = vsel %vm2911, %v2886, %v2342
      %v2920 = vsel %vm2911, %v2887, %v2344
      %v2921 = vsel %vm2911, %v2888, %v2346
      %v2922 = vsel %vm2911, %v2889, %v2348
      %v2923 = vsel %vm2911, %v2890, %v2350
      %v2924 = vsel %vm2911, %v2891, %v2352
      %v2925 = vsel %vm2911, %v2892, %v2354
      %v2926 = vsel %vm2911, %v2893, %v2356
      %v2927 = vsel %vm2911, %v2894, %v2358
      %v2928 = vsel %vm2911, %v2895, %v2360
      %v2929 = vsel %vm2911, %v2896, %v2362
      %v2930 = vsel %vm2911, %v2897, %v2364
      %v2931 = vsel %vm2911, %v2898, %v2366
      %v2932 = vsel %vm2911, %v2899, %v2368
      %v2933 = vsel %vm2911, %v2900, %v2370
      %v2934 = vsel %vm2911, %v2901, %v2372
      %v2935 = vsel %vm2911, %v2902, %v2374
      %v2936 = vsel %vm2911, %v2903, %v2376
      %v2937 = vsel %vm2911, %v2904, %v2378
      %v2938 = vsel %vm2911, %v2905, %v2380
      %v2939 = vsel %vm2911, %v2906, %v2382
      %v2940 = vsel %vm2911, %v2907, %v2384
      %v2941 = vsel %vm2911, %v2908, %v2386
      %v2942 = vsel %vm2911, %v2909, %v2388
      %v2943 = vsel %vm2911, %v2910, %v2390
      %vm2944 = vcmask 195584
      %v2945 = vsel %vm2944, %v2912, %v2456
      %v2946 = vsel %vm2944, %v2913, %v2458
      %v2947 = vsel %vm2944, %v2914, %v2460
      %v2948 = vsel %vm2944, %v2915, %v2462
      %v2949 = vsel %vm2944, %v2916, %v2464
      %v2950 = vsel %vm2944, %v2917, %v2466
      %v2951 = vsel %vm2944, %v2918, %v2468
      %v2952 = vsel %vm2944, %v2919, %v2470
      %v2953 = vsel %vm2944, %v2920, %v2472
      %v2954 = vsel %vm2944, %v2921, %v2474
      %v2955 = vsel %vm2944, %v2922, %v2476
      %v2956 = vsel %vm2944, %v2923, %v2478
      %v2957 = vsel %vm2944, %v2924, %v2480
      %v2958 = vsel %vm2944, %v2925, %v2482
      %v2959 = vsel %vm2944, %v2926, %v2484
      %v2960 = vsel %vm2944, %v2927, %v2486
      %v2961 = vsel %vm2944, %v2928, %v2488
      %v2962 = vsel %vm2944, %v2929, %v2490
      %v2963 = vsel %vm2944, %v2930, %v2492
      %v2964 = vsel %vm2944, %v2931, %v2494
      %v2965 = vsel %vm2944, %v2932, %v2496
      %v2966 = vsel %vm2944, %v2933, %v2498
      %v2967 = vsel %vm2944, %v2934, %v2500
      %v2968 = vsel %vm2944, %v2935, %v2502
      %v2969 = vsel %vm2944, %v2936, %v2504
      %v2970 = vsel %vm2944, %v2937, %v2506
      %v2971 = vsel %vm2944, %v2938, %v2508
      %v2972 = vsel %vm2944, %v2939, %v2510
      %v2973 = vsel %vm2944, %v2940, %v2512
      %v2974 = vsel %vm2944, %v2941, %v2514
      %v2975 = vsel %vm2944, %v2942, %v2516
      %v2976 = vsel %vm2944, %v2943, %v2518
      %vm2977 = vcmask 228352
      %v2978 = vsel %vm2977, %v2945, %v2556
      %v2979 = vsel %vm2977, %v2946, %v2558
      %v2980 = vsel %vm2977, %v2947, %v2560
      %v2981 = vsel %vm2977, %v2948, %v2562
      %v2982 = vsel %vm2977, %v2949, %v2564
      %v2983 = vsel %vm2977, %v2950, %v2566
      %v2984 = vsel %vm2977, %v2951, %v2568
      %v2985 = vsel %vm2977, %v2952, %v2570
      %v2986 = vsel %vm2977, %v2953, %v2572
      %v2987 = vsel %vm2977, %v2954, %v2574
      %v2988 = vsel %vm2977, %v2955, %v2576
      %v2989 = vsel %vm2977, %v2956, %v2578
      %v2990 = vsel %vm2977, %v2957, %v2580
      %v2991 = vsel %vm2977, %v2958, %v2582
      %v2992 = vsel %vm2977, %v2959, %v2584
      %v2993 = vsel %vm2977, %v2960, %v2586
      %v2994 = vsel %vm2977, %v2961, %v2588
      %v2995 = vsel %vm2977, %v2962, %v2590
      %v2996 = vsel %vm2977, %v2963, %v2592
      %v2997 = vsel %vm2977, %v2964, %v2594
      %v2998 = vsel %vm2977, %v2965, %v2596
      %v2999 = vsel %vm2977, %v2966, %v2598
      %v3000 = vsel %vm2977, %v2967, %v2600
      %v3001 = vsel %vm2977, %v2968, %v2602
      %v3002 = vsel %vm2977, %v2969, %v2604
      %v3003 = vsel %vm2977, %v2970, %v2606
      %v3004 = vsel %vm2977, %v2971, %v2608
      %v3005 = vsel %vm2977, %v2972, %v2610
      %v3006 = vsel %vm2977, %v2973, %v2612
      %v3007 = vsel %vm2977, %v2974, %v2614
      %v3008 = vsel %vm2977, %v2975, %v2616
      %v3009 = vsel %vm2977, %v2976, %v2618
      %vm3010 = vcmask 261120
      %v3011 = vsel %vm3010, %v2978, %v2684
      %v3012 = vsel %vm3010, %v2979, %v2686
      %v3013 = vsel %vm3010, %v2980, %v2688
      %v3014 = vsel %vm3010, %v2981, %v2690
      %v3015 = vsel %vm3010, %v2982, %v2692
      %v3016 = vsel %vm3010, %v2983, %v2694
      %v3017 = vsel %vm3010, %v2984, %v2696
      %v3018 = vsel %vm3010, %v2985, %v2698
      %v3019 = vsel %vm3010, %v2986, %v2700
      %v3020 = vsel %vm3010, %v2987, %v2702
      %v3021 = vsel %vm3010, %v2988, %v2704
      %v3022 = vsel %vm3010, %v2989, %v2706
      %v3023 = vsel %vm3010, %v2990, %v2708
      %v3024 = vsel %vm3010, %v2991, %v2710
      %v3025 = vsel %vm3010, %v2992, %v2712
      %v3026 = vsel %vm3010, %v2993, %v2714
      %v3027 = vsel %vm3010, %v2994, %v2716
      %v3028 = vsel %vm3010, %v2995, %v2718
      %v3029 = vsel %vm3010, %v2996, %v2720
      %v3030 = vsel %vm3010, %v2997, %v2722
      %v3031 = vsel %vm3010, %v2998, %v2724
      %v3032 = vsel %vm3010, %v2999, %v2726
      %v3033 = vsel %vm3010, %v3000, %v2728
      %v3034 = vsel %vm3010, %v3001, %v2730
      %v3035 = vsel %vm3010, %v3002, %v2732
      %v3036 = vsel %vm3010, %v3003, %v2734
      %v3037 = vsel %vm3010, %v3004, %v2736
      %v3038 = vsel %vm3010, %v3005, %v2738
      %v3039 = vsel %vm3010, %v3006, %v2740
      %v3040 = vsel %vm3010, %v3007, %v2742
      %v3041 = vsel %vm3010, %v3008, %v2744
      %v3042 = vsel %vm3010, %v3009, %v2746
      %v3043 = vld [vmem:[%s5] sm:$0xff]
      %v3044 = vld [vmem:[%s5 + $0x8] sm:$0xff]
      %v3045 = vld [vmem:[%s5 + $0x10] sm:$0xff]
      %v3046 = vld [vmem:[%s5 + $0x18] sm:$0xff]
      %v3047 = vld [vmem:[%s5 + $0x20] sm:$0xf]
      %vm3048 = vcmask 293888
      %v3050 = vsel %vm3048, %v3011, 0
      %v3053 = vsel %vm3048, %v3012, 0
      %v3056 = vsel %vm3048, %v3013, 0
      %v3059 = vsel %vm3048, %v3014, 0
      %v3062 = vsel %vm3048, %v3015, 0
      %v3065 = vsel %vm3048, %v3016, 0
      %v3068 = vsel %vm3048, %v3017, 0
      %v3071 = vsel %vm3048, %v3018, 0
      %v3074 = vsel %vm3048, %v3019, 0
      %v3077 = vsel %vm3048, %v3020, 0
      %v3080 = vsel %vm3048, %v3021, 0
      %v3083 = vsel %vm3048, %v3022, 0
      %v3086 = vsel %vm3048, %v3023, 0
      %v3089 = vsel %vm3048, %v3024, 0
      %v3092 = vsel %vm3048, %v3025, 0
      %v3095 = vsel %vm3048, %v3026, 0
      %v3098 = vsel %vm3048, %v3027, 0
      %v3101 = vsel %vm3048, %v3028, 0
      %v3104 = vsel %vm3048, %v3029, 0
      %v3107 = vsel %vm3048, %v3030, 0
      %v3110 = vsel %vm3048, %v3031, 0
      %v3113 = vsel %vm3048, %v3032, 0
      %v3116 = vsel %vm3048, %v3033, 0
      %v3119 = vsel %vm3048, %v3034, 0
      %v3122 = vsel %vm3048, %v3035, 0
      %v3125 = vsel %vm3048, %v3036, 0
      %v3128 = vsel %vm3048, %v3037, 0
      %v3131 = vsel %vm3048, %v3038, 0
      %v3134 = vsel %vm3048, %v3039, 0
      %v3137 = vsel %vm3048, %v3040, 0
      %v3140 = vsel %vm3048, %v3041, 0
      %v3143 = vsel %vm3048, %v3042, 0
      %vm3145 = vcmask 1043456
      %v3147 = vsel %vm3145, %v3047, 0
      %3149 = vmatpush.msra.mxu0 0.0
      %3150 = vmatpush.msra.mxu0 0.0
      %3151 = vmatpush.msra.mxu0 0.0
      %3152 = vmatpush.msra.mxu0 0.0
      %3153 = vmatpush.msra.mxu0 0.0
      %3154 = vmatpush.msra.mxu0 0.0
      %3155 = vmatpush.msra.mxu0 0.0
      %3156 = vmatpush.msra.mxu0 0.0
      %3157 = vmatpush.msra.mxu0 0.0
      %3158 = vmatpush.msra.mxu0 0.0
      %3159 = vmatpush.msra.mxu0 0.0
      %3160 = vmatpush.msra.mxu0 %v3147
      %3161 = vmatpush.msra.mxu0 %v3046
      %3162 = vmatpush.msra.mxu0 %v3045
      %3163 = vmatpush.msra.mxu0 %v3044
      %3164 = vmatpush.msra.mxu0 %v3043
      %3165 = vmatmul.f32.gmra.mxu0 %v3050
      %v3166 = vpop.f32.mrf.mxu0
      %v3167 = vadd.f32 0.0, %v3166
      %3168 = vmatmul.f32.gmra.mxu0 %v3053
      %v3169 = vpop.f32.mrf.mxu0
      %v3170 = vadd.f32 0.0, %v3169
      %3171 = vmatmul.f32.gmra.mxu0 %v3056
      %v3172 = vpop.f32.mrf.mxu0
      %v3173 = vadd.f32 0.0, %v3172
      %3174 = vmatmul.f32.gmra.mxu0 %v3059
      %v3175 = vpop.f32.mrf.mxu0
      %v3176 = vadd.f32 0.0, %v3175
      %3177 = vmatmul.f32.gmra.mxu0 %v3062
      %v3178 = vpop.f32.mrf.mxu0
      %v3179 = vadd.f32 0.0, %v3178
      %3180 = vmatmul.f32.gmra.mxu0 %v3065
      %v3181 = vpop.f32.mrf.mxu0
      %v3182 = vadd.f32 0.0, %v3181
      %3183 = vmatmul.f32.gmra.mxu0 %v3068
      %v3184 = vpop.f32.mrf.mxu0
      %v3185 = vadd.f32 0.0, %v3184
      %3186 = vmatmul.f32.gmra.mxu0 %v3071
      %v3187 = vpop.f32.mrf.mxu0
      %v3188 = vadd.f32 0.0, %v3187
      %3189 = vmatmul.f32.gmra.mxu0 %v3074
      %v3190 = vpop.f32.mrf.mxu0
      %v3191 = vadd.f32 0.0, %v3190
      %3192 = vmatmul.f32.gmra.mxu0 %v3077
      %v3193 = vpop.f32.mrf.mxu0
      %v3194 = vadd.f32 0.0, %v3193
      %3195 = vmatmul.f32.gmra.mxu0 %v3080
      %v3196 = vpop.f32.mrf.mxu0
      %v3197 = vadd.f32 0.0, %v3196
      %3198 = vmatmul.f32.gmra.mxu0 %v3083
      %v3199 = vpop.f32.mrf.mxu0
      %v3200 = vadd.f32 0.0, %v3199
      %3201 = vmatmul.f32.gmra.mxu0 %v3086
      %v3202 = vpop.f32.mrf.mxu0
      %v3203 = vadd.f32 0.0, %v3202
      %3204 = vmatmul.f32.gmra.mxu0 %v3089
      %v3205 = vpop.f32.mrf.mxu0
      %v3206 = vadd.f32 0.0, %v3205
      %3207 = vmatmul.f32.gmra.mxu0 %v3092
      %v3208 = vpop.f32.mrf.mxu0
      %v3209 = vadd.f32 0.0, %v3208
      %3210 = vmatmul.f32.gmra.mxu0 %v3095
      %v3211 = vpop.f32.mrf.mxu0
      %v3212 = vadd.f32 0.0, %v3211
      %3213 = vmatmul.f32.gmra.mxu0 %v3098
      %v3214 = vpop.f32.mrf.mxu0
      %v3215 = vadd.f32 0.0, %v3214
      %3216 = vmatmul.f32.gmra.mxu0 %v3101
      %v3217 = vpop.f32.mrf.mxu0
      %v3218 = vadd.f32 0.0, %v3217
      %3219 = vmatmul.f32.gmra.mxu0 %v3104
      %v3220 = vpop.f32.mrf.mxu0
      %v3221 = vadd.f32 0.0, %v3220
      %3222 = vmatmul.f32.gmra.mxu0 %v3107
      %v3223 = vpop.f32.mrf.mxu0
      %v3224 = vadd.f32 0.0, %v3223
      %3225 = vmatmul.f32.gmra.mxu0 %v3110
      %v3226 = vpop.f32.mrf.mxu0
      %v3227 = vadd.f32 0.0, %v3226
      %3228 = vmatmul.f32.gmra.mxu0 %v3113
      %v3229 = vpop.f32.mrf.mxu0
      %v3230 = vadd.f32 0.0, %v3229
      %3231 = vmatmul.f32.gmra.mxu0 %v3116
      %v3232 = vpop.f32.mrf.mxu0
      %v3233 = vadd.f32 0.0, %v3232
      %3234 = vmatmul.f32.gmra.mxu0 %v3119
      %v3235 = vpop.f32.mrf.mxu0
      %v3236 = vadd.f32 0.0, %v3235
      %3237 = vmatmul.f32.gmra.mxu0 %v3122
      %v3238 = vpop.f32.mrf.mxu0
      %v3239 = vadd.f32 0.0, %v3238
      %3240 = vmatmul.f32.gmra.mxu0 %v3125
      %v3241 = vpop.f32.mrf.mxu0
      %v3242 = vadd.f32 0.0, %v3241
      %3243 = vmatmul.f32.gmra.mxu0 %v3128
      %v3244 = vpop.f32.mrf.mxu0
      %v3245 = vadd.f32 0.0, %v3244
      %3246 = vmatmul.f32.gmra.mxu0 %v3131
      %v3247 = vpop.f32.mrf.mxu0
      %v3248 = vadd.f32 0.0, %v3247
      %3249 = vmatmul.f32.gmra.mxu0 %v3134
      %v3250 = vpop.f32.mrf.mxu0
      %v3251 = vadd.f32 0.0, %v3250
      %3252 = vmatmul.f32.gmra.mxu0 %v3137
      %v3253 = vpop.f32.mrf.mxu0
      %v3254 = vadd.f32 0.0, %v3253
      %3255 = vmatmul.f32.gmra.mxu0 %v3140
      %v3256 = vpop.f32.mrf.mxu0
      %v3257 = vadd.f32 0.0, %v3256
      %3258 = vmatmul.f32.gmra.mxu0 %v3143
      %v3259 = vpop.f32.mrf.mxu0
      %v3260 = vadd.f32 0.0, %v3259
      %3261 = vdwg.mxu0
      %3262 = vst.msk [vmem:[%s515] sm:$0xff] %vm2812, %v3167
      %3263 = vst.msk [vmem:[%s515 + $0x8] sm:$0xff] %vm2812, %v3170
      %3264 = vst.msk [vmem:[%s515 + $0x10] sm:$0xff] %vm2812, %v3173
      %3265 = vst.msk [vmem:[%s515 + $0x18] sm:$0xff] %vm2812, %v3176
      %3266 = vst.msk [vmem:[%s515 + $0x20] sm:$0xff] %vm2812, %v3179
      %3267 = vst.msk [vmem:[%s515 + $0x28] sm:$0xff] %vm2812, %v3182
      %3268 = vst.msk [vmem:[%s515 + $0x30] sm:$0xff] %vm2812, %v3185
      %3269 = vst.msk [vmem:[%s515 + $0x38] sm:$0xff] %vm2812, %v3188
      %3270 = vst.msk [vmem:[%s515 + $0x40] sm:$0xff] %vm2812, %v3191
      %3271 = vst.msk [vmem:[%s515 + $0x48] sm:$0xff] %vm2812, %v3194
      %3272 = vst.msk [vmem:[%s515 + $0x50] sm:$0xff] %vm2812, %v3197
      %3273 = vst.msk [vmem:[%s515 + $0x58] sm:$0xff] %vm2812, %v3200
      %3274 = vst.msk [vmem:[%s515 + $0x60] sm:$0xff] %vm2812, %v3203
      %3275 = vst.msk [vmem:[%s515 + $0x68] sm:$0xff] %vm2812, %v3206
      %3276 = vst.msk [vmem:[%s515 + $0x70] sm:$0xff] %vm2812, %v3209
      %3277 = vst.msk [vmem:[%s515 + $0x78] sm:$0xff] %vm2812, %v3212
      %3278 = vst.msk [vmem:[%s515 + $0x80] sm:$0xff] %vm2812, %v3215
      %3279 = vst.msk [vmem:[%s515 + $0x88] sm:$0xff] %vm2812, %v3218
      %3280 = vst.msk [vmem:[%s515 + $0x90] sm:$0xff] %vm2812, %v3221
      %3281 = vst.msk [vmem:[%s515 + $0x98] sm:$0xff] %vm2812, %v3224
      %3282 = vst.msk [vmem:[%s515 + $0xa0] sm:$0xff] %vm2812, %v3227
      %3283 = vst.msk [vmem:[%s515 + $0xa8] sm:$0xff] %vm2812, %v3230
      %3284 = vst.msk [vmem:[%s515 + $0xb0] sm:$0xff] %vm2812, %v3233
      %3285 = vst.msk [vmem:[%s515 + $0xb8] sm:$0xff] %vm2812, %v3236
      %3286 = vst.msk [vmem:[%s515 + $0xc0] sm:$0xff] %vm2812, %v3239
      %3287 = vst.msk [vmem:[%s515 + $0xc8] sm:$0xff] %vm2812, %v3242
      %3288 = vst.msk [vmem:[%s515 + $0xd0] sm:$0xff] %vm2812, %v3245
      %3289 = vst.msk [vmem:[%s515 + $0xd8] sm:$0xff] %vm2812, %v3248
      %3290 = vst.msk [vmem:[%s515 + $0xe0] sm:$0xff] %vm2812, %v3251
      %3291 = vst.msk [vmem:[%s515 + $0xe8] sm:$0xff] %vm2812, %v3254
      %3292 = vst.msk [vmem:[%s515 + $0xf0] sm:$0xff] %vm2812, %v3257
      %3293 = vst.msk [vmem:[%s515 + $0xf8] sm:$0xff] %vm2812, %v3260
      %3294 = vst.msk [vmem:[%s526] sm:$0xff] %vm2812, %v3257
      %3295 = vst.msk [vmem:[%s526 + $0x8] sm:$0xff] %vm2812, %v3260
      %3296 = vst.msk [vmem:[%s536] sm:$0xff] %vm2812, %v3167
      %3297 = vst.msk [vmem:[%s536 + $0x8] sm:$0xff] %vm2812, %v3170
      %v3298 = vsel %vm2812, %v3167, 0.0
      %v3299 = vsel %vm2812, %v3170, 0.0
      %v3300 = vadd.f32 %v3298, %v3299
      %v3301 = vsel %vm2812, %v3173, 0.0
      %v3302 = vadd.f32 %v3300, %v3301
      %v3303 = vsel %vm2812, %v3176, 0.0
      %v3304 = vadd.f32 %v3302, %v3303
      %v3305 = vsel %vm2812, %v3179, 0.0
      %v3306 = vadd.f32 %v3304, %v3305
      %v3307 = vsel %vm2812, %v3182, 0.0
      %v3308 = vadd.f32 %v3306, %v3307
      %v3309 = vsel %vm2812, %v3185, 0.0
      %v3310 = vadd.f32 %v3308, %v3309
      %v3311 = vsel %vm2812, %v3188, 0.0
      %v3312 = vadd.f32 %v3310, %v3311
      %v3313 = vsel %vm2812, %v3191, 0.0
      %v3314 = vadd.f32 %v3312, %v3313
      %v3315 = vsel %vm2812, %v3194, 0.0
      %v3316 = vadd.f32 %v3314, %v3315
      %v3317 = vsel %vm2812, %v3197, 0.0
      %v3318 = vadd.f32 %v3316, %v3317
      %v3319 = vsel %vm2812, %v3200, 0.0
      %v3320 = vadd.f32 %v3318, %v3319
      %v3321 = vsel %vm2812, %v3203, 0.0
      %v3322 = vadd.f32 %v3320, %v3321
      %v3323 = vsel %vm2812, %v3206, 0.0
      %v3324 = vadd.f32 %v3322, %v3323
      %v3325 = vsel %vm2812, %v3209, 0.0
      %v3326 = vadd.f32 %v3324, %v3325
      %v3327 = vsel %vm2812, %v3212, 0.0
      %v3328 = vadd.f32 %v3326, %v3327
      %v3329 = vsel %vm2812, %v3215, 0.0
      %v3330 = vadd.f32 %v3328, %v3329
      %v3331 = vsel %vm2812, %v3218, 0.0
      %v3332 = vadd.f32 %v3330, %v3331
      %v3333 = vsel %vm2812, %v3221, 0.0
      %v3334 = vadd.f32 %v3332, %v3333
      %v3335 = vsel %vm2812, %v3224, 0.0
      %v3336 = vadd.f32 %v3334, %v3335
      %v3337 = vsel %vm2812, %v3227, 0.0
      %v3338 = vadd.f32 %v3336, %v3337
      %v3339 = vsel %vm2812, %v3230, 0.0
      %v3340 = vadd.f32 %v3338, %v3339
      %v3341 = vsel %vm2812, %v3233, 0.0
      %v3342 = vadd.f32 %v3340, %v3341
      %v3343 = vsel %vm2812, %v3236, 0.0
      %v3344 = vadd.f32 %v3342, %v3343
      %v3345 = vsel %vm2812, %v3239, 0.0
      %v3346 = vadd.f32 %v3344, %v3345
      %v3347 = vsel %vm2812, %v3242, 0.0
      %v3348 = vadd.f32 %v3346, %v3347
      %v3349 = vsel %vm2812, %v3245, 0.0
      %v3350 = vadd.f32 %v3348, %v3349
      %v3351 = vsel %vm2812, %v3248, 0.0
      %v3352 = vadd.f32 %v3350, %v3351
      %v3353 = vsel %vm2812, %v3251, 0.0
      %v3354 = vadd.f32 %v3352, %v3353
      %v3355 = vsel %vm2812, %v3254, 0.0
      %v3356 = vadd.f32 %v3354, %v3355
      %v3357 = vsel %vm2812, %v3257, 0.0
      %v3358 = vadd.f32 %v3356, %v3357
      %v3359 = vsel %vm2812, %v3260, 0.0
      %v3360 = vadd.f32 %v3358, %v3359
      %v3361 = vrot.slane %v3360, 4
      %v3362 = vadd.f32 %v3360, %v3361
      %v3363 = vrot.slane %v3362, 2
      %v3364 = vadd.f32 %v3362, %v3363
      %v3365 = vrot.slane %v3364, 1
      %v3366 = vadd.f32 %v3364, %v3365
      %vm3367 = vcmask 57344
      %3368 = vst.msk [vmem:[%s542] sm:$0x1] %vm3367, %v3366
      %v3369 = vmul.f32 %v3167, %v3167
      %v3370 = vmul.f32 %v3170, %v3170
      %v3371 = vmul.f32 %v3173, %v3173
      %v3372 = vmul.f32 %v3176, %v3176
      %v3373 = vmul.f32 %v3179, %v3179
      %v3374 = vmul.f32 %v3182, %v3182
      %v3375 = vmul.f32 %v3185, %v3185
      %v3376 = vmul.f32 %v3188, %v3188
      %v3377 = vmul.f32 %v3191, %v3191
      %v3378 = vmul.f32 %v3194, %v3194
      %v3379 = vmul.f32 %v3197, %v3197
      %v3380 = vmul.f32 %v3200, %v3200
      %v3381 = vmul.f32 %v3203, %v3203
      %v3382 = vmul.f32 %v3206, %v3206
      %v3383 = vmul.f32 %v3209, %v3209
      %v3384 = vmul.f32 %v3212, %v3212
      %v3385 = vmul.f32 %v3215, %v3215
      %v3386 = vmul.f32 %v3218, %v3218
      %v3387 = vmul.f32 %v3221, %v3221
      %v3388 = vmul.f32 %v3224, %v3224
      %v3389 = vmul.f32 %v3227, %v3227
      %v3390 = vmul.f32 %v3230, %v3230
      %v3391 = vmul.f32 %v3233, %v3233
      %v3392 = vmul.f32 %v3236, %v3236
      %v3393 = vmul.f32 %v3239, %v3239
      %v3394 = vmul.f32 %v3242, %v3242
      %v3395 = vmul.f32 %v3245, %v3245
      %v3396 = vmul.f32 %v3248, %v3248
      %v3397 = vmul.f32 %v3251, %v3251
      %v3398 = vmul.f32 %v3254, %v3254
      %v3399 = vmul.f32 %v3257, %v3257
      %v3400 = vmul.f32 %v3260, %v3260
      %v3401 = vsel %vm2812, %v3369, 0.0
      %v3402 = vsel %vm2812, %v3370, 0.0
      %v3403 = vadd.f32 %v3401, %v3402
      %v3404 = vsel %vm2812, %v3371, 0.0
      %v3405 = vadd.f32 %v3403, %v3404
      %v3406 = vsel %vm2812, %v3372, 0.0
      %v3407 = vadd.f32 %v3405, %v3406
      %v3408 = vsel %vm2812, %v3373, 0.0
      %v3409 = vadd.f32 %v3407, %v3408
      %v3410 = vsel %vm2812, %v3374, 0.0
      %v3411 = vadd.f32 %v3409, %v3410
      %v3412 = vsel %vm2812, %v3375, 0.0
      %v3413 = vadd.f32 %v3411, %v3412
      %v3414 = vsel %vm2812, %v3376, 0.0
      %v3415 = vadd.f32 %v3413, %v3414
      %v3416 = vsel %vm2812, %v3377, 0.0
      %v3417 = vadd.f32 %v3415, %v3416
      %v3418 = vsel %vm2812, %v3378, 0.0
      %v3419 = vadd.f32 %v3417, %v3418
      %v3420 = vsel %vm2812, %v3379, 0.0
      %v3421 = vadd.f32 %v3419, %v3420
      %v3422 = vsel %vm2812, %v3380, 0.0
      %v3423 = vadd.f32 %v3421, %v3422
      %v3424 = vsel %vm2812, %v3381, 0.0
      %v3425 = vadd.f32 %v3423, %v3424
      %v3426 = vsel %vm2812, %v3382, 0.0
      %v3427 = vadd.f32 %v3425, %v3426
      %v3428 = vsel %vm2812, %v3383, 0.0
      %v3429 = vadd.f32 %v3427, %v3428
      %v3430 = vsel %vm2812, %v3384, 0.0
      %v3431 = vadd.f32 %v3429, %v3430
      %v3432 = vsel %vm2812, %v3385, 0.0
      %v3433 = vadd.f32 %v3431, %v3432
      %v3434 = vsel %vm2812, %v3386, 0.0
      %v3435 = vadd.f32 %v3433, %v3434
      %v3436 = vsel %vm2812, %v3387, 0.0
      %v3437 = vadd.f32 %v3435, %v3436
      %v3438 = vsel %vm2812, %v3388, 0.0
      %v3439 = vadd.f32 %v3437, %v3438
      %v3440 = vsel %vm2812, %v3389, 0.0
      %v3441 = vadd.f32 %v3439, %v3440
      %v3442 = vsel %vm2812, %v3390, 0.0
      %v3443 = vadd.f32 %v3441, %v3442
      %v3444 = vsel %vm2812, %v3391, 0.0
      %v3445 = vadd.f32 %v3443, %v3444
      %v3446 = vsel %vm2812, %v3392, 0.0
      %v3447 = vadd.f32 %v3445, %v3446
      %v3448 = vsel %vm2812, %v3393, 0.0
      %v3449 = vadd.f32 %v3447, %v3448
      %v3450 = vsel %vm2812, %v3394, 0.0
      %v3451 = vadd.f32 %v3449, %v3450
      %v3452 = vsel %vm2812, %v3395, 0.0
      %v3453 = vadd.f32 %v3451, %v3452
      %v3454 = vsel %vm2812, %v3396, 0.0
      %v3455 = vadd.f32 %v3453, %v3454
      %v3456 = vsel %vm2812, %v3397, 0.0
      %v3457 = vadd.f32 %v3455, %v3456
      %v3458 = vsel %vm2812, %v3398, 0.0
      %v3459 = vadd.f32 %v3457, %v3458
      %v3460 = vsel %vm2812, %v3399, 0.0
      %v3461 = vadd.f32 %v3459, %v3460
      %v3462 = vsel %vm2812, %v3400, 0.0
      %v3463 = vadd.f32 %v3461, %v3462
      %v3464 = vrot.slane %v3463, 4
      %v3465 = vadd.f32 %v3463, %v3464
      %v3466 = vrot.slane %v3465, 2
      %v3467 = vadd.f32 %v3465, %v3466
      %v3468 = vrot.slane %v3467, 1
      %v3469 = vadd.f32 %v3467, %v3468
      %3470 = vst.msk [vmem:[%s548] sm:$0x1] %vm3367, %v3469
      %s3471 = smul.u32 32, %s27
      %p3472 = scmp.lt.s32.totalorder %s26, 1
      %s3473 = scalar_select %p3472, %s26, 1
      %p3474 = scmp.lt.s32.totalorder %s3471, 31
      %s3475 = scalar_select %p3474, %s3471, 31
      %s3476 = smul.addr %s3473, 32
      %s3477 = sadd.s32 %s3475, %s3476
      %s3478 = smul.addr %s3477, 8
      %s3479 = scalar_lea.vmem %s6, %s3478
      %s3480 = sadd.s32 %s27, 1
      %p3481 = scmp.lt.s32.totalorder %s26, 1
      %s3482 = scalar_select %p3481, %s26, 1
      %p3483 = scmp.lt.s32.totalorder %s3480, 1
      %s3484 = scalar_select %p3483, %s3480, 1
      %s3485 = smul.addr %s3484, 2
      %s3486 = smul.addr %s3482, 4
      %s3487 = sadd.s32 %s3485, %s3486
      %s3488 = smul.addr %s3487, 8
      %s3489 = scalar_lea.vmem %s7, %s3488
      %p3490 = scmp.lt.s32.totalorder %s26, 1
      %s3491 = scalar_select %p3490, %s26, 1
      %p3492 = scmp.lt.s32.totalorder %s27, 1
      %s3493 = scalar_select %p3492, %s27, 1
      %s3494 = smul.addr %s3493, 2
      %s3495 = smul.addr %s3491, 4
      %s3496 = sadd.s32 %s3494, %s3495
      %s3497 = smul.addr %s3496, 8
      %s3498 = scalar_lea.vmem %s8, %s3497
      %p3499 = scmp.lt.s32.totalorder %s26, 1
      %s3500 = scalar_select %p3499, %s26, 1
      %p3501 = scmp.lt.s32.totalorder %s27, 0
      %s3502 = scalar_select %p3501, %s27, 0
      %s3503 = sadd.s32 %s3502, %s3500
      %s3504 = scalar_lea.vmem %s9, %s3503
      %p3505 = scmp.lt.s32.totalorder %s26, 1
      %s3506 = scalar_select %p3505, %s26, 1
      %p3507 = scmp.lt.s32.totalorder %s27, 0
      %s3508 = scalar_select %p3507, %s27, 0
      %s3509 = sadd.s32 %s3508, %s3506
      %s3510 = scalar_lea.vmem %s10, %s3509
      // Predicated region
      $region45: #{gblock_forward_pallas.2} parent=43 // pred_check
        %p3511 = pneg %p201
      $region46: #{gblock_forward_pallas.2} parent=43 // pred_check_branch
        %3513 = sbr.rel (%p3511) target = $region48
      $region47: #{gblock_forward_pallas.2} parent=43 // pred_region
        %s3514 = smul.u32 32, %s27
      $region48: #{gblock_forward_pallas.2} parent=43 // pred_fallthru
        _
      // Predicated region
      $region49: #{gblock_forward_pallas.2} parent=43 // pred_check
        %p3515 = pneg %p231
      $region50: #{gblock_forward_pallas.2} parent=43 // pred_check_branch
        %3517 = sbr.rel (%p3515) target = $region52
      $region51: #{gblock_forward_pallas.2} parent=43 // pred_region
        %s3518 = sadd.s32 %s27, 1
      $region52: #{gblock_forward_pallas.2} parent=43 // pred_fallthru
        _
      // Predicated region
      $region53: #{gblock_forward_pallas.2} parent=43 // pred_check
        %p3519 = pneg %p259
      $region54: #{gblock_forward_pallas.2} parent=43 // pred_check_branch
        %3521 = sbr.rel (%p3519) target = $region56
      $region55: #{gblock_forward_pallas.2} parent=43 // pred_region
        _
      $region56: #{gblock_forward_pallas.2} parent=43 // pred_fallthru
        _
      // Predicated region
      $region57: #{gblock_forward_pallas.2} parent=43 // pred_check
        %p3522 = pneg %p287
      $region58: #{gblock_forward_pallas.2} parent=43 // pred_check_branch
        %3524 = sbr.rel (%p3522) target = $region60
      $region59: #{gblock_forward_pallas.2} parent=43 // pred_region
        _
      $region60: #{gblock_forward_pallas.2} parent=43 // pred_fallthru
        _
      // Predicated region
      $region61: #{gblock_forward_pallas.2} parent=43 // pred_check
        %p3525 = pneg %p315
      $region62: #{gblock_forward_pallas.2} parent=43 // pred_check_branch
        %3527 = sbr.rel (%p3525) target = $region64
      $region63: #{gblock_forward_pallas.2} parent=43 // pred_region
        _
      $region64: #{gblock_forward_pallas.2} parent=43 // pred_fallthru
        _
    $region44: #{gblock_forward_pallas.2} parent=5 // pred_fallthru
      _
    %p3528 = scmp.le.s32.totalorder 2, %s17
    // Predicated region
    $region65: #{gblock_forward_pallas.2} parent=5 // pred_check
      %p3529 = pneg %p3528
    $region66: #{gblock_forward_pallas.2} parent=5 // pred_check_branch
      %3531 = sbr.rel (%p3529) target = $region68
    $region67: #{gblock_forward_pallas.2} parent=5 // pred_region
      %s3532 = ssub.s32 %s17, 2
      // Predicated region
      $region69: #{gblock_forward_pallas.2} parent=67 // pred_check
        %p3533 = pneg %p207
      $region70: #{gblock_forward_pallas.2} parent=67 // pred_check_branch
        %3535 = sbr.rel (%p3533) target = $region72
      $region71: #{gblock_forward_pallas.2} parent=67 // pred_region
        %s3536 = smul.u32 32, %s29
        %p3537 = scmp.lt.s32.totalorder %s28, 1
        %s3538 = scalar_select %p3537, %s28, 1
        %p3539 = scmp.lt.s32.totalorder %s3536, 31
        %s3540 = scalar_select %p3539, %s3536, 31
        %s3541 = smul.addr %s3538, 32
        %s3542 = sadd.s32 %s3540, %s3541
        %s3543 = smul.addr %s3542, 8
        %s3544 = scalar_lea.vmem %s6, %s3543
      $region72: #{gblock_forward_pallas.2} parent=67 // pred_fallthru
        _
      // Predicated region
      $region73: #{gblock_forward_pallas.2} parent=67 // pred_check
        %p3545 = pneg %p237
      $region74: #{gblock_forward_pallas.2} parent=67 // pred_check_branch
        %3547 = sbr.rel (%p3545) target = $region76
      $region75: #{gblock_forward_pallas.2} parent=67 // pred_region
        %s3548 = sadd.s32 %s29, 1
        %p3549 = scmp.lt.s32.totalorder %s28, 1
        %s3550 = scalar_select %p3549, %s28, 1
        %p3551 = scmp.lt.s32.totalorder %s3548, 1
        %s3552 = scalar_select %p3551, %s3548, 1
        %s3553 = smul.addr %s3552, 2
        %s3554 = smul.addr %s3550, 4
        %s3555 = sadd.s32 %s3553, %s3554
        %s3556 = smul.addr %s3555, 8
        %s3557 = scalar_lea.vmem %s7, %s3556
      $region76: #{gblock_forward_pallas.2} parent=67 // pred_fallthru
        _
      // Predicated region
      $region77: #{gblock_forward_pallas.2} parent=67 // pred_check
        %p3558 = pneg %p265
      $region78: #{gblock_forward_pallas.2} parent=67 // pred_check_branch
        %3560 = sbr.rel (%p3558) target = $region80
      $region79: #{gblock_forward_pallas.2} parent=67 // pred_region
        %p3561 = scmp.lt.s32.totalorder %s28, 1
        %s3562 = scalar_select %p3561, %s28, 1
        %p3563 = scmp.lt.s32.totalorder %s29, 1
        %s3564 = scalar_select %p3563, %s29, 1
        %s3565 = smul.addr %s3564, 2
        %s3566 = smul.addr %s3562, 4
        %s3567 = sadd.s32 %s3565, %s3566
        %s3568 = smul.addr %s3567, 8
        %s3569 = scalar_lea.vmem %s8, %s3568
      $region80: #{gblock_forward_pallas.2} parent=67 // pred_fallthru
        _
      // Predicated region
      $region81: #{gblock_forward_pallas.2} parent=67 // pred_check
        %p3570 = pneg %p293
      $region82: #{gblock_forward_pallas.2} parent=67 // pred_check_branch
        %3572 = sbr.rel (%p3570) target = $region84
      $region83: #{gblock_forward_pallas.2} parent=67 // pred_region
        %p3573 = scmp.lt.s32.totalorder %s28, 1
        %s3574 = scalar_select %p3573, %s28, 1
        %p3575 = scmp.lt.s32.totalorder %s29, 0
        %s3576 = scalar_select %p3575, %s29, 0
        %s3577 = sadd.s32 %s3576, %s3574
        %s3578 = scalar_lea.vmem %s9, %s3577
      $region84: #{gblock_forward_pallas.2} parent=67 // pred_fallthru
        _
      // Predicated region
      $region85: #{gblock_forward_pallas.2} parent=67 // pred_check
        %p3579 = pneg %p321
      $region86: #{gblock_forward_pallas.2} parent=67 // pred_check_branch
        %3581 = sbr.rel (%p3579) target = $region88
      $region87: #{gblock_forward_pallas.2} parent=67 // pred_region
        %p3582 = scmp.lt.s32.totalorder %s28, 1
        %s3583 = scalar_select %p3582, %s28, 1
        %p3584 = scmp.lt.s32.totalorder %s29, 0
        %s3585 = scalar_select %p3584, %s29, 0
        %s3586 = sadd.s32 %s3585, %s3583
        %s3587 = scalar_lea.vmem %s10, %s3586
      $region88: #{gblock_forward_pallas.2} parent=67 // pred_fallthru
        _
    $region68: #{gblock_forward_pallas.2} parent=5 // pred_fallthru
      _
  $region6: #{gblock_forward_pallas.2} parent=0 // loop_footer
    %s21 = sadd.s32 1, %s17
  $region7: #{gblock_forward_pallas.2} parent=0 // loop_footer_branch
    %16 = sbr.rel target = $region3
  $region8: #{gblock_forward_pallas.2} parent=0 // loop_exit
    _

</llo_original>
